<compile_context>
chip_gen: v7x
topology: tpu7x:2x2x1
jax: 0.10.0
libtpu: 0.0.40
codegen_flags: <defaults>
</compile_context>

<pallas_src>
import functools

import jax
import jax.numpy as jnp
from jax.experimental import pallas as pl
from jax.experimental.pallas import tpu as pltpu

NEG_SLOPE = 0.2
BN_EPS = 1e-5


def _round_up(x, m):
    return (x + m - 1) // m * m


def _vmem_limit_bytes():
    # ~75% of physical VMEM: 96 MiB on v5e/v6e (128 MiB), 48 MiB on v7x (64 MiB).
    try:
        cap = pltpu.get_tpu_info().vmem_capacity_bytes
        return int(max(32 << 20, min(cap * 3 // 4, 100 << 20)))
    except Exception:
        return 64 << 20


_VMEM_LIMIT = _vmem_limit_bytes()


def _row_tiling(nh):
    """Row tile (multiple of 16 for bf16 sublane packing) and padded row count."""
    t = min(512, _round_up(nh, 16))
    return t, _round_up(nh, t)


# --------------------------- Pallas kernels ---------------------------

def _conv_lrelu_kernel(x_ref, w_ref, o_ref, *, wo_count, cout):
    # x_ref: (Wo, t, Kp) bf16, w_ref: (Kp, Cout) bf16, o_ref: (t, Wo*Cout) bf16.
    for wo in range(wo_count):
        y = jnp.dot(x_ref[wo], w_ref[...], preferred_element_type=jnp.float32)
        z = jnp.where(y >= 0, y, NEG_SLOPE * y)
        o_ref[:, pl.ds(wo * cout, cout)] = z.astype(o_ref.dtype)


def _conv_bn_lrelu_kernel(x_ref, w_ref, g_ref, b_ref, e_ref, o_ref,
                          s_acc, q_acc, *, wo_count, cout, inv_m, tile_rows):
    # Conv matmul written straight into the VMEM-resident output block (no
    # y_acc scratch); batch stats accumulate in f32 scratch; BN affine +
    # LeakyReLU applied in-place at the last grid step.  o_ref is bf16.
    i = pl.program_id(0)

    @pl.when(i == 0)
    def _():
        s_acc[...] = jnp.zeros_like(s_acc)
        q_acc[...] = jnp.zeros_like(q_acc)

    row0 = pl.multiple_of(i * tile_rows, tile_rows)
    for wo in range(wo_count):
        y = jnp.dot(x_ref[wo], w_ref[...], preferred_element_type=jnp.float32)
        s_acc[...] += jnp.sum(y, axis=0, keepdims=True)
        q_acc[...] += jnp.sum(y * y, axis=0, keepdims=True)
        o_ref[pl.ds(row0, tile_rows), pl.ds(wo * cout, cout)] = y.astype(o_ref.dtype)

    @pl.when(i == pl.num_programs(0) - 1)
    def _():
        # Zero-padded tail rows contribute 0 to both sums; divide by true M.
        mean = s_acc[...] * inv_m
        var = jnp.maximum(q_acc[...] * inv_m - mean * mean, 0.0)
        inv_std = jax.lax.rsqrt(var + BN_EPS)                     # EUP
        scale = g_ref[...] * inv_std
        shift = b_ref[...] - mean * scale
        # Expand per-channel scale/shift to the dense (wo, c) lane layout with
        # a tiny 0/1 matmul (avoids in-kernel reshape/tile).
        scale_d = jnp.dot(scale, e_ref[...], preferred_element_type=jnp.float32)
        shift_d = jnp.dot(shift, e_ref[...], preferred_element_type=jnp.float32)
        z = o_ref[...].astype(jnp.float32) * scale_d + shift_d
        o_ref[...] = jnp.where(z >= 0, z, NEG_SLOPE * z).astype(o_ref.dtype)


def _conv_bn_head_kernel(x_ref, w_ref, g_ref, b_ref, e_ref, wl_ref, sel_ref,
                         bl_ref, o_ref, z_acc, s_acc, q_acc,
                         *, wo_count, cout, inv_m, tile_rows):
    # conv4 + BN + LeakyReLU + Flatten + Linear + sigmoid, fully fused.  The
    # conv4 activation stays in VMEM scratch; only the (N, 1) head hits HBM.
    i = pl.program_id(0)

    @pl.when(i == 0)
    def _():
        s_acc[...] = jnp.zeros_like(s_acc)
        q_acc[...] = jnp.zeros_like(q_acc)

    row0 = pl.multiple_of(i * tile_rows, tile_rows)
    for wo in range(wo_count):
        y = jnp.dot(x_ref[wo], w_ref[...], preferred_element_type=jnp.float32)
        s_acc[...] += jnp.sum(y, axis=0, keepdims=True)
        q_acc[...] += jnp.sum(y * y, axis=0, keepdims=True)
        z_acc[pl.ds(row0, tile_rows), pl.ds(wo * cout, cout)] = y

    @pl.when(i == pl.num_programs(0) - 1)
    def _():
        mean = s_acc[...] * inv_m
        var = jnp.maximum(q_acc[...] * inv_m - mean * mean, 0.0)
        inv_std = jax.lax.rsqrt(var + BN_EPS)
        scale = g_ref[...] * inv_std
        shift = b_ref[...] - mean * scale
        scale_d = jnp.dot(scale, e_ref[...], preferred_element_type=jnp.float32)
        shift_d = jnp.dot(shift, e_ref[...], preferred_element_type=jnp.float32)
        z = z_acc[...] * scale_d + shift_d
        z = jnp.where(z >= 0, z, NEG_SLOPE * z)
        # Flatten + Linear: elementwise multiply by the pre-permuted Linear
        # weight, lane-reduce per row, then a masked row-segment sum per sample.
        row = jnp.sum(z * wl_ref[...], axis=1, keepdims=True)      # (NHp, 1)
        logits = jnp.dot(sel_ref[...], row,
                         preferred_element_type=jnp.float32) + bl_ref[...]
        o_ref[...] = 1.0 / (1.0 + jnp.exp(-logits))                # sigmoid


# --------------------------- wrappers ---------------------------

def _im2col_wo_major(x_nhwc, k, stride, pad, k_pad):
    """Patches ordered (Wo, N*Ho, K), K zero-padded to k_pad (128-aligned)."""
    N, H, W, C = x_nhwc.shape
    Ho = (H + 2 * pad - k) // stride + 1
    Wo = (W + 2 * pad - k) // stride + 1
    xp = jnp.pad(x_nhwc, ((0, 0), (pad, pad), (pad, pad), (0, 0)))
    cols = []
    for i in range(k):
        for j in range(k):
            cols.append(xp[:, i:i + stride * Ho:stride,
                           j:j + stride * Wo:stride, :])
    p = jnp.stack(cols, axis=3).reshape(N, Ho, Wo, k * k * C)
    p = jnp.transpose(p, (2, 0, 1, 3)).reshape(Wo, N * Ho, k * k * C)
    if k_pad > k * k * C:
        p = jnp.pad(p, ((0, 0), (0, 0), (0, k_pad - k * k * C)))
    return p, Ho, Wo


def _prep_conv(x_nhwc, w_oikk, stride, pad):
    Cout, Cin, k, _ = w_oikk.shape
    N = x_nhwc.shape[0]
    K = k * k * Cin
    Kp = _round_up(K, 128)
    patches, Ho, Wo = _im2col_wo_major(x_nhwc, k, stride, pad, Kp)
    NH = N * Ho
    t, NHp = _row_tiling(NH)
    if NHp > NH:
        patches = jnp.pad(patches, ((0, 0), (0, NHp - NH), (0, 0)))
    patches = patches.astype(jnp.bfloat16)
    wm = jnp.transpose(w_oikk, (2, 3, 1, 0)).reshape(K, Cout)     # (kh,kw,ci,co)
    wm = jnp.pad(wm, ((0, Kp - K), (0, 0))).astype(jnp.bfloat16)
    return patches, wm, N, Ho, Wo, Cout, Kp, NH, NHp, t


def _expand_matrix(cout, wo):
    # E[c, wo*Cout + c'] = 1 iff c == c'  (per-channel -> dense lane layout).
    return jnp.tile(jnp.eye(cout, dtype=jnp.float32), (1, wo))


def conv_layer(x_nhwc, w_oikk, bn_params=None, stride=2, pad=2):
    """conv(5x5,s2,p2,no bias) -> [BatchNorm] -> LeakyReLU(0.2), bf16 output."""
    patches, wm, N, Ho, Wo, Cout, Kp, NH, NHp, t = _prep_conv(
        x_nhwc, w_oikk, stride, pad)
    grid = (NHp // t,)
    x_spec = pl.BlockSpec((Wo, t, Kp), lambda i: (0, i, 0))
    w_spec = pl.BlockSpec((Kp, Cout), lambda i: (0, 0))
    if bn_params is None:
        kernel = functools.partial(_conv_lrelu_kernel, wo_count=Wo, cout=Cout)
        out = pl.pallas_call(
            kernel,
            out_shape=jax.ShapeDtypeStruct((NHp, Wo * Cout), jnp.bfloat16),
            grid=grid,
            in_specs=[x_spec, w_spec],
            out_specs=pl.BlockSpec((t, Wo * Cout), lambda i: (i, 0)),
            compiler_params=pltpu.CompilerParams(
                dimension_semantics=("parallel",),
                vmem_limit_bytes=_VMEM_LIMIT),
        )(patches, wm)
    else:
        gamma, beta = bn_params
        # Training-mode BN (biased variance over N*Ho*Wo).
        # TODO(synk): running-mean/var momentum updates are not produced.
        kernel = functools.partial(_conv_bn_lrelu_kernel, wo_count=Wo,
                                   cout=Cout, inv_m=1.0 / (N * Ho * Wo),
                                   tile_rows=t)
        out = pl.pallas_call(
            kernel,
            out_shape=jax.ShapeDtypeStruct((NHp, Wo * Cout), jnp.bfloat16),
            grid=grid,
            in_specs=[x_spec, w_spec,
                      pl.BlockSpec((1, Cout), lambda i: (0, 0)),
                      pl.BlockSpec((1, Cout), lambda i: (0, 0)),
                      pl.BlockSpec((Cout, Wo * Cout), lambda i: (0, 0))],
            out_specs=pl.BlockSpec((NHp, Wo * Cout), lambda i: (0, 0)),
            scratch_shapes=[pltpu.VMEM((1, Cout), jnp.float32),
                            pltpu.VMEM((1, Cout), jnp.float32)],
            compiler_params=pltpu.CompilerParams(
                dimension_semantics=("arbitrary",),
                vmem_limit_bytes=_VMEM_LIMIT),
        )(patches, wm,
          gamma.reshape(1, Cout).astype(jnp.float32),
          beta.reshape(1, Cout).astype(jnp.float32),
          _expand_matrix(Cout, Wo))
    return out[:NH].reshape(N, Ho, Wo, Cout)


def conv_bn_head(x_nhwc, w_oikk, gamma, beta, wl, bl, stride=2, pad=2):
    """Fused conv4 + BN + LeakyReLU + Flatten + Linear + sigmoid -> (N, 1)."""
    patches, wm, N, Ho, Wo, Cout, Kp, NH, NHp, t = _prep_conv(
        x_nhwc, w_oikk, stride, pad)

    # Linear weight rows come in PyTorch NCHW-flatten order (c, ho, wo);
    # permute to the kernel's dense (row=(n,ho), col=(wo,c)) layout.
    wl_d = wl.reshape(Cout, Ho, Wo).transpose(1, 2, 0).reshape(Ho, Wo * Cout)
    wl_d = jnp.tile(wl_d, (N, 1))
    wl_d = jnp.pad(wl_d, ((0, NHp - NH), (0, 0))).astype(jnp.float32)

    # Row-segment selector (also masks padded rows): logits[n] = sum over its rows.
    rows = jnp.arange(NHp)
    sel = ((rows[None, :] // Ho) == jnp.arange(N)[:, None]) & (rows[None, :] < NH)
    sel = sel.astype(jnp.float32)

    kernel = functools.partial(_conv_bn_head_kernel, wo_count=Wo, cout=Cout,
                               inv_m=1.0 / (N * Ho * Wo), tile_rows=t)
    return pl.pallas_call(
        kernel,
        out_shape=jax.ShapeDtypeStruct((N, 1), jnp.float32),
        grid=(NHp // t,),
        in_specs=[pl.BlockSpec((Wo, t, Kp), lambda i: (0, i, 0)),
                  pl.BlockSpec((Kp, Cout), lambda i: (0, 0)),
                  pl.BlockSpec((1, Cout), lambda i: (0, 0)),
                  pl.BlockSpec((1, Cout), lambda i: (0, 0)),
                  pl.BlockSpec((Cout, Wo * Cout), lambda i: (0, 0)),
                  pl.BlockSpec((NHp, Wo * Cout), lambda i: (0, 0)),
                  pl.BlockSpec((N, NHp), lambda i: (0, 0)),
                  pl.BlockSpec((1, 1), lambda i: (0, 0))],
        out_specs=pl.BlockSpec((N, 1), lambda i: (0, 0)),
        scratch_shapes=[pltpu.VMEM((NHp, Wo * Cout), jnp.float32),
                        pltpu.VMEM((1, Cout), jnp.float32),
                        pltpu.VMEM((1, Cout), jnp.float32)],
        compiler_params=pltpu.CompilerParams(
            dimension_semantics=("arbitrary",),
            vmem_limit_bytes=_VMEM_LIMIT),
    )(patches, wm,
      gamma.reshape(1, Cout).astype(jnp.float32),
      beta.reshape(1, Cout).astype(jnp.float32),
      _expand_matrix(Cout, Wo), wl_d, sel,
      bl.reshape(1, 1).astype(jnp.float32))


def discriminator_forward(x_nchw, params):
    x = jnp.transpose(x_nchw, (0, 2, 3, 1)).astype(jnp.float32)   # NCHW -> NHWC
    x = conv_layer(x, params['w1'])
    x = conv_layer(x, params['w2'], (params['g2'], params['b2']))
    x = conv_layer(x, params['w3'], (params['g3'], params['b3']))
    # conv4 + bn4 + LeakyReLU + Flatten + Linear + sigmoid in one kernel.
    return conv_bn_head(x, params['w4'], params['g4'], params['b4'],
                        params['wl'], params['bl'])
    # TODO(synk): self.conv5 is defined in __init__ but never used in forward;
    # it is intentionally omitted.


# --------------------------- main ---------------------------

if __name__ == "__main__":
    nc, ndf = 3, 8
    batch, H, W = 2, 32, 32          # 32 -> 16 -> 8 -> 4 -> 2 after 4 convs
    flat_dim = (ndf * 8) * 2 * 2     # Linear in_features adapted to small shape

    key = jax.random.PRNGKey(0)
    ks = jax.random.split(key, 9)

    def conv_w(k, cout, cin):
        return 0.02 * jax.random.normal(k, (cout, cin, 5, 5), jnp.float32)

    params = {
        'w1': conv_w(ks[0], ndf, nc),
        'w2': conv_w(ks[1], ndf * 2, ndf),
        'g2': 1.0 + 0.02 * jax.random.normal(ks[2], (ndf * 2,), jnp.float32),
        'b2': jnp.zeros((ndf * 2,), jnp.float32),
        'w3': conv_w(ks[3], ndf * 4, ndf * 2),
        'g3': 1.0 + 0.02 * jax.random.normal(ks[4], (ndf * 4,), jnp.float32),
        'b3': jnp.zeros((ndf * 4,), jnp.float32),
        'w4': conv_w(ks[5], ndf * 8, ndf * 4),
        'g4': 1.0 + 0.02 * jax.random.normal(ks[6], (ndf * 8,), jnp.float32),
        'b4': jnp.zeros((ndf * 8,), jnp.float32),
        'wl': 0.02 * jax.random.normal(ks[7], (flat_dim, 1), jnp.float32),
        'bl': jnp.zeros((1,), jnp.float32),
    }

    x = jax.random.normal(ks[8], (batch, nc, H, W), jnp.float32)

    fwd = jax.jit(discriminator_forward)
    out = fwd(x, params)
    out = jax.block_until_ready(out)
    assert out.shape == (batch, 1)
    assert jnp.all((out >= 0.0) & (out <= 1.0))
    print("KERNEL_OK")
</pallas_src>

<mosaic_0001>
module attributes {stable_mosaic.version = 11 : i64} {
  func.func @_conv_lrelu_kernel(%arg0: i32, %arg1: memref<16x32x128xbf16, #tpu.memory_space<vmem>>, %arg2: memref<128x8xbf16, #tpu.memory_space<vmem>>, %arg3: memref<32x128xbf16, #tpu.memory_space<vmem>>) attributes {dimension_semantics = [#tpu.dimension_semantics<parallel>], iteration_bounds = array<i64: 1>, scalar_prefetch = 0 : i64, scratch_operands = 0 : i64, tpu.core_type = #tpu.core_type<tc>, window_params = [{transform_indices = @transform_0, window_bounds = array<i64: 16, 32, 128>}, {pipeline_mode = #tpu.pipeline_mode<synchronous>, transform_indices = @transform_1, window_bounds = array<i64: 128, 8>}, {transform_indices = @transform_2, window_bounds = array<i64: 32, 128>}]} {
    %c0 = arith.constant 0 : index
    %c0_0 = arith.constant 0 : index
    %c0_1 = arith.constant 0 : index
    %0 = vector.load %arg1[%c0, %c0_0, %c0_1] : memref<16x32x128xbf16, #tpu.memory_space<vmem>>, vector<1x32x128xbf16>
    %1 = vector.shape_cast %0 : vector<1x32x128xbf16> to vector<32x128xbf16>
    %c0_2 = arith.constant 0 : index
    %c0_3 = arith.constant 0 : index
    %2 = vector.load %arg2[%c0_2, %c0_3] : memref<128x8xbf16, #tpu.memory_space<vmem>>, vector<128x8xbf16>
    %cst = arith.constant dense<0.000000e+00> : vector<32x8xf32>
    %3 = tpu.matmul %1, %2, %cst {dimension_numbers = #tpu.dot_dimension_numbers<[1], [0], [0], [1], [0, 0, 1, 1], [], []>} : vector<32x128xbf16>, vector<128x8xbf16>, vector<32x8xf32> -> vector<32x8xf32>
    %cst_4 = arith.constant 0.000000e+00 : f32
    %4 = vector.broadcast %cst_4 : f32 to vector<32x8xf32>
    %5 = arith.cmpf oge, %3, %4 : vector<32x8xf32>
    %cst_5 = arith.constant 2.000000e-01 : f32
    %6 = vector.broadcast %cst_5 : f32 to vector<32x8xf32>
    %7 = arith.mulf %6, %3 : vector<32x8xf32>
    %8 = arith.select %5, %3, %7 : vector<32x8xi1>, vector<32x8xf32>
    %9 = arith.truncf %8 : vector<32x8xf32> to vector<32x8xbf16>
    %c0_6 = arith.constant 0 : index
    %c0_7 = arith.constant 0 : index
    %10 = vector.load %arg3[%c0_6, %c0_7] : memref<32x128xbf16, #tpu.memory_space<vmem>>, vector<32x8xbf16>
    tpu.vector_store %arg3[%c0_6, %c0_7], %9 {strides = array<i32>} : memref<32x128xbf16, #tpu.memory_space<vmem>>, vector<32x8xbf16>,
    %c1 = arith.constant 1 : index
    %c0_8 = arith.constant 0 : index
    %c0_9 = arith.constant 0 : index
    %11 = vector.load %arg1[%c1, %c0_8, %c0_9] : memref<16x32x128xbf16, #tpu.memory_space<vmem>>, vector<1x32x128xbf16>
    %12 = vector.shape_cast %11 : vector<1x32x128xbf16> to vector<32x128xbf16>
    %c0_10 = arith.constant 0 : index
    %c0_11 = arith.constant 0 : index
    %13 = vector.load %arg2[%c0_10, %c0_11] : memref<128x8xbf16, #tpu.memory_space<vmem>>, vector<128x8xbf16>
    %cst_12 = arith.constant dense<0.000000e+00> : vector<32x8xf32>
    %14 = tpu.matmul %12, %13, %cst_12 {dimension_numbers = #tpu.dot_dimension_numbers<[1], [0], [0], [1], [0, 0, 1, 1], [], []>} : vector<32x128xbf16>, vector<128x8xbf16>, vector<32x8xf32> -> vector<32x8xf32>
    %cst_13 = arith.constant 0.000000e+00 : f32
    %15 = vector.broadcast %cst_13 : f32 to vector<32x8xf32>
    %16 = arith.cmpf oge, %14, %15 : vector<32x8xf32>
    %cst_14 = arith.constant 2.000000e-01 : f32
    %17 = vector.broadcast %cst_14 : f32 to vector<32x8xf32>
    %18 = arith.mulf %17, %14 : vector<32x8xf32>
    %19 = arith.select %16, %14, %18 : vector<32x8xi1>, vector<32x8xf32>
    %20 = arith.truncf %19 : vector<32x8xf32> to vector<32x8xbf16>
    %c0_15 = arith.constant 0 : index
    %c8 = arith.constant 8 : index
    %21 = vector.load %arg3[%c0_15, %c8] : memref<32x128xbf16, #tpu.memory_space<vmem>>, vector<32x8xbf16>
    tpu.vector_store %arg3[%c0_15, %c8], %20 {strides = array<i32>} : memref<32x128xbf16, #tpu.memory_space<vmem>>, vector<32x8xbf16>,
    %c2 = arith.constant 2 : index
    %c0_16 = arith.constant 0 : index
    %c0_17 = arith.constant 0 : index
    %22 = vector.load %arg1[%c2, %c0_16, %c0_17] : memref<16x32x128xbf16, #tpu.memory_space<vmem>>, vector<1x32x128xbf16>
    %23 = vector.shape_cast %22 : vector<1x32x128xbf16> to vector<32x128xbf16>
    %c0_18 = arith.constant 0 : index
    %c0_19 = arith.constant 0 : index
    %24 = vector.load %arg2[%c0_18, %c0_19] : memref<128x8xbf16, #tpu.memory_space<vmem>>, vector<128x8xbf16>
    %cst_20 = arith.constant dense<0.000000e+00> : vector<32x8xf32>
    %25 = tpu.matmul %23, %24, %cst_20 {dimension_numbers = #tpu.dot_dimension_numbers<[1], [0], [0], [1], [0, 0, 1, 1], [], []>} : vector<32x128xbf16>, vector<128x8xbf16>, vector<32x8xf32> -> vector<32x8xf32>
    %cst_21 = arith.constant 0.000000e+00 : f32
    %26 = vector.broadcast %cst_21 : f32 to vector<32x8xf32>
    %27 = arith.cmpf oge, %25, %26 : vector<32x8xf32>
    %cst_22 = arith.constant 2.000000e-01 : f32
    %28 = vector.broadcast %cst_22 : f32 to vector<32x8xf32>
    %29 = arith.mulf %28, %25 : vector<32x8xf32>
    %30 = arith.select %27, %25, %29 : vector<32x8xi1>, vector<32x8xf32>
    %31 = arith.truncf %30 : vector<32x8xf32> to vector<32x8xbf16>
    %c0_23 = arith.constant 0 : index
    %c16 = arith.constant 16 : index
    %32 = vector.load %arg3[%c0_23, %c16] : memref<32x128xbf16, #tpu.memory_space<vmem>>, vector<32x8xbf16>
    tpu.vector_store %arg3[%c0_23, %c16], %31 {strides = array<i32>} : memref<32x128xbf16, #tpu.memory_space<vmem>>, vector<32x8xbf16>,
    %c3 = arith.constant 3 : index
    %c0_24 = arith.constant 0 : index
    %c0_25 = arith.constant 0 : index
    %33 = vector.load %arg1[%c3, %c0_24, %c0_25] : memref<16x32x128xbf16, #tpu.memory_space<vmem>>, vector<1x32x128xbf16>
    %34 = vector.shape_cast %33 : vector<1x32x128xbf16> to vector<32x128xbf16>
    %c0_26 = arith.constant 0 : index
    %c0_27 = arith.constant 0 : index
    %35 = vector.load %arg2[%c0_26, %c0_27] : memref<128x8xbf16, #tpu.memory_space<vmem>>, vector<128x8xbf16>
    %cst_28 = arith.constant dense<0.000000e+00> : vector<32x8xf32>
    %36 = tpu.matmul %34, %35, %cst_28 {dimension_numbers = #tpu.dot_dimension_numbers<[1], [0], [0], [1], [0, 0, 1, 1], [], []>} : vector<32x128xbf16>, vector<128x8xbf16>, vector<32x8xf32> -> vector<32x8xf32>
    %cst_29 = arith.constant 0.000000e+00 : f32
    %37 = vector.broadcast %cst_29 : f32 to vector<32x8xf32>
    %38 = arith.cmpf oge, %36, %37 : vector<32x8xf32>
    %cst_30 = arith.constant 2.000000e-01 : f32
    %39 = vector.broadcast %cst_30 : f32 to vector<32x8xf32>
    %40 = arith.mulf %39, %36 : vector<32x8xf32>
    %41 = arith.select %38, %36, %40 : vector<32x8xi1>, vector<32x8xf32>
    %42 = arith.truncf %41 : vector<32x8xf32> to vector<32x8xbf16>
    %c0_31 = arith.constant 0 : index
    %c24 = arith.constant 24 : index
    %43 = vector.load %arg3[%c0_31, %c24] : memref<32x128xbf16, #tpu.memory_space<vmem>>, vector<32x8xbf16>
    tpu.vector_store %arg3[%c0_31, %c24], %42 {strides = array<i32>} : memref<32x128xbf16, #tpu.memory_space<vmem>>, vector<32x8xbf16>,
    %c4 = arith.constant 4 : index
    %c0_32 = arith.constant 0 : index
    %c0_33 = arith.constant 0 : index
    %44 = vector.load %arg1[%c4, %c0_32, %c0_33] : memref<16x32x128xbf16, #tpu.memory_space<vmem>>, vector<1x32x128xbf16>
    %45 = vector.shape_cast %44 : vector<1x32x128xbf16> to vector<32x128xbf16>
    %c0_34 = arith.constant 0 : index
    %c0_35 = arith.constant 0 : index
    %46 = vector.load %arg2[%c0_34, %c0_35] : memref<128x8xbf16, #tpu.memory_space<vmem>>, vector<128x8xbf16>
    %cst_36 = arith.constant dense<0.000000e+00> : vector<32x8xf32>
    %47 = tpu.matmul %45, %46, %cst_36 {dimension_numbers = #tpu.dot_dimension_numbers<[1], [0], [0], [1], [0, 0, 1, 1], [], []>} : vector<32x128xbf16>, vector<128x8xbf16>, vector<32x8xf32> -> vector<32x8xf32>
    %cst_37 = arith.constant 0.000000e+00 : f32
    %48 = vector.broadcast %cst_37 : f32 to vector<32x8xf32>
    %49 = arith.cmpf oge, %47, %48 : vector<32x8xf32>
    %cst_38 = arith.constant 2.000000e-01 : f32
    %50 = vector.broadcast %cst_38 : f32 to vector<32x8xf32>
    %51 = arith.mulf %50, %47 : vector<32x8xf32>
    %52 = arith.select %49, %47, %51 : vector<32x8xi1>, vector<32x8xf32>
    %53 = arith.truncf %52 : vector<32x8xf32> to vector<32x8xbf16>
    %c0_39 = arith.constant 0 : index
    %c32 = arith.constant 32 : index
    %54 = vector.load %arg3[%c0_39, %c32] : memref<32x128xbf16, #tpu.memory_space<vmem>>, vector<32x8xbf16>
    tpu.vector_store %arg3[%c0_39, %c32], %53 {strides = array<i32>} : memref<32x128xbf16, #tpu.memory_space<vmem>>, vector<32x8xbf16>,
    %c5 = arith.constant 5 : index
    %c0_40 = arith.constant 0 : index
    %c0_41 = arith.constant 0 : index
    %55 = vector.load %arg1[%c5, %c0_40, %c0_41] : memref<16x32x128xbf16, #tpu.memory_space<vmem>>, vector<1x32x128xbf16>
    %56 = vector.shape_cast %55 : vector<1x32x128xbf16> to vector<32x128xbf16>
    %c0_42 = arith.constant 0 : index
    %c0_43 = arith.constant 0 : index
    %57 = vector.load %arg2[%c0_42, %c0_43] : memref<128x8xbf16, #tpu.memory_space<vmem>>, vector<128x8xbf16>
    %cst_44 = arith.constant dense<0.000000e+00> : vector<32x8xf32>
    %58 = tpu.matmul %56, %57, %cst_44 {dimension_numbers = #tpu.dot_dimension_numbers<[1], [0], [0], [1], [0, 0, 1, 1], [], []>} : vector<32x128xbf16>, vector<128x8xbf16>, vector<32x8xf32> -> vector<32x8xf32>
    %cst_45 = arith.constant 0.000000e+00 : f32
    %59 = vector.broadcast %cst_45 : f32 to vector<32x8xf32>
    %60 = arith.cmpf oge, %58, %59 : vector<32x8xf32>
    %cst_46 = arith.constant 2.000000e-01 : f32
    %61 = vector.broadcast %cst_46 : f32 to vector<32x8xf32>
    %62 = arith.mulf %61, %58 : vector<32x8xf32>
    %63 = arith.select %60, %58, %62 : vector<32x8xi1>, vector<32x8xf32>
    %64 = arith.truncf %63 : vector<32x8xf32> to vector<32x8xbf16>
    %c0_47 = arith.constant 0 : index
    %c40 = arith.constant 40 : index
    %65 = vector.load %arg3[%c0_47, %c40] : memref<32x128xbf16, #tpu.memory_space<vmem>>, vector<32x8xbf16>
    tpu.vector_store %arg3[%c0_47, %c40], %64 {strides = array<i32>} : memref<32x128xbf16, #tpu.memory_space<vmem>>, vector<32x8xbf16>,
    %c6 = arith.constant 6 : index
    %c0_48 = arith.constant 0 : index
    %c0_49 = arith.constant 0 : index
    %66 = vector.load %arg1[%c6, %c0_48, %c0_49] : memref<16x32x128xbf16, #tpu.memory_space<vmem>>, vector<1x32x128xbf16>
    %67 = vector.shape_cast %66 : vector<1x32x128xbf16> to vector<32x128xbf16>
    %c0_50 = arith.constant 0 : index
    %c0_51 = arith.constant 0 : index
    %68 = vector.load %arg2[%c0_50, %c0_51] : memref<128x8xbf16, #tpu.memory_space<vmem>>, vector<128x8xbf16>
    %cst_52 = arith.constant dense<0.000000e+00> : vector<32x8xf32>
    %69 = tpu.matmul %67, %68, %cst_52 {dimension_numbers = #tpu.dot_dimension_numbers<[1], [0], [0], [1], [0, 0, 1, 1], [], []>} : vector<32x128xbf16>, vector<128x8xbf16>, vector<32x8xf32> -> vector<32x8xf32>
    %cst_53 = arith.constant 0.000000e+00 : f32
    %70 = vector.broadcast %cst_53 : f32 to vector<32x8xf32>
    %71 = arith.cmpf oge, %69, %70 : vector<32x8xf32>
    %cst_54 = arith.constant 2.000000e-01 : f32
    %72 = vector.broadcast %cst_54 : f32 to vector<32x8xf32>
    %73 = arith.mulf %72, %69 : vector<32x8xf32>
    %74 = arith.select %71, %69, %73 : vector<32x8xi1>, vector<32x8xf32>
    %75 = arith.truncf %74 : vector<32x8xf32> to vector<32x8xbf16>
    %c0_55 = arith.constant 0 : index
    %c48 = arith.constant 48 : index
    %76 = vector.load %arg3[%c0_55, %c48] : memref<32x128xbf16, #tpu.memory_space<vmem>>, vector<32x8xbf16>
    tpu.vector_store %arg3[%c0_55, %c48], %75 {strides = array<i32>} : memref<32x128xbf16, #tpu.memory_space<vmem>>, vector<32x8xbf16>,
    %c7 = arith.constant 7 : index
    %c0_56 = arith.constant 0 : index
    %c0_57 = arith.constant 0 : index
    %77 = vector.load %arg1[%c7, %c0_56, %c0_57] : memref<16x32x128xbf16, #tpu.memory_space<vmem>>, vector<1x32x128xbf16>
    %78 = vector.shape_cast %77 : vector<1x32x128xbf16> to vector<32x128xbf16>
    %c0_58 = arith.constant 0 : index
    %c0_59 = arith.constant 0 : index
    %79 = vector.load %arg2[%c0_58, %c0_59] : memref<128x8xbf16, #tpu.memory_space<vmem>>, vector<128x8xbf16>
    %cst_60 = arith.constant dense<0.000000e+00> : vector<32x8xf32>
    %80 = tpu.matmul %78, %79, %cst_60 {dimension_numbers = #tpu.dot_dimension_numbers<[1], [0], [0], [1], [0, 0, 1, 1], [], []>} : vector<32x128xbf16>, vector<128x8xbf16>, vector<32x8xf32> -> vector<32x8xf32>
    %cst_61 = arith.constant 0.000000e+00 : f32
    %81 = vector.broadcast %cst_61 : f32 to vector<32x8xf32>
    %82 = arith.cmpf oge, %80, %81 : vector<32x8xf32>
    %cst_62 = arith.constant 2.000000e-01 : f32
    %83 = vector.broadcast %cst_62 : f32 to vector<32x8xf32>
    %84 = arith.mulf %83, %80 : vector<32x8xf32>
    %85 = arith.select %82, %80, %84 : vector<32x8xi1>, vector<32x8xf32>
    %86 = arith.truncf %85 : vector<32x8xf32> to vector<32x8xbf16>
    %c0_63 = arith.constant 0 : index
    %c56 = arith.constant 56 : index
    %87 = vector.load %arg3[%c0_63, %c56] : memref<32x128xbf16, #tpu.memory_space<vmem>>, vector<32x8xbf16>
    tpu.vector_store %arg3[%c0_63, %c56], %86 {strides = array<i32>} : memref<32x128xbf16, #tpu.memory_space<vmem>>, vector<32x8xbf16>,
    %c8_64 = arith.constant 8 : index
    %c0_65 = arith.constant 0 : index
    %c0_66 = arith.constant 0 : index
    %88 = vector.load %arg1[%c8_64, %c0_65, %c0_66] : memref<16x32x128xbf16, #tpu.memory_space<vmem>>, vector<1x32x128xbf16>
    %89 = vector.shape_cast %88 : vector<1x32x128xbf16> to vector<32x128xbf16>
    %c0_67 = arith.constant 0 : index
    %c0_68 = arith.constant 0 : index
    %90 = vector.load %arg2[%c0_67, %c0_68] : memref<128x8xbf16, #tpu.memory_space<vmem>>, vector<128x8xbf16>
    %cst_69 = arith.constant dense<0.000000e+00> : vector<32x8xf32>
    %91 = tpu.matmul %89, %90, %cst_69 {dimension_numbers = #tpu.dot_dimension_numbers<[1], [0], [0], [1], [0, 0, 1, 1], [], []>} : vector<32x128xbf16>, vector<128x8xbf16>, vector<32x8xf32> -> vector<32x8xf32>
    %cst_70 = arith.constant 0.000000e+00 : f32
    %92 = vector.broadcast %cst_70 : f32 to vector<32x8xf32>
    %93 = arith.cmpf oge, %91, %92 : vector<32x8xf32>
    %cst_71 = arith.constant 2.000000e-01 : f32
    %94 = vector.broadcast %cst_71 : f32 to vector<32x8xf32>
    %95 = arith.mulf %94, %91 : vector<32x8xf32>
    %96 = arith.select %93, %91, %95 : vector<32x8xi1>, vector<32x8xf32>
    %97 = arith.truncf %96 : vector<32x8xf32> to vector<32x8xbf16>
    %c0_72 = arith.constant 0 : index
    %c64 = arith.constant 64 : index
    %98 = vector.load %arg3[%c0_72, %c64] : memref<32x128xbf16, #tpu.memory_space<vmem>>, vector<32x8xbf16>
    tpu.vector_store %arg3[%c0_72, %c64], %97 {strides = array<i32>} : memref<32x128xbf16, #tpu.memory_space<vmem>>, vector<32x8xbf16>,
    %c9 = arith.constant 9 : index
    %c0_73 = arith.constant 0 : index
    %c0_74 = arith.constant 0 : index
    %99 = vector.load %arg1[%c9, %c0_73, %c0_74] : memref<16x32x128xbf16, #tpu.memory_space<vmem>>, vector<1x32x128xbf16>
    %100 = vector.shape_cast %99 : vector<1x32x128xbf16> to vector<32x128xbf16>
    %c0_75 = arith.constant 0 : index
    %c0_76 = arith.constant 0 : index
    %101 = vector.load %arg2[%c0_75, %c0_76] : memref<128x8xbf16, #tpu.memory_space<vmem>>, vector<128x8xbf16>
    %cst_77 = arith.constant dense<0.000000e+00> : vector<32x8xf32>
    %102 = tpu.matmul %100, %101, %cst_77 {dimension_numbers = #tpu.dot_dimension_numbers<[1], [0], [0], [1], [0, 0, 1, 1], [], []>} : vector<32x128xbf16>, vector<128x8xbf16>, vector<32x8xf32> -> vector<32x8xf32>
    %cst_78 = arith.constant 0.000000e+00 : f32
    %103 = vector.broadcast %cst_78 : f32 to vector<32x8xf32>
    %104 = arith.cmpf oge, %102, %103 : vector<32x8xf32>
    %cst_79 = arith.constant 2.000000e-01 : f32
    %105 = vector.broadcast %cst_79 : f32 to vector<32x8xf32>
    %106 = arith.mulf %105, %102 : vector<32x8xf32>
    %107 = arith.select %104, %102, %106 : vector<32x8xi1>, vector<32x8xf32>
    %108 = arith.truncf %107 : vector<32x8xf32> to vector<32x8xbf16>
    %c0_80 = arith.constant 0 : index
    %c72 = arith.constant 72 : index
    %109 = vector.load %arg3[%c0_80, %c72] : memref<32x128xbf16, #tpu.memory_space<vmem>>, vector<32x8xbf16>
    tpu.vector_store %arg3[%c0_80, %c72], %108 {strides = array<i32>} : memref<32x128xbf16, #tpu.memory_space<vmem>>, vector<32x8xbf16>,
    %c10 = arith.constant 10 : index
    %c0_81 = arith.constant 0 : index
    %c0_82 = arith.constant 0 : index
    %110 = vector.load %arg1[%c10, %c0_81, %c0_82] : memref<16x32x128xbf16, #tpu.memory_space<vmem>>, vector<1x32x128xbf16>
    %111 = vector.shape_cast %110 : vector<1x32x128xbf16> to vector<32x128xbf16>
    %c0_83 = arith.constant 0 : index
    %c0_84 = arith.constant 0 : index
    %112 = vector.load %arg2[%c0_83, %c0_84] : memref<128x8xbf16, #tpu.memory_space<vmem>>, vector<128x8xbf16>
    %cst_85 = arith.constant dense<0.000000e+00> : vector<32x8xf32>
    %113 = tpu.matmul %111, %112, %cst_85 {dimension_numbers = #tpu.dot_dimension_numbers<[1], [0], [0], [1], [0, 0, 1, 1], [], []>} : vector<32x128xbf16>, vector<128x8xbf16>, vector<32x8xf32> -> vector<32x8xf32>
    %cst_86 = arith.constant 0.000000e+00 : f32
    %114 = vector.broadcast %cst_86 : f32 to vector<32x8xf32>
    %115 = arith.cmpf oge, %113, %114 : vector<32x8xf32>
    %cst_87 = arith.constant 2.000000e-01 : f32
    %116 = vector.broadcast %cst_87 : f32 to vector<32x8xf32>
    %117 = arith.mulf %116, %113 : vector<32x8xf32>
    %118 = arith.select %115, %113, %117 : vector<32x8xi1>, vector<32x8xf32>
    %119 = arith.truncf %118 : vector<32x8xf32> to vector<32x8xbf16>
    %c0_88 = arith.constant 0 : index
    %c80 = arith.constant 80 : index
    %120 = vector.load %arg3[%c0_88, %c80] : memref<32x128xbf16, #tpu.memory_space<vmem>>, vector<32x8xbf16>
    tpu.vector_store %arg3[%c0_88, %c80], %119 {strides = array<i32>} : memref<32x128xbf16, #tpu.memory_space<vmem>>, vector<32x8xbf16>,
    %c11 = arith.constant 11 : index
    %c0_89 = arith.constant 0 : index
    %c0_90 = arith.constant 0 : index
    %121 = vector.load %arg1[%c11, %c0_89, %c0_90] : memref<16x32x128xbf16, #tpu.memory_space<vmem>>, vector<1x32x128xbf16>
    %122 = vector.shape_cast %121 : vector<1x32x128xbf16> to vector<32x128xbf16>
    %c0_91 = arith.constant 0 : index
    %c0_92 = arith.constant 0 : index
    %123 = vector.load %arg2[%c0_91, %c0_92] : memref<128x8xbf16, #tpu.memory_space<vmem>>, vector<128x8xbf16>
    %cst_93 = arith.constant dense<0.000000e+00> : vector<32x8xf32>
    %124 = tpu.matmul %122, %123, %cst_93 {dimension_numbers = #tpu.dot_dimension_numbers<[1], [0], [0], [1], [0, 0, 1, 1], [], []>} : vector<32x128xbf16>, vector<128x8xbf16>, vector<32x8xf32> -> vector<32x8xf32>
    %cst_94 = arith.constant 0.000000e+00 : f32
    %125 = vector.broadcast %cst_94 : f32 to vector<32x8xf32>
    %126 = arith.cmpf oge, %124, %125 : vector<32x8xf32>
    %cst_95 = arith.constant 2.000000e-01 : f32
    %127 = vector.broadcast %cst_95 : f32 to vector<32x8xf32>
    %128 = arith.mulf %127, %124 : vector<32x8xf32>
    %129 = arith.select %126, %124, %128 : vector<32x8xi1>, vector<32x8xf32>
    %130 = arith.truncf %129 : vector<32x8xf32> to vector<32x8xbf16>
    %c0_96 = arith.constant 0 : index
    %c88 = arith.constant 88 : index
    %131 = vector.load %arg3[%c0_96, %c88] : memref<32x128xbf16, #tpu.memory_space<vmem>>, vector<32x8xbf16>
    tpu.vector_store %arg3[%c0_96, %c88], %130 {strides = array<i32>} : memref<32x128xbf16, #tpu.memory_space<vmem>>, vector<32x8xbf16>,
    %c12 = arith.constant 12 : index
    %c0_97 = arith.constant 0 : index
    %c0_98 = arith.constant 0 : index
    %132 = vector.load %arg1[%c12, %c0_97, %c0_98] : memref<16x32x128xbf16, #tpu.memory_space<vmem>>, vector<1x32x128xbf16>
    %133 = vector.shape_cast %132 : vector<1x32x128xbf16> to vector<32x128xbf16>
    %c0_99 = arith.constant 0 : index
    %c0_100 = arith.constant 0 : index
    %134 = vector.load %arg2[%c0_99, %c0_100] : memref<128x8xbf16, #tpu.memory_space<vmem>>, vector<128x8xbf16>
    %cst_101 = arith.constant dense<0.000000e+00> : vector<32x8xf32>
    %135 = tpu.matmul %133, %134, %cst_101 {dimension_numbers = #tpu.dot_dimension_numbers<[1], [0], [0], [1], [0, 0, 1, 1], [], []>} : vector<32x128xbf16>, vector<128x8xbf16>, vector<32x8xf32> -> vector<32x8xf32>
    %cst_102 = arith.constant 0.000000e+00 : f32
    %136 = vector.broadcast %cst_102 : f32 to vector<32x8xf32>
    %137 = arith.cmpf oge, %135, %136 : vector<32x8xf32>
    %cst_103 = arith.constant 2.000000e-01 : f32
    %138 = vector.broadcast %cst_103 : f32 to vector<32x8xf32>
    %139 = arith.mulf %138, %135 : vector<32x8xf32>
    %140 = arith.select %137, %135, %139 : vector<32x8xi1>, vector<32x8xf32>
    %141 = arith.truncf %140 : vector<32x8xf32> to vector<32x8xbf16>
    %c0_104 = arith.constant 0 : index
    %c96 = arith.constant 96 : index
    %142 = vector.load %arg3[%c0_104, %c96] : memref<32x128xbf16, #tpu.memory_space<vmem>>, vector<32x8xbf16>
    tpu.vector_store %arg3[%c0_104, %c96], %141 {strides = array<i32>} : memref<32x128xbf16, #tpu.memory_space<vmem>>, vector<32x8xbf16>,
    %c13 = arith.constant 13 : index
    %c0_105 = arith.constant 0 : index
    %c0_106 = arith.constant 0 : index
    %143 = vector.load %arg1[%c13, %c0_105, %c0_106] : memref<16x32x128xbf16, #tpu.memory_space<vmem>>, vector<1x32x128xbf16>
    %144 = vector.shape_cast %143 : vector<1x32x128xbf16> to vector<32x128xbf16>
    %c0_107 = arith.constant 0 : index
    %c0_108 = arith.constant 0 : index
    %145 = vector.load %arg2[%c0_107, %c0_108] : memref<128x8xbf16, #tpu.memory_space<vmem>>, vector<128x8xbf16>
    %cst_109 = arith.constant dense<0.000000e+00> : vector<32x8xf32>
    %146 = tpu.matmul %144, %145, %cst_109 {dimension_numbers = #tpu.dot_dimension_numbers<[1], [0], [0], [1], [0, 0, 1, 1], [], []>} : vector<32x128xbf16>, vector<128x8xbf16>, vector<32x8xf32> -> vector<32x8xf32>
    %cst_110 = arith.constant 0.000000e+00 : f32
    %147 = vector.broadcast %cst_110 : f32 to vector<32x8xf32>
    %148 = arith.cmpf oge, %146, %147 : vector<32x8xf32>
    %cst_111 = arith.constant 2.000000e-01 : f32
    %149 = vector.broadcast %cst_111 : f32 to vector<32x8xf32>
    %150 = arith.mulf %149, %146 : vector<32x8xf32>
    %151 = arith.select %148, %146, %150 : vector<32x8xi1>, vector<32x8xf32>
    %152 = arith.truncf %151 : vector<32x8xf32> to vector<32x8xbf16>
    %c0_112 = arith.constant 0 : index
    %c104 = arith.constant 104 : index
    %153 = vector.load %arg3[%c0_112, %c104] : memref<32x128xbf16, #tpu.memory_space<vmem>>, vector<32x8xbf16>
    tpu.vector_store %arg3[%c0_112, %c104], %152 {strides = array<i32>} : memref<32x128xbf16, #tpu.memory_space<vmem>>, vector<32x8xbf16>,
    %c14 = arith.constant 14 : index
    %c0_113 = arith.constant 0 : index
    %c0_114 = arith.constant 0 : index
    %154 = vector.load %arg1[%c14, %c0_113, %c0_114] : memref<16x32x128xbf16, #tpu.memory_space<vmem>>, vector<1x32x128xbf16>
    %155 = vector.shape_cast %154 : vector<1x32x128xbf16> to vector<32x128xbf16>
    %c0_115 = arith.constant 0 : index
    %c0_116 = arith.constant 0 : index
    %156 = vector.load %arg2[%c0_115, %c0_116] : memref<128x8xbf16, #tpu.memory_space<vmem>>, vector<128x8xbf16>
    %cst_117 = arith.constant dense<0.000000e+00> : vector<32x8xf32>
    %157 = tpu.matmul %155, %156, %cst_117 {dimension_numbers = #tpu.dot_dimension_numbers<[1], [0], [0], [1], [0, 0, 1, 1], [], []>} : vector<32x128xbf16>, vector<128x8xbf16>, vector<32x8xf32> -> vector<32x8xf32>
    %cst_118 = arith.constant 0.000000e+00 : f32
    %158 = vector.broadcast %cst_118 : f32 to vector<32x8xf32>
    %159 = arith.cmpf oge, %157, %158 : vector<32x8xf32>
    %cst_119 = arith.constant 2.000000e-01 : f32
    %160 = vector.broadcast %cst_119 : f32 to vector<32x8xf32>
    %161 = arith.mulf %160, %157 : vector<32x8xf32>
    %162 = arith.select %159, %157, %161 : vector<32x8xi1>, vector<32x8xf32>
    %163 = arith.truncf %162 : vector<32x8xf32> to vector<32x8xbf16>
    %c0_120 = arith.constant 0 : index
    %c112 = arith.constant 112 : index
    %164 = vector.load %arg3[%c0_120, %c112] : memref<32x128xbf16, #tpu.memory_space<vmem>>, vector<32x8xbf16>
    tpu.vector_store %arg3[%c0_120, %c112], %163 {strides = array<i32>} : memref<32x128xbf16, #tpu.memory_space<vmem>>, vector<32x8xbf16>,
    %c15 = arith.constant 15 : index
    %c0_121 = arith.constant 0 : index
    %c0_122 = arith.constant 0 : index
    %165 = vector.load %arg1[%c15, %c0_121, %c0_122] : memref<16x32x128xbf16, #tpu.memory_space<vmem>>, vector<1x32x128xbf16>
    %166 = vector.shape_cast %165 : vector<1x32x128xbf16> to vector<32x128xbf16>
    %c0_123 = arith.constant 0 : index
    %c0_124 = arith.constant 0 : index
    %167 = vector.load %arg2[%c0_123, %c0_124] : memref<128x8xbf16, #tpu.memory_space<vmem>>, vector<128x8xbf16>
    %cst_125 = arith.constant dense<0.000000e+00> : vector<32x8xf32>
    %168 = tpu.matmul %166, %167, %cst_125 {dimension_numbers = #tpu.dot_dimension_numbers<[1], [0], [0], [1], [0, 0, 1, 1], [], []>} : vector<32x128xbf16>, vector<128x8xbf16>, vector<32x8xf32> -> vector<32x8xf32>
    %cst_126 = arith.constant 0.000000e+00 : f32
    %169 = vector.broadcast %cst_126 : f32 to vector<32x8xf32>
    %170 = arith.cmpf oge, %168, %169 : vector<32x8xf32>
    %cst_127 = arith.constant 2.000000e-01 : f32
    %171 = vector.broadcast %cst_127 : f32 to vector<32x8xf32>
    %172 = arith.mulf %171, %168 : vector<32x8xf32>
    %173 = arith.select %170, %168, %172 : vector<32x8xi1>, vector<32x8xf32>
    %174 = arith.truncf %173 : vector<32x8xf32> to vector<32x8xbf16>
    %c0_128 = arith.constant 0 : index
    %c120 = arith.constant 120 : index
    %175 = vector.load %arg3[%c0_128, %c120] : memref<32x128xbf16, #tpu.memory_space<vmem>>, vector<32x8xbf16>
    tpu.vector_store %arg3[%c0_128, %c120], %174 {strides = array<i32>} : memref<32x128xbf16, #tpu.memory_space<vmem>>, vector<32x8xbf16>,
    return
  }
  func.func @transform_0(%arg0: i32) -> (i32, i32, i32) {
    %c0_i32 = arith.constant 0 : i32
    %c0_i32_0 = arith.constant 0 : i32
    %c0_i32_1 = arith.constant 0 : i32
    return %c0_i32, %arg0, %c0_i32_0 : i32, i32, i32
  }
  func.func @transform_1(%arg0: i32) -> (i32, i32) {
    %c0_i32 = arith.constant 0 : i32
    %c0_i32_0 = arith.constant 0 : i32
    %c0_i32_1 = arith.constant 0 : i32
    return %c0_i32, %c0_i32_0 : i32, i32
  }
  func.func @transform_2(%arg0: i32) -> (i32, i32) {
    %c0_i32 = arith.constant 0 : i32
    %c0_i32_0 = arith.constant 0 : i32
    return %arg0, %c0_i32 : i32, i32
  }
}

module attributes {stable_mosaic.version = 11 : i64} {
  func.func @_conv_bn_lrelu_kernel(%arg0: i32, %arg1: memref<8x16x256xbf16, #tpu.memory_space<vmem>>, %arg2: memref<256x16xbf16, #tpu.memory_space<vmem>>, %arg3: memref<1x16xf32, #tpu.memory_space<vmem>>, %arg4: memref<1x16xf32, #tpu.memory_space<vmem>>, %arg5: memref<16x128xf32, #tpu.memory_space<vmem>>, %arg6: memref<16x128xbf16, #tpu.memory_space<vmem>>, %arg7: memref<1x16xf32, #tpu.memory_space<vmem>>, %arg8: memref<1x16xf32, #tpu.memory_space<vmem>>) attributes {dimension_semantics = [#tpu.dimension_semantics<arbitrary>], iteration_bounds = array<i64: 1>, scalar_prefetch = 0 : i64, scratch_operands = 2 : i64, tpu.core_type = #tpu.core_type<tc>, window_params = [{transform_indices = @transform_0, window_bounds = array<i64: 8, 16, 256>}, {pipeline_mode = #tpu.pipeline_mode<synchronous>, transform_indices = @transform_1, window_bounds = array<i64: 256, 16>}, {pipeline_mode = #tpu.pipeline_mode<synchronous>, transform_indices = @transform_2, window_bounds = array<i64: 1, 16>}, {pipeline_mode = #tpu.pipeline_mode<synchronous>, transform_indices = @transform_3, window_bounds = array<i64: 1, 16>}, {pipeline_mode = #tpu.pipeline_mode<synchronous>, transform_indices = @transform_4, window_bounds = array<i64: 16, 128>}, {pipeline_mode = #tpu.pipeline_mode<synchronous>, transform_indices = @transform_5, window_bounds = array<i64: 16, 128>}]} {
    %c0_i32 = arith.constant 0 : i32
    %0 = arith.cmpi eq, %arg0, %c0_i32 : i32
    %1 = arith.extui %0 : i1 to i32
    %c0_i32_0 = arith.constant 0 : i32
    %2 = arith.cmpi ne, %1, %c0_i32_0 : i32
    scf.if %2 {
      %cst_123 = arith.constant 0.000000e+00 : f32
      %152 = vector.broadcast %cst_123 : f32 to vector<1x16xf32>
      %c0_124 = arith.constant 0 : index
      %c0_125 = arith.constant 0 : index
      %153 = vector.load %arg7[%c0_124, %c0_125] : memref<1x16xf32, #tpu.memory_space<vmem>>, vector<1x16xf32>
      tpu.vector_store %arg7[%c0_124, %c0_125], %152 {strides = array<i32>} : memref<1x16xf32, #tpu.memory_space<vmem>>, vector<1x16xf32>,
      %cst_126 = arith.constant 0.000000e+00 : f32
      %154 = vector.broadcast %cst_126 : f32 to vector<1x16xf32>
      %c0_127 = arith.constant 0 : index
      %c0_128 = arith.constant 0 : index
      %155 = vector.load %arg8[%c0_127, %c0_128] : memref<1x16xf32, #tpu.memory_space<vmem>>, vector<1x16xf32>
      tpu.vector_store %arg8[%c0_127, %c0_128], %154 {strides = array<i32>} : memref<1x16xf32, #tpu.memory_space<vmem>>, vector<1x16xf32>,
    } else {
    }
    %c16_i32 = arith.constant 16 : i32
    %3 = arith.muli %arg0, %c16_i32 : i32
    %4 = tpu.assume_multiple %3, 16 : i32
    %c0 = arith.constant 0 : index
    %c0_1 = arith.constant 0 : index
    %c0_2 = arith.constant 0 : index
    %5 = vector.load %arg1[%c0, %c0_1, %c0_2] : memref<8x16x256xbf16, #tpu.memory_space<vmem>>, vector<1x16x256xbf16>
    %6 = vector.shape_cast %5 : vector<1x16x256xbf16> to vector<16x256xbf16>
    %c0_3 = arith.constant 0 : index
    %c0_4 = arith.constant 0 : index
    %7 = vector.load %arg2[%c0_3, %c0_4] : memref<256x16xbf16, #tpu.memory_space<vmem>>, vector<256x16xbf16>
    %cst = arith.constant dense<0.000000e+00> : vector<16x16xf32>
    %8 = tpu.matmul %6, %7, %cst {dimension_numbers = #tpu.dot_dimension_numbers<[1], [0], [0], [1], [0, 0, 1, 1], [], []>} : vector<16x256xbf16>, vector<256x16xbf16>, vector<16x16xf32> -> vector<16x16xf32>
    %c0_5 = arith.constant 0 : index
    %c0_6 = arith.constant 0 : index
    %9 = vector.load %arg7[%c0_5, %c0_6] : memref<1x16xf32, #tpu.memory_space<vmem>>, vector<1x16xf32>
    %cst_7 = arith.constant dense<0.000000e+00> : vector<16xf32>
    %10 = vector.multi_reduction <add>, %8, %cst_7 [0] : vector<16x16xf32> to vector<16xf32>
    %11 = vector.shape_cast %10 : vector<16xf32> to vector<1x16xf32>
    %12 = arith.addf %9, %11 : vector<1x16xf32>
    %c0_8 = arith.constant 0 : index
    %c0_9 = arith.constant 0 : index
    %13 = vector.load %arg7[%c0_8, %c0_9] : memref<1x16xf32, #tpu.memory_space<vmem>>, vector<1x16xf32>
    tpu.vector_store %arg7[%c0_8, %c0_9], %12 {strides = array<i32>} : memref<1x16xf32, #tpu.memory_space<vmem>>, vector<1x16xf32>,
    %c0_10 = arith.constant 0 : index
    %c0_11 = arith.constant 0 : index
    %14 = vector.load %arg8[%c0_10, %c0_11] : memref<1x16xf32, #tpu.memory_space<vmem>>, vector<1x16xf32>
    %15 = arith.mulf %8, %8 : vector<16x16xf32>
    %cst_12 = arith.constant dense<0.000000e+00> : vector<16xf32>
    %16 = vector.multi_reduction <add>, %15, %cst_12 [0] : vector<16x16xf32> to vector<16xf32>
    %17 = vector.shape_cast %16 : vector<16xf32> to vector<1x16xf32>
    %18 = arith.addf %14, %17 : vector<1x16xf32>
    %c0_13 = arith.constant 0 : index
    %c0_14 = arith.constant 0 : index
    %19 = vector.load %arg8[%c0_13, %c0_14] : memref<1x16xf32, #tpu.memory_space<vmem>>, vector<1x16xf32>
    tpu.vector_store %arg8[%c0_13, %c0_14], %18 {strides = array<i32>} : memref<1x16xf32, #tpu.memory_space<vmem>>, vector<1x16xf32>,
    %20 = arith.truncf %8 : vector<16x16xf32> to vector<16x16xbf16>
    %21 = arith.index_cast %4 : i32 to index
    %c0_15 = arith.constant 0 : index
    %22 = vector.load %arg6[%21, %c0_15] : memref<16x128xbf16, #tpu.memory_space<vmem>>, vector<16x16xbf16>
    tpu.vector_store %arg6[%21, %c0_15], %20 {strides = array<i32>} : memref<16x128xbf16, #tpu.memory_space<vmem>>, vector<16x16xbf16>,
    %c1 = arith.constant 1 : index
    %c0_16 = arith.constant 0 : index
    %c0_17 = arith.constant 0 : index
    %23 = vector.load %arg1[%c1, %c0_16, %c0_17] : memref<8x16x256xbf16, #tpu.memory_space<vmem>>, vector<1x16x256xbf16>
    %24 = vector.shape_cast %23 : vector<1x16x256xbf16> to vector<16x256xbf16>
    %c0_18 = arith.constant 0 : index
    %c0_19 = arith.constant 0 : index
    %25 = vector.load %arg2[%c0_18, %c0_19] : memref<256x16xbf16, #tpu.memory_space<vmem>>, vector<256x16xbf16>
    %cst_20 = arith.constant dense<0.000000e+00> : vector<16x16xf32>
    %26 = tpu.matmul %24, %25, %cst_20 {dimension_numbers = #tpu.dot_dimension_numbers<[1], [0], [0], [1], [0, 0, 1, 1], [], []>} : vector<16x256xbf16>, vector<256x16xbf16>, vector<16x16xf32> -> vector<16x16xf32>
    %c0_21 = arith.constant 0 : index
    %c0_22 = arith.constant 0 : index
    %27 = vector.load %arg7[%c0_21, %c0_22] : memref<1x16xf32, #tpu.memory_space<vmem>>, vector<1x16xf32>
    %cst_23 = arith.constant dense<0.000000e+00> : vector<16xf32>
    %28 = vector.multi_reduction <add>, %26, %cst_23 [0] : vector<16x16xf32> to vector<16xf32>
    %29 = vector.shape_cast %28 : vector<16xf32> to vector<1x16xf32>
    %30 = arith.addf %27, %29 : vector<1x16xf32>
    %c0_24 = arith.constant 0 : index
    %c0_25 = arith.constant 0 : index
    %31 = vector.load %arg7[%c0_24, %c0_25] : memref<1x16xf32, #tpu.memory_space<vmem>>, vector<1x16xf32>
    tpu.vector_store %arg7[%c0_24, %c0_25], %30 {strides = array<i32>} : memref<1x16xf32, #tpu.memory_space<vmem>>, vector<1x16xf32>,
    %c0_26 = arith.constant 0 : index
    %c0_27 = arith.constant 0 : index
    %32 = vector.load %arg8[%c0_26, %c0_27] : memref<1x16xf32, #tpu.memory_space<vmem>>, vector<1x16xf32>
    %33 = arith.mulf %26, %26 : vector<16x16xf32>
    %cst_28 = arith.constant dense<0.000000e+00> : vector<16xf32>
    %34 = vector.multi_reduction <add>, %33, %cst_28 [0] : vector<16x16xf32> to vector<16xf32>
    %35 = vector.shape_cast %34 : vector<16xf32> to vector<1x16xf32>
    %36 = arith.addf %32, %35 : vector<1x16xf32>
    %c0_29 = arith.constant 0 : index
    %c0_30 = arith.constant 0 : index
    %37 = vector.load %arg8[%c0_29, %c0_30] : memref<1x16xf32, #tpu.memory_space<vmem>>, vector<1x16xf32>
    tpu.vector_store %arg8[%c0_29, %c0_30], %36 {strides = array<i32>} : memref<1x16xf32, #tpu.memory_space<vmem>>, vector<1x16xf32>,
    %38 = arith.truncf %26 : vector<16x16xf32> to vector<16x16xbf16>
    %39 = arith.index_cast %4 : i32 to index
    %c16 = arith.constant 16 : index
    %40 = vector.load %arg6[%39, %c16] : memref<16x128xbf16, #tpu.memory_space<vmem>>, vector<16x16xbf16>
    tpu.vector_store %arg6[%39, %c16], %38 {strides = array<i32>} : memref<16x128xbf16, #tpu.memory_space<vmem>>, vector<16x16xbf16>,
    %c2 = arith.constant 2 : index
    %c0_31 = arith.constant 0 : index
    %c0_32 = arith.constant 0 : index
    %41 = vector.load %arg1[%c2, %c0_31, %c0_32] : memref<8x16x256xbf16, #tpu.memory_space<vmem>>, vector<1x16x256xbf16>
    %42 = vector.shape_cast %41 : vector<1x16x256xbf16> to vector<16x256xbf16>
    %c0_33 = arith.constant 0 : index
    %c0_34 = arith.constant 0 : index
    %43 = vector.load %arg2[%c0_33, %c0_34] : memref<256x16xbf16, #tpu.memory_space<vmem>>, vector<256x16xbf16>
    %cst_35 = arith.constant dense<0.000000e+00> : vector<16x16xf32>
    %44 = tpu.matmul %42, %43, %cst_35 {dimension_numbers = #tpu.dot_dimension_numbers<[1], [0], [0], [1], [0, 0, 1, 1], [], []>} : vector<16x256xbf16>, vector<256x16xbf16>, vector<16x16xf32> -> vector<16x16xf32>
    %c0_36 = arith.constant 0 : index
    %c0_37 = arith.constant 0 : index
    %45 = vector.load %arg7[%c0_36, %c0_37] : memref<1x16xf32, #tpu.memory_space<vmem>>, vector<1x16xf32>
    %cst_38 = arith.constant dense<0.000000e+00> : vector<16xf32>
    %46 = vector.multi_reduction <add>, %44, %cst_38 [0] : vector<16x16xf32> to vector<16xf32>
    %47 = vector.shape_cast %46 : vector<16xf32> to vector<1x16xf32>
    %48 = arith.addf %45, %47 : vector<1x16xf32>
    %c0_39 = arith.constant 0 : index
    %c0_40 = arith.constant 0 : index
    %49 = vector.load %arg7[%c0_39, %c0_40] : memref<1x16xf32, #tpu.memory_space<vmem>>, vector<1x16xf32>
    tpu.vector_store %arg7[%c0_39, %c0_40], %48 {strides = array<i32>} : memref<1x16xf32, #tpu.memory_space<vmem>>, vector<1x16xf32>,
    %c0_41 = arith.constant 0 : index
    %c0_42 = arith.constant 0 : index
    %50 = vector.load %arg8[%c0_41, %c0_42] : memref<1x16xf32, #tpu.memory_space<vmem>>, vector<1x16xf32>
    %51 = arith.mulf %44, %44 : vector<16x16xf32>
    %cst_43 = arith.constant dense<0.000000e+00> : vector<16xf32>
    %52 = vector.multi_reduction <add>, %51, %cst_43 [0] : vector<16x16xf32> to vector<16xf32>
    %53 = vector.shape_cast %52 : vector<16xf32> to vector<1x16xf32>
    %54 = arith.addf %50, %53 : vector<1x16xf32>
    %c0_44 = arith.constant 0 : index
    %c0_45 = arith.constant 0 : index
    %55 = vector.load %arg8[%c0_44, %c0_45] : memref<1x16xf32, #tpu.memory_space<vmem>>, vector<1x16xf32>
    tpu.vector_store %arg8[%c0_44, %c0_45], %54 {strides = array<i32>} : memref<1x16xf32, #tpu.memory_space<vmem>>, vector<1x16xf32>,
    %56 = arith.truncf %44 : vector<16x16xf32> to vector<16x16xbf16>
    %57 = arith.index_cast %4 : i32 to index
    %c32 = arith.constant 32 : index
    %58 = vector.load %arg6[%57, %c32] : memref<16x128xbf16, #tpu.memory_space<vmem>>, vector<16x16xbf16>
    tpu.vector_store %arg6[%57, %c32], %56 {strides = array<i32>} : memref<16x128xbf16, #tpu.memory_space<vmem>>, vector<16x16xbf16>,
    %c3 = arith.constant 3 : index
    %c0_46 = arith.constant 0 : index
    %c0_47 = arith.constant 0 : index
    %59 = vector.load %arg1[%c3, %c0_46, %c0_47] : memref<8x16x256xbf16, #tpu.memory_space<vmem>>, vector<1x16x256xbf16>
    %60 = vector.shape_cast %59 : vector<1x16x256xbf16> to vector<16x256xbf16>
    %c0_48 = arith.constant 0 : index
    %c0_49 = arith.constant 0 : index
    %61 = vector.load %arg2[%c0_48, %c0_49] : memref<256x16xbf16, #tpu.memory_space<vmem>>, vector<256x16xbf16>
    %cst_50 = arith.constant dense<0.000000e+00> : vector<16x16xf32>
    %62 = tpu.matmul %60, %61, %cst_50 {dimension_numbers = #tpu.dot_dimension_numbers<[1], [0], [0], [1], [0, 0, 1, 1], [], []>} : vector<16x256xbf16>, vector<256x16xbf16>, vector<16x16xf32> -> vector<16x16xf32>
    %c0_51 = arith.constant 0 : index
    %c0_52 = arith.constant 0 : index
    %63 = vector.load %arg7[%c0_51, %c0_52] : memref<1x16xf32, #tpu.memory_space<vmem>>, vector<1x16xf32>
    %cst_53 = arith.constant dense<0.000000e+00> : vector<16xf32>
    %64 = vector.multi_reduction <add>, %62, %cst_53 [0] : vector<16x16xf32> to vector<16xf32>
    %65 = vector.shape_cast %64 : vector<16xf32> to vector<1x16xf32>
    %66 = arith.addf %63, %65 : vector<1x16xf32>
    %c0_54 = arith.constant 0 : index
    %c0_55 = arith.constant 0 : index
    %67 = vector.load %arg7[%c0_54, %c0_55] : memref<1x16xf32, #tpu.memory_space<vmem>>, vector<1x16xf32>
    tpu.vector_store %arg7[%c0_54, %c0_55], %66 {strides = array<i32>} : memref<1x16xf32, #tpu.memory_space<vmem>>, vector<1x16xf32>,
    %c0_56 = arith.constant 0 : index
    %c0_57 = arith.constant 0 : index
    %68 = vector.load %arg8[%c0_56, %c0_57] : memref<1x16xf32, #tpu.memory_space<vmem>>, vector<1x16xf32>
    %69 = arith.mulf %62, %62 : vector<16x16xf32>
    %cst_58 = arith.constant dense<0.000000e+00> : vector<16xf32>
    %70 = vector.multi_reduction <add>, %69, %cst_58 [0] : vector<16x16xf32> to vector<16xf32>
    %71 = vector.shape_cast %70 : vector<16xf32> to vector<1x16xf32>
    %72 = arith.addf %68, %71 : vector<1x16xf32>
    %c0_59 = arith.constant 0 : index
    %c0_60 = arith.constant 0 : index
    %73 = vector.load %arg8[%c0_59, %c0_60] : memref<1x16xf32, #tpu.memory_space<vmem>>, vector<1x16xf32>
    tpu.vector_store %arg8[%c0_59, %c0_60], %72 {strides = array<i32>} : memref<1x16xf32, #tpu.memory_space<vmem>>, vector<1x16xf32>,
    %74 = arith.truncf %62 : vector<16x16xf32> to vector<16x16xbf16>
    %75 = arith.index_cast %4 : i32 to index
    %c48 = arith.constant 48 : index
    %76 = vector.load %arg6[%75, %c48] : memref<16x128xbf16, #tpu.memory_space<vmem>>, vector<16x16xbf16>
    tpu.vector_store %arg6[%75, %c48], %74 {strides = array<i32>} : memref<16x128xbf16, #tpu.memory_space<vmem>>, vector<16x16xbf16>,
    %c4 = arith.constant 4 : index
    %c0_61 = arith.constant 0 : index
    %c0_62 = arith.constant 0 : index
    %77 = vector.load %arg1[%c4, %c0_61, %c0_62] : memref<8x16x256xbf16, #tpu.memory_space<vmem>>, vector<1x16x256xbf16>
    %78 = vector.shape_cast %77 : vector<1x16x256xbf16> to vector<16x256xbf16>
    %c0_63 = arith.constant 0 : index
    %c0_64 = arith.constant 0 : index
    %79 = vector.load %arg2[%c0_63, %c0_64] : memref<256x16xbf16, #tpu.memory_space<vmem>>, vector<256x16xbf16>
    %cst_65 = arith.constant dense<0.000000e+00> : vector<16x16xf32>
    %80 = tpu.matmul %78, %79, %cst_65 {dimension_numbers = #tpu.dot_dimension_numbers<[1], [0], [0], [1], [0, 0, 1, 1], [], []>} : vector<16x256xbf16>, vector<256x16xbf16>, vector<16x16xf32> -> vector<16x16xf32>
    %c0_66 = arith.constant 0 : index
    %c0_67 = arith.constant 0 : index
    %81 = vector.load %arg7[%c0_66, %c0_67] : memref<1x16xf32, #tpu.memory_space<vmem>>, vector<1x16xf32>
    %cst_68 = arith.constant dense<0.000000e+00> : vector<16xf32>
    %82 = vector.multi_reduction <add>, %80, %cst_68 [0] : vector<16x16xf32> to vector<16xf32>
    %83 = vector.shape_cast %82 : vector<16xf32> to vector<1x16xf32>
    %84 = arith.addf %81, %83 : vector<1x16xf32>
    %c0_69 = arith.constant 0 : index
    %c0_70 = arith.constant 0 : index
    %85 = vector.load %arg7[%c0_69, %c0_70] : memref<1x16xf32, #tpu.memory_space<vmem>>, vector<1x16xf32>
    tpu.vector_store %arg7[%c0_69, %c0_70], %84 {strides = array<i32>} : memref<1x16xf32, #tpu.memory_space<vmem>>, vector<1x16xf32>,
    %c0_71 = arith.constant 0 : index
    %c0_72 = arith.constant 0 : index
    %86 = vector.load %arg8[%c0_71, %c0_72] : memref<1x16xf32, #tpu.memory_space<vmem>>, vector<1x16xf32>
    %87 = arith.mulf %80, %80 : vector<16x16xf32>
    %cst_73 = arith.constant dense<0.000000e+00> : vector<16xf32>
    %88 = vector.multi_reduction <add>, %87, %cst_73 [0] : vector<16x16xf32> to vector<16xf32>
    %89 = vector.shape_cast %88 : vector<16xf32> to vector<1x16xf32>
    %90 = arith.addf %86, %89 : vector<1x16xf32>
    %c0_74 = arith.constant 0 : index
    %c0_75 = arith.constant 0 : index
    %91 = vector.load %arg8[%c0_74, %c0_75] : memref<1x16xf32, #tpu.memory_space<vmem>>, vector<1x16xf32>
    tpu.vector_store %arg8[%c0_74, %c0_75], %90 {strides = array<i32>} : memref<1x16xf32, #tpu.memory_space<vmem>>, vector<1x16xf32>,
    %92 = arith.truncf %80 : vector<16x16xf32> to vector<16x16xbf16>
    %93 = arith.index_cast %4 : i32 to index
    %c64 = arith.constant 64 : index
    %94 = vector.load %arg6[%93, %c64] : memref<16x128xbf16, #tpu.memory_space<vmem>>, vector<16x16xbf16>
    tpu.vector_store %arg6[%93, %c64], %92 {strides = array<i32>} : memref<16x128xbf16, #tpu.memory_space<vmem>>, vector<16x16xbf16>,
    %c5 = arith.constant 5 : index
    %c0_76 = arith.constant 0 : index
    %c0_77 = arith.constant 0 : index
    %95 = vector.load %arg1[%c5, %c0_76, %c0_77] : memref<8x16x256xbf16, #tpu.memory_space<vmem>>, vector<1x16x256xbf16>
    %96 = vector.shape_cast %95 : vector<1x16x256xbf16> to vector<16x256xbf16>
    %c0_78 = arith.constant 0 : index
    %c0_79 = arith.constant 0 : index
    %97 = vector.load %arg2[%c0_78, %c0_79] : memref<256x16xbf16, #tpu.memory_space<vmem>>, vector<256x16xbf16>
    %cst_80 = arith.constant dense<0.000000e+00> : vector<16x16xf32>
    %98 = tpu.matmul %96, %97, %cst_80 {dimension_numbers = #tpu.dot_dimension_numbers<[1], [0], [0], [1], [0, 0, 1, 1], [], []>} : vector<16x256xbf16>, vector<256x16xbf16>, vector<16x16xf32> -> vector<16x16xf32>
    %c0_81 = arith.constant 0 : index
    %c0_82 = arith.constant 0 : index
    %99 = vector.load %arg7[%c0_81, %c0_82] : memref<1x16xf32, #tpu.memory_space<vmem>>, vector<1x16xf32>
    %cst_83 = arith.constant dense<0.000000e+00> : vector<16xf32>
    %100 = vector.multi_reduction <add>, %98, %cst_83 [0] : vector<16x16xf32> to vector<16xf32>
    %101 = vector.shape_cast %100 : vector<16xf32> to vector<1x16xf32>
    %102 = arith.addf %99, %101 : vector<1x16xf32>
    %c0_84 = arith.constant 0 : index
    %c0_85 = arith.constant 0 : index
    %103 = vector.load %arg7[%c0_84, %c0_85] : memref<1x16xf32, #tpu.memory_space<vmem>>, vector<1x16xf32>
    tpu.vector_store %arg7[%c0_84, %c0_85], %102 {strides = array<i32>} : memref<1x16xf32, #tpu.memory_space<vmem>>, vector<1x16xf32>,
    %c0_86 = arith.constant 0 : index
    %c0_87 = arith.constant 0 : index
    %104 = vector.load %arg8[%c0_86, %c0_87] : memref<1x16xf32, #tpu.memory_space<vmem>>, vector<1x16xf32>
    %105 = arith.mulf %98, %98 : vector<16x16xf32>
    %cst_88 = arith.constant dense<0.000000e+00> : vector<16xf32>
    %106 = vector.multi_reduction <add>, %105, %cst_88 [0] : vector<16x16xf32> to vector<16xf32>
    %107 = vector.shape_cast %106 : vector<16xf32> to vector<1x16xf32>
    %108 = arith.addf %104, %107 : vector<1x16xf32>
    %c0_89 = arith.constant 0 : index
    %c0_90 = arith.constant 0 : index
    %109 = vector.load %arg8[%c0_89, %c0_90] : memref<1x16xf32, #tpu.memory_space<vmem>>, vector<1x16xf32>
    tpu.vector_store %arg8[%c0_89, %c0_90], %108 {strides = array<i32>} : memref<1x16xf32, #tpu.memory_space<vmem>>, vector<1x16xf32>,
    %110 = arith.truncf %98 : vector<16x16xf32> to vector<16x16xbf16>
    %111 = arith.index_cast %4 : i32 to index
    %c80 = arith.constant 80 : index
    %112 = vector.load %arg6[%111, %c80] : memref<16x128xbf16, #tpu.memory_space<vmem>>, vector<16x16xbf16>
    tpu.vector_store %arg6[%111, %c80], %110 {strides = array<i32>} : memref<16x128xbf16, #tpu.memory_space<vmem>>, vector<16x16xbf16>,
    %c6 = arith.constant 6 : index
    %c0_91 = arith.constant 0 : index
    %c0_92 = arith.constant 0 : index
    %113 = vector.load %arg1[%c6, %c0_91, %c0_92] : memref<8x16x256xbf16, #tpu.memory_space<vmem>>, vector<1x16x256xbf16>
    %114 = vector.shape_cast %113 : vector<1x16x256xbf16> to vector<16x256xbf16>
    %c0_93 = arith.constant 0 : index
    %c0_94 = arith.constant 0 : index
    %115 = vector.load %arg2[%c0_93, %c0_94] : memref<256x16xbf16, #tpu.memory_space<vmem>>, vector<256x16xbf16>
    %cst_95 = arith.constant dense<0.000000e+00> : vector<16x16xf32>
    %116 = tpu.matmul %114, %115, %cst_95 {dimension_numbers = #tpu.dot_dimension_numbers<[1], [0], [0], [1], [0, 0, 1, 1], [], []>} : vector<16x256xbf16>, vector<256x16xbf16>, vector<16x16xf32> -> vector<16x16xf32>
    %c0_96 = arith.constant 0 : index
    %c0_97 = arith.constant 0 : index
    %117 = vector.load %arg7[%c0_96, %c0_97] : memref<1x16xf32, #tpu.memory_space<vmem>>, vector<1x16xf32>
    %cst_98 = arith.constant dense<0.000000e+00> : vector<16xf32>
    %118 = vector.multi_reduction <add>, %116, %cst_98 [0] : vector<16x16xf32> to vector<16xf32>
    %119 = vector.shape_cast %118 : vector<16xf32> to vector<1x16xf32>
    %120 = arith.addf %117, %119 : vector<1x16xf32>
    %c0_99 = arith.constant 0 : index
    %c0_100 = arith.constant 0 : index
    %121 = vector.load %arg7[%c0_99, %c0_100] : memref<1x16xf32, #tpu.memory_space<vmem>>, vector<1x16xf32>
    tpu.vector_store %arg7[%c0_99, %c0_100], %120 {strides = array<i32>} : memref<1x16xf32, #tpu.memory_space<vmem>>, vector<1x16xf32>,
    %c0_101 = arith.constant 0 : index
    %c0_102 = arith.constant 0 : index
    %122 = vector.load %arg8[%c0_101, %c0_102] : memref<1x16xf32, #tpu.memory_space<vmem>>, vector<1x16xf32>
    %123 = arith.mulf %116, %116 : vector<16x16xf32>
    %cst_103 = arith.constant dense<0.000000e+00> : vector<16xf32>
    %124 = vector.multi_reduction <add>, %123, %cst_103 [0] : vector<16x16xf32> to vector<16xf32>
    %125 = vector.shape_cast %124 : vector<16xf32> to vector<1x16xf32>
    %126 = arith.addf %122, %125 : vector<1x16xf32>
    %c0_104 = arith.constant 0 : index
    %c0_105 = arith.constant 0 : index
    %127 = vector.load %arg8[%c0_104, %c0_105] : memref<1x16xf32, #tpu.memory_space<vmem>>, vector<1x16xf32>
    tpu.vector_store %arg8[%c0_104, %c0_105], %126 {strides = array<i32>} : memref<1x16xf32, #tpu.memory_space<vmem>>, vector<1x16xf32>,
    %128 = arith.truncf %116 : vector<16x16xf32> to vector<16x16xbf16>
    %129 = arith.index_cast %4 : i32 to index
    %c96 = arith.constant 96 : index
    %130 = vector.load %arg6[%129, %c96] : memref<16x128xbf16, #tpu.memory_space<vmem>>, vector<16x16xbf16>
    tpu.vector_store %arg6[%129, %c96], %128 {strides = array<i32>} : memref<16x128xbf16, #tpu.memory_space<vmem>>, vector<16x16xbf16>,
    %c7 = arith.constant 7 : index
    %c0_106 = arith.constant 0 : index
    %c0_107 = arith.constant 0 : index
    %131 = vector.load %arg1[%c7, %c0_106, %c0_107] : memref<8x16x256xbf16, #tpu.memory_space<vmem>>, vector<1x16x256xbf16>
    %132 = vector.shape_cast %131 : vector<1x16x256xbf16> to vector<16x256xbf16>
    %c0_108 = arith.constant 0 : index
    %c0_109 = arith.constant 0 : index
    %133 = vector.load %arg2[%c0_108, %c0_109] : memref<256x16xbf16, #tpu.memory_space<vmem>>, vector<256x16xbf16>
    %cst_110 = arith.constant dense<0.000000e+00> : vector<16x16xf32>
    %134 = tpu.matmul %132, %133, %cst_110 {dimension_numbers = #tpu.dot_dimension_numbers<[1], [0], [0], [1], [0, 0, 1, 1], [], []>} : vector<16x256xbf16>, vector<256x16xbf16>, vector<16x16xf32> -> vector<16x16xf32>
    %c0_111 = arith.constant 0 : index
    %c0_112 = arith.constant 0 : index
    %135 = vector.load %arg7[%c0_111, %c0_112] : memref<1x16xf32, #tpu.memory_space<vmem>>, vector<1x16xf32>
    %cst_113 = arith.constant dense<0.000000e+00> : vector<16xf32>
    %136 = vector.multi_reduction <add>, %134, %cst_113 [0] : vector<16x16xf32> to vector<16xf32>
    %137 = vector.shape_cast %136 : vector<16xf32> to vector<1x16xf32>
    %138 = arith.addf %135, %137 : vector<1x16xf32>
    %c0_114 = arith.constant 0 : index
    %c0_115 = arith.constant 0 : index
    %139 = vector.load %arg7[%c0_114, %c0_115] : memref<1x16xf32, #tpu.memory_space<vmem>>, vector<1x16xf32>
    tpu.vector_store %arg7[%c0_114, %c0_115], %138 {strides = array<i32>} : memref<1x16xf32, #tpu.memory_space<vmem>>, vector<1x16xf32>,
    %c0_116 = arith.constant 0 : index
    %c0_117 = arith.constant 0 : index
    %140 = vector.load %arg8[%c0_116, %c0_117] : memref<1x16xf32, #tpu.memory_space<vmem>>, vector<1x16xf32>
    %141 = arith.mulf %134, %134 : vector<16x16xf32>
    %cst_118 = arith.constant dense<0.000000e+00> : vector<16xf32>
    %142 = vector.multi_reduction <add>, %141, %cst_118 [0] : vector<16x16xf32> to vector<16xf32>
    %143 = vector.shape_cast %142 : vector<16xf32> to vector<1x16xf32>
    %144 = arith.addf %140, %143 : vector<1x16xf32>
    %c0_119 = arith.constant 0 : index
    %c0_120 = arith.constant 0 : index
    %145 = vector.load %arg8[%c0_119, %c0_120] : memref<1x16xf32, #tpu.memory_space<vmem>>, vector<1x16xf32>
    tpu.vector_store %arg8[%c0_119, %c0_120], %144 {strides = array<i32>} : memref<1x16xf32, #tpu.memory_space<vmem>>, vector<1x16xf32>,
    %146 = arith.truncf %134 : vector<16x16xf32> to vector<16x16xbf16>
    %147 = arith.index_cast %4 : i32 to index
    %c112 = arith.constant 112 : index
    %148 = vector.load %arg6[%147, %c112] : memref<16x128xbf16, #tpu.memory_space<vmem>>, vector<16x16xbf16>
    tpu.vector_store %arg6[%147, %c112], %146 {strides = array<i32>} : memref<16x128xbf16, #tpu.memory_space<vmem>>, vector<16x16xbf16>,
    %c0_i32_121 = arith.constant 0 : i32
    %149 = arith.cmpi eq, %arg0, %c0_i32_121 : i32
    %150 = arith.extui %149 : i1 to i32
    %c0_i32_122 = arith.constant 0 : i32
    %151 = arith.cmpi ne, %150, %c0_i32_122 : i32
    scf.if %151 {
      %c0_123 = arith.constant 0 : index
      %c0_124 = arith.constant 0 : index
      %152 = vector.load %arg7[%c0_123, %c0_124] : memref<1x16xf32, #tpu.memory_space<vmem>>, vector<1x16xf32>
      %cst_125 = arith.constant 7.812500e-03 : f32
      %153 = vector.broadcast %cst_125 : f32 to vector<1x16xf32>
      %154 = arith.mulf %152, %153 : vector<1x16xf32>
      %c0_126 = arith.constant 0 : index
      %c0_127 = arith.constant 0 : index
      %155 = vector.load %arg8[%c0_126, %c0_127] : memref<1x16xf32, #tpu.memory_space<vmem>>, vector<1x16xf32>
      %cst_128 = arith.constant 7.812500e-03 : f32
      %156 = vector.broadcast %cst_128 : f32 to vector<1x16xf32>
      %157 = arith.mulf %155, %156 : vector<1x16xf32>
      %158 = arith.mulf %154, %154 : vector<1x16xf32>
      %159 = arith.subf %157, %158 : vector<1x16xf32>
      %cst_129 = arith.constant 0.000000e+00 : f32
      %160 = vector.broadcast %cst_129 : f32 to vector<1x16xf32>
      %161 = arith.maximumf %159, %160 : vector<1x16xf32>
      %cst_130 = arith.constant 9.99999974E-6 : f32
      %162 = vector.broadcast %cst_130 : f32 to vector<1x16xf32>
      %163 = arith.addf %161, %162 : vector<1x16xf32>
      %164 = math.rsqrt %163 : vector<1x16xf32>
      %c0_131 = arith.constant 0 : index
      %c0_132 = arith.constant 0 : index
      %165 = vector.load %arg3[%c0_131, %c0_132] : memref<1x16xf32, #tpu.memory_space<vmem>>, vector<1x16xf32>
      %166 = arith.mulf %165, %164 : vector<1x16xf32>
      %c0_133 = arith.constant 0 : index
      %c0_134 = arith.constant 0 : index
      %167 = vector.load %arg4[%c0_133, %c0_134] : memref<1x16xf32, #tpu.memory_space<vmem>>, vector<1x16xf32>
      %168 = arith.mulf %154, %166 : vector<1x16xf32>
      %169 = arith.subf %167, %168 : vector<1x16xf32>
      %c0_135 = arith.constant 0 : index
      %c0_136 = arith.constant 0 : index
      %170 = vector.load %arg5[%c0_135, %c0_136] : memref<16x128xf32, #tpu.memory_space<vmem>>, vector<16x128xf32>
      %cst_137 = arith.constant dense<0.000000e+00> : vector<1x128xf32>
      %171 = tpu.matmul %166, %170, %cst_137 {dimension_numbers = #tpu.dot_dimension_numbers<[1], [0], [0], [1], [0, 0, 1, 1], [], []>} : vector<1x16xf32>, vector<16x128xf32>, vector<1x128xf32> -> vector<1x128xf32>
      %c0_138 = arith.constant 0 : index
      %c0_139 = arith.constant 0 : index
      %172 = vector.load %arg5[%c0_138, %c0_139] : memref<16x128xf32, #tpu.memory_space<vmem>>, vector<16x128xf32>
      %cst_140 = arith.constant dense<0.000000e+00> : vector<1x128xf32>
      %173 = tpu.matmul %169, %172, %cst_140 {dimension_numbers = #tpu.dot_dimension_numbers<[1], [0], [0], [1], [0, 0, 1, 1], [], []>} : vector<1x16xf32>, vector<16x128xf32>, vector<1x128xf32> -> vector<1x128xf32>
      %c0_141 = arith.constant 0 : index
      %c0_142 = arith.constant 0 : index
      %174 = vector.load %arg6[%c0_141, %c0_142] : memref<16x128xbf16, #tpu.memory_space<vmem>>, vector<16x128xbf16>
      %175 = arith.extf %174 : vector<16x128xbf16> to vector<16x128xf32>
      %176 = vector.broadcast %171 : vector<1x128xf32> to vector<16x128xf32>
      %177 = arith.mulf %175, %176 : vector<16x128xf32>
      %178 = vector.broadcast %173 : vector<1x128xf32> to vector<16x128xf32>
      %179 = arith.addf %177, %178 : vector<16x128xf32>
      %cst_143 = arith.constant 0.000000e+00 : f32
      %180 = vector.broadcast %cst_143 : f32 to vector<16x128xf32>
      %181 = arith.cmpf oge, %179, %180 : vector<16x128xf32>
      %cst_144 = arith.constant 2.000000e-01 : f32
      %182 = vector.broadcast %cst_144 : f32 to vector<16x128xf32>
      %183 = arith.mulf %182, %179 : vector<16x128xf32>
      %184 = arith.select %181, %179, %183 : vector<16x128xi1>, vector<16x128xf32>
      %185 = arith.truncf %184 : vector<16x128xf32> to vector<16x128xbf16>
      %c0_145 = arith.constant 0 : index
      %c0_146 = arith.constant 0 : index
      %186 = vector.load %arg6[%c0_145, %c0_146] : memref<16x128xbf16, #tpu.memory_space<vmem>>, vector<16x128xbf16>
      tpu.vector_store %arg6[%c0_145, %c0_146], %185 {strides = array<i32>} : memref<16x128xbf16, #tpu.memory_space<vmem>>, vector<16x128xbf16>,
    } else {
    }
    return
  }
  func.func @transform_0(%arg0: i32) -> (i32, i32, i32) {
    %c0_i32 = arith.constant 0 : i32
    %c0_i32_0 = arith.constant 0 : i32
    %c0_i32_1 = arith.constant 0 : i32
    return %c0_i32, %arg0, %c0_i32_0 : i32, i32, i32
  }
  func.func @transform_1(%arg0: i32) -> (i32, i32) {
    %c0_i32 = arith.constant 0 : i32
    %c0_i32_0 = arith.constant 0 : i32
    %c0_i32_1 = arith.constant 0 : i32
    return %c0_i32, %c0_i32_0 : i32, i32
  }
  func.func @transform_2(%arg0: i32) -> (i32, i32) {
    %c0_i32 = arith.constant 0 : i32
    %c0_i32_0 = arith.constant 0 : i32
    %c0_i32_1 = arith.constant 0 : i32
    return %c0_i32, %c0_i32_0 : i32, i32
  }
  func.func @transform_3(%arg0: i32) -> (i32, i32) {
    %c0_i32 = arith.constant 0 : i32
    %c0_i32_0 = arith.constant 0 : i32
    %c0_i32_1 = arith.constant 0 : i32
    return %c0_i32, %c0_i32_0 : i32, i32
  }
  func.func @transform_4(%arg0: i32) -> (i32, i32) {
    %c0_i32 = arith.constant 0 : i32
    %c0_i32_0 = arith.constant 0 : i32
    %c0_i32_1 = arith.constant 0 : i32
    return %c0_i32, %c0_i32_0 : i32, i32
  }
  func.func @transform_5(%arg0: i32) -> (i32, i32) {
    %c0_i32 = arith.constant 0 : i32
    %c0_i32_0 = arith.constant 0 : i32
    %c0_i32_1 = arith.constant 0 : i32
    return %c0_i32, %c0_i32_0 : i32, i32
  }
}

module attributes {stable_mosaic.version = 11 : i64} {
  func.func @_conv_bn_lrelu_kernel(%arg0: i32, %arg1: memref<4x16x512xbf16, #tpu.memory_space<vmem>>, %arg2: memref<512x32xbf16, #tpu.memory_space<vmem>>, %arg3: memref<1x32xf32, #tpu.memory_space<vmem>>, %arg4: memref<1x32xf32, #tpu.memory_space<vmem>>, %arg5: memref<32x128xf32, #tpu.memory_space<vmem>>, %arg6: memref<16x128xbf16, #tpu.memory_space<vmem>>, %arg7: memref<1x32xf32, #tpu.memory_space<vmem>>, %arg8: memref<1x32xf32, #tpu.memory_space<vmem>>) attributes {dimension_semantics = [#tpu.dimension_semantics<arbitrary>], iteration_bounds = array<i64: 1>, scalar_prefetch = 0 : i64, scratch_operands = 2 : i64, tpu.core_type = #tpu.core_type<tc>, window_params = [{transform_indices = @transform_0, window_bounds = array<i64: 4, 16, 512>}, {pipeline_mode = #tpu.pipeline_mode<synchronous>, transform_indices = @transform_1, window_bounds = array<i64: 512, 32>}, {pipeline_mode = #tpu.pipeline_mode<synchronous>, transform_indices = @transform_2, window_bounds = array<i64: 1, 32>}, {pipeline_mode = #tpu.pipeline_mode<synchronous>, transform_indices = @transform_3, window_bounds = array<i64: 1, 32>}, {pipeline_mode = #tpu.pipeline_mode<synchronous>, transform_indices = @transform_4, window_bounds = array<i64: 32, 128>}, {pipeline_mode = #tpu.pipeline_mode<synchronous>, transform_indices = @transform_5, window_bounds = array<i64: 16, 128>}]} {
    %c0_i32 = arith.constant 0 : i32
    %0 = arith.cmpi eq, %arg0, %c0_i32 : i32
    %1 = arith.extui %0 : i1 to i32
    %c0_i32_0 = arith.constant 0 : i32
    %2 = arith.cmpi ne, %1, %c0_i32_0 : i32
    scf.if %2 {
      %cst_63 = arith.constant 0.000000e+00 : f32
      %80 = vector.broadcast %cst_63 : f32 to vector<1x32xf32>
      %c0_64 = arith.constant 0 : index
      %c0_65 = arith.constant 0 : index
      %81 = vector.load %arg7[%c0_64, %c0_65] : memref<1x32xf32, #tpu.memory_space<vmem>>, vector<1x32xf32>
      tpu.vector_store %arg7[%c0_64, %c0_65], %80 {strides = array<i32>} : memref<1x32xf32, #tpu.memory_space<vmem>>, vector<1x32xf32>,
      %cst_66 = arith.constant 0.000000e+00 : f32
      %82 = vector.broadcast %cst_66 : f32 to vector<1x32xf32>
      %c0_67 = arith.constant 0 : index
      %c0_68 = arith.constant 0 : index
      %83 = vector.load %arg8[%c0_67, %c0_68] : memref<1x32xf32, #tpu.memory_space<vmem>>, vector<1x32xf32>
      tpu.vector_store %arg8[%c0_67, %c0_68], %82 {strides = array<i32>} : memref<1x32xf32, #tpu.memory_space<vmem>>, vector<1x32xf32>,
    } else {
    }
    %c16_i32 = arith.constant 16 : i32
    %3 = arith.muli %arg0, %c16_i32 : i32
    %4 = tpu.assume_multiple %3, 16 : i32
    %c0 = arith.constant 0 : index
    %c0_1 = arith.constant 0 : index
    %c0_2 = arith.constant 0 : index
    %5 = vector.load %arg1[%c0, %c0_1, %c0_2] : memref<4x16x512xbf16, #tpu.memory_space<vmem>>, vector<1x16x512xbf16>
    %6 = vector.shape_cast %5 : vector<1x16x512xbf16> to vector<16x512xbf16>
    %c0_3 = arith.constant 0 : index
    %c0_4 = arith.constant 0 : index
    %7 = vector.load %arg2[%c0_3, %c0_4] : memref<512x32xbf16, #tpu.memory_space<vmem>>, vector<512x32xbf16>
    %cst = arith.constant dense<0.000000e+00> : vector<16x32xf32>
    %8 = tpu.matmul %6, %7, %cst {dimension_numbers = #tpu.dot_dimension_numbers<[1], [0], [0], [1], [0, 0, 1, 1], [], []>} : vector<16x512xbf16>, vector<512x32xbf16>, vector<16x32xf32> -> vector<16x32xf32>
    %c0_5 = arith.constant 0 : index
    %c0_6 = arith.constant 0 : index
    %9 = vector.load %arg7[%c0_5, %c0_6] : memref<1x32xf32, #tpu.memory_space<vmem>>, vector<1x32xf32>
    %cst_7 = arith.constant dense<0.000000e+00> : vector<32xf32>
    %10 = vector.multi_reduction <add>, %8, %cst_7 [0] : vector<16x32xf32> to vector<32xf32>
    %11 = vector.shape_cast %10 : vector<32xf32> to vector<1x32xf32>
    %12 = arith.addf %9, %11 : vector<1x32xf32>
    %c0_8 = arith.constant 0 : index
    %c0_9 = arith.constant 0 : index
    %13 = vector.load %arg7[%c0_8, %c0_9] : memref<1x32xf32, #tpu.memory_space<vmem>>, vector<1x32xf32>
    tpu.vector_store %arg7[%c0_8, %c0_9], %12 {strides = array<i32>} : memref<1x32xf32, #tpu.memory_space<vmem>>, vector<1x32xf32>,
    %c0_10 = arith.constant 0 : index
    %c0_11 = arith.constant 0 : index
    %14 = vector.load %arg8[%c0_10, %c0_11] : memref<1x32xf32, #tpu.memory_space<vmem>>, vector<1x32xf32>
    %15 = arith.mulf %8, %8 : vector<16x32xf32>
    %cst_12 = arith.constant dense<0.000000e+00> : vector<32xf32>
    %16 = vector.multi_reduction <add>, %15, %cst_12 [0] : vector<16x32xf32> to vector<32xf32>
    %17 = vector.shape_cast %16 : vector<32xf32> to vector<1x32xf32>
    %18 = arith.addf %14, %17 : vector<1x32xf32>
    %c0_13 = arith.constant 0 : index
    %c0_14 = arith.constant 0 : index
    %19 = vector.load %arg8[%c0_13, %c0_14] : memref<1x32xf32, #tpu.memory_space<vmem>>, vector<1x32xf32>
    tpu.vector_store %arg8[%c0_13, %c0_14], %18 {strides = array<i32>} : memref<1x32xf32, #tpu.memory_space<vmem>>, vector<1x32xf32>,
    %20 = arith.truncf %8 : vector<16x32xf32> to vector<16x32xbf16>
    %21 = arith.index_cast %4 : i32 to index
    %c0_15 = arith.constant 0 : index
    %22 = vector.load %arg6[%21, %c0_15] : memref<16x128xbf16, #tpu.memory_space<vmem>>, vector<16x32xbf16>
    tpu.vector_store %arg6[%21, %c0_15], %20 {strides = array<i32>} : memref<16x128xbf16, #tpu.memory_space<vmem>>, vector<16x32xbf16>,
    %c1 = arith.constant 1 : index
    %c0_16 = arith.constant 0 : index
    %c0_17 = arith.constant 0 : index
    %23 = vector.load %arg1[%c1, %c0_16, %c0_17] : memref<4x16x512xbf16, #tpu.memory_space<vmem>>, vector<1x16x512xbf16>
    %24 = vector.shape_cast %23 : vector<1x16x512xbf16> to vector<16x512xbf16>
    %c0_18 = arith.constant 0 : index
    %c0_19 = arith.constant 0 : index
    %25 = vector.load %arg2[%c0_18, %c0_19] : memref<512x32xbf16, #tpu.memory_space<vmem>>, vector<512x32xbf16>
    %cst_20 = arith.constant dense<0.000000e+00> : vector<16x32xf32>
    %26 = tpu.matmul %24, %25, %cst_20 {dimension_numbers = #tpu.dot_dimension_numbers<[1], [0], [0], [1], [0, 0, 1, 1], [], []>} : vector<16x512xbf16>, vector<512x32xbf16>, vector<16x32xf32> -> vector<16x32xf32>
    %c0_21 = arith.constant 0 : index
    %c0_22 = arith.constant 0 : index
    %27 = vector.load %arg7[%c0_21, %c0_22] : memref<1x32xf32, #tpu.memory_space<vmem>>, vector<1x32xf32>
    %cst_23 = arith.constant dense<0.000000e+00> : vector<32xf32>
    %28 = vector.multi_reduction <add>, %26, %cst_23 [0] : vector<16x32xf32> to vector<32xf32>
    %29 = vector.shape_cast %28 : vector<32xf32> to vector<1x32xf32>
    %30 = arith.addf %27, %29 : vector<1x32xf32>
    %c0_24 = arith.constant 0 : index
    %c0_25 = arith.constant 0 : index
    %31 = vector.load %arg7[%c0_24, %c0_25] : memref<1x32xf32, #tpu.memory_space<vmem>>, vector<1x32xf32>
    tpu.vector_store %arg7[%c0_24, %c0_25], %30 {strides = array<i32>} : memref<1x32xf32, #tpu.memory_space<vmem>>, vector<1x32xf32>,
    %c0_26 = arith.constant 0 : index
    %c0_27 = arith.constant 0 : index
    %32 = vector.load %arg8[%c0_26, %c0_27] : memref<1x32xf32, #tpu.memory_space<vmem>>, vector<1x32xf32>
    %33 = arith.mulf %26, %26 : vector<16x32xf32>
    %cst_28 = arith.constant dense<0.000000e+00> : vector<32xf32>
    %34 = vector.multi_reduction <add>, %33, %cst_28 [0] : vector<16x32xf32> to vector<32xf32>
    %35 = vector.shape_cast %34 : vector<32xf32> to vector<1x32xf32>
    %36 = arith.addf %32, %35 : vector<1x32xf32>
    %c0_29 = arith.constant 0 : index
    %c0_30 = arith.constant 0 : index
    %37 = vector.load %arg8[%c0_29, %c0_30] : memref<1x32xf32, #tpu.memory_space<vmem>>, vector<1x32xf32>
    tpu.vector_store %arg8[%c0_29, %c0_30], %36 {strides = array<i32>} : memref<1x32xf32, #tpu.memory_space<vmem>>, vector<1x32xf32>,
    %38 = arith.truncf %26 : vector<16x32xf32> to vector<16x32xbf16>
    %39 = arith.index_cast %4 : i32 to index
    %c32 = arith.constant 32 : index
    %40 = vector.load %arg6[%39, %c32] : memref<16x128xbf16, #tpu.memory_space<vmem>>, vector<16x32xbf16>
    tpu.vector_store %arg6[%39, %c32], %38 {strides = array<i32>} : memref<16x128xbf16, #tpu.memory_space<vmem>>, vector<16x32xbf16>,
    %c2 = arith.constant 2 : index
    %c0_31 = arith.constant 0 : index
    %c0_32 = arith.constant 0 : index
    %41 = vector.load %arg1[%c2, %c0_31, %c0_32] : memref<4x16x512xbf16, #tpu.memory_space<vmem>>, vector<1x16x512xbf16>
    %42 = vector.shape_cast %41 : vector<1x16x512xbf16> to vector<16x512xbf16>
    %c0_33 = arith.constant 0 : index
    %c0_34 = arith.constant 0 : index
    %43 = vector.load %arg2[%c0_33, %c0_34] : memref<512x32xbf16, #tpu.memory_space<vmem>>, vector<512x32xbf16>
    %cst_35 = arith.constant dense<0.000000e+00> : vector<16x32xf32>
    %44 = tpu.matmul %42, %43, %cst_35 {dimension_numbers = #tpu.dot_dimension_numbers<[1], [0], [0], [1], [0, 0, 1, 1], [], []>} : vector<16x512xbf16>, vector<512x32xbf16>, vector<16x32xf32> -> vector<16x32xf32>
    %c0_36 = arith.constant 0 : index
    %c0_37 = arith.constant 0 : index
    %45 = vector.load %arg7[%c0_36, %c0_37] : memref<1x32xf32, #tpu.memory_space<vmem>>, vector<1x32xf32>
    %cst_38 = arith.constant dense<0.000000e+00> : vector<32xf32>
    %46 = vector.multi_reduction <add>, %44, %cst_38 [0] : vector<16x32xf32> to vector<32xf32>
    %47 = vector.shape_cast %46 : vector<32xf32> to vector<1x32xf32>
    %48 = arith.addf %45, %47 : vector<1x32xf32>
    %c0_39 = arith.constant 0 : index
    %c0_40 = arith.constant 0 : index
    %49 = vector.load %arg7[%c0_39, %c0_40] : memref<1x32xf32, #tpu.memory_space<vmem>>, vector<1x32xf32>
    tpu.vector_store %arg7[%c0_39, %c0_40], %48 {strides = array<i32>} : memref<1x32xf32, #tpu.memory_space<vmem>>, vector<1x32xf32>,
    %c0_41 = arith.constant 0 : index
    %c0_42 = arith.constant 0 : index
    %50 = vector.load %arg8[%c0_41, %c0_42] : memref<1x32xf32, #tpu.memory_space<vmem>>, vector<1x32xf32>
    %51 = arith.mulf %44, %44 : vector<16x32xf32>
    %cst_43 = arith.constant dense<0.000000e+00> : vector<32xf32>
    %52 = vector.multi_reduction <add>, %51, %cst_43 [0] : vector<16x32xf32> to vector<32xf32>
    %53 = vector.shape_cast %52 : vector<32xf32> to vector<1x32xf32>
    %54 = arith.addf %50, %53 : vector<1x32xf32>
    %c0_44 = arith.constant 0 : index
    %c0_45 = arith.constant 0 : index
    %55 = vector.load %arg8[%c0_44, %c0_45] : memref<1x32xf32, #tpu.memory_space<vmem>>, vector<1x32xf32>
    tpu.vector_store %arg8[%c0_44, %c0_45], %54 {strides = array<i32>} : memref<1x32xf32, #tpu.memory_space<vmem>>, vector<1x32xf32>,
    %56 = arith.truncf %44 : vector<16x32xf32> to vector<16x32xbf16>
    %57 = arith.index_cast %4 : i32 to index
    %c64 = arith.constant 64 : index
    %58 = vector.load %arg6[%57, %c64] : memref<16x128xbf16, #tpu.memory_space<vmem>>, vector<16x32xbf16>
    tpu.vector_store %arg6[%57, %c64], %56 {strides = array<i32>} : memref<16x128xbf16, #tpu.memory_space<vmem>>, vector<16x32xbf16>,
    %c3 = arith.constant 3 : index
    %c0_46 = arith.constant 0 : index
    %c0_47 = arith.constant 0 : index
    %59 = vector.load %arg1[%c3, %c0_46, %c0_47] : memref<4x16x512xbf16, #tpu.memory_space<vmem>>, vector<1x16x512xbf16>
    %60 = vector.shape_cast %59 : vector<1x16x512xbf16> to vector<16x512xbf16>
    %c0_48 = arith.constant 0 : index
    %c0_49 = arith.constant 0 : index
    %61 = vector.load %arg2[%c0_48, %c0_49] : memref<512x32xbf16, #tpu.memory_space<vmem>>, vector<512x32xbf16>
    %cst_50 = arith.constant dense<0.000000e+00> : vector<16x32xf32>
    %62 = tpu.matmul %60, %61, %cst_50 {dimension_numbers = #tpu.dot_dimension_numbers<[1], [0], [0], [1], [0, 0, 1, 1], [], []>} : vector<16x512xbf16>, vector<512x32xbf16>, vector<16x32xf32> -> vector<16x32xf32>
    %c0_51 = arith.constant 0 : index
    %c0_52 = arith.constant 0 : index
    %63 = vector.load %arg7[%c0_51, %c0_52] : memref<1x32xf32, #tpu.memory_space<vmem>>, vector<1x32xf32>
    %cst_53 = arith.constant dense<0.000000e+00> : vector<32xf32>
    %64 = vector.multi_reduction <add>, %62, %cst_53 [0] : vector<16x32xf32> to vector<32xf32>
    %65 = vector.shape_cast %64 : vector<32xf32> to vector<1x32xf32>
    %66 = arith.addf %63, %65 : vector<1x32xf32>
    %c0_54 = arith.constant 0 : index
    %c0_55 = arith.constant 0 : index
    %67 = vector.load %arg7[%c0_54, %c0_55] : memref<1x32xf32, #tpu.memory_space<vmem>>, vector<1x32xf32>
    tpu.vector_store %arg7[%c0_54, %c0_55], %66 {strides = array<i32>} : memref<1x32xf32, #tpu.memory_space<vmem>>, vector<1x32xf32>,
    %c0_56 = arith.constant 0 : index
    %c0_57 = arith.constant 0 : index
    %68 = vector.load %arg8[%c0_56, %c0_57] : memref<1x32xf32, #tpu.memory_space<vmem>>, vector<1x32xf32>
    %69 = arith.mulf %62, %62 : vector<16x32xf32>
    %cst_58 = arith.constant dense<0.000000e+00> : vector<32xf32>
    %70 = vector.multi_reduction <add>, %69, %cst_58 [0] : vector<16x32xf32> to vector<32xf32>
    %71 = vector.shape_cast %70 : vector<32xf32> to vector<1x32xf32>
    %72 = arith.addf %68, %71 : vector<1x32xf32>
    %c0_59 = arith.constant 0 : index
    %c0_60 = arith.constant 0 : index
    %73 = vector.load %arg8[%c0_59, %c0_60] : memref<1x32xf32, #tpu.memory_space<vmem>>, vector<1x32xf32>
    tpu.vector_store %arg8[%c0_59, %c0_60], %72 {strides = array<i32>} : memref<1x32xf32, #tpu.memory_space<vmem>>, vector<1x32xf32>,
    %74 = arith.truncf %62 : vector<16x32xf32> to vector<16x32xbf16>
    %75 = arith.index_cast %4 : i32 to index
    %c96 = arith.constant 96 : index
    %76 = vector.load %arg6[%75, %c96] : memref<16x128xbf16, #tpu.memory_space<vmem>>, vector<16x32xbf16>
    tpu.vector_store %arg6[%75, %c96], %74 {strides = array<i32>} : memref<16x128xbf16, #tpu.memory_space<vmem>>, vector<16x32xbf16>,
    %c0_i32_61 = arith.constant 0 : i32
    %77 = arith.cmpi eq, %arg0, %c0_i32_61 : i32
    %78 = arith.extui %77 : i1 to i32
    %c0_i32_62 = arith.constant 0 : i32
    %79 = arith.cmpi ne, %78, %c0_i32_62 : i32
    scf.if %79 {
      %c0_63 = arith.constant 0 : index
      %c0_64 = arith.constant 0 : index
      %80 = vector.load %arg7[%c0_63, %c0_64] : memref<1x32xf32, #tpu.memory_space<vmem>>, vector<1x32xf32>
      %cst_65 = arith.constant 3.125000e-02 : f32
      %81 = vector.broadcast %cst_65 : f32 to vector<1x32xf32>
      %82 = arith.mulf %80, %81 : vector<1x32xf32>
      %c0_66 = arith.constant 0 : index
      %c0_67 = arith.constant 0 : index
      %83 = vector.load %arg8[%c0_66, %c0_67] : memref<1x32xf32, #tpu.memory_space<vmem>>, vector<1x32xf32>
      %cst_68 = arith.constant 3.125000e-02 : f32
      %84 = vector.broadcast %cst_68 : f32 to vector<1x32xf32>
      %85 = arith.mulf %83, %84 : vector<1x32xf32>
      %86 = arith.mulf %82, %82 : vector<1x32xf32>
      %87 = arith.subf %85, %86 : vector<1x32xf32>
      %cst_69 = arith.constant 0.000000e+00 : f32
      %88 = vector.broadcast %cst_69 : f32 to vector<1x32xf32>
      %89 = arith.maximumf %87, %88 : vector<1x32xf32>
      %cst_70 = arith.constant 9.99999974E-6 : f32
      %90 = vector.broadcast %cst_70 : f32 to vector<1x32xf32>
      %91 = arith.addf %89, %90 : vector<1x32xf32>
      %92 = math.rsqrt %91 : vector<1x32xf32>
      %c0_71 = arith.constant 0 : index
      %c0_72 = arith.constant 0 : index
      %93 = vector.load %arg3[%c0_71, %c0_72] : memref<1x32xf32, #tpu.memory_space<vmem>>, vector<1x32xf32>
      %94 = arith.mulf %93, %92 : vector<1x32xf32>
      %c0_73 = arith.constant 0 : index
      %c0_74 = arith.constant 0 : index
      %95 = vector.load %arg4[%c0_73, %c0_74] : memref<1x32xf32, #tpu.memory_space<vmem>>, vector<1x32xf32>
      %96 = arith.mulf %82, %94 : vector<1x32xf32>
      %97 = arith.subf %95, %96 : vector<1x32xf32>
      %c0_75 = arith.constant 0 : index
      %c0_76 = arith.constant 0 : index
      %98 = vector.load %arg5[%c0_75, %c0_76] : memref<32x128xf32, #tpu.memory_space<vmem>>, vector<32x128xf32>
      %cst_77 = arith.constant dense<0.000000e+00> : vector<1x128xf32>
      %99 = tpu.matmul %94, %98, %cst_77 {dimension_numbers = #tpu.dot_dimension_numbers<[1], [0], [0], [1], [0, 0, 1, 1], [], []>} : vector<1x32xf32>, vector<32x128xf32>, vector<1x128xf32> -> vector<1x128xf32>
      %c0_78 = arith.constant 0 : index
      %c0_79 = arith.constant 0 : index
      %100 = vector.load %arg5[%c0_78, %c0_79] : memref<32x128xf32, #tpu.memory_space<vmem>>, vector<32x128xf32>
      %cst_80 = arith.constant dense<0.000000e+00> : vector<1x128xf32>
      %101 = tpu.matmul %97, %100, %cst_80 {dimension_numbers = #tpu.dot_dimension_numbers<[1], [0], [0], [1], [0, 0, 1, 1], [], []>} : vector<1x32xf32>, vector<32x128xf32>, vector<1x128xf32> -> vector<1x128xf32>
      %c0_81 = arith.constant 0 : index
      %c0_82 = arith.constant 0 : index
      %102 = vector.load %arg6[%c0_81, %c0_82] : memref<16x128xbf16, #tpu.memory_space<vmem>>, vector<16x128xbf16>
      %103 = arith.extf %102 : vector<16x128xbf16> to vector<16x128xf32>
      %104 = vector.broadcast %99 : vector<1x128xf32> to vector<16x128xf32>
      %105 = arith.mulf %103, %104 : vector<16x128xf32>
      %106 = vector.broadcast %101 : vector<1x128xf32> to vector<16x128xf32>
      %107 = arith.addf %105, %106 : vector<16x128xf32>
      %cst_83 = arith.constant 0.000000e+00 : f32
      %108 = vector.broadcast %cst_83 : f32 to vector<16x128xf32>
      %109 = arith.cmpf oge, %107, %108 : vector<16x128xf32>
      %cst_84 = arith.constant 2.000000e-01 : f32
      %110 = vector.broadcast %cst_84 : f32 to vector<16x128xf32>
      %111 = arith.mulf %110, %107 : vector<16x128xf32>
      %112 = arith.select %109, %107, %111 : vector<16x128xi1>, vector<16x128xf32>
      %113 = arith.truncf %112 : vector<16x128xf32> to vector<16x128xbf16>
      %c0_85 = arith.constant 0 : index
      %c0_86 = arith.constant 0 : index
      %114 = vector.load %arg6[%c0_85, %c0_86] : memref<16x128xbf16, #tpu.memory_space<vmem>>, vector<16x128xbf16>
      tpu.vector_store %arg6[%c0_85, %c0_86], %113 {strides = array<i32>} : memref<16x128xbf16, #tpu.memory_space<vmem>>, vector<16x128xbf16>,
    } else {
    }
    return
  }
  func.func @transform_0(%arg0: i32) -> (i32, i32, i32) {
    %c0_i32 = arith.constant 0 : i32
    %c0_i32_0 = arith.constant 0 : i32
    %c0_i32_1 = arith.constant 0 : i32
    return %c0_i32, %arg0, %c0_i32_0 : i32, i32, i32
  }
  func.func @transform_1(%arg0: i32) -> (i32, i32) {
    %c0_i32 = arith.constant 0 : i32
    %c0_i32_0 = arith.constant 0 : i32
    %c0_i32_1 = arith.constant 0 : i32
    return %c0_i32, %c0_i32_0 : i32, i32
  }
  func.func @transform_2(%arg0: i32) -> (i32, i32) {
    %c0_i32 = arith.constant 0 : i32
    %c0_i32_0 = arith.constant 0 : i32
    %c0_i32_1 = arith.constant 0 : i32
    return %c0_i32, %c0_i32_0 : i32, i32
  }
  func.func @transform_3(%arg0: i32) -> (i32, i32) {
    %c0_i32 = arith.constant 0 : i32
    %c0_i32_0 = arith.constant 0 : i32
    %c0_i32_1 = arith.constant 0 : i32
    return %c0_i32, %c0_i32_0 : i32, i32
  }
  func.func @transform_4(%arg0: i32) -> (i32, i32) {
    %c0_i32 = arith.constant 0 : i32
    %c0_i32_0 = arith.constant 0 : i32
    %c0_i32_1 = arith.constant 0 : i32
    return %c0_i32, %c0_i32_0 : i32, i32
  }
  func.func @transform_5(%arg0: i32) -> (i32, i32) {
    %c0_i32 = arith.constant 0 : i32
    %c0_i32_0 = arith.constant 0 : i32
    %c0_i32_1 = arith.constant 0 : i32
    return %c0_i32, %c0_i32_0 : i32, i32
  }
}

module attributes {stable_mosaic.version = 11 : i64} {
  func.func @_conv_bn_head_kernel(%arg0: i32, %arg1: memref<2x16x896xbf16, #tpu.memory_space<vmem>>, %arg2: memref<896x64xbf16, #tpu.memory_space<vmem>>, %arg3: memref<1x64xf32, #tpu.memory_space<vmem>>, %arg4: memref<1x64xf32, #tpu.memory_space<vmem>>, %arg5: memref<64x128xf32, #tpu.memory_space<vmem>>, %arg6: memref<16x128xf32, #tpu.memory_space<vmem>>, %arg7: memref<2x16xf32, #tpu.memory_space<vmem>>, %arg8: memref<1x1xf32, #tpu.memory_space<vmem>>, %arg9: memref<2x1xf32, #tpu.memory_space<vmem>>, %arg10: memref<16x128xf32, #tpu.memory_space<vmem>>, %arg11: memref<1x64xf32, #tpu.memory_space<vmem>>, %arg12: memref<1x64xf32, #tpu.memory_space<vmem>>) attributes {dimension_semantics = [#tpu.dimension_semantics<arbitrary>], iteration_bounds = array<i64: 1>, scalar_prefetch = 0 : i64, scratch_operands = 3 : i64, tpu.core_type = #tpu.core_type<tc>, window_params = [{transform_indices = @transform_0, window_bounds = array<i64: 2, 16, 896>}, {pipeline_mode = #tpu.pipeline_mode<synchronous>, transform_indices = @transform_1, window_bounds = array<i64: 896, 64>}, {pipeline_mode = #tpu.pipeline_mode<synchronous>, transform_indices = @transform_2, window_bounds = array<i64: 1, 64>}, {pipeline_mode = #tpu.pipeline_mode<synchronous>, transform_indices = @transform_3, window_bounds = array<i64: 1, 64>}, {pipeline_mode = #tpu.pipeline_mode<synchronous>, transform_indices = @transform_4, window_bounds = array<i64: 64, 128>}, {pipeline_mode = #tpu.pipeline_mode<synchronous>, transform_indices = @transform_5, window_bounds = array<i64: 16, 128>}, {pipeline_mode = #tpu.pipeline_mode<synchronous>, transform_indices = @transform_6, window_bounds = array<i64: 2, 16>}, {pipeline_mode = #tpu.pipeline_mode<synchronous>, transform_indices = @transform_7, window_bounds = array<i64: 1, 1>}, {pipeline_mode = #tpu.pipeline_mode<synchronous>, transform_indices = @transform_8, window_bounds = array<i64: 2, 1>}]} {
    %c0_i32 = arith.constant 0 : i32
    %0 = arith.cmpi eq, %arg0, %c0_i32 : i32
    %1 = arith.extui %0 : i1 to i32
    %c0_i32_0 = arith.constant 0 : i32
    %2 = arith.cmpi ne, %1, %c0_i32_0 : i32
    scf.if %2 {
      %cst_33 = arith.constant 0.000000e+00 : f32
      %42 = vector.broadcast %cst_33 : f32 to vector<1x64xf32>
      %c0_34 = arith.constant 0 : index
      %c0_35 = arith.constant 0 : index
      %43 = vector.load %arg11[%c0_34, %c0_35] : memref<1x64xf32, #tpu.memory_space<vmem>>, vector<1x64xf32>
      tpu.vector_store %arg11[%c0_34, %c0_35], %42 {strides = array<i32>} : memref<1x64xf32, #tpu.memory_space<vmem>>, vector<1x64xf32>,
      %cst_36 = arith.constant 0.000000e+00 : f32
      %44 = vector.broadcast %cst_36 : f32 to vector<1x64xf32>
      %c0_37 = arith.constant 0 : index
      %c0_38 = arith.constant 0 : index
      %45 = vector.load %arg12[%c0_37, %c0_38] : memref<1x64xf32, #tpu.memory_space<vmem>>, vector<1x64xf32>
      tpu.vector_store %arg12[%c0_37, %c0_38], %44 {strides = array<i32>} : memref<1x64xf32, #tpu.memory_space<vmem>>, vector<1x64xf32>,
    } else {
    }
    %c16_i32 = arith.constant 16 : i32
    %3 = arith.muli %arg0, %c16_i32 : i32
    %4 = tpu.assume_multiple %3, 16 : i32
    %c0 = arith.constant 0 : index
    %c0_1 = arith.constant 0 : index
    %c0_2 = arith.constant 0 : index
    %5 = vector.load %arg1[%c0, %c0_1, %c0_2] : memref<2x16x896xbf16, #tpu.memory_space<vmem>>, vector<1x16x896xbf16>
    %6 = vector.shape_cast %5 : vector<1x16x896xbf16> to vector<16x896xbf16>
    %c0_3 = arith.constant 0 : index
    %c0_4 = arith.constant 0 : index
    %7 = vector.load %arg2[%c0_3, %c0_4] : memref<896x64xbf16, #tpu.memory_space<vmem>>, vector<896x64xbf16>
    %cst = arith.constant dense<0.000000e+00> : vector<16x64xf32>
    %8 = tpu.matmul %6, %7, %cst {dimension_numbers = #tpu.dot_dimension_numbers<[1], [0], [0], [1], [0, 0, 1, 1], [], []>} : vector<16x896xbf16>, vector<896x64xbf16>, vector<16x64xf32> -> vector<16x64xf32>
    %c0_5 = arith.constant 0 : index
    %c0_6 = arith.constant 0 : index
    %9 = vector.load %arg11[%c0_5, %c0_6] : memref<1x64xf32, #tpu.memory_space<vmem>>, vector<1x64xf32>
    %cst_7 = arith.constant dense<0.000000e+00> : vector<64xf32>
    %10 = vector.multi_reduction <add>, %8, %cst_7 [0] : vector<16x64xf32> to vector<64xf32>
    %11 = vector.shape_cast %10 : vector<64xf32> to vector<1x64xf32>
    %12 = arith.addf %9, %11 : vector<1x64xf32>
    %c0_8 = arith.constant 0 : index
    %c0_9 = arith.constant 0 : index
    %13 = vector.load %arg11[%c0_8, %c0_9] : memref<1x64xf32, #tpu.memory_space<vmem>>, vector<1x64xf32>
    tpu.vector_store %arg11[%c0_8, %c0_9], %12 {strides = array<i32>} : memref<1x64xf32, #tpu.memory_space<vmem>>, vector<1x64xf32>,
    %c0_10 = arith.constant 0 : index
    %c0_11 = arith.constant 0 : index
    %14 = vector.load %arg12[%c0_10, %c0_11] : memref<1x64xf32, #tpu.memory_space<vmem>>, vector<1x64xf32>
    %15 = arith.mulf %8, %8 : vector<16x64xf32>
    %cst_12 = arith.constant dense<0.000000e+00> : vector<64xf32>
    %16 = vector.multi_reduction <add>, %15, %cst_12 [0] : vector<16x64xf32> to vector<64xf32>
    %17 = vector.shape_cast %16 : vector<64xf32> to vector<1x64xf32>
    %18 = arith.addf %14, %17 : vector<1x64xf32>
    %c0_13 = arith.constant 0 : index
    %c0_14 = arith.constant 0 : index
    %19 = vector.load %arg12[%c0_13, %c0_14] : memref<1x64xf32, #tpu.memory_space<vmem>>, vector<1x64xf32>
    tpu.vector_store %arg12[%c0_13, %c0_14], %18 {strides = array<i32>} : memref<1x64xf32, #tpu.memory_space<vmem>>, vector<1x64xf32>,
    %20 = arith.index_cast %4 : i32 to index
    %c0_15 = arith.constant 0 : index
    %21 = vector.load %arg10[%20, %c0_15] : memref<16x128xf32, #tpu.memory_space<vmem>>, vector<16x64xf32>
    tpu.vector_store %arg10[%20, %c0_15], %8 {strides = array<i32>} : memref<16x128xf32, #tpu.memory_space<vmem>>, vector<16x64xf32>,
    %c1 = arith.constant 1 : index
    %c0_16 = arith.constant 0 : index
    %c0_17 = arith.constant 0 : index
    %22 = vector.load %arg1[%c1, %c0_16, %c0_17] : memref<2x16x896xbf16, #tpu.memory_space<vmem>>, vector<1x16x896xbf16>
    %23 = vector.shape_cast %22 : vector<1x16x896xbf16> to vector<16x896xbf16>
    %c0_18 = arith.constant 0 : index
    %c0_19 = arith.constant 0 : index
    %24 = vector.load %arg2[%c0_18, %c0_19] : memref<896x64xbf16, #tpu.memory_space<vmem>>, vector<896x64xbf16>
    %cst_20 = arith.constant dense<0.000000e+00> : vector<16x64xf32>
    %25 = tpu.matmul %23, %24, %cst_20 {dimension_numbers = #tpu.dot_dimension_numbers<[1], [0], [0], [1], [0, 0, 1, 1], [], []>} : vector<16x896xbf16>, vector<896x64xbf16>, vector<16x64xf32> -> vector<16x64xf32>
    %c0_21 = arith.constant 0 : index
    %c0_22 = arith.constant 0 : index
    %26 = vector.load %arg11[%c0_21, %c0_22] : memref<1x64xf32, #tpu.memory_space<vmem>>, vector<1x64xf32>
    %cst_23 = arith.constant dense<0.000000e+00> : vector<64xf32>
    %27 = vector.multi_reduction <add>, %25, %cst_23 [0] : vector<16x64xf32> to vector<64xf32>
    %28 = vector.shape_cast %27 : vector<64xf32> to vector<1x64xf32>
    %29 = arith.addf %26, %28 : vector<1x64xf32>
    %c0_24 = arith.constant 0 : index
    %c0_25 = arith.constant 0 : index
    %30 = vector.load %arg11[%c0_24, %c0_25] : memref<1x64xf32, #tpu.memory_space<vmem>>, vector<1x64xf32>
    tpu.vector_store %arg11[%c0_24, %c0_25], %29 {strides = array<i32>} : memref<1x64xf32, #tpu.memory_space<vmem>>, vector<1x64xf32>,
    %c0_26 = arith.constant 0 : index
    %c0_27 = arith.constant 0 : index
    %31 = vector.load %arg12[%c0_26, %c0_27] : memref<1x64xf32, #tpu.memory_space<vmem>>, vector<1x64xf32>
    %32 = arith.mulf %25, %25 : vector<16x64xf32>
    %cst_28 = arith.constant dense<0.000000e+00> : vector<64xf32>
    %33 = vector.multi_reduction <add>, %32, %cst_28 [0] : vector<16x64xf32> to vector<64xf32>
    %34 = vector.shape_cast %33 : vector<64xf32> to vector<1x64xf32>
    %35 = arith.addf %31, %34 : vector<1x64xf32>
    %c0_29 = arith.constant 0 : index
    %c0_30 = arith.constant 0 : index
    %36 = vector.load %arg12[%c0_29, %c0_30] : memref<1x64xf32, #tpu.memory_space<vmem>>, vector<1x64xf32>
    tpu.vector_store %arg12[%c0_29, %c0_30], %35 {strides = array<i32>} : memref<1x64xf32, #tpu.memory_space<vmem>>, vector<1x64xf32>,
    %37 = arith.index_cast %4 : i32 to index
    %c64 = arith.constant 64 : index
    %38 = vector.load %arg10[%37, %c64] : memref<16x128xf32, #tpu.memory_space<vmem>>, vector<16x64xf32>
    tpu.vector_store %arg10[%37, %c64], %25 {strides = array<i32>} : memref<16x128xf32, #tpu.memory_space<vmem>>, vector<16x64xf32>,
    %c0_i32_31 = arith.constant 0 : i32
    %39 = arith.cmpi eq, %arg0, %c0_i32_31 : i32
    %40 = arith.extui %39 : i1 to i32
    %c0_i32_32 = arith.constant 0 : i32
    %41 = arith.cmpi ne, %40, %c0_i32_32 : i32
    scf.if %41 {
      %c0_33 = arith.constant 0 : index
      %c0_34 = arith.constant 0 : index
      %42 = vector.load %arg11[%c0_33, %c0_34] : memref<1x64xf32, #tpu.memory_space<vmem>>, vector<1x64xf32>
      %cst_35 = arith.constant 1.250000e-01 : f32
      %43 = vector.broadcast %cst_35 : f32 to vector<1x64xf32>
      %44 = arith.mulf %42, %43 : vector<1x64xf32>
      %c0_36 = arith.constant 0 : index
      %c0_37 = arith.constant 0 : index
      %45 = vector.load %arg12[%c0_36, %c0_37] : memref<1x64xf32, #tpu.memory_space<vmem>>, vector<1x64xf32>
      %cst_38 = arith.constant 1.250000e-01 : f32
      %46 = vector.broadcast %cst_38 : f32 to vector<1x64xf32>
      %47 = arith.mulf %45, %46 : vector<1x64xf32>
      %48 = arith.mulf %44, %44 : vector<1x64xf32>
      %49 = arith.subf %47, %48 : vector<1x64xf32>
      %cst_39 = arith.constant 0.000000e+00 : f32
      %50 = vector.broadcast %cst_39 : f32 to vector<1x64xf32>
      %51 = arith.maximumf %49, %50 : vector<1x64xf32>
      %cst_40 = arith.constant 9.99999974E-6 : f32
      %52 = vector.broadcast %cst_40 : f32 to vector<1x64xf32>
      %53 = arith.addf %51, %52 : vector<1x64xf32>
      %54 = math.rsqrt %53 : vector<1x64xf32>
      %c0_41 = arith.constant 0 : index
      %c0_42 = arith.constant 0 : index
      %55 = vector.load %arg3[%c0_41, %c0_42] : memref<1x64xf32, #tpu.memory_space<vmem>>, vector<1x64xf32>
      %56 = arith.mulf %55, %54 : vector<1x64xf32>
      %c0_43 = arith.constant 0 : index
      %c0_44 = arith.constant 0 : index
      %57 = vector.load %arg4[%c0_43, %c0_44] : memref<1x64xf32, #tpu.memory_space<vmem>>, vector<1x64xf32>
      %58 = arith.mulf %44, %56 : vector<1x64xf32>
      %59 = arith.subf %57, %58 : vector<1x64xf32>
      %c0_45 = arith.constant 0 : index
      %c0_46 = arith.constant 0 : index
      %60 = vector.load %arg5[%c0_45, %c0_46] : memref<64x128xf32, #tpu.memory_space<vmem>>, vector<64x128xf32>
      %cst_47 = arith.constant dense<0.000000e+00> : vector<1x128xf32>
      %61 = tpu.matmul %56, %60, %cst_47 {dimension_numbers = #tpu.dot_dimension_numbers<[1], [0], [0], [1], [0, 0, 1, 1], [], []>} : vector<1x64xf32>, vector<64x128xf32>, vector<1x128xf32> -> vector<1x128xf32>
      %c0_48 = arith.constant 0 : index
      %c0_49 = arith.constant 0 : index
      %62 = vector.load %arg5[%c0_48, %c0_49] : memref<64x128xf32, #tpu.memory_space<vmem>>, vector<64x128xf32>
      %cst_50 = arith.constant dense<0.000000e+00> : vector<1x128xf32>
      %63 = tpu.matmul %59, %62, %cst_50 {dimension_numbers = #tpu.dot_dimension_numbers<[1], [0], [0], [1], [0, 0, 1, 1], [], []>} : vector<1x64xf32>, vector<64x128xf32>, vector<1x128xf32> -> vector<1x128xf32>
      %c0_51 = arith.constant 0 : index
      %c0_52 = arith.constant 0 : index
      %64 = vector.load %arg10[%c0_51, %c0_52] : memref<16x128xf32, #tpu.memory_space<vmem>>, vector<16x128xf32>
      %65 = vector.broadcast %61 : vector<1x128xf32> to vector<16x128xf32>
      %66 = arith.mulf %64, %65 : vector<16x128xf32>
      %67 = vector.broadcast %63 : vector<1x128xf32> to vector<16x128xf32>
      %68 = arith.addf %66, %67 : vector<16x128xf32>
      %cst_53 = arith.constant 0.000000e+00 : f32
      %69 = vector.broadcast %cst_53 : f32 to vector<16x128xf32>
      %70 = arith.cmpf oge, %68, %69 : vector<16x128xf32>
      %cst_54 = arith.constant 2.000000e-01 : f32
      %71 = vector.broadcast %cst_54 : f32 to vector<16x128xf32>
      %72 = arith.mulf %71, %68 : vector<16x128xf32>
      %73 = arith.select %70, %68, %72 : vector<16x128xi1>, vector<16x128xf32>
      %c0_55 = arith.constant 0 : index
      %c0_56 = arith.constant 0 : index
      %74 = vector.load %arg6[%c0_55, %c0_56] : memref<16x128xf32, #tpu.memory_space<vmem>>, vector<16x128xf32>
      %75 = arith.mulf %73, %74 : vector<16x128xf32>
      %cst_57 = arith.constant dense<0.000000e+00> : vector<16xf32>
      %76 = vector.multi_reduction <add>, %75, %cst_57 [1] : vector<16x128xf32> to vector<16xf32>
      %77 = vector.shape_cast %76 : vector<16xf32> to vector<16x1xf32>
      %c0_58 = arith.constant 0 : index
      %c0_59 = arith.constant 0 : index
      %78 = vector.load %arg7[%c0_58, %c0_59] : memref<2x16xf32, #tpu.memory_space<vmem>>, vector<2x16xf32>
      %cst_60 = arith.constant dense<0.000000e+00> : vector<2x1xf32>
      %79 = tpu.matmul %78, %77, %cst_60 {dimension_numbers = #tpu.dot_dimension_numbers<[1], [0], [0], [1], [0, 0, 1, 1], [], []>} : vector<2x16xf32>, vector<16x1xf32>, vector<2x1xf32> -> vector<2x1xf32>
      %c0_61 = arith.constant 0 : index
      %c0_62 = arith.constant 0 : index
      %80 = vector.load %arg8[%c0_61, %c0_62] : memref<1x1xf32, #tpu.memory_space<vmem>>, vector<1x1xf32>
      %81 = vector.broadcast %80 : vector<1x1xf32> to vector<2x1xf32>
      %82 = arith.addf %79, %81 : vector<2x1xf32>
      %cst_63 = arith.constant 0.000000e+00 : f32
      %83 = vector.broadcast %cst_63 : f32 to vector<2x1xf32>
      %84 = arith.subf %83, %82 : vector<2x1xf32>
      %85 = math.exp %84 : vector<2x1xf32>
      %cst_64 = arith.constant 1.000000e+00 : f32
      %86 = vector.broadcast %cst_64 : f32 to vector<2x1xf32>
      %87 = arith.addf %86, %85 : vector<2x1xf32>
      %cst_65 = arith.constant 1.000000e+00 : f32
      %88 = vector.broadcast %cst_65 : f32 to vector<2x1xf32>
      %89 = arith.divf %88, %87 : vector<2x1xf32>
      %c0_66 = arith.constant 0 : index
      %c0_67 = arith.constant 0 : index
      %90 = vector.load %arg9[%c0_66, %c0_67] : memref<2x1xf32, #tpu.memory_space<vmem>>, vector<2x1xf32>
      tpu.vector_store %arg9[%c0_66, %c0_67], %89 {strides = array<i32>} : memref<2x1xf32, #tpu.memory_space<vmem>>, vector<2x1xf32>,
    } else {
    }
    return
  }
  func.func @transform_0(%arg0: i32) -> (i32, i32, i32) {
    %c0_i32 = arith.constant 0 : i32
    %c0_i32_0 = arith.constant 0 : i32
    %c0_i32_1 = arith.constant 0 : i32
    return %c0_i32, %arg0, %c0_i32_0 : i32, i32, i32
  }
  func.func @transform_1(%arg0: i32) -> (i32, i32) {
    %c0_i32 = arith.constant 0 : i32
    %c0_i32_0 = arith.constant 0 : i32
    %c0_i32_1 = arith.constant 0 : i32
    return %c0_i32, %c0_i32_0 : i32, i32
  }
  func.func @transform_2(%arg0: i32) -> (i32, i32) {
    %c0_i32 = arith.constant 0 : i32
    %c0_i32_0 = arith.constant 0 : i32
    %c0_i32_1 = arith.constant 0 : i32
    return %c0_i32, %c0_i32_0 : i32, i32
  }
  func.func @transform_3(%arg0: i32) -> (i32, i32) {
    %c0_i32 = arith.constant 0 : i32
    %c0_i32_0 = arith.constant 0 : i32
    %c0_i32_1 = arith.constant 0 : i32
    return %c0_i32, %c0_i32_0 : i32, i32
  }
  func.func @transform_4(%arg0: i32) -> (i32, i32) {
    %c0_i32 = arith.constant 0 : i32
    %c0_i32_0 = arith.constant 0 : i32
    %c0_i32_1 = arith.constant 0 : i32
    return %c0_i32, %c0_i32_0 : i32, i32
  }
  func.func @transform_5(%arg0: i32) -> (i32, i32) {
    %c0_i32 = arith.constant 0 : i32
    %c0_i32_0 = arith.constant 0 : i32
    %c0_i32_1 = arith.constant 0 : i32
    return %c0_i32, %c0_i32_0 : i32, i32
  }
  func.func @transform_6(%arg0: i32) -> (i32, i32) {
    %c0_i32 = arith.constant 0 : i32
    %c0_i32_0 = arith.constant 0 : i32
    %c0_i32_1 = arith.constant 0 : i32
    return %c0_i32, %c0_i32_0 : i32, i32
  }
  func.func @transform_7(%arg0: i32) -> (i32, i32) {
    %c0_i32 = arith.constant 0 : i32
    %c0_i32_0 = arith.constant 0 : i32
    %c0_i32_1 = arith.constant 0 : i32
    return %c0_i32, %c0_i32_0 : i32, i32
  }
  func.func @transform_8(%arg0: i32) -> (i32, i32) {
    %c0_i32 = arith.constant 0 : i32
    %c0_i32_0 = arith.constant 0 : i32
    %c0_i32_1 = arith.constant 0 : i32
    return %c0_i32, %c0_i32_0 : i32, i32
  }
}

</mosaic_0001>

<llo_original>
// kernel: discriminator_forward.4
$region0: #{discriminator_forward.4}
  #allocation0 [shape = 'u32[]', space=smem, size = 0x4, offset = 0x4, fixed_abs, tag = 'smem constant byte address 0x4 - core index']
  #allocation1 [shape = 'u32[144,128]{1,0:T(1,128)}', space=vmem, size = 0x12000, scoped, tag = 'internal scratch']
  %s0 = inlined_call_operand.hbm [shape: bf16[16,32,128], index: 0, kind: input, shape index: {}]
  %s1 = inlined_call_operand.hbm [shape: bf16[128,8], index: 1, kind: input, shape index: {}]
  %s2 = inlined_call_operand.hbm [shape: bf16[32,128], index: 2, kind: output, shape index: {}]
  %s3 = sld [smem:[#allocation0]]
  $region26: #{discriminator_forward.4} parent=0
    _
  %s5 = ssub.s32 1, %s3
  %s6 = scalar_select 0, %s5, %s3
  $region1: #{discriminator_forward.4} parent=0
    #allocation2 [shape = 'u8[131072]{0}', space=vmem, size = 0x20000, scoped, tag = 'input window, operand 0, single buffered']
    #allocation3 [shape = 's32[1]{0}', space=sflag, size = 0x4, scoped, tag = 'scoped memory for discriminator_forward.4']
    #allocation4 [shape = 's32[1]{0}', space=sflag, size = 0x4, scoped, tag = 'scoped memory for discriminator_forward.4']
    #allocation5 [shape = 'u8[32768]{0}', space=vmem, size = 0x8000, scoped, tag = 'input window, operand 1, single buffered']
    #allocation6 [shape = 's32[1]{0}', space=sflag, size = 0x4, scoped, tag = 'scoped memory for discriminator_forward.4']
    #allocation7 [shape = 'u8[8192]{0}', space=vmem, size = 0x2000, scoped, tag = 'output window, operand 0, single buffered']
    %7 = vsyncpa [#allocation3], 0
    %8 = vsyncpa [#allocation6], 0
    %9 = vsyncpa [#allocation4], 0
    // Predicated region
    $region2: #{discriminator_forward.4} parent=1 // pred_check
      _
    $region3: #{discriminator_forward.4} parent=1 // pred_check_branch
      %11 = sbr.rel (0) target = $region5
    $region4: #{discriminator_forward.4} parent=1 // pred_region
      %s13 = ssub.s32 4096, 4096
      %14 = vsyncadd [#allocation3], %s13
      %s15 = sshll.u32 [#allocation2], 4
      %s16 = int_to_ptr.vmem [resolvable:$true] %s15
      %21 = dma.hbm_to_vmem [thread:$0]  %s0, 4096, %s16, [#allocation3], 64, 64, 4
    $region5: #{discriminator_forward.4} parent=1 // pred_fallthru
      _
    // Predicated region
    $region6: #{discriminator_forward.4} parent=1 // pred_check
      _
    $region7: #{discriminator_forward.4} parent=1 // pred_check_branch
      %23 = sbr.rel (0) target = $region9
    $region8: #{discriminator_forward.4} parent=1 // pred_region
      %s25 = ssub.s32 1024, 1024
      %26 = vsyncadd [#allocation6], %s25
      %s27 = sshll.u32 [#allocation5], 4
      %s28 = int_to_ptr.vmem [resolvable:$true] %s27
      %33 = dma.hbm_to_vmem [thread:$0]  %s1, 1024, %s28, [#allocation6], 64, 64, 4
    $region9: #{discriminator_forward.4} parent=1 // pred_fallthru
      _
    // Predicated region
    $region10: #{discriminator_forward.4} parent=1 // pred_check
      _
    $region11: #{discriminator_forward.4} parent=1 // pred_check_branch
      %35 = sbr.rel (0) target = $region13
    $region12: #{discriminator_forward.4} parent=1 // pred_region
      %36 = dma.done [#allocation3], 4096
    $region13: #{discriminator_forward.4} parent=1 // pred_fallthru
      _
    // Predicated region
    $region14: #{discriminator_forward.4} parent=1 // pred_check
      _
    $region15: #{discriminator_forward.4} parent=1 // pred_check_branch
      %38 = sbr.rel (0) target = $region17
    $region16: #{discriminator_forward.4} parent=1 // pred_region
      %39 = dma.done [#allocation6], 1024
    $region17: #{discriminator_forward.4} parent=1 // pred_fallthru
      _
    %v41 = vld [vmem:[#allocation2] sm:$0xf]
    %v42 = vld [vmem:[#allocation2 + $0x4] sm:$0xf]
    %v43 = vld [vmem:[#allocation2 + $0x8] sm:$0xf]
    %v44 = vld [vmem:[#allocation2 + $0xc] sm:$0xf]
    %v45 = vld [vmem:[#allocation5] sm:$0xf]
    %v46 = vld [vmem:[#allocation5 + $0x4] sm:$0xf]
    %v47 = vld [vmem:[#allocation5 + $0x8] sm:$0xf]
    %v48 = vld [vmem:[#allocation5 + $0xc] sm:$0xf]
    %v49 = vld [vmem:[#allocation5 + $0x10] sm:$0xf]
    %v50 = vld [vmem:[#allocation5 + $0x14] sm:$0xf]
    %v51 = vld [vmem:[#allocation5 + $0x18] sm:$0xf]
    %v52 = vld [vmem:[#allocation5 + $0x1c] sm:$0xf]
    %v53 = vld [vmem:[#allocation5 + $0x20] sm:$0xf]
    %v54 = vld [vmem:[#allocation5 + $0x24] sm:$0xf]
    %v55 = vld [vmem:[#allocation5 + $0x28] sm:$0xf]
    %v56 = vld [vmem:[#allocation5 + $0x2c] sm:$0xf]
    %v57 = vld [vmem:[#allocation5 + $0x30] sm:$0xf]
    %v58 = vld [vmem:[#allocation5 + $0x34] sm:$0xf]
    %v59 = vld [vmem:[#allocation5 + $0x38] sm:$0xf]
    %v60 = vld [vmem:[#allocation5 + $0x3c] sm:$0xf]
    %v65 = vunpack.c.l.b16 %v41
    %v66 = vunpack.c.l.b16 %v42
    %v67 = vunpack.c.l.b16 %v43
    %v68 = vunpack.c.l.b16 %v44
    %v69 = vpack.c.b16 %v66, %v65
    %v70 = vpack.c.b16 %v68, %v67
    %v89 = vunpack.c.l.b16 %v45
    %v90 = vunpack.c.l.b16 %v46
    %v91 = vunpack.c.l.b16 %v47
    %v92 = vunpack.c.l.b16 %v48
    %v93 = vunpack.c.l.b16 %v49
    %v94 = vunpack.c.l.b16 %v50
    %v95 = vunpack.c.l.b16 %v51
    %v96 = vunpack.c.l.b16 %v52
    %v97 = vunpack.c.l.b16 %v53
    %v98 = vunpack.c.l.b16 %v54
    %v99 = vunpack.c.l.b16 %v55
    %v100 = vunpack.c.l.b16 %v56
    %v101 = vunpack.c.l.b16 %v57
    %v102 = vunpack.c.l.b16 %v58
    %v103 = vunpack.c.l.b16 %v59
    %v104 = vunpack.c.l.b16 %v60
    %v105 = vpack.c.b16 %v90, %v89
    %v106 = vpack.c.b16 %v92, %v91
    %v107 = vpack.c.b16 %v94, %v93
    %v108 = vpack.c.b16 %v96, %v95
    %v109 = vpack.c.b16 %v98, %v97
    %v110 = vpack.c.b16 %v100, %v99
    %v111 = vpack.c.b16 %v102, %v101
    %v112 = vpack.c.b16 %v104, %v103
    %121 = vmatprep.subr.bf16.mxu0 0
    %122 = vmatpush1.bf16.msra.mxu0 %v105
    %123 = vmatprep.subr.bf16.mxu0 0
    %124 = vmatpush1.bf16.msra.mxu0 %v106
    %125 = vmatprep.subr.bf16.mxu0 0
    %126 = vmatpush1.bf16.msra.mxu0 %v107
    %127 = vmatprep.subr.bf16.mxu0 0
    %128 = vmatpush1.bf16.msra.mxu0 %v108
    %129 = vmatprep.subr.bf16.mxu0 0
    %130 = vmatpush1.bf16.msra.mxu0 %v109
    %131 = vmatprep.subr.bf16.mxu0 0
    %132 = vmatpush1.bf16.msra.mxu0 %v110
    %133 = vmatprep.subr.bf16.mxu0 0
    %134 = vmatpush1.bf16.msra.mxu0 %v111
    %135 = vmatprep.subr.bf16.mxu0 0
    %136 = vmatpush1.bf16.msra.mxu0 %v112
    %137 = vmatprep.subr.bf16.mxu0 0
    %138 = vmatpush1.bf16.msra.mxu0 0
    %139 = vmatprep.subr.bf16.mxu0 0
    %140 = vmatpush1.bf16.msra.mxu0 0
    %141 = vmatprep.subr.bf16.mxu0 0
    %142 = vmatpush1.bf16.msra.mxu0 0
    %143 = vmatprep.subr.bf16.mxu0 0
    %144 = vmatpush1.bf16.msra.mxu0 0
    %145 = vmatprep.subr.bf16.mxu0 0
    %146 = vmatpush1.bf16.msra.mxu0 0
    %147 = vmatprep.subr.bf16.mxu0 0
    %148 = vmatpush1.bf16.msra.mxu0 0
    %149 = vmatprep.subr.bf16.mxu0 0
    %150 = vmatpush1.bf16.msra.mxu0 0
    %151 = vmatprep.subr.bf16.mxu0 0
    %152 = vmatpush1.bf16.msra.mxu0 0
    %153 = vmatprep.mubr.bf16.mxu0 0
    %154 = vmatmul.mubr.bf16.gmra.mrb[0].mxu0 %v69
    %v155 = vpop.f32.mrb[0].mxu0
    %v156 = vadd.f32 0.0, %v155
    %v157 = vpop.f32.mrb[0].mxu0
    %v158 = vpop.f32.mrb[0].mxu0
    %v159 = vadd.f32 0.0, %v158
    %v160 = vpop.f32.mrb[0].mxu0
    %161 = vmatprep.mubr.bf16.mxu0 0
    %162 = vmatmul.mubr.bf16.gmra.mrb[0].mxu0 %v70
    %v163 = vpop.f32.mrb[0].mxu0
    %v164 = vadd.f32 0.0, %v163
    %v165 = vpop.f32.mrb[0].mxu0
    %v166 = vpop.f32.mrb[0].mxu0
    %v167 = vadd.f32 0.0, %v166
    %v168 = vpop.f32.mrb[0].mxu0
    %169 = vdwg.mxu0
    %vm170 = vcmp.ge.f32.partialorder %v156, 0.0
    %vm171 = vcmp.ge.f32.partialorder %v159, 0.0
    %vm172 = vcmp.ge.f32.partialorder %v164, 0.0
    %vm173 = vcmp.ge.f32.partialorder %v167, 0.0
    %v174 = vmul.f32 %v156, 0.2
    %v175 = vmul.f32 %v159, 0.2
    %v176 = vmul.f32 %v164, 0.2
    %v177 = vmul.f32 %v167, 0.2
    %v178 = vsel %vm170, %v156, %v174
    %v179 = vsel %vm171, %v159, %v175
    %v180 = vsel %vm172, %v164, %v176
    %v181 = vsel %vm173, %v167, %v177
    %v182 = vpack.c.bf16 %v179, %v178
    %v183 = vpack.c.bf16 %v181, %v180
    %v186 = vunpack.c.l.b16 %v182
    %v187 = vunpack.c.h.b16 %v182
    %v188 = vunpack.c.l.b16 %v183
    %v189 = vunpack.c.h.b16 %v183
    %v190 = vpack.c.b16 %v186, %v186
    %v191 = vpack.c.b16 %v187, %v187
    %v192 = vpack.c.b16 %v188, %v188
    %v193 = vpack.c.b16 %v189, %v189
    %vm198 = vcmask 60416
    %199 = vst.msk [vmem:[#allocation7] sm:$0xf] %vm198, %v190
    %200 = vst.msk [vmem:[#allocation7 + $0x4] sm:$0xf] %vm198, %v191
    %201 = vst.msk [vmem:[#allocation7 + $0x8] sm:$0xf] %vm198, %v192
    %202 = vst.msk [vmem:[#allocation7 + $0xc] sm:$0xf] %vm198, %v193
    %s203 = scalar_lea.vmem [#allocation2], 16
    %v204 = vld [vmem:[%s203] sm:$0xf]
    %v205 = vld [vmem:[%s203 + $0x4] sm:$0xf]
    %v206 = vld [vmem:[%s203 + $0x8] sm:$0xf]
    %v207 = vld [vmem:[%s203 + $0xc] sm:$0xf]
    %v208 = vld [vmem:[#allocation5] sm:$0xf]
    %v209 = vld [vmem:[#allocation5 + $0x4] sm:$0xf]
    %v210 = vld [vmem:[#allocation5 + $0x8] sm:$0xf]
    %v211 = vld [vmem:[#allocation5 + $0xc] sm:$0xf]
    %v212 = vld [vmem:[#allocation5 + $0x10] sm:$0xf]
    %v213 = vld [vmem:[#allocation5 + $0x14] sm:$0xf]
    %v214 = vld [vmem:[#allocation5 + $0x18] sm:$0xf]
    %v215 = vld [vmem:[#allocation5 + $0x1c] sm:$0xf]
    %v216 = vld [vmem:[#allocation5 + $0x20] sm:$0xf]
    %v217 = vld [vmem:[#allocation5 + $0x24] sm:$0xf]
    %v218 = vld [vmem:[#allocation5 + $0x28] sm:$0xf]
    %v219 = vld [vmem:[#allocation5 + $0x2c] sm:$0xf]
    %v220 = vld [vmem:[#allocation5 + $0x30] sm:$0xf]
    %v221 = vld [vmem:[#allocation5 + $0x34] sm:$0xf]
    %v222 = vld [vmem:[#allocation5 + $0x38] sm:$0xf]
    %v223 = vld [vmem:[#allocation5 + $0x3c] sm:$0xf]
    %v228 = vunpack.c.l.b16 %v204
    %v229 = vunpack.c.l.b16 %v205
    %v230 = vunpack.c.l.b16 %v206
    %v231 = vunpack.c.l.b16 %v207
    %v232 = vpack.c.b16 %v229, %v228
    %v233 = vpack.c.b16 %v231, %v230
    %v252 = vunpack.c.l.b16 %v208
    %v253 = vunpack.c.l.b16 %v209
    %v254 = vunpack.c.l.b16 %v210
    %v255 = vunpack.c.l.b16 %v211
    %v256 = vunpack.c.l.b16 %v212
    %v257 = vunpack.c.l.b16 %v213
    %v258 = vunpack.c.l.b16 %v214
    %v259 = vunpack.c.l.b16 %v215
    %v260 = vunpack.c.l.b16 %v216
    %v261 = vunpack.c.l.b16 %v217
    %v262 = vunpack.c.l.b16 %v218
    %v263 = vunpack.c.l.b16 %v219
    %v264 = vunpack.c.l.b16 %v220
    %v265 = vunpack.c.l.b16 %v221
    %v266 = vunpack.c.l.b16 %v222
    %v267 = vunpack.c.l.b16 %v223
    %v268 = vpack.c.b16 %v253, %v252
    %v269 = vpack.c.b16 %v255, %v254
    %v270 = vpack.c.b16 %v257, %v256
    %v271 = vpack.c.b16 %v259, %v258
    %v272 = vpack.c.b16 %v261, %v260
    %v273 = vpack.c.b16 %v263, %v262
    %v274 = vpack.c.b16 %v265, %v264
    %v275 = vpack.c.b16 %v267, %v266
    %284 = vmatprep.subr.bf16.mxu0 0
    %285 = vmatpush1.bf16.msra.mxu0 %v268
    %286 = vmatprep.subr.bf16.mxu0 0
    %287 = vmatpush1.bf16.msra.mxu0 %v269
    %288 = vmatprep.subr.bf16.mxu0 0
    %289 = vmatpush1.bf16.msra.mxu0 %v270
    %290 = vmatprep.subr.bf16.mxu0 0
    %291 = vmatpush1.bf16.msra.mxu0 %v271
    %292 = vmatprep.subr.bf16.mxu0 0
    %293 = vmatpush1.bf16.msra.mxu0 %v272
    %294 = vmatprep.subr.bf16.mxu0 0
    %295 = vmatpush1.bf16.msra.mxu0 %v273
    %296 = vmatprep.subr.bf16.mxu0 0
    %297 = vmatpush1.bf16.msra.mxu0 %v274
    %298 = vmatprep.subr.bf16.mxu0 0
    %299 = vmatpush1.bf16.msra.mxu0 %v275
    %300 = vmatprep.subr.bf16.mxu0 0
    %301 = vmatpush1.bf16.msra.mxu0 0
    %302 = vmatprep.subr.bf16.mxu0 0
    %303 = vmatpush1.bf16.msra.mxu0 0
    %304 = vmatprep.subr.bf16.mxu0 0
    %305 = vmatpush1.bf16.msra.mxu0 0
    %306 = vmatprep.subr.bf16.mxu0 0
    %307 = vmatpush1.bf16.msra.mxu0 0
    %308 = vmatprep.subr.bf16.mxu0 0
    %309 = vmatpush1.bf16.msra.mxu0 0
    %310 = vmatprep.subr.bf16.mxu0 0
    %311 = vmatpush1.bf16.msra.mxu0 0
    %312 = vmatprep.subr.bf16.mxu0 0
    %313 = vmatpush1.bf16.msra.mxu0 0
    %314 = vmatprep.subr.bf16.mxu0 0
    %315 = vmatpush1.bf16.msra.mxu0 0
    %316 = vmatprep.mubr.bf16.mxu0 0
    %317 = vmatmul.mubr.bf16.gmra.mrb[0].mxu0 %v232
    %v318 = vpop.f32.mrb[0].mxu0
    %v319 = vadd.f32 0.0, %v318
    %v320 = vpop.f32.mrb[0].mxu0
    %v321 = vpop.f32.mrb[0].mxu0
    %v322 = vadd.f32 0.0, %v321
    %v323 = vpop.f32.mrb[0].mxu0
    %324 = vmatprep.mubr.bf16.mxu0 0
    %325 = vmatmul.mubr.bf16.gmra.mrb[0].mxu0 %v233
    %v326 = vpop.f32.mrb[0].mxu0
    %v327 = vadd.f32 0.0, %v326
    %v328 = vpop.f32.mrb[0].mxu0
    %v329 = vpop.f32.mrb[0].mxu0
    %v330 = vadd.f32 0.0, %v329
    %v331 = vpop.f32.mrb[0].mxu0
    %332 = vdwg.mxu0
    %vm333 = vcmp.ge.f32.partialorder %v319, 0.0
    %vm334 = vcmp.ge.f32.partialorder %v322, 0.0
    %vm335 = vcmp.ge.f32.partialorder %v327, 0.0
    %vm336 = vcmp.ge.f32.partialorder %v330, 0.0
    %v337 = vmul.f32 %v319, 0.2
    %v338 = vmul.f32 %v322, 0.2
    %v339 = vmul.f32 %v327, 0.2
    %v340 = vmul.f32 %v330, 0.2
    %v341 = vsel %vm333, %v319, %v337
    %v342 = vsel %vm334, %v322, %v338
    %v343 = vsel %vm335, %v327, %v339
    %v344 = vsel %vm336, %v330, %v340
    %v345 = vpack.c.bf16 %v342, %v341
    %v346 = vpack.c.bf16 %v344, %v343
    %v349 = vunpack.c.l.b16 %v345
    %v350 = vunpack.c.h.b16 %v345
    %v351 = vunpack.c.l.b16 %v346
    %v352 = vunpack.c.h.b16 %v346
    %v353 = vpack.c.b16 %v349, %v349
    %v354 = vpack.c.b16 %v350, %v350
    %v355 = vpack.c.b16 %v351, %v351
    %v356 = vpack.c.b16 %v352, %v352
    %357 = vrot.lane.b32.xlu0 %v353, 8
    %v358 = vpop.permute.xlu0 %357
    %359 = vrot.lane.b32.xlu0 %v354, 8
    %v360 = vpop.permute.xlu0 %359
    %361 = vrot.lane.b32.xlu0 %v355, 8
    %v362 = vpop.permute.xlu0 %361
    %363 = vrot.lane.b32.xlu0 %v356, 8
    %v364 = vpop.permute.xlu0 %363
    %vm369 = vcmask 126016
    %370 = vst.msk [vmem:[#allocation7] sm:$0xf] %vm369, %v358
    %371 = vst.msk [vmem:[#allocation7 + $0x4] sm:$0xf] %vm369, %v360
    %372 = vst.msk [vmem:[#allocation7 + $0x8] sm:$0xf] %vm369, %v362
    %373 = vst.msk [vmem:[#allocation7 + $0xc] sm:$0xf] %vm369, %v364
    %s374 = scalar_lea.vmem [#allocation2], 32
    %v375 = vld [vmem:[%s374] sm:$0xf]
    %v376 = vld [vmem:[%s374 + $0x4] sm:$0xf]
    %v377 = vld [vmem:[%s374 + $0x8] sm:$0xf]
    %v378 = vld [vmem:[%s374 + $0xc] sm:$0xf]
    %v379 = vld [vmem:[#allocation5] sm:$0xf]
    %v380 = vld [vmem:[#allocation5 + $0x4] sm:$0xf]
    %v381 = vld [vmem:[#allocation5 + $0x8] sm:$0xf]
    %v382 = vld [vmem:[#allocation5 + $0xc] sm:$0xf]
    %v383 = vld [vmem:[#allocation5 + $0x10] sm:$0xf]
    %v384 = vld [vmem:[#allocation5 + $0x14] sm:$0xf]
    %v385 = vld [vmem:[#allocation5 + $0x18] sm:$0xf]
    %v386 = vld [vmem:[#allocation5 + $0x1c] sm:$0xf]
    %v387 = vld [vmem:[#allocation5 + $0x20] sm:$0xf]
    %v388 = vld [vmem:[#allocation5 + $0x24] sm:$0xf]
    %v389 = vld [vmem:[#allocation5 + $0x28] sm:$0xf]
    %v390 = vld [vmem:[#allocation5 + $0x2c] sm:$0xf]
    %v391 = vld [vmem:[#allocation5 + $0x30] sm:$0xf]
    %v392 = vld [vmem:[#allocation5 + $0x34] sm:$0xf]
    %v393 = vld [vmem:[#allocation5 + $0x38] sm:$0xf]
    %v394 = vld [vmem:[#allocation5 + $0x3c] sm:$0xf]
    %v399 = vunpack.c.l.b16 %v375
    %v400 = vunpack.c.l.b16 %v376
    %v401 = vunpack.c.l.b16 %v377
    %v402 = vunpack.c.l.b16 %v378
    %v403 = vpack.c.b16 %v400, %v399
    %v404 = vpack.c.b16 %v402, %v401
    %v423 = vunpack.c.l.b16 %v379
    %v424 = vunpack.c.l.b16 %v380
    %v425 = vunpack.c.l.b16 %v381
    %v426 = vunpack.c.l.b16 %v382
    %v427 = vunpack.c.l.b16 %v383
    %v428 = vunpack.c.l.b16 %v384
    %v429 = vunpack.c.l.b16 %v385
    %v430 = vunpack.c.l.b16 %v386
    %v431 = vunpack.c.l.b16 %v387
    %v432 = vunpack.c.l.b16 %v388
    %v433 = vunpack.c.l.b16 %v389
    %v434 = vunpack.c.l.b16 %v390
    %v435 = vunpack.c.l.b16 %v391
    %v436 = vunpack.c.l.b16 %v392
    %v437 = vunpack.c.l.b16 %v393
    %v438 = vunpack.c.l.b16 %v394
    %v439 = vpack.c.b16 %v424, %v423
    %v440 = vpack.c.b16 %v426, %v425
    %v441 = vpack.c.b16 %v428, %v427
    %v442 = vpack.c.b16 %v430, %v429
    %v443 = vpack.c.b16 %v432, %v431
    %v444 = vpack.c.b16 %v434, %v433
    %v445 = vpack.c.b16 %v436, %v435
    %v446 = vpack.c.b16 %v438, %v437
    %455 = vmatprep.subr.bf16.mxu0 0
    %456 = vmatpush1.bf16.msra.mxu0 %v439
    %457 = vmatprep.subr.bf16.mxu0 0
    %458 = vmatpush1.bf16.msra.mxu0 %v440
    %459 = vmatprep.subr.bf16.mxu0 0
    %460 = vmatpush1.bf16.msra.mxu0 %v441
    %461 = vmatprep.subr.bf16.mxu0 0
    %462 = vmatpush1.bf16.msra.mxu0 %v442
    %463 = vmatprep.subr.bf16.mxu0 0
    %464 = vmatpush1.bf16.msra.mxu0 %v443
    %465 = vmatprep.subr.bf16.mxu0 0
    %466 = vmatpush1.bf16.msra.mxu0 %v444
    %467 = vmatprep.subr.bf16.mxu0 0
    %468 = vmatpush1.bf16.msra.mxu0 %v445
    %469 = vmatprep.subr.bf16.mxu0 0
    %470 = vmatpush1.bf16.msra.mxu0 %v446
    %471 = vmatprep.subr.bf16.mxu0 0
    %472 = vmatpush1.bf16.msra.mxu0 0
    %473 = vmatprep.subr.bf16.mxu0 0
    %474 = vmatpush1.bf16.msra.mxu0 0
    %475 = vmatprep.subr.bf16.mxu0 0
    %476 = vmatpush1.bf16.msra.mxu0 0
    %477 = vmatprep.subr.bf16.mxu0 0
    %478 = vmatpush1.bf16.msra.mxu0 0
    %479 = vmatprep.subr.bf16.mxu0 0
    %480 = vmatpush1.bf16.msra.mxu0 0
    %481 = vmatprep.subr.bf16.mxu0 0
    %482 = vmatpush1.bf16.msra.mxu0 0
    %483 = vmatprep.subr.bf16.mxu0 0
    %484 = vmatpush1.bf16.msra.mxu0 0
    %485 = vmatprep.subr.bf16.mxu0 0
    %486 = vmatpush1.bf16.msra.mxu0 0
    %487 = vmatprep.mubr.bf16.mxu0 0
    %488 = vmatmul.mubr.bf16.gmra.mrb[0].mxu0 %v403
    %v489 = vpop.f32.mrb[0].mxu0
    %v490 = vadd.f32 0.0, %v489
    %v491 = vpop.f32.mrb[0].mxu0
    %v492 = vpop.f32.mrb[0].mxu0
    %v493 = vadd.f32 0.0, %v492
    %v494 = vpop.f32.mrb[0].mxu0
    %495 = vmatprep.mubr.bf16.mxu0 0
    %496 = vmatmul.mubr.bf16.gmra.mrb[0].mxu0 %v404
    %v497 = vpop.f32.mrb[0].mxu0
    %v498 = vadd.f32 0.0, %v497
    %v499 = vpop.f32.mrb[0].mxu0
    %v500 = vpop.f32.mrb[0].mxu0
    %v501 = vadd.f32 0.0, %v500
    %v502 = vpop.f32.mrb[0].mxu0
    %503 = vdwg.mxu0
    %vm504 = vcmp.ge.f32.partialorder %v490, 0.0
    %vm505 = vcmp.ge.f32.partialorder %v493, 0.0
    %vm506 = vcmp.ge.f32.partialorder %v498, 0.0
    %vm507 = vcmp.ge.f32.partialorder %v501, 0.0
    %v508 = vmul.f32 %v490, 0.2
    %v509 = vmul.f32 %v493, 0.2
    %v510 = vmul.f32 %v498, 0.2
    %v511 = vmul.f32 %v501, 0.2
    %v512 = vsel %vm504, %v490, %v508
    %v513 = vsel %vm505, %v493, %v509
    %v514 = vsel %vm506, %v498, %v510
    %v515 = vsel %vm507, %v501, %v511
    %v516 = vpack.c.bf16 %v513, %v512
    %v517 = vpack.c.bf16 %v515, %v514
    %v520 = vunpack.c.l.b16 %v516
    %v521 = vunpack.c.h.b16 %v516
    %v522 = vunpack.c.l.b16 %v517
    %v523 = vunpack.c.h.b16 %v517
    %v524 = vpack.c.b16 %v520, %v520
    %v525 = vpack.c.b16 %v521, %v521
    %v526 = vpack.c.b16 %v522, %v522
    %v527 = vpack.c.b16 %v523, %v523
    %528 = vrot.lane.b32.xlu0 %v524, 16
    %v529 = vpop.permute.xlu0 %528
    %530 = vrot.lane.b32.xlu0 %v525, 16
    %v531 = vpop.permute.xlu0 %530
    %532 = vrot.lane.b32.xlu0 %v526, 16
    %v533 = vpop.permute.xlu0 %532
    %534 = vrot.lane.b32.xlu0 %v527, 16
    %v535 = vpop.permute.xlu0 %534
    %vm540 = vcmask 191616
    %541 = vst.msk [vmem:[#allocation7] sm:$0xf] %vm540, %v529
    %542 = vst.msk [vmem:[#allocation7 + $0x4] sm:$0xf] %vm540, %v531
    %543 = vst.msk [vmem:[#allocation7 + $0x8] sm:$0xf] %vm540, %v533
    %544 = vst.msk [vmem:[#allocation7 + $0xc] sm:$0xf] %vm540, %v535
    %s545 = scalar_lea.vmem [#allocation2], 48
    %v546 = vld [vmem:[%s545] sm:$0xf]
    %v547 = vld [vmem:[%s545 + $0x4] sm:$0xf]
    %v548 = vld [vmem:[%s545 + $0x8] sm:$0xf]
    %v549 = vld [vmem:[%s545 + $0xc] sm:$0xf]
    %v550 = vld [vmem:[#allocation5] sm:$0xf]
    %v551 = vld [vmem:[#allocation5 + $0x4] sm:$0xf]
    %v552 = vld [vmem:[#allocation5 + $0x8] sm:$0xf]
    %v553 = vld [vmem:[#allocation5 + $0xc] sm:$0xf]
    %v554 = vld [vmem:[#allocation5 + $0x10] sm:$0xf]
    %v555 = vld [vmem:[#allocation5 + $0x14] sm:$0xf]
    %v556 = vld [vmem:[#allocation5 + $0x18] sm:$0xf]
    %v557 = vld [vmem:[#allocation5 + $0x1c] sm:$0xf]
    %v558 = vld [vmem:[#allocation5 + $0x20] sm:$0xf]
    %v559 = vld [vmem:[#allocation5 + $0x24] sm:$0xf]
    %v560 = vld [vmem:[#allocation5 + $0x28] sm:$0xf]
    %v561 = vld [vmem:[#allocation5 + $0x2c] sm:$0xf]
    %v562 = vld [vmem:[#allocation5 + $0x30] sm:$0xf]
    %v563 = vld [vmem:[#allocation5 + $0x34] sm:$0xf]
    %v564 = vld [vmem:[#allocation5 + $0x38] sm:$0xf]
    %v565 = vld [vmem:[#allocation5 + $0x3c] sm:$0xf]
    %v570 = vunpack.c.l.b16 %v546
    %v571 = vunpack.c.l.b16 %v547
    %v572 = vunpack.c.l.b16 %v548
    %v573 = vunpack.c.l.b16 %v549
    %v574 = vpack.c.b16 %v571, %v570
    %v575 = vpack.c.b16 %v573, %v572
    %v594 = vunpack.c.l.b16 %v550
    %v595 = vunpack.c.l.b16 %v551
    %v596 = vunpack.c.l.b16 %v552
    %v597 = vunpack.c.l.b16 %v553
    %v598 = vunpack.c.l.b16 %v554
    %v599 = vunpack.c.l.b16 %v555
    %v600 = vunpack.c.l.b16 %v556
    %v601 = vunpack.c.l.b16 %v557
    %v602 = vunpack.c.l.b16 %v558
    %v603 = vunpack.c.l.b16 %v559
    %v604 = vunpack.c.l.b16 %v560
    %v605 = vunpack.c.l.b16 %v561
    %v606 = vunpack.c.l.b16 %v562
    %v607 = vunpack.c.l.b16 %v563
    %v608 = vunpack.c.l.b16 %v564
    %v609 = vunpack.c.l.b16 %v565
    %v610 = vpack.c.b16 %v595, %v594
    %v611 = vpack.c.b16 %v597, %v596
    %v612 = vpack.c.b16 %v599, %v598
    %v613 = vpack.c.b16 %v601, %v600
    %v614 = vpack.c.b16 %v603, %v602
    %v615 = vpack.c.b16 %v605, %v604
    %v616 = vpack.c.b16 %v607, %v606
    %v617 = vpack.c.b16 %v609, %v608
    %626 = vmatprep.subr.bf16.mxu0 0
    %627 = vmatpush1.bf16.msra.mxu0 %v610
    %628 = vmatprep.subr.bf16.mxu0 0
    %629 = vmatpush1.bf16.msra.mxu0 %v611
    %630 = vmatprep.subr.bf16.mxu0 0
    %631 = vmatpush1.bf16.msra.mxu0 %v612
    %632 = vmatprep.subr.bf16.mxu0 0
    %633 = vmatpush1.bf16.msra.mxu0 %v613
    %634 = vmatprep.subr.bf16.mxu0 0
    %635 = vmatpush1.bf16.msra.mxu0 %v614
    %636 = vmatprep.subr.bf16.mxu0 0
    %637 = vmatpush1.bf16.msra.mxu0 %v615
    %638 = vmatprep.subr.bf16.mxu0 0
    %639 = vmatpush1.bf16.msra.mxu0 %v616
    %640 = vmatprep.subr.bf16.mxu0 0
    %641 = vmatpush1.bf16.msra.mxu0 %v617
    %642 = vmatprep.subr.bf16.mxu0 0
    %643 = vmatpush1.bf16.msra.mxu0 0
    %644 = vmatprep.subr.bf16.mxu0 0
    %645 = vmatpush1.bf16.msra.mxu0 0
    %646 = vmatprep.subr.bf16.mxu0 0
    %647 = vmatpush1.bf16.msra.mxu0 0
    %648 = vmatprep.subr.bf16.mxu0 0
    %649 = vmatpush1.bf16.msra.mxu0 0
    %650 = vmatprep.subr.bf16.mxu0 0
    %651 = vmatpush1.bf16.msra.mxu0 0
    %652 = vmatprep.subr.bf16.mxu0 0
    %653 = vmatpush1.bf16.msra.mxu0 0
    %654 = vmatprep.subr.bf16.mxu0 0
    %655 = vmatpush1.bf16.msra.mxu0 0
    %656 = vmatprep.subr.bf16.mxu0 0
    %657 = vmatpush1.bf16.msra.mxu0 0
    %658 = vmatprep.mubr.bf16.mxu0 0
    %659 = vmatmul.mubr.bf16.gmra.mrb[0].mxu0 %v574
    %v660 = vpop.f32.mrb[0].mxu0
    %v661 = vadd.f32 0.0, %v660
    %v662 = vpop.f32.mrb[0].mxu0
    %v663 = vpop.f32.mrb[0].mxu0
    %v664 = vadd.f32 0.0, %v663
    %v665 = vpop.f32.mrb[0].mxu0
    %666 = vmatprep.mubr.bf16.mxu0 0
    %667 = vmatmul.mubr.bf16.gmra.mrb[0].mxu0 %v575
    %v668 = vpop.f32.mrb[0].mxu0
    %v669 = vadd.f32 0.0, %v668
    %v670 = vpop.f32.mrb[0].mxu0
    %v671 = vpop.f32.mrb[0].mxu0
    %v672 = vadd.f32 0.0, %v671
    %v673 = vpop.f32.mrb[0].mxu0
    %674 = vdwg.mxu0
    %vm675 = vcmp.ge.f32.partialorder %v661, 0.0
    %vm676 = vcmp.ge.f32.partialorder %v664, 0.0
    %vm677 = vcmp.ge.f32.partialorder %v669, 0.0
    %vm678 = vcmp.ge.f32.partialorder %v672, 0.0
    %v679 = vmul.f32 %v661, 0.2
    %v680 = vmul.f32 %v664, 0.2
    %v681 = vmul.f32 %v669, 0.2
    %v682 = vmul.f32 %v672, 0.2
    %v683 = vsel %vm675, %v661, %v679
    %v684 = vsel %vm676, %v664, %v680
    %v685 = vsel %vm677, %v669, %v681
    %v686 = vsel %vm678, %v672, %v682
    %v687 = vpack.c.bf16 %v684, %v683
    %v688 = vpack.c.bf16 %v686, %v685
    %v691 = vunpack.c.l.b16 %v687
    %v692 = vunpack.c.h.b16 %v687
    %v693 = vunpack.c.l.b16 %v688
    %v694 = vunpack.c.h.b16 %v688
    %v695 = vpack.c.b16 %v691, %v691
    %v696 = vpack.c.b16 %v692, %v692
    %v697 = vpack.c.b16 %v693, %v693
    %v698 = vpack.c.b16 %v694, %v694
    %699 = vrot.lane.b32.xlu0 %v695, 24
    %v700 = vpop.permute.xlu0 %699
    %701 = vrot.lane.b32.xlu0 %v696, 24
    %v702 = vpop.permute.xlu0 %701
    %703 = vrot.lane.b32.xlu0 %v697, 24
    %v704 = vpop.permute.xlu0 %703
    %705 = vrot.lane.b32.xlu0 %v698, 24
    %v706 = vpop.permute.xlu0 %705
    %vm711 = vcmask 257216
    %712 = vst.msk [vmem:[#allocation7] sm:$0xf] %vm711, %v700
    %713 = vst.msk [vmem:[#allocation7 + $0x4] sm:$0xf] %vm711, %v702
    %714 = vst.msk [vmem:[#allocation7 + $0x8] sm:$0xf] %vm711, %v704
    %715 = vst.msk [vmem:[#allocation7 + $0xc] sm:$0xf] %vm711, %v706
    %s716 = scalar_lea.vmem [#allocation2], 64
    %v717 = vld [vmem:[%s716] sm:$0xf]
    %v718 = vld [vmem:[%s716 + $0x4] sm:$0xf]
    %v719 = vld [vmem:[%s716 + $0x8] sm:$0xf]
    %v720 = vld [vmem:[%s716 + $0xc] sm:$0xf]
    %v721 = vld [vmem:[#allocation5] sm:$0xf]
    %v722 = vld [vmem:[#allocation5 + $0x4] sm:$0xf]
    %v723 = vld [vmem:[#allocation5 + $0x8] sm:$0xf]
    %v724 = vld [vmem:[#allocation5 + $0xc] sm:$0xf]
    %v725 = vld [vmem:[#allocation5 + $0x10] sm:$0xf]
    %v726 = vld [vmem:[#allocation5 + $0x14] sm:$0xf]
    %v727 = vld [vmem:[#allocation5 + $0x18] sm:$0xf]
    %v728 = vld [vmem:[#allocation5 + $0x1c] sm:$0xf]
    %v729 = vld [vmem:[#allocation5 + $0x20] sm:$0xf]
    %v730 = vld [vmem:[#allocation5 + $0x24] sm:$0xf]
    %v731 = vld [vmem:[#allocation5 + $0x28] sm:$0xf]
    %v732 = vld [vmem:[#allocation5 + $0x2c] sm:$0xf]
    %v733 = vld [vmem:[#allocation5 + $0x30] sm:$0xf]
    %v734 = vld [vmem:[#allocation5 + $0x34] sm:$0xf]
    %v735 = vld [vmem:[#allocation5 + $0x38] sm:$0xf]
    %v736 = vld [vmem:[#allocation5 + $0x3c] sm:$0xf]
    %v741 = vunpack.c.l.b16 %v717
    %v742 = vunpack.c.l.b16 %v718
    %v743 = vunpack.c.l.b16 %v719
    %v744 = vunpack.c.l.b16 %v720
    %v745 = vpack.c.b16 %v742, %v741
    %v746 = vpack.c.b16 %v744, %v743
    %v765 = vunpack.c.l.b16 %v721
    %v766 = vunpack.c.l.b16 %v722
    %v767 = vunpack.c.l.b16 %v723
    %v768 = vunpack.c.l.b16 %v724
    %v769 = vunpack.c.l.b16 %v725
    %v770 = vunpack.c.l.b16 %v726
    %v771 = vunpack.c.l.b16 %v727
    %v772 = vunpack.c.l.b16 %v728
    %v773 = vunpack.c.l.b16 %v729
    %v774 = vunpack.c.l.b16 %v730
    %v775 = vunpack.c.l.b16 %v731
    %v776 = vunpack.c.l.b16 %v732
    %v777 = vunpack.c.l.b16 %v733
    %v778 = vunpack.c.l.b16 %v734
    %v779 = vunpack.c.l.b16 %v735
    %v780 = vunpack.c.l.b16 %v736
    %v781 = vpack.c.b16 %v766, %v765
    %v782 = vpack.c.b16 %v768, %v767
    %v783 = vpack.c.b16 %v770, %v769
    %v784 = vpack.c.b16 %v772, %v771
    %v785 = vpack.c.b16 %v774, %v773
    %v786 = vpack.c.b16 %v776, %v775
    %v787 = vpack.c.b16 %v778, %v777
    %v788 = vpack.c.b16 %v780, %v779
    %797 = vmatprep.subr.bf16.mxu0 0
    %798 = vmatpush1.bf16.msra.mxu0 %v781
    %799 = vmatprep.subr.bf16.mxu0 0
    %800 = vmatpush1.bf16.msra.mxu0 %v782
    %801 = vmatprep.subr.bf16.mxu0 0
    %802 = vmatpush1.bf16.msra.mxu0 %v783
    %803 = vmatprep.subr.bf16.mxu0 0
    %804 = vmatpush1.bf16.msra.mxu0 %v784
    %805 = vmatprep.subr.bf16.mxu0 0
    %806 = vmatpush1.bf16.msra.mxu0 %v785
    %807 = vmatprep.subr.bf16.mxu0 0
    %808 = vmatpush1.bf16.msra.mxu0 %v786
    %809 = vmatprep.subr.bf16.mxu0 0
    %810 = vmatpush1.bf16.msra.mxu0 %v787
    %811 = vmatprep.subr.bf16.mxu0 0
    %812 = vmatpush1.bf16.msra.mxu0 %v788
    %813 = vmatprep.subr.bf16.mxu0 0
    %814 = vmatpush1.bf16.msra.mxu0 0
    %815 = vmatprep.subr.bf16.mxu0 0
    %816 = vmatpush1.bf16.msra.mxu0 0
    %817 = vmatprep.subr.bf16.mxu0 0
    %818 = vmatpush1.bf16.msra.mxu0 0
    %819 = vmatprep.subr.bf16.mxu0 0
    %820 = vmatpush1.bf16.msra.mxu0 0
    %821 = vmatprep.subr.bf16.mxu0 0
    %822 = vmatpush1.bf16.msra.mxu0 0
    %823 = vmatprep.subr.bf16.mxu0 0
    %824 = vmatpush1.bf16.msra.mxu0 0
    %825 = vmatprep.subr.bf16.mxu0 0
    %826 = vmatpush1.bf16.msra.mxu0 0
    %827 = vmatprep.subr.bf16.mxu0 0
    %828 = vmatpush1.bf16.msra.mxu0 0
    %829 = vmatprep.mubr.bf16.mxu0 0
    %830 = vmatmul.mubr.bf16.gmra.mrb[0].mxu0 %v745
    %v831 = vpop.f32.mrb[0].mxu0
    %v832 = vadd.f32 0.0, %v831
    %v833 = vpop.f32.mrb[0].mxu0
    %v834 = vpop.f32.mrb[0].mxu0
    %v835 = vadd.f32 0.0, %v834
    %v836 = vpop.f32.mrb[0].mxu0
    %837 = vmatprep.mubr.bf16.mxu0 0
    %838 = vmatmul.mubr.bf16.gmra.mrb[0].mxu0 %v746
    %v839 = vpop.f32.mrb[0].mxu0
    %v840 = vadd.f32 0.0, %v839
    %v841 = vpop.f32.mrb[0].mxu0
    %v842 = vpop.f32.mrb[0].mxu0
    %v843 = vadd.f32 0.0, %v842
    %v844 = vpop.f32.mrb[0].mxu0
    %845 = vdwg.mxu0
    %vm846 = vcmp.ge.f32.partialorder %v832, 0.0
    %vm847 = vcmp.ge.f32.partialorder %v835, 0.0
    %vm848 = vcmp.ge.f32.partialorder %v840, 0.0
    %vm849 = vcmp.ge.f32.partialorder %v843, 0.0
    %v850 = vmul.f32 %v832, 0.2
    %v851 = vmul.f32 %v835, 0.2
    %v852 = vmul.f32 %v840, 0.2
    %v853 = vmul.f32 %v843, 0.2
    %v854 = vsel %vm846, %v832, %v850
    %v855 = vsel %vm847, %v835, %v851
    %v856 = vsel %vm848, %v840, %v852
    %v857 = vsel %vm849, %v843, %v853
    %v858 = vpack.c.bf16 %v855, %v854
    %v859 = vpack.c.bf16 %v857, %v856
    %v862 = vunpack.c.l.b16 %v858
    %v863 = vunpack.c.h.b16 %v858
    %v864 = vunpack.c.l.b16 %v859
    %v865 = vunpack.c.h.b16 %v859
    %v866 = vpack.c.b16 %v862, %v862
    %v867 = vpack.c.b16 %v863, %v863
    %v868 = vpack.c.b16 %v864, %v864
    %v869 = vpack.c.b16 %v865, %v865
    %870 = vrot.lane.b32.xlu0 %v866, 32
    %v871 = vpop.permute.xlu0 %870
    %872 = vrot.lane.b32.xlu0 %v867, 32
    %v873 = vpop.permute.xlu0 %872
    %874 = vrot.lane.b32.xlu0 %v868, 32
    %v875 = vpop.permute.xlu0 %874
    %876 = vrot.lane.b32.xlu0 %v869, 32
    %v877 = vpop.permute.xlu0 %876
    %vm882 = vcmask 322816
    %883 = vst.msk [vmem:[#allocation7] sm:$0xf] %vm882, %v871
    %884 = vst.msk [vmem:[#allocation7 + $0x4] sm:$0xf] %vm882, %v873
    %885 = vst.msk [vmem:[#allocation7 + $0x8] sm:$0xf] %vm882, %v875
    %886 = vst.msk [vmem:[#allocation7 + $0xc] sm:$0xf] %vm882, %v877
    %s887 = scalar_lea.vmem [#allocation2], 80
    %v888 = vld [vmem:[%s887] sm:$0xf]
    %v889 = vld [vmem:[%s887 + $0x4] sm:$0xf]
    %v890 = vld [vmem:[%s887 + $0x8] sm:$0xf]
    %v891 = vld [vmem:[%s887 + $0xc] sm:$0xf]
    %v892 = vld [vmem:[#allocation5] sm:$0xf]
    %v893 = vld [vmem:[#allocation5 + $0x4] sm:$0xf]
    %v894 = vld [vmem:[#allocation5 + $0x8] sm:$0xf]
    %v895 = vld [vmem:[#allocation5 + $0xc] sm:$0xf]
    %v896 = vld [vmem:[#allocation5 + $0x10] sm:$0xf]
    %v897 = vld [vmem:[#allocation5 + $0x14] sm:$0xf]
    %v898 = vld [vmem:[#allocation5 + $0x18] sm:$0xf]
    %v899 = vld [vmem:[#allocation5 + $0x1c] sm:$0xf]
    %v900 = vld [vmem:[#allocation5 + $0x20] sm:$0xf]
    %v901 = vld [vmem:[#allocation5 + $0x24] sm:$0xf]
    %v902 = vld [vmem:[#allocation5 + $0x28] sm:$0xf]
    %v903 = vld [vmem:[#allocation5 + $0x2c] sm:$0xf]
    %v904 = vld [vmem:[#allocation5 + $0x30] sm:$0xf]
    %v905 = vld [vmem:[#allocation5 + $0x34] sm:$0xf]
    %v906 = vld [vmem:[#allocation5 + $0x38] sm:$0xf]
    %v907 = vld [vmem:[#allocation5 + $0x3c] sm:$0xf]
    %v912 = vunpack.c.l.b16 %v888
    %v913 = vunpack.c.l.b16 %v889
    %v914 = vunpack.c.l.b16 %v890
    %v915 = vunpack.c.l.b16 %v891
    %v916 = vpack.c.b16 %v913, %v912
    %v917 = vpack.c.b16 %v915, %v914
    %v936 = vunpack.c.l.b16 %v892
    %v937 = vunpack.c.l.b16 %v893
    %v938 = vunpack.c.l.b16 %v894
    %v939 = vunpack.c.l.b16 %v895
    %v940 = vunpack.c.l.b16 %v896
    %v941 = vunpack.c.l.b16 %v897
    %v942 = vunpack.c.l.b16 %v898
    %v943 = vunpack.c.l.b16 %v899
    %v944 = vunpack.c.l.b16 %v900
    %v945 = vunpack.c.l.b16 %v901
    %v946 = vunpack.c.l.b16 %v902
    %v947 = vunpack.c.l.b16 %v903
    %v948 = vunpack.c.l.b16 %v904
    %v949 = vunpack.c.l.b16 %v905
    %v950 = vunpack.c.l.b16 %v906
    %v951 = vunpack.c.l.b16 %v907
    %v952 = vpack.c.b16 %v937, %v936
    %v953 = vpack.c.b16 %v939, %v938
    %v954 = vpack.c.b16 %v941, %v940
    %v955 = vpack.c.b16 %v943, %v942
    %v956 = vpack.c.b16 %v945, %v944
    %v957 = vpack.c.b16 %v947, %v946
    %v958 = vpack.c.b16 %v949, %v948
    %v959 = vpack.c.b16 %v951, %v950
    %968 = vmatprep.subr.bf16.mxu0 0
    %969 = vmatpush1.bf16.msra.mxu0 %v952
    %970 = vmatprep.subr.bf16.mxu0 0
    %971 = vmatpush1.bf16.msra.mxu0 %v953
    %972 = vmatprep.subr.bf16.mxu0 0
    %973 = vmatpush1.bf16.msra.mxu0 %v954
    %974 = vmatprep.subr.bf16.mxu0 0
    %975 = vmatpush1.bf16.msra.mxu0 %v955
    %976 = vmatprep.subr.bf16.mxu0 0
    %977 = vmatpush1.bf16.msra.mxu0 %v956
    %978 = vmatprep.subr.bf16.mxu0 0
    %979 = vmatpush1.bf16.msra.mxu0 %v957
    %980 = vmatprep.subr.bf16.mxu0 0
    %981 = vmatpush1.bf16.msra.mxu0 %v958
    %982 = vmatprep.subr.bf16.mxu0 0
    %983 = vmatpush1.bf16.msra.mxu0 %v959
    %984 = vmatprep.subr.bf16.mxu0 0
    %985 = vmatpush1.bf16.msra.mxu0 0
    %986 = vmatprep.subr.bf16.mxu0 0
    %987 = vmatpush1.bf16.msra.mxu0 0
    %988 = vmatprep.subr.bf16.mxu0 0
    %989 = vmatpush1.bf16.msra.mxu0 0
    %990 = vmatprep.subr.bf16.mxu0 0
    %991 = vmatpush1.bf16.msra.mxu0 0
    %992 = vmatprep.subr.bf16.mxu0 0
    %993 = vmatpush1.bf16.msra.mxu0 0
    %994 = vmatprep.subr.bf16.mxu0 0
    %995 = vmatpush1.bf16.msra.mxu0 0
    %996 = vmatprep.subr.bf16.mxu0 0
    %997 = vmatpush1.bf16.msra.mxu0 0
    %998 = vmatprep.subr.bf16.mxu0 0
    %999 = vmatpush1.bf16.msra.mxu0 0
    %1000 = vmatprep.mubr.bf16.mxu0 0
    %1001 = vmatmul.mubr.bf16.gmra.mrb[0].mxu0 %v916
    %v1002 = vpop.f32.mrb[0].mxu0
    %v1003 = vadd.f32 0.0, %v1002
    %v1004 = vpop.f32.mrb[0].mxu0
    %v1005 = vpop.f32.mrb[0].mxu0
    %v1006 = vadd.f32 0.0, %v1005
    %v1007 = vpop.f32.mrb[0].mxu0
    %1008 = vmatprep.mubr.bf16.mxu0 0
    %1009 = vmatmul.mubr.bf16.gmra.mrb[0].mxu0 %v917
    %v1010 = vpop.f32.mrb[0].mxu0
    %v1011 = vadd.f32 0.0, %v1010
    %v1012 = vpop.f32.mrb[0].mxu0
    %v1013 = vpop.f32.mrb[0].mxu0
    %v1014 = vadd.f32 0.0, %v1013
    %v1015 = vpop.f32.mrb[0].mxu0
    %1016 = vdwg.mxu0
    %vm1017 = vcmp.ge.f32.partialorder %v1003, 0.0
    %vm1018 = vcmp.ge.f32.partialorder %v1006, 0.0
    %vm1019 = vcmp.ge.f32.partialorder %v1011, 0.0
    %vm1020 = vcmp.ge.f32.partialorder %v1014, 0.0
    %v1021 = vmul.f32 %v1003, 0.2
    %v1022 = vmul.f32 %v1006, 0.2
    %v1023 = vmul.f32 %v1011, 0.2
    %v1024 = vmul.f32 %v1014, 0.2
    %v1025 = vsel %vm1017, %v1003, %v1021
    %v1026 = vsel %vm1018, %v1006, %v1022
    %v1027 = vsel %vm1019, %v1011, %v1023
    %v1028 = vsel %vm1020, %v1014, %v1024
    %v1029 = vpack.c.bf16 %v1026, %v1025
    %v1030 = vpack.c.bf16 %v1028, %v1027
    %v1033 = vunpack.c.l.b16 %v1029
    %v1034 = vunpack.c.h.b16 %v1029
    %v1035 = vunpack.c.l.b16 %v1030
    %v1036 = vunpack.c.h.b16 %v1030
    %v1037 = vpack.c.b16 %v1033, %v1033
    %v1038 = vpack.c.b16 %v1034, %v1034
    %v1039 = vpack.c.b16 %v1035, %v1035
    %v1040 = vpack.c.b16 %v1036, %v1036
    %1041 = vrot.lane.b32.xlu0 %v1037, 40
    %v1042 = vpop.permute.xlu0 %1041
    %1043 = vrot.lane.b32.xlu0 %v1038, 40
    %v1044 = vpop.permute.xlu0 %1043
    %1045 = vrot.lane.b32.xlu0 %v1039, 40
    %v1046 = vpop.permute.xlu0 %1045
    %1047 = vrot.lane.b32.xlu0 %v1040, 40
    %v1048 = vpop.permute.xlu0 %1047
    %vm1053 = vcmask 388416
    %1054 = vst.msk [vmem:[#allocation7] sm:$0xf] %vm1053, %v1042
    %1055 = vst.msk [vmem:[#allocation7 + $0x4] sm:$0xf] %vm1053, %v1044
    %1056 = vst.msk [vmem:[#allocation7 + $0x8] sm:$0xf] %vm1053, %v1046
    %1057 = vst.msk [vmem:[#allocation7 + $0xc] sm:$0xf] %vm1053, %v1048
    %s1058 = scalar_lea.vmem [#allocation2], 96
    %v1059 = vld [vmem:[%s1058] sm:$0xf]
    %v1060 = vld [vmem:[%s1058 + $0x4] sm:$0xf]
    %v1061 = vld [vmem:[%s1058 + $0x8] sm:$0xf]
    %v1062 = vld [vmem:[%s1058 + $0xc] sm:$0xf]
    %v1063 = vld [vmem:[#allocation5] sm:$0xf]
    %v1064 = vld [vmem:[#allocation5 + $0x4] sm:$0xf]
    %v1065 = vld [vmem:[#allocation5 + $0x8] sm:$0xf]
    %v1066 = vld [vmem:[#allocation5 + $0xc] sm:$0xf]
    %v1067 = vld [vmem:[#allocation5 + $0x10] sm:$0xf]
    %v1068 = vld [vmem:[#allocation5 + $0x14] sm:$0xf]
    %v1069 = vld [vmem:[#allocation5 + $0x18] sm:$0xf]
    %v1070 = vld [vmem:[#allocation5 + $0x1c] sm:$0xf]
    %v1071 = vld [vmem:[#allocation5 + $0x20] sm:$0xf]
    %v1072 = vld [vmem:[#allocation5 + $0x24] sm:$0xf]
    %v1073 = vld [vmem:[#allocation5 + $0x28] sm:$0xf]
    %v1074 = vld [vmem:[#allocation5 + $0x2c] sm:$0xf]
    %v1075 = vld [vmem:[#allocation5 + $0x30] sm:$0xf]
    %v1076 = vld [vmem:[#allocation5 + $0x34] sm:$0xf]
    %v1077 = vld [vmem:[#allocation5 + $0x38] sm:$0xf]
    %v1078 = vld [vmem:[#allocation5 + $0x3c] sm:$0xf]
    %v1083 = vunpack.c.l.b16 %v1059
    %v1084 = vunpack.c.l.b16 %v1060
    %v1085 = vunpack.c.l.b16 %v1061
    %v1086 = vunpack.c.l.b16 %v1062
    %v1087 = vpack.c.b16 %v1084, %v1083
    %v1088 = vpack.c.b16 %v1086, %v1085
    %v1107 = vunpack.c.l.b16 %v1063
    %v1108 = vunpack.c.l.b16 %v1064
    %v1109 = vunpack.c.l.b16 %v1065
    %v1110 = vunpack.c.l.b16 %v1066
    %v1111 = vunpack.c.l.b16 %v1067
    %v1112 = vunpack.c.l.b16 %v1068
    %v1113 = vunpack.c.l.b16 %v1069
    %v1114 = vunpack.c.l.b16 %v1070
    %v1115 = vunpack.c.l.b16 %v1071
    %v1116 = vunpack.c.l.b16 %v1072
    %v1117 = vunpack.c.l.b16 %v1073
    %v1118 = vunpack.c.l.b16 %v1074
    %v1119 = vunpack.c.l.b16 %v1075
    %v1120 = vunpack.c.l.b16 %v1076
    %v1121 = vunpack.c.l.b16 %v1077
    %v1122 = vunpack.c.l.b16 %v1078
    %v1123 = vpack.c.b16 %v1108, %v1107
    %v1124 = vpack.c.b16 %v1110, %v1109
    %v1125 = vpack.c.b16 %v1112, %v1111
    %v1126 = vpack.c.b16 %v1114, %v1113
    %v1127 = vpack.c.b16 %v1116, %v1115
    %v1128 = vpack.c.b16 %v1118, %v1117
    %v1129 = vpack.c.b16 %v1120, %v1119
    %v1130 = vpack.c.b16 %v1122, %v1121
    %1139 = vmatprep.subr.bf16.mxu0 0
    %1140 = vmatpush1.bf16.msra.mxu0 %v1123
    %1141 = vmatprep.subr.bf16.mxu0 0
    %1142 = vmatpush1.bf16.msra.mxu0 %v1124
    %1143 = vmatprep.subr.bf16.mxu0 0
    %1144 = vmatpush1.bf16.msra.mxu0 %v1125
    %1145 = vmatprep.subr.bf16.mxu0 0
    %1146 = vmatpush1.bf16.msra.mxu0 %v1126
    %1147 = vmatprep.subr.bf16.mxu0 0
    %1148 = vmatpush1.bf16.msra.mxu0 %v1127
    %1149 = vmatprep.subr.bf16.mxu0 0
    %1150 = vmatpush1.bf16.msra.mxu0 %v1128
    %1151 = vmatprep.subr.bf16.mxu0 0
    %1152 = vmatpush1.bf16.msra.mxu0 %v1129
    %1153 = vmatprep.subr.bf16.mxu0 0
    %1154 = vmatpush1.bf16.msra.mxu0 %v1130
    %1155 = vmatprep.subr.bf16.mxu0 0
    %1156 = vmatpush1.bf16.msra.mxu0 0
    %1157 = vmatprep.subr.bf16.mxu0 0
    %1158 = vmatpush1.bf16.msra.mxu0 0
    %1159 = vmatprep.subr.bf16.mxu0 0
    %1160 = vmatpush1.bf16.msra.mxu0 0
    %1161 = vmatprep.subr.bf16.mxu0 0
    %1162 = vmatpush1.bf16.msra.mxu0 0
    %1163 = vmatprep.subr.bf16.mxu0 0
    %1164 = vmatpush1.bf16.msra.mxu0 0
    %1165 = vmatprep.subr.bf16.mxu0 0
    %1166 = vmatpush1.bf16.msra.mxu0 0
    %1167 = vmatprep.subr.bf16.mxu0 0
    %1168 = vmatpush1.bf16.msra.mxu0 0
    %1169 = vmatprep.subr.bf16.mxu0 0
    %1170 = vmatpush1.bf16.msra.mxu0 0
    %1171 = vmatprep.mubr.bf16.mxu0 0
    %1172 = vmatmul.mubr.bf16.gmra.mrb[0].mxu0 %v1087
    %v1173 = vpop.f32.mrb[0].mxu0
    %v1174 = vadd.f32 0.0, %v1173
    %v1175 = vpop.f32.mrb[0].mxu0
    %v1176 = vpop.f32.mrb[0].mxu0
    %v1177 = vadd.f32 0.0, %v1176
    %v1178 = vpop.f32.mrb[0].mxu0
    %1179 = vmatprep.mubr.bf16.mxu0 0
    %1180 = vmatmul.mubr.bf16.gmra.mrb[0].mxu0 %v1088
    %v1181 = vpop.f32.mrb[0].mxu0
    %v1182 = vadd.f32 0.0, %v1181
    %v1183 = vpop.f32.mrb[0].mxu0
    %v1184 = vpop.f32.mrb[0].mxu0
    %v1185 = vadd.f32 0.0, %v1184
    %v1186 = vpop.f32.mrb[0].mxu0
    %1187 = vdwg.mxu0
    %vm1188 = vcmp.ge.f32.partialorder %v1174, 0.0
    %vm1189 = vcmp.ge.f32.partialorder %v1177, 0.0
    %vm1190 = vcmp.ge.f32.partialorder %v1182, 0.0
    %vm1191 = vcmp.ge.f32.partialorder %v1185, 0.0
    %v1192 = vmul.f32 %v1174, 0.2
    %v1193 = vmul.f32 %v1177, 0.2
    %v1194 = vmul.f32 %v1182, 0.2
    %v1195 = vmul.f32 %v1185, 0.2
    %v1196 = vsel %vm1188, %v1174, %v1192
    %v1197 = vsel %vm1189, %v1177, %v1193
    %v1198 = vsel %vm1190, %v1182, %v1194
    %v1199 = vsel %vm1191, %v1185, %v1195
    %v1200 = vpack.c.bf16 %v1197, %v1196
    %v1201 = vpack.c.bf16 %v1199, %v1198
    %v1204 = vunpack.c.l.b16 %v1200
    %v1205 = vunpack.c.h.b16 %v1200
    %v1206 = vunpack.c.l.b16 %v1201
    %v1207 = vunpack.c.h.b16 %v1201
    %v1208 = vpack.c.b16 %v1204, %v1204
    %v1209 = vpack.c.b16 %v1205, %v1205
    %v1210 = vpack.c.b16 %v1206, %v1206
    %v1211 = vpack.c.b16 %v1207, %v1207
    %1212 = vrot.lane.b32.xlu0 %v1208, 48
    %v1213 = vpop.permute.xlu0 %1212
    %1214 = vrot.lane.b32.xlu0 %v1209, 48
    %v1215 = vpop.permute.xlu0 %1214
    %1216 = vrot.lane.b32.xlu0 %v1210, 48
    %v1217 = vpop.permute.xlu0 %1216
    %1218 = vrot.lane.b32.xlu0 %v1211, 48
    %v1219 = vpop.permute.xlu0 %1218
    %vm1224 = vcmask 454016
    %1225 = vst.msk [vmem:[#allocation7] sm:$0xf] %vm1224, %v1213
    %1226 = vst.msk [vmem:[#allocation7 + $0x4] sm:$0xf] %vm1224, %v1215
    %1227 = vst.msk [vmem:[#allocation7 + $0x8] sm:$0xf] %vm1224, %v1217
    %1228 = vst.msk [vmem:[#allocation7 + $0xc] sm:$0xf] %vm1224, %v1219
    %s1229 = scalar_lea.vmem [#allocation2], 112
    %v1230 = vld [vmem:[%s1229] sm:$0xf]
    %v1231 = vld [vmem:[%s1229 + $0x4] sm:$0xf]
    %v1232 = vld [vmem:[%s1229 + $0x8] sm:$0xf]
    %v1233 = vld [vmem:[%s1229 + $0xc] sm:$0xf]
    %v1234 = vld [vmem:[#allocation5] sm:$0xf]
    %v1235 = vld [vmem:[#allocation5 + $0x4] sm:$0xf]
    %v1236 = vld [vmem:[#allocation5 + $0x8] sm:$0xf]
    %v1237 = vld [vmem:[#allocation5 + $0xc] sm:$0xf]
    %v1238 = vld [vmem:[#allocation5 + $0x10] sm:$0xf]
    %v1239 = vld [vmem:[#allocation5 + $0x14] sm:$0xf]
    %v1240 = vld [vmem:[#allocation5 + $0x18] sm:$0xf]
    %v1241 = vld [vmem:[#allocation5 + $0x1c] sm:$0xf]
    %v1242 = vld [vmem:[#allocation5 + $0x20] sm:$0xf]
    %v1243 = vld [vmem:[#allocation5 + $0x24] sm:$0xf]
    %v1244 = vld [vmem:[#allocation5 + $0x28] sm:$0xf]
    %v1245 = vld [vmem:[#allocation5 + $0x2c] sm:$0xf]
    %v1246 = vld [vmem:[#allocation5 + $0x30] sm:$0xf]
    %v1247 = vld [vmem:[#allocation5 + $0x34] sm:$0xf]
    %v1248 = vld [vmem:[#allocation5 + $0x38] sm:$0xf]
    %v1249 = vld [vmem:[#allocation5 + $0x3c] sm:$0xf]
    %v1254 = vunpack.c.l.b16 %v1230
    %v1255 = vunpack.c.l.b16 %v1231
    %v1256 = vunpack.c.l.b16 %v1232
    %v1257 = vunpack.c.l.b16 %v1233
    %v1258 = vpack.c.b16 %v1255, %v1254
    %v1259 = vpack.c.b16 %v1257, %v1256
    %v1278 = vunpack.c.l.b16 %v1234
    %v1279 = vunpack.c.l.b16 %v1235
    %v1280 = vunpack.c.l.b16 %v1236
    %v1281 = vunpack.c.l.b16 %v1237
    %v1282 = vunpack.c.l.b16 %v1238
    %v1283 = vunpack.c.l.b16 %v1239
    %v1284 = vunpack.c.l.b16 %v1240
    %v1285 = vunpack.c.l.b16 %v1241
    %v1286 = vunpack.c.l.b16 %v1242
    %v1287 = vunpack.c.l.b16 %v1243
    %v1288 = vunpack.c.l.b16 %v1244
    %v1289 = vunpack.c.l.b16 %v1245
    %v1290 = vunpack.c.l.b16 %v1246
    %v1291 = vunpack.c.l.b16 %v1247
    %v1292 = vunpack.c.l.b16 %v1248
    %v1293 = vunpack.c.l.b16 %v1249
    %v1294 = vpack.c.b16 %v1279, %v1278
    %v1295 = vpack.c.b16 %v1281, %v1280
    %v1296 = vpack.c.b16 %v1283, %v1282
    %v1297 = vpack.c.b16 %v1285, %v1284
    %v1298 = vpack.c.b16 %v1287, %v1286
    %v1299 = vpack.c.b16 %v1289, %v1288
    %v1300 = vpack.c.b16 %v1291, %v1290
    %v1301 = vpack.c.b16 %v1293, %v1292
    %1310 = vmatprep.subr.bf16.mxu0 0
    %1311 = vmatpush1.bf16.msra.mxu0 %v1294
    %1312 = vmatprep.subr.bf16.mxu0 0
    %1313 = vmatpush1.bf16.msra.mxu0 %v1295
    %1314 = vmatprep.subr.bf16.mxu0 0
    %1315 = vmatpush1.bf16.msra.mxu0 %v1296
    %1316 = vmatprep.subr.bf16.mxu0 0
    %1317 = vmatpush1.bf16.msra.mxu0 %v1297
    %1318 = vmatprep.subr.bf16.mxu0 0
    %1319 = vmatpush1.bf16.msra.mxu0 %v1298
    %1320 = vmatprep.subr.bf16.mxu0 0
    %1321 = vmatpush1.bf16.msra.mxu0 %v1299
    %1322 = vmatprep.subr.bf16.mxu0 0
    %1323 = vmatpush1.bf16.msra.mxu0 %v1300
    %1324 = vmatprep.subr.bf16.mxu0 0
    %1325 = vmatpush1.bf16.msra.mxu0 %v1301
    %1326 = vmatprep.subr.bf16.mxu0 0
    %1327 = vmatpush1.bf16.msra.mxu0 0
    %1328 = vmatprep.subr.bf16.mxu0 0
    %1329 = vmatpush1.bf16.msra.mxu0 0
    %1330 = vmatprep.subr.bf16.mxu0 0
    %1331 = vmatpush1.bf16.msra.mxu0 0
    %1332 = vmatprep.subr.bf16.mxu0 0
    %1333 = vmatpush1.bf16.msra.mxu0 0
    %1334 = vmatprep.subr.bf16.mxu0 0
    %1335 = vmatpush1.bf16.msra.mxu0 0
    %1336 = vmatprep.subr.bf16.mxu0 0
    %1337 = vmatpush1.bf16.msra.mxu0 0
    %1338 = vmatprep.subr.bf16.mxu0 0
    %1339 = vmatpush1.bf16.msra.mxu0 0
    %1340 = vmatprep.subr.bf16.mxu0 0
    %1341 = vmatpush1.bf16.msra.mxu0 0
    %1342 = vmatprep.mubr.bf16.mxu0 0
    %1343 = vmatmul.mubr.bf16.gmra.mrb[0].mxu0 %v1258
    %v1344 = vpop.f32.mrb[0].mxu0
    %v1345 = vadd.f32 0.0, %v1344
    %v1346 = vpop.f32.mrb[0].mxu0
    %v1347 = vpop.f32.mrb[0].mxu0
    %v1348 = vadd.f32 0.0, %v1347
    %v1349 = vpop.f32.mrb[0].mxu0
    %1350 = vmatprep.mubr.bf16.mxu0 0
    %1351 = vmatmul.mubr.bf16.gmra.mrb[0].mxu0 %v1259
    %v1352 = vpop.f32.mrb[0].mxu0
    %v1353 = vadd.f32 0.0, %v1352
    %v1354 = vpop.f32.mrb[0].mxu0
    %v1355 = vpop.f32.mrb[0].mxu0
    %v1356 = vadd.f32 0.0, %v1355
    %v1357 = vpop.f32.mrb[0].mxu0
    %1358 = vdwg.mxu0
    %vm1359 = vcmp.ge.f32.partialorder %v1345, 0.0
    %vm1360 = vcmp.ge.f32.partialorder %v1348, 0.0
    %vm1361 = vcmp.ge.f32.partialorder %v1353, 0.0
    %vm1362 = vcmp.ge.f32.partialorder %v1356, 0.0
    %v1363 = vmul.f32 %v1345, 0.2
    %v1364 = vmul.f32 %v1348, 0.2
    %v1365 = vmul.f32 %v1353, 0.2
    %v1366 = vmul.f32 %v1356, 0.2
    %v1367 = vsel %vm1359, %v1345, %v1363
    %v1368 = vsel %vm1360, %v1348, %v1364
    %v1369 = vsel %vm1361, %v1353, %v1365
    %v1370 = vsel %vm1362, %v1356, %v1366
    %v1371 = vpack.c.bf16 %v1368, %v1367
    %v1372 = vpack.c.bf16 %v1370, %v1369
    %v1375 = vunpack.c.l.b16 %v1371
    %v1376 = vunpack.c.h.b16 %v1371
    %v1377 = vunpack.c.l.b16 %v1372
    %v1378 = vunpack.c.h.b16 %v1372
    %v1379 = vpack.c.b16 %v1375, %v1375
    %v1380 = vpack.c.b16 %v1376, %v1376
    %v1381 = vpack.c.b16 %v1377, %v1377
    %v1382 = vpack.c.b16 %v1378, %v1378
    %1383 = vrot.lane.b32.xlu0 %v1379, 56
    %v1384 = vpop.permute.xlu0 %1383
    %1385 = vrot.lane.b32.xlu0 %v1380, 56
    %v1386 = vpop.permute.xlu0 %1385
    %1387 = vrot.lane.b32.xlu0 %v1381, 56
    %v1388 = vpop.permute.xlu0 %1387
    %1389 = vrot.lane.b32.xlu0 %v1382, 56
    %v1390 = vpop.permute.xlu0 %1389
    %vm1395 = vcmask 519616
    %1396 = vst.msk [vmem:[#allocation7] sm:$0xf] %vm1395, %v1384
    %1397 = vst.msk [vmem:[#allocation7 + $0x4] sm:$0xf] %vm1395, %v1386
    %1398 = vst.msk [vmem:[#allocation7 + $0x8] sm:$0xf] %vm1395, %v1388
    %1399 = vst.msk [vmem:[#allocation7 + $0xc] sm:$0xf] %vm1395, %v1390
    %s1400 = scalar_lea.vmem [#allocation2], 128
    %v1401 = vld [vmem:[%s1400] sm:$0xf]
    %v1402 = vld [vmem:[%s1400 + $0x4] sm:$0xf]
    %v1403 = vld [vmem:[%s1400 + $0x8] sm:$0xf]
    %v1404 = vld [vmem:[%s1400 + $0xc] sm:$0xf]
    %v1405 = vld [vmem:[#allocation5] sm:$0xf]
    %v1406 = vld [vmem:[#allocation5 + $0x4] sm:$0xf]
    %v1407 = vld [vmem:[#allocation5 + $0x8] sm:$0xf]
    %v1408 = vld [vmem:[#allocation5 + $0xc] sm:$0xf]
    %v1409 = vld [vmem:[#allocation5 + $0x10] sm:$0xf]
    %v1410 = vld [vmem:[#allocation5 + $0x14] sm:$0xf]
    %v1411 = vld [vmem:[#allocation5 + $0x18] sm:$0xf]
    %v1412 = vld [vmem:[#allocation5 + $0x1c] sm:$0xf]
    %v1413 = vld [vmem:[#allocation5 + $0x20] sm:$0xf]
    %v1414 = vld [vmem:[#allocation5 + $0x24] sm:$0xf]
    %v1415 = vld [vmem:[#allocation5 + $0x28] sm:$0xf]
    %v1416 = vld [vmem:[#allocation5 + $0x2c] sm:$0xf]
    %v1417 = vld [vmem:[#allocation5 + $0x30] sm:$0xf]
    %v1418 = vld [vmem:[#allocation5 + $0x34] sm:$0xf]
    %v1419 = vld [vmem:[#allocation5 + $0x38] sm:$0xf]
    %v1420 = vld [vmem:[#allocation5 + $0x3c] sm:$0xf]
    %v1425 = vunpack.c.l.b16 %v1401
    %v1426 = vunpack.c.l.b16 %v1402
    %v1427 = vunpack.c.l.b16 %v1403
    %v1428 = vunpack.c.l.b16 %v1404
    %v1429 = vpack.c.b16 %v1426, %v1425
    %v1430 = vpack.c.b16 %v1428, %v1427
    %v1449 = vunpack.c.l.b16 %v1405
    %v1450 = vunpack.c.l.b16 %v1406
    %v1451 = vunpack.c.l.b16 %v1407
    %v1452 = vunpack.c.l.b16 %v1408
    %v1453 = vunpack.c.l.b16 %v1409
    %v1454 = vunpack.c.l.b16 %v1410
    %v1455 = vunpack.c.l.b16 %v1411
    %v1456 = vunpack.c.l.b16 %v1412
    %v1457 = vunpack.c.l.b16 %v1413
    %v1458 = vunpack.c.l.b16 %v1414
    %v1459 = vunpack.c.l.b16 %v1415
    %v1460 = vunpack.c.l.b16 %v1416
    %v1461 = vunpack.c.l.b16 %v1417
    %v1462 = vunpack.c.l.b16 %v1418
    %v1463 = vunpack.c.l.b16 %v1419
    %v1464 = vunpack.c.l.b16 %v1420
    %v1465 = vpack.c.b16 %v1450, %v1449
    %v1466 = vpack.c.b16 %v1452, %v1451
    %v1467 = vpack.c.b16 %v1454, %v1453
    %v1468 = vpack.c.b16 %v1456, %v1455
    %v1469 = vpack.c.b16 %v1458, %v1457
    %v1470 = vpack.c.b16 %v1460, %v1459
    %v1471 = vpack.c.b16 %v1462, %v1461
    %v1472 = vpack.c.b16 %v1464, %v1463
    %1481 = vmatprep.subr.bf16.mxu0 0
    %1482 = vmatpush1.bf16.msra.mxu0 %v1465
    %1483 = vmatprep.subr.bf16.mxu0 0
    %1484 = vmatpush1.bf16.msra.mxu0 %v1466
    %1485 = vmatprep.subr.bf16.mxu0 0
    %1486 = vmatpush1.bf16.msra.mxu0 %v1467
    %1487 = vmatprep.subr.bf16.mxu0 0
    %1488 = vmatpush1.bf16.msra.mxu0 %v1468
    %1489 = vmatprep.subr.bf16.mxu0 0
    %1490 = vmatpush1.bf16.msra.mxu0 %v1469
    %1491 = vmatprep.subr.bf16.mxu0 0
    %1492 = vmatpush1.bf16.msra.mxu0 %v1470
    %1493 = vmatprep.subr.bf16.mxu0 0
    %1494 = vmatpush1.bf16.msra.mxu0 %v1471
    %1495 = vmatprep.subr.bf16.mxu0 0
    %1496 = vmatpush1.bf16.msra.mxu0 %v1472
    %1497 = vmatprep.subr.bf16.mxu0 0
    %1498 = vmatpush1.bf16.msra.mxu0 0
    %1499 = vmatprep.subr.bf16.mxu0 0
    %1500 = vmatpush1.bf16.msra.mxu0 0
    %1501 = vmatprep.subr.bf16.mxu0 0
    %1502 = vmatpush1.bf16.msra.mxu0 0
    %1503 = vmatprep.subr.bf16.mxu0 0
    %1504 = vmatpush1.bf16.msra.mxu0 0
    %1505 = vmatprep.subr.bf16.mxu0 0
    %1506 = vmatpush1.bf16.msra.mxu0 0
    %1507 = vmatprep.subr.bf16.mxu0 0
    %1508 = vmatpush1.bf16.msra.mxu0 0
    %1509 = vmatprep.subr.bf16.mxu0 0
    %1510 = vmatpush1.bf16.msra.mxu0 0
    %1511 = vmatprep.subr.bf16.mxu0 0
    %1512 = vmatpush1.bf16.msra.mxu0 0
    %1513 = vmatprep.mubr.bf16.mxu0 0
    %1514 = vmatmul.mubr.bf16.gmra.mrb[0].mxu0 %v1429
    %v1515 = vpop.f32.mrb[0].mxu0
    %v1516 = vadd.f32 0.0, %v1515
    %v1517 = vpop.f32.mrb[0].mxu0
    %v1518 = vpop.f32.mrb[0].mxu0
    %v1519 = vadd.f32 0.0, %v1518
    %v1520 = vpop.f32.mrb[0].mxu0
    %1521 = vmatprep.mubr.bf16.mxu0 0
    %1522 = vmatmul.mubr.bf16.gmra.mrb[0].mxu0 %v1430
    %v1523 = vpop.f32.mrb[0].mxu0
    %v1524 = vadd.f32 0.0, %v1523
    %v1525 = vpop.f32.mrb[0].mxu0
    %v1526 = vpop.f32.mrb[0].mxu0
    %v1527 = vadd.f32 0.0, %v1526
    %v1528 = vpop.f32.mrb[0].mxu0
    %1529 = vdwg.mxu0
    %vm1530 = vcmp.ge.f32.partialorder %v1516, 0.0
    %vm1531 = vcmp.ge.f32.partialorder %v1519, 0.0
    %vm1532 = vcmp.ge.f32.partialorder %v1524, 0.0
    %vm1533 = vcmp.ge.f32.partialorder %v1527, 0.0
    %v1534 = vmul.f32 %v1516, 0.2
    %v1535 = vmul.f32 %v1519, 0.2
    %v1536 = vmul.f32 %v1524, 0.2
    %v1537 = vmul.f32 %v1527, 0.2
    %v1538 = vsel %vm1530, %v1516, %v1534
    %v1539 = vsel %vm1531, %v1519, %v1535
    %v1540 = vsel %vm1532, %v1524, %v1536
    %v1541 = vsel %vm1533, %v1527, %v1537
    %v1542 = vpack.c.bf16 %v1539, %v1538
    %v1543 = vpack.c.bf16 %v1541, %v1540
    %v1546 = vunpack.c.l.b16 %v1542
    %v1547 = vunpack.c.h.b16 %v1542
    %v1548 = vunpack.c.l.b16 %v1543
    %v1549 = vunpack.c.h.b16 %v1543
    %v1550 = vpack.c.b16 %v1546, %v1546
    %v1551 = vpack.c.b16 %v1547, %v1547
    %v1552 = vpack.c.b16 %v1548, %v1548
    %v1553 = vpack.c.b16 %v1549, %v1549
    %1554 = vrot.lane.b32.xlu0 %v1550, 64
    %v1555 = vpop.permute.xlu0 %1554
    %1556 = vrot.lane.b32.xlu0 %v1551, 64
    %v1557 = vpop.permute.xlu0 %1556
    %1558 = vrot.lane.b32.xlu0 %v1552, 64
    %v1559 = vpop.permute.xlu0 %1558
    %1560 = vrot.lane.b32.xlu0 %v1553, 64
    %v1561 = vpop.permute.xlu0 %1560
    %vm1566 = vcmask 585216
    %1567 = vst.msk [vmem:[#allocation7] sm:$0xf] %vm1566, %v1555
    %1568 = vst.msk [vmem:[#allocation7 + $0x4] sm:$0xf] %vm1566, %v1557
    %1569 = vst.msk [vmem:[#allocation7 + $0x8] sm:$0xf] %vm1566, %v1559
    %1570 = vst.msk [vmem:[#allocation7 + $0xc] sm:$0xf] %vm1566, %v1561
    %s1571 = scalar_lea.vmem [#allocation2], 144
    %v1572 = vld [vmem:[%s1571] sm:$0xf]
    %v1573 = vld [vmem:[%s1571 + $0x4] sm:$0xf]
    %v1574 = vld [vmem:[%s1571 + $0x8] sm:$0xf]
    %v1575 = vld [vmem:[%s1571 + $0xc] sm:$0xf]
    %v1576 = vld [vmem:[#allocation5] sm:$0xf]
    %v1577 = vld [vmem:[#allocation5 + $0x4] sm:$0xf]
    %v1578 = vld [vmem:[#allocation5 + $0x8] sm:$0xf]
    %v1579 = vld [vmem:[#allocation5 + $0xc] sm:$0xf]
    %v1580 = vld [vmem:[#allocation5 + $0x10] sm:$0xf]
    %v1581 = vld [vmem:[#allocation5 + $0x14] sm:$0xf]
    %v1582 = vld [vmem:[#allocation5 + $0x18] sm:$0xf]
    %v1583 = vld [vmem:[#allocation5 + $0x1c] sm:$0xf]
    %v1584 = vld [vmem:[#allocation5 + $0x20] sm:$0xf]
    %v1585 = vld [vmem:[#allocation5 + $0x24] sm:$0xf]
    %v1586 = vld [vmem:[#allocation5 + $0x28] sm:$0xf]
    %v1587 = vld [vmem:[#allocation5 + $0x2c] sm:$0xf]
    %v1588 = vld [vmem:[#allocation5 + $0x30] sm:$0xf]
    %v1589 = vld [vmem:[#allocation5 + $0x34] sm:$0xf]
    %v1590 = vld [vmem:[#allocation5 + $0x38] sm:$0xf]
    %v1591 = vld [vmem:[#allocation5 + $0x3c] sm:$0xf]
    %v1596 = vunpack.c.l.b16 %v1572
    %v1597 = vunpack.c.l.b16 %v1573
    %v1598 = vunpack.c.l.b16 %v1574
    %v1599 = vunpack.c.l.b16 %v1575
    %v1600 = vpack.c.b16 %v1597, %v1596
    %v1601 = vpack.c.b16 %v1599, %v1598
    %v1620 = vunpack.c.l.b16 %v1576
    %v1621 = vunpack.c.l.b16 %v1577
    %v1622 = vunpack.c.l.b16 %v1578
    %v1623 = vunpack.c.l.b16 %v1579
    %v1624 = vunpack.c.l.b16 %v1580
    %v1625 = vunpack.c.l.b16 %v1581
    %v1626 = vunpack.c.l.b16 %v1582
    %v1627 = vunpack.c.l.b16 %v1583
    %v1628 = vunpack.c.l.b16 %v1584
    %v1629 = vunpack.c.l.b16 %v1585
    %v1630 = vunpack.c.l.b16 %v1586
    %v1631 = vunpack.c.l.b16 %v1587
    %v1632 = vunpack.c.l.b16 %v1588
    %v1633 = vunpack.c.l.b16 %v1589
    %v1634 = vunpack.c.l.b16 %v1590
    %v1635 = vunpack.c.l.b16 %v1591
    %v1636 = vpack.c.b16 %v1621, %v1620
    %v1637 = vpack.c.b16 %v1623, %v1622
    %v1638 = vpack.c.b16 %v1625, %v1624
    %v1639 = vpack.c.b16 %v1627, %v1626
    %v1640 = vpack.c.b16 %v1629, %v1628
    %v1641 = vpack.c.b16 %v1631, %v1630
    %v1642 = vpack.c.b16 %v1633, %v1632
    %v1643 = vpack.c.b16 %v1635, %v1634
    %1652 = vmatprep.subr.bf16.mxu0 0
    %1653 = vmatpush1.bf16.msra.mxu0 %v1636
    %1654 = vmatprep.subr.bf16.mxu0 0
    %1655 = vmatpush1.bf16.msra.mxu0 %v1637
    %1656 = vmatprep.subr.bf16.mxu0 0
    %1657 = vmatpush1.bf16.msra.mxu0 %v1638
    %1658 = vmatprep.subr.bf16.mxu0 0
    %1659 = vmatpush1.bf16.msra.mxu0 %v1639
    %1660 = vmatprep.subr.bf16.mxu0 0
    %1661 = vmatpush1.bf16.msra.mxu0 %v1640
    %1662 = vmatprep.subr.bf16.mxu0 0
    %1663 = vmatpush1.bf16.msra.mxu0 %v1641
    %1664 = vmatprep.subr.bf16.mxu0 0
    %1665 = vmatpush1.bf16.msra.mxu0 %v1642
    %1666 = vmatprep.subr.bf16.mxu0 0
    %1667 = vmatpush1.bf16.msra.mxu0 %v1643
    %1668 = vmatprep.subr.bf16.mxu0 0
    %1669 = vmatpush1.bf16.msra.mxu0 0
    %1670 = vmatprep.subr.bf16.mxu0 0
    %1671 = vmatpush1.bf16.msra.mxu0 0
    %1672 = vmatprep.subr.bf16.mxu0 0
    %1673 = vmatpush1.bf16.msra.mxu0 0
    %1674 = vmatprep.subr.bf16.mxu0 0
    %1675 = vmatpush1.bf16.msra.mxu0 0
    %1676 = vmatprep.subr.bf16.mxu0 0
    %1677 = vmatpush1.bf16.msra.mxu0 0
    %1678 = vmatprep.subr.bf16.mxu0 0
    %1679 = vmatpush1.bf16.msra.mxu0 0
    %1680 = vmatprep.subr.bf16.mxu0 0
    %1681 = vmatpush1.bf16.msra.mxu0 0
    %1682 = vmatprep.subr.bf16.mxu0 0
    %1683 = vmatpush1.bf16.msra.mxu0 0
    %1684 = vmatprep.mubr.bf16.mxu0 0
    %1685 = vmatmul.mubr.bf16.gmra.mrb[0].mxu0 %v1600
    %v1686 = vpop.f32.mrb[0].mxu0
    %v1687 = vadd.f32 0.0, %v1686
    %v1688 = vpop.f32.mrb[0].mxu0
    %v1689 = vpop.f32.mrb[0].mxu0
    %v1690 = vadd.f32 0.0, %v1689
    %v1691 = vpop.f32.mrb[0].mxu0
    %1692 = vmatprep.mubr.bf16.mxu0 0
    %1693 = vmatmul.mubr.bf16.gmra.mrb[0].mxu0 %v1601
    %v1694 = vpop.f32.mrb[0].mxu0
    %v1695 = vadd.f32 0.0, %v1694
    %v1696 = vpop.f32.mrb[0].mxu0
    %v1697 = vpop.f32.mrb[0].mxu0
    %v1698 = vadd.f32 0.0, %v1697
    %v1699 = vpop.f32.mrb[0].mxu0
    %1700 = vdwg.mxu0
    %vm1701 = vcmp.ge.f32.partialorder %v1687, 0.0
    %vm1702 = vcmp.ge.f32.partialorder %v1690, 0.0
    %vm1703 = vcmp.ge.f32.partialorder %v1695, 0.0
    %vm1704 = vcmp.ge.f32.partialorder %v1698, 0.0
    %v1705 = vmul.f32 %v1687, 0.2
    %v1706 = vmul.f32 %v1690, 0.2
    %v1707 = vmul.f32 %v1695, 0.2
    %v1708 = vmul.f32 %v1698, 0.2
    %v1709 = vsel %vm1701, %v1687, %v1705
    %v1710 = vsel %vm1702, %v1690, %v1706
    %v1711 = vsel %vm1703, %v1695, %v1707
    %v1712 = vsel %vm1704, %v1698, %v1708
    %v1713 = vpack.c.bf16 %v1710, %v1709
    %v1714 = vpack.c.bf16 %v1712, %v1711
    %v1717 = vunpack.c.l.b16 %v1713
    %v1718 = vunpack.c.h.b16 %v1713
    %v1719 = vunpack.c.l.b16 %v1714
    %v1720 = vunpack.c.h.b16 %v1714
    %v1721 = vpack.c.b16 %v1717, %v1717
    %v1722 = vpack.c.b16 %v1718, %v1718
    %v1723 = vpack.c.b16 %v1719, %v1719
    %v1724 = vpack.c.b16 %v1720, %v1720
    %1725 = vrot.lane.b32.xlu0 %v1721, 72
    %v1726 = vpop.permute.xlu0 %1725
    %1727 = vrot.lane.b32.xlu0 %v1722, 72
    %v1728 = vpop.permute.xlu0 %1727
    %1729 = vrot.lane.b32.xlu0 %v1723, 72
    %v1730 = vpop.permute.xlu0 %1729
    %1731 = vrot.lane.b32.xlu0 %v1724, 72
    %v1732 = vpop.permute.xlu0 %1731
    %vm1737 = vcmask 650816
    %1738 = vst.msk [vmem:[#allocation7] sm:$0xf] %vm1737, %v1726
    %1739 = vst.msk [vmem:[#allocation7 + $0x4] sm:$0xf] %vm1737, %v1728
    %1740 = vst.msk [vmem:[#allocation7 + $0x8] sm:$0xf] %vm1737, %v1730
    %1741 = vst.msk [vmem:[#allocation7 + $0xc] sm:$0xf] %vm1737, %v1732
    %s1742 = scalar_lea.vmem [#allocation2], 160
    %v1743 = vld [vmem:[%s1742] sm:$0xf]
    %v1744 = vld [vmem:[%s1742 + $0x4] sm:$0xf]
    %v1745 = vld [vmem:[%s1742 + $0x8] sm:$0xf]
    %v1746 = vld [vmem:[%s1742 + $0xc] sm:$0xf]
    %v1747 = vld [vmem:[#allocation5] sm:$0xf]
    %v1748 = vld [vmem:[#allocation5 + $0x4] sm:$0xf]
    %v1749 = vld [vmem:[#allocation5 + $0x8] sm:$0xf]
    %v1750 = vld [vmem:[#allocation5 + $0xc] sm:$0xf]
    %v1751 = vld [vmem:[#allocation5 + $0x10] sm:$0xf]
    %v1752 = vld [vmem:[#allocation5 + $0x14] sm:$0xf]
    %v1753 = vld [vmem:[#allocation5 + $0x18] sm:$0xf]
    %v1754 = vld [vmem:[#allocation5 + $0x1c] sm:$0xf]
    %v1755 = vld [vmem:[#allocation5 + $0x20] sm:$0xf]
    %v1756 = vld [vmem:[#allocation5 + $0x24] sm:$0xf]
    %v1757 = vld [vmem:[#allocation5 + $0x28] sm:$0xf]
    %v1758 = vld [vmem:[#allocation5 + $0x2c] sm:$0xf]
    %v1759 = vld [vmem:[#allocation5 + $0x30] sm:$0xf]
    %v1760 = vld [vmem:[#allocation5 + $0x34] sm:$0xf]
    %v1761 = vld [vmem:[#allocation5 + $0x38] sm:$0xf]
    %v1762 = vld [vmem:[#allocation5 + $0x3c] sm:$0xf]
    %v1767 = vunpack.c.l.b16 %v1743
    %v1768 = vunpack.c.l.b16 %v1744
    %v1769 = vunpack.c.l.b16 %v1745
    %v1770 = vunpack.c.l.b16 %v1746
    %v1771 = vpack.c.b16 %v1768, %v1767
    %v1772 = vpack.c.b16 %v1770, %v1769
    %v1791 = vunpack.c.l.b16 %v1747
    %v1792 = vunpack.c.l.b16 %v1748
    %v1793 = vunpack.c.l.b16 %v1749
    %v1794 = vunpack.c.l.b16 %v1750
    %v1795 = vunpack.c.l.b16 %v1751
    %v1796 = vunpack.c.l.b16 %v1752
    %v1797 = vunpack.c.l.b16 %v1753
    %v1798 = vunpack.c.l.b16 %v1754
    %v1799 = vunpack.c.l.b16 %v1755
    %v1800 = vunpack.c.l.b16 %v1756
    %v1801 = vunpack.c.l.b16 %v1757
    %v1802 = vunpack.c.l.b16 %v1758
    %v1803 = vunpack.c.l.b16 %v1759
    %v1804 = vunpack.c.l.b16 %v1760
    %v1805 = vunpack.c.l.b16 %v1761
    %v1806 = vunpack.c.l.b16 %v1762
    %v1807 = vpack.c.b16 %v1792, %v1791
    %v1808 = vpack.c.b16 %v1794, %v1793
    %v1809 = vpack.c.b16 %v1796, %v1795
    %v1810 = vpack.c.b16 %v1798, %v1797
    %v1811 = vpack.c.b16 %v1800, %v1799
    %v1812 = vpack.c.b16 %v1802, %v1801
    %v1813 = vpack.c.b16 %v1804, %v1803
    %v1814 = vpack.c.b16 %v1806, %v1805
    %1823 = vmatprep.subr.bf16.mxu0 0
    %1824 = vmatpush1.bf16.msra.mxu0 %v1807
    %1825 = vmatprep.subr.bf16.mxu0 0
    %1826 = vmatpush1.bf16.msra.mxu0 %v1808
    %1827 = vmatprep.subr.bf16.mxu0 0
    %1828 = vmatpush1.bf16.msra.mxu0 %v1809
    %1829 = vmatprep.subr.bf16.mxu0 0
    %1830 = vmatpush1.bf16.msra.mxu0 %v1810
    %1831 = vmatprep.subr.bf16.mxu0 0
    %1832 = vmatpush1.bf16.msra.mxu0 %v1811
    %1833 = vmatprep.subr.bf16.mxu0 0
    %1834 = vmatpush1.bf16.msra.mxu0 %v1812
    %1835 = vmatprep.subr.bf16.mxu0 0
    %1836 = vmatpush1.bf16.msra.mxu0 %v1813
    %1837 = vmatprep.subr.bf16.mxu0 0
    %1838 = vmatpush1.bf16.msra.mxu0 %v1814
    %1839 = vmatprep.subr.bf16.mxu0 0
    %1840 = vmatpush1.bf16.msra.mxu0 0
    %1841 = vmatprep.subr.bf16.mxu0 0
    %1842 = vmatpush1.bf16.msra.mxu0 0
    %1843 = vmatprep.subr.bf16.mxu0 0
    %1844 = vmatpush1.bf16.msra.mxu0 0
    %1845 = vmatprep.subr.bf16.mxu0 0
    %1846 = vmatpush1.bf16.msra.mxu0 0
    %1847 = vmatprep.subr.bf16.mxu0 0
    %1848 = vmatpush1.bf16.msra.mxu0 0
    %1849 = vmatprep.subr.bf16.mxu0 0
    %1850 = vmatpush1.bf16.msra.mxu0 0
    %1851 = vmatprep.subr.bf16.mxu0 0
    %1852 = vmatpush1.bf16.msra.mxu0 0
    %1853 = vmatprep.subr.bf16.mxu0 0
    %1854 = vmatpush1.bf16.msra.mxu0 0
    %1855 = vmatprep.mubr.bf16.mxu0 0
    %1856 = vmatmul.mubr.bf16.gmra.mrb[0].mxu0 %v1771
    %v1857 = vpop.f32.mrb[0].mxu0
    %v1858 = vadd.f32 0.0, %v1857
    %v1859 = vpop.f32.mrb[0].mxu0
    %v1860 = vpop.f32.mrb[0].mxu0
    %v1861 = vadd.f32 0.0, %v1860
    %v1862 = vpop.f32.mrb[0].mxu0
    %1863 = vmatprep.mubr.bf16.mxu0 0
    %1864 = vmatmul.mubr.bf16.gmra.mrb[0].mxu0 %v1772
    %v1865 = vpop.f32.mrb[0].mxu0
    %v1866 = vadd.f32 0.0, %v1865
    %v1867 = vpop.f32.mrb[0].mxu0
    %v1868 = vpop.f32.mrb[0].mxu0
    %v1869 = vadd.f32 0.0, %v1868
    %v1870 = vpop.f32.mrb[0].mxu0
    %1871 = vdwg.mxu0
    %vm1872 = vcmp.ge.f32.partialorder %v1858, 0.0
    %vm1873 = vcmp.ge.f32.partialorder %v1861, 0.0
    %vm1874 = vcmp.ge.f32.partialorder %v1866, 0.0
    %vm1875 = vcmp.ge.f32.partialorder %v1869, 0.0
    %v1876 = vmul.f32 %v1858, 0.2
    %v1877 = vmul.f32 %v1861, 0.2
    %v1878 = vmul.f32 %v1866, 0.2
    %v1879 = vmul.f32 %v1869, 0.2
    %v1880 = vsel %vm1872, %v1858, %v1876
    %v1881 = vsel %vm1873, %v1861, %v1877
    %v1882 = vsel %vm1874, %v1866, %v1878
    %v1883 = vsel %vm1875, %v1869, %v1879
    %v1884 = vpack.c.bf16 %v1881, %v1880
    %v1885 = vpack.c.bf16 %v1883, %v1882
    %v1888 = vunpack.c.l.b16 %v1884
    %v1889 = vunpack.c.h.b16 %v1884
    %v1890 = vunpack.c.l.b16 %v1885
    %v1891 = vunpack.c.h.b16 %v1885
    %v1892 = vpack.c.b16 %v1888, %v1888
    %v1893 = vpack.c.b16 %v1889, %v1889
    %v1894 = vpack.c.b16 %v1890, %v1890
    %v1895 = vpack.c.b16 %v1891, %v1891
    %1896 = vrot.lane.b32.xlu0 %v1892, 80
    %v1897 = vpop.permute.xlu0 %1896
    %1898 = vrot.lane.b32.xlu0 %v1893, 80
    %v1899 = vpop.permute.xlu0 %1898
    %1900 = vrot.lane.b32.xlu0 %v1894, 80
    %v1901 = vpop.permute.xlu0 %1900
    %1902 = vrot.lane.b32.xlu0 %v1895, 80
    %v1903 = vpop.permute.xlu0 %1902
    %vm1908 = vcmask 716416
    %1909 = vst.msk [vmem:[#allocation7] sm:$0xf] %vm1908, %v1897
    %1910 = vst.msk [vmem:[#allocation7 + $0x4] sm:$0xf] %vm1908, %v1899
    %1911 = vst.msk [vmem:[#allocation7 + $0x8] sm:$0xf] %vm1908, %v1901
    %1912 = vst.msk [vmem:[#allocation7 + $0xc] sm:$0xf] %vm1908, %v1903
    %s1913 = scalar_lea.vmem [#allocation2], 176
    %v1914 = vld [vmem:[%s1913] sm:$0xf]
    %v1915 = vld [vmem:[%s1913 + $0x4] sm:$0xf]
    %v1916 = vld [vmem:[%s1913 + $0x8] sm:$0xf]
    %v1917 = vld [vmem:[%s1913 + $0xc] sm:$0xf]
    %v1918 = vld [vmem:[#allocation5] sm:$0xf]
    %v1919 = vld [vmem:[#allocation5 + $0x4] sm:$0xf]
    %v1920 = vld [vmem:[#allocation5 + $0x8] sm:$0xf]
    %v1921 = vld [vmem:[#allocation5 + $0xc] sm:$0xf]
    %v1922 = vld [vmem:[#allocation5 + $0x10] sm:$0xf]
    %v1923 = vld [vmem:[#allocation5 + $0x14] sm:$0xf]
    %v1924 = vld [vmem:[#allocation5 + $0x18] sm:$0xf]
    %v1925 = vld [vmem:[#allocation5 + $0x1c] sm:$0xf]
    %v1926 = vld [vmem:[#allocation5 + $0x20] sm:$0xf]
    %v1927 = vld [vmem:[#allocation5 + $0x24] sm:$0xf]
    %v1928 = vld [vmem:[#allocation5 + $0x28] sm:$0xf]
    %v1929 = vld [vmem:[#allocation5 + $0x2c] sm:$0xf]
    %v1930 = vld [vmem:[#allocation5 + $0x30] sm:$0xf]
    %v1931 = vld [vmem:[#allocation5 + $0x34] sm:$0xf]
    %v1932 = vld [vmem:[#allocation5 + $0x38] sm:$0xf]
    %v1933 = vld [vmem:[#allocation5 + $0x3c] sm:$0xf]
    %v1938 = vunpack.c.l.b16 %v1914
    %v1939 = vunpack.c.l.b16 %v1915
    %v1940 = vunpack.c.l.b16 %v1916
    %v1941 = vunpack.c.l.b16 %v1917
    %v1942 = vpack.c.b16 %v1939, %v1938
    %v1943 = vpack.c.b16 %v1941, %v1940
    %v1962 = vunpack.c.l.b16 %v1918
    %v1963 = vunpack.c.l.b16 %v1919
    %v1964 = vunpack.c.l.b16 %v1920
    %v1965 = vunpack.c.l.b16 %v1921
    %v1966 = vunpack.c.l.b16 %v1922
    %v1967 = vunpack.c.l.b16 %v1923
    %v1968 = vunpack.c.l.b16 %v1924
    %v1969 = vunpack.c.l.b16 %v1925
    %v1970 = vunpack.c.l.b16 %v1926
    %v1971 = vunpack.c.l.b16 %v1927
    %v1972 = vunpack.c.l.b16 %v1928
    %v1973 = vunpack.c.l.b16 %v1929
    %v1974 = vunpack.c.l.b16 %v1930
    %v1975 = vunpack.c.l.b16 %v1931
    %v1976 = vunpack.c.l.b16 %v1932
    %v1977 = vunpack.c.l.b16 %v1933
    %v1978 = vpack.c.b16 %v1963, %v1962
    %v1979 = vpack.c.b16 %v1965, %v1964
    %v1980 = vpack.c.b16 %v1967, %v1966
    %v1981 = vpack.c.b16 %v1969, %v1968
    %v1982 = vpack.c.b16 %v1971, %v1970
    %v1983 = vpack.c.b16 %v1973, %v1972
    %v1984 = vpack.c.b16 %v1975, %v1974
    %v1985 = vpack.c.b16 %v1977, %v1976
    %1994 = vmatprep.subr.bf16.mxu0 0
    %1995 = vmatpush1.bf16.msra.mxu0 %v1978
    %1996 = vmatprep.subr.bf16.mxu0 0
    %1997 = vmatpush1.bf16.msra.mxu0 %v1979
    %1998 = vmatprep.subr.bf16.mxu0 0
    %1999 = vmatpush1.bf16.msra.mxu0 %v1980
    %2000 = vmatprep.subr.bf16.mxu0 0
    %2001 = vmatpush1.bf16.msra.mxu0 %v1981
    %2002 = vmatprep.subr.bf16.mxu0 0
    %2003 = vmatpush1.bf16.msra.mxu0 %v1982
    %2004 = vmatprep.subr.bf16.mxu0 0
    %2005 = vmatpush1.bf16.msra.mxu0 %v1983
    %2006 = vmatprep.subr.bf16.mxu0 0
    %2007 = vmatpush1.bf16.msra.mxu0 %v1984
    %2008 = vmatprep.subr.bf16.mxu0 0
    %2009 = vmatpush1.bf16.msra.mxu0 %v1985
    %2010 = vmatprep.subr.bf16.mxu0 0
    %2011 = vmatpush1.bf16.msra.mxu0 0
    %2012 = vmatprep.subr.bf16.mxu0 0
    %2013 = vmatpush1.bf16.msra.mxu0 0
    %2014 = vmatprep.subr.bf16.mxu0 0
    %2015 = vmatpush1.bf16.msra.mxu0 0
    %2016 = vmatprep.subr.bf16.mxu0 0
    %2017 = vmatpush1.bf16.msra.mxu0 0
    %2018 = vmatprep.subr.bf16.mxu0 0
    %2019 = vmatpush1.bf16.msra.mxu0 0
    %2020 = vmatprep.subr.bf16.mxu0 0
    %2021 = vmatpush1.bf16.msra.mxu0 0
    %2022 = vmatprep.subr.bf16.mxu0 0
    %2023 = vmatpush1.bf16.msra.mxu0 0
    %2024 = vmatprep.subr.bf16.mxu0 0
    %2025 = vmatpush1.bf16.msra.mxu0 0
    %2026 = vmatprep.mubr.bf16.mxu0 0
    %2027 = vmatmul.mubr.bf16.gmra.mrb[0].mxu0 %v1942
    %v2028 = vpop.f32.mrb[0].mxu0
    %v2029 = vadd.f32 0.0, %v2028
    %v2030 = vpop.f32.mrb[0].mxu0
    %v2031 = vpop.f32.mrb[0].mxu0
    %v2032 = vadd.f32 0.0, %v2031
    %v2033 = vpop.f32.mrb[0].mxu0
    %2034 = vmatprep.mubr.bf16.mxu0 0
    %2035 = vmatmul.mubr.bf16.gmra.mrb[0].mxu0 %v1943
    %v2036 = vpop.f32.mrb[0].mxu0
    %v2037 = vadd.f32 0.0, %v2036
    %v2038 = vpop.f32.mrb[0].mxu0
    %v2039 = vpop.f32.mrb[0].mxu0
    %v2040 = vadd.f32 0.0, %v2039
    %v2041 = vpop.f32.mrb[0].mxu0
    %2042 = vdwg.mxu0
    %vm2043 = vcmp.ge.f32.partialorder %v2029, 0.0
    %vm2044 = vcmp.ge.f32.partialorder %v2032, 0.0
    %vm2045 = vcmp.ge.f32.partialorder %v2037, 0.0
    %vm2046 = vcmp.ge.f32.partialorder %v2040, 0.0
    %v2047 = vmul.f32 %v2029, 0.2
    %v2048 = vmul.f32 %v2032, 0.2
    %v2049 = vmul.f32 %v2037, 0.2
    %v2050 = vmul.f32 %v2040, 0.2
    %v2051 = vsel %vm2043, %v2029, %v2047
    %v2052 = vsel %vm2044, %v2032, %v2048
    %v2053 = vsel %vm2045, %v2037, %v2049
    %v2054 = vsel %vm2046, %v2040, %v2050
    %v2055 = vpack.c.bf16 %v2052, %v2051
    %v2056 = vpack.c.bf16 %v2054, %v2053
    %v2059 = vunpack.c.l.b16 %v2055
    %v2060 = vunpack.c.h.b16 %v2055
    %v2061 = vunpack.c.l.b16 %v2056
    %v2062 = vunpack.c.h.b16 %v2056
    %v2063 = vpack.c.b16 %v2059, %v2059
    %v2064 = vpack.c.b16 %v2060, %v2060
    %v2065 = vpack.c.b16 %v2061, %v2061
    %v2066 = vpack.c.b16 %v2062, %v2062
    %2067 = vrot.lane.b32.xlu0 %v2063, 88
    %v2068 = vpop.permute.xlu0 %2067
    %2069 = vrot.lane.b32.xlu0 %v2064, 88
    %v2070 = vpop.permute.xlu0 %2069
    %2071 = vrot.lane.b32.xlu0 %v2065, 88
    %v2072 = vpop.permute.xlu0 %2071
    %2073 = vrot.lane.b32.xlu0 %v2066, 88
    %v2074 = vpop.permute.xlu0 %2073
    %vm2079 = vcmask 782016
    %2080 = vst.msk [vmem:[#allocation7] sm:$0xf] %vm2079, %v2068
    %2081 = vst.msk [vmem:[#allocation7 + $0x4] sm:$0xf] %vm2079, %v2070
    %2082 = vst.msk [vmem:[#allocation7 + $0x8] sm:$0xf] %vm2079, %v2072
    %2083 = vst.msk [vmem:[#allocation7 + $0xc] sm:$0xf] %vm2079, %v2074
    %s2084 = scalar_lea.vmem [#allocation2], 192
    %v2085 = vld [vmem:[%s2084] sm:$0xf]
    %v2086 = vld [vmem:[%s2084 + $0x4] sm:$0xf]
    %v2087 = vld [vmem:[%s2084 + $0x8] sm:$0xf]
    %v2088 = vld [vmem:[%s2084 + $0xc] sm:$0xf]
    %v2089 = vld [vmem:[#allocation5] sm:$0xf]
    %v2090 = vld [vmem:[#allocation5 + $0x4] sm:$0xf]
    %v2091 = vld [vmem:[#allocation5 + $0x8] sm:$0xf]
    %v2092 = vld [vmem:[#allocation5 + $0xc] sm:$0xf]
    %v2093 = vld [vmem:[#allocation5 + $0x10] sm:$0xf]
    %v2094 = vld [vmem:[#allocation5 + $0x14] sm:$0xf]
    %v2095 = vld [vmem:[#allocation5 + $0x18] sm:$0xf]
    %v2096 = vld [vmem:[#allocation5 + $0x1c] sm:$0xf]
    %v2097 = vld [vmem:[#allocation5 + $0x20] sm:$0xf]
    %v2098 = vld [vmem:[#allocation5 + $0x24] sm:$0xf]
    %v2099 = vld [vmem:[#allocation5 + $0x28] sm:$0xf]
    %v2100 = vld [vmem:[#allocation5 + $0x2c] sm:$0xf]
    %v2101 = vld [vmem:[#allocation5 + $0x30] sm:$0xf]
    %v2102 = vld [vmem:[#allocation5 + $0x34] sm:$0xf]
    %v2103 = vld [vmem:[#allocation5 + $0x38] sm:$0xf]
    %v2104 = vld [vmem:[#allocation5 + $0x3c] sm:$0xf]
    %v2109 = vunpack.c.l.b16 %v2085
    %v2110 = vunpack.c.l.b16 %v2086
    %v2111 = vunpack.c.l.b16 %v2087
    %v2112 = vunpack.c.l.b16 %v2088
    %v2113 = vpack.c.b16 %v2110, %v2109
    %v2114 = vpack.c.b16 %v2112, %v2111
    %v2133 = vunpack.c.l.b16 %v2089
    %v2134 = vunpack.c.l.b16 %v2090
    %v2135 = vunpack.c.l.b16 %v2091
    %v2136 = vunpack.c.l.b16 %v2092
    %v2137 = vunpack.c.l.b16 %v2093
    %v2138 = vunpack.c.l.b16 %v2094
    %v2139 = vunpack.c.l.b16 %v2095
    %v2140 = vunpack.c.l.b16 %v2096
    %v2141 = vunpack.c.l.b16 %v2097
    %v2142 = vunpack.c.l.b16 %v2098
    %v2143 = vunpack.c.l.b16 %v2099
    %v2144 = vunpack.c.l.b16 %v2100
    %v2145 = vunpack.c.l.b16 %v2101
    %v2146 = vunpack.c.l.b16 %v2102
    %v2147 = vunpack.c.l.b16 %v2103
    %v2148 = vunpack.c.l.b16 %v2104
    %v2149 = vpack.c.b16 %v2134, %v2133
    %v2150 = vpack.c.b16 %v2136, %v2135
    %v2151 = vpack.c.b16 %v2138, %v2137
    %v2152 = vpack.c.b16 %v2140, %v2139
    %v2153 = vpack.c.b16 %v2142, %v2141
    %v2154 = vpack.c.b16 %v2144, %v2143
    %v2155 = vpack.c.b16 %v2146, %v2145
    %v2156 = vpack.c.b16 %v2148, %v2147
    %2165 = vmatprep.subr.bf16.mxu0 0
    %2166 = vmatpush1.bf16.msra.mxu0 %v2149
    %2167 = vmatprep.subr.bf16.mxu0 0
    %2168 = vmatpush1.bf16.msra.mxu0 %v2150
    %2169 = vmatprep.subr.bf16.mxu0 0
    %2170 = vmatpush1.bf16.msra.mxu0 %v2151
    %2171 = vmatprep.subr.bf16.mxu0 0
    %2172 = vmatpush1.bf16.msra.mxu0 %v2152
    %2173 = vmatprep.subr.bf16.mxu0 0
    %2174 = vmatpush1.bf16.msra.mxu0 %v2153
    %2175 = vmatprep.subr.bf16.mxu0 0
    %2176 = vmatpush1.bf16.msra.mxu0 %v2154
    %2177 = vmatprep.subr.bf16.mxu0 0
    %2178 = vmatpush1.bf16.msra.mxu0 %v2155
    %2179 = vmatprep.subr.bf16.mxu0 0
    %2180 = vmatpush1.bf16.msra.mxu0 %v2156
    %2181 = vmatprep.subr.bf16.mxu0 0
    %2182 = vmatpush1.bf16.msra.mxu0 0
    %2183 = vmatprep.subr.bf16.mxu0 0
    %2184 = vmatpush1.bf16.msra.mxu0 0
    %2185 = vmatprep.subr.bf16.mxu0 0
    %2186 = vmatpush1.bf16.msra.mxu0 0
    %2187 = vmatprep.subr.bf16.mxu0 0
    %2188 = vmatpush1.bf16.msra.mxu0 0
    %2189 = vmatprep.subr.bf16.mxu0 0
    %2190 = vmatpush1.bf16.msra.mxu0 0
    %2191 = vmatprep.subr.bf16.mxu0 0
    %2192 = vmatpush1.bf16.msra.mxu0 0
    %2193 = vmatprep.subr.bf16.mxu0 0
    %2194 = vmatpush1.bf16.msra.mxu0 0
    %2195 = vmatprep.subr.bf16.mxu0 0
    %2196 = vmatpush1.bf16.msra.mxu0 0
    %2197 = vmatprep.mubr.bf16.mxu0 0
    %2198 = vmatmul.mubr.bf16.gmra.mrb[0].mxu0 %v2113
    %v2199 = vpop.f32.mrb[0].mxu0
    %v2200 = vadd.f32 0.0, %v2199
    %v2201 = vpop.f32.mrb[0].mxu0
    %v2202 = vpop.f32.mrb[0].mxu0
    %v2203 = vadd.f32 0.0, %v2202
    %v2204 = vpop.f32.mrb[0].mxu0
    %2205 = vmatprep.mubr.bf16.mxu0 0
    %2206 = vmatmul.mubr.bf16.gmra.mrb[0].mxu0 %v2114
    %v2207 = vpop.f32.mrb[0].mxu0
    %v2208 = vadd.f32 0.0, %v2207
    %v2209 = vpop.f32.mrb[0].mxu0
    %v2210 = vpop.f32.mrb[0].mxu0
    %v2211 = vadd.f32 0.0, %v2210
    %v2212 = vpop.f32.mrb[0].mxu0
    %2213 = vdwg.mxu0
    %vm2214 = vcmp.ge.f32.partialorder %v2200, 0.0
    %vm2215 = vcmp.ge.f32.partialorder %v2203, 0.0
    %vm2216 = vcmp.ge.f32.partialorder %v2208, 0.0
    %vm2217 = vcmp.ge.f32.partialorder %v2211, 0.0
    %v2218 = vmul.f32 %v2200, 0.2
    %v2219 = vmul.f32 %v2203, 0.2
    %v2220 = vmul.f32 %v2208, 0.2
    %v2221 = vmul.f32 %v2211, 0.2
    %v2222 = vsel %vm2214, %v2200, %v2218
    %v2223 = vsel %vm2215, %v2203, %v2219
    %v2224 = vsel %vm2216, %v2208, %v2220
    %v2225 = vsel %vm2217, %v2211, %v2221
    %v2226 = vpack.c.bf16 %v2223, %v2222
    %v2227 = vpack.c.bf16 %v2225, %v2224
    %v2230 = vunpack.c.l.b16 %v2226
    %v2231 = vunpack.c.h.b16 %v2226
    %v2232 = vunpack.c.l.b16 %v2227
    %v2233 = vunpack.c.h.b16 %v2227
    %v2234 = vpack.c.b16 %v2230, %v2230
    %v2235 = vpack.c.b16 %v2231, %v2231
    %v2236 = vpack.c.b16 %v2232, %v2232
    %v2237 = vpack.c.b16 %v2233, %v2233
    %2238 = vrot.lane.b32.xlu0 %v2234, 96
    %v2239 = vpop.permute.xlu0 %2238
    %2240 = vrot.lane.b32.xlu0 %v2235, 96
    %v2241 = vpop.permute.xlu0 %2240
    %2242 = vrot.lane.b32.xlu0 %v2236, 96
    %v2243 = vpop.permute.xlu0 %2242
    %2244 = vrot.lane.b32.xlu0 %v2237, 96
    %v2245 = vpop.permute.xlu0 %2244
    %vm2250 = vcmask 847616
    %2251 = vst.msk [vmem:[#allocation7] sm:$0xf] %vm2250, %v2239
    %2252 = vst.msk [vmem:[#allocation7 + $0x4] sm:$0xf] %vm2250, %v2241
    %2253 = vst.msk [vmem:[#allocation7 + $0x8] sm:$0xf] %vm2250, %v2243
    %2254 = vst.msk [vmem:[#allocation7 + $0xc] sm:$0xf] %vm2250, %v2245
    %s2255 = scalar_lea.vmem [#allocation2], 208
    %v2256 = vld [vmem:[%s2255] sm:$0xf]
    %v2257 = vld [vmem:[%s2255 + $0x4] sm:$0xf]
    %v2258 = vld [vmem:[%s2255 + $0x8] sm:$0xf]
    %v2259 = vld [vmem:[%s2255 + $0xc] sm:$0xf]
    %v2260 = vld [vmem:[#allocation5] sm:$0xf]
    %v2261 = vld [vmem:[#allocation5 + $0x4] sm:$0xf]
    %v2262 = vld [vmem:[#allocation5 + $0x8] sm:$0xf]
    %v2263 = vld [vmem:[#allocation5 + $0xc] sm:$0xf]
    %v2264 = vld [vmem:[#allocation5 + $0x10] sm:$0xf]
    %v2265 = vld [vmem:[#allocation5 + $0x14] sm:$0xf]
    %v2266 = vld [vmem:[#allocation5 + $0x18] sm:$0xf]
    %v2267 = vld [vmem:[#allocation5 + $0x1c] sm:$0xf]
    %v2268 = vld [vmem:[#allocation5 + $0x20] sm:$0xf]
    %v2269 = vld [vmem:[#allocation5 + $0x24] sm:$0xf]
    %v2270 = vld [vmem:[#allocation5 + $0x28] sm:$0xf]
    %v2271 = vld [vmem:[#allocation5 + $0x2c] sm:$0xf]
    %v2272 = vld [vmem:[#allocation5 + $0x30] sm:$0xf]
    %v2273 = vld [vmem:[#allocation5 + $0x34] sm:$0xf]
    %v2274 = vld [vmem:[#allocation5 + $0x38] sm:$0xf]
    %v2275 = vld [vmem:[#allocation5 + $0x3c] sm:$0xf]
    %v2280 = vunpack.c.l.b16 %v2256
    %v2281 = vunpack.c.l.b16 %v2257
    %v2282 = vunpack.c.l.b16 %v2258
    %v2283 = vunpack.c.l.b16 %v2259
    %v2284 = vpack.c.b16 %v2281, %v2280
    %v2285 = vpack.c.b16 %v2283, %v2282
    %v2304 = vunpack.c.l.b16 %v2260
    %v2305 = vunpack.c.l.b16 %v2261
    %v2306 = vunpack.c.l.b16 %v2262
    %v2307 = vunpack.c.l.b16 %v2263
    %v2308 = vunpack.c.l.b16 %v2264
    %v2309 = vunpack.c.l.b16 %v2265
    %v2310 = vunpack.c.l.b16 %v2266
    %v2311 = vunpack.c.l.b16 %v2267
    %v2312 = vunpack.c.l.b16 %v2268
    %v2313 = vunpack.c.l.b16 %v2269
    %v2314 = vunpack.c.l.b16 %v2270
    %v2315 = vunpack.c.l.b16 %v2271
    %v2316 = vunpack.c.l.b16 %v2272
    %v2317 = vunpack.c.l.b16 %v2273
    %v2318 = vunpack.c.l.b16 %v2274
    %v2319 = vunpack.c.l.b16 %v2275
    %v2320 = vpack.c.b16 %v2305, %v2304
    %v2321 = vpack.c.b16 %v2307, %v2306
    %v2322 = vpack.c.b16 %v2309, %v2308
    %v2323 = vpack.c.b16 %v2311, %v2310
    %v2324 = vpack.c.b16 %v2313, %v2312
    %v2325 = vpack.c.b16 %v2315, %v2314
    %v2326 = vpack.c.b16 %v2317, %v2316
    %v2327 = vpack.c.b16 %v2319, %v2318
    %2336 = vmatprep.subr.bf16.mxu0 0
    %2337 = vmatpush1.bf16.msra.mxu0 %v2320
    %2338 = vmatprep.subr.bf16.mxu0 0
    %2339 = vmatpush1.bf16.msra.mxu0 %v2321
    %2340 = vmatprep.subr.bf16.mxu0 0
    %2341 = vmatpush1.bf16.msra.mxu0 %v2322
    %2342 = vmatprep.subr.bf16.mxu0 0
    %2343 = vmatpush1.bf16.msra.mxu0 %v2323
    %2344 = vmatprep.subr.bf16.mxu0 0
    %2345 = vmatpush1.bf16.msra.mxu0 %v2324
    %2346 = vmatprep.subr.bf16.mxu0 0
    %2347 = vmatpush1.bf16.msra.mxu0 %v2325
    %2348 = vmatprep.subr.bf16.mxu0 0
    %2349 = vmatpush1.bf16.msra.mxu0 %v2326
    %2350 = vmatprep.subr.bf16.mxu0 0
    %2351 = vmatpush1.bf16.msra.mxu0 %v2327
    %2352 = vmatprep.subr.bf16.mxu0 0
    %2353 = vmatpush1.bf16.msra.mxu0 0
    %2354 = vmatprep.subr.bf16.mxu0 0
    %2355 = vmatpush1.bf16.msra.mxu0 0
    %2356 = vmatprep.subr.bf16.mxu0 0
    %2357 = vmatpush1.bf16.msra.mxu0 0
    %2358 = vmatprep.subr.bf16.mxu0 0
    %2359 = vmatpush1.bf16.msra.mxu0 0
    %2360 = vmatprep.subr.bf16.mxu0 0
    %2361 = vmatpush1.bf16.msra.mxu0 0
    %2362 = vmatprep.subr.bf16.mxu0 0
    %2363 = vmatpush1.bf16.msra.mxu0 0
    %2364 = vmatprep.subr.bf16.mxu0 0
    %2365 = vmatpush1.bf16.msra.mxu0 0
    %2366 = vmatprep.subr.bf16.mxu0 0
    %2367 = vmatpush1.bf16.msra.mxu0 0
    %2368 = vmatprep.mubr.bf16.mxu0 0
    %2369 = vmatmul.mubr.bf16.gmra.mrb[0].mxu0 %v2284
    %v2370 = vpop.f32.mrb[0].mxu0
    %v2371 = vadd.f32 0.0, %v2370
    %v2372 = vpop.f32.mrb[0].mxu0
    %v2373 = vpop.f32.mrb[0].mxu0
    %v2374 = vadd.f32 0.0, %v2373
    %v2375 = vpop.f32.mrb[0].mxu0
    %2376 = vmatprep.mubr.bf16.mxu0 0
    %2377 = vmatmul.mubr.bf16.gmra.mrb[0].mxu0 %v2285
    %v2378 = vpop.f32.mrb[0].mxu0
    %v2379 = vadd.f32 0.0, %v2378
    %v2380 = vpop.f32.mrb[0].mxu0
    %v2381 = vpop.f32.mrb[0].mxu0
    %v2382 = vadd.f32 0.0, %v2381
    %v2383 = vpop.f32.mrb[0].mxu0
    %2384 = vdwg.mxu0
    %vm2385 = vcmp.ge.f32.partialorder %v2371, 0.0
    %vm2386 = vcmp.ge.f32.partialorder %v2374, 0.0
    %vm2387 = vcmp.ge.f32.partialorder %v2379, 0.0
    %vm2388 = vcmp.ge.f32.partialorder %v2382, 0.0
    %v2389 = vmul.f32 %v2371, 0.2
    %v2390 = vmul.f32 %v2374, 0.2
    %v2391 = vmul.f32 %v2379, 0.2
    %v2392 = vmul.f32 %v2382, 0.2
    %v2393 = vsel %vm2385, %v2371, %v2389
    %v2394 = vsel %vm2386, %v2374, %v2390
    %v2395 = vsel %vm2387, %v2379, %v2391
    %v2396 = vsel %vm2388, %v2382, %v2392
    %v2397 = vpack.c.bf16 %v2394, %v2393
    %v2398 = vpack.c.bf16 %v2396, %v2395
    %v2401 = vunpack.c.l.b16 %v2397
    %v2402 = vunpack.c.h.b16 %v2397
    %v2403 = vunpack.c.l.b16 %v2398
    %v2404 = vunpack.c.h.b16 %v2398
    %v2405 = vpack.c.b16 %v2401, %v2401
    %v2406 = vpack.c.b16 %v2402, %v2402
    %v2407 = vpack.c.b16 %v2403, %v2403
    %v2408 = vpack.c.b16 %v2404, %v2404
    %2409 = vrot.lane.b32.xlu0 %v2405, 104
    %v2410 = vpop.permute.xlu0 %2409
    %2411 = vrot.lane.b32.xlu0 %v2406, 104
    %v2412 = vpop.permute.xlu0 %2411
    %2413 = vrot.lane.b32.xlu0 %v2407, 104
    %v2414 = vpop.permute.xlu0 %2413
    %2415 = vrot.lane.b32.xlu0 %v2408, 104
    %v2416 = vpop.permute.xlu0 %2415
    %vm2421 = vcmask 913216
    %2422 = vst.msk [vmem:[#allocation7] sm:$0xf] %vm2421, %v2410
    %2423 = vst.msk [vmem:[#allocation7 + $0x4] sm:$0xf] %vm2421, %v2412
    %2424 = vst.msk [vmem:[#allocation7 + $0x8] sm:$0xf] %vm2421, %v2414
    %2425 = vst.msk [vmem:[#allocation7 + $0xc] sm:$0xf] %vm2421, %v2416
    %s2426 = scalar_lea.vmem [#allocation2], 224
    %v2427 = vld [vmem:[%s2426] sm:$0xf]
    %v2428 = vld [vmem:[%s2426 + $0x4] sm:$0xf]
    %v2429 = vld [vmem:[%s2426 + $0x8] sm:$0xf]
    %v2430 = vld [vmem:[%s2426 + $0xc] sm:$0xf]
    %v2431 = vld [vmem:[#allocation5] sm:$0xf]
    %v2432 = vld [vmem:[#allocation5 + $0x4] sm:$0xf]
    %v2433 = vld [vmem:[#allocation5 + $0x8] sm:$0xf]
    %v2434 = vld [vmem:[#allocation5 + $0xc] sm:$0xf]
    %v2435 = vld [vmem:[#allocation5 + $0x10] sm:$0xf]
    %v2436 = vld [vmem:[#allocation5 + $0x14] sm:$0xf]
    %v2437 = vld [vmem:[#allocation5 + $0x18] sm:$0xf]
    %v2438 = vld [vmem:[#allocation5 + $0x1c] sm:$0xf]
    %v2439 = vld [vmem:[#allocation5 + $0x20] sm:$0xf]
    %v2440 = vld [vmem:[#allocation5 + $0x24] sm:$0xf]
    %v2441 = vld [vmem:[#allocation5 + $0x28] sm:$0xf]
    %v2442 = vld [vmem:[#allocation5 + $0x2c] sm:$0xf]
    %v2443 = vld [vmem:[#allocation5 + $0x30] sm:$0xf]
    %v2444 = vld [vmem:[#allocation5 + $0x34] sm:$0xf]
    %v2445 = vld [vmem:[#allocation5 + $0x38] sm:$0xf]
    %v2446 = vld [vmem:[#allocation5 + $0x3c] sm:$0xf]
    %v2451 = vunpack.c.l.b16 %v2427
    %v2452 = vunpack.c.l.b16 %v2428
    %v2453 = vunpack.c.l.b16 %v2429
    %v2454 = vunpack.c.l.b16 %v2430
    %v2455 = vpack.c.b16 %v2452, %v2451
    %v2456 = vpack.c.b16 %v2454, %v2453
    %v2475 = vunpack.c.l.b16 %v2431
    %v2476 = vunpack.c.l.b16 %v2432
    %v2477 = vunpack.c.l.b16 %v2433
    %v2478 = vunpack.c.l.b16 %v2434
    %v2479 = vunpack.c.l.b16 %v2435
    %v2480 = vunpack.c.l.b16 %v2436
    %v2481 = vunpack.c.l.b16 %v2437
    %v2482 = vunpack.c.l.b16 %v2438
    %v2483 = vunpack.c.l.b16 %v2439
    %v2484 = vunpack.c.l.b16 %v2440
    %v2485 = vunpack.c.l.b16 %v2441
    %v2486 = vunpack.c.l.b16 %v2442
    %v2487 = vunpack.c.l.b16 %v2443
    %v2488 = vunpack.c.l.b16 %v2444
    %v2489 = vunpack.c.l.b16 %v2445
    %v2490 = vunpack.c.l.b16 %v2446
    %v2491 = vpack.c.b16 %v2476, %v2475
    %v2492 = vpack.c.b16 %v2478, %v2477
    %v2493 = vpack.c.b16 %v2480, %v2479
    %v2494 = vpack.c.b16 %v2482, %v2481
    %v2495 = vpack.c.b16 %v2484, %v2483
    %v2496 = vpack.c.b16 %v2486, %v2485
    %v2497 = vpack.c.b16 %v2488, %v2487
    %v2498 = vpack.c.b16 %v2490, %v2489
    %2507 = vmatprep.subr.bf16.mxu0 0
    %2508 = vmatpush1.bf16.msra.mxu0 %v2491
    %2509 = vmatprep.subr.bf16.mxu0 0
    %2510 = vmatpush1.bf16.msra.mxu0 %v2492
    %2511 = vmatprep.subr.bf16.mxu0 0
    %2512 = vmatpush1.bf16.msra.mxu0 %v2493
    %2513 = vmatprep.subr.bf16.mxu0 0
    %2514 = vmatpush1.bf16.msra.mxu0 %v2494
    %2515 = vmatprep.subr.bf16.mxu0 0
    %2516 = vmatpush1.bf16.msra.mxu0 %v2495
    %2517 = vmatprep.subr.bf16.mxu0 0
    %2518 = vmatpush1.bf16.msra.mxu0 %v2496
    %2519 = vmatprep.subr.bf16.mxu0 0
    %2520 = vmatpush1.bf16.msra.mxu0 %v2497
    %2521 = vmatprep.subr.bf16.mxu0 0
    %2522 = vmatpush1.bf16.msra.mxu0 %v2498
    %2523 = vmatprep.subr.bf16.mxu0 0
    %2524 = vmatpush1.bf16.msra.mxu0 0
    %2525 = vmatprep.subr.bf16.mxu0 0
    %2526 = vmatpush1.bf16.msra.mxu0 0
    %2527 = vmatprep.subr.bf16.mxu0 0
    %2528 = vmatpush1.bf16.msra.mxu0 0
    %2529 = vmatprep.subr.bf16.mxu0 0
    %2530 = vmatpush1.bf16.msra.mxu0 0
    %2531 = vmatprep.subr.bf16.mxu0 0
    %2532 = vmatpush1.bf16.msra.mxu0 0
    %2533 = vmatprep.subr.bf16.mxu0 0
    %2534 = vmatpush1.bf16.msra.mxu0 0
    %2535 = vmatprep.subr.bf16.mxu0 0
    %2536 = vmatpush1.bf16.msra.mxu0 0
    %2537 = vmatprep.subr.bf16.mxu0 0
    %2538 = vmatpush1.bf16.msra.mxu0 0
    %2539 = vmatprep.mubr.bf16.mxu0 0
    %2540 = vmatmul.mubr.bf16.gmra.mrb[0].mxu0 %v2455
    %v2541 = vpop.f32.mrb[0].mxu0
    %v2542 = vadd.f32 0.0, %v2541
    %v2543 = vpop.f32.mrb[0].mxu0
    %v2544 = vpop.f32.mrb[0].mxu0
    %v2545 = vadd.f32 0.0, %v2544
    %v2546 = vpop.f32.mrb[0].mxu0
    %2547 = vmatprep.mubr.bf16.mxu0 0
    %2548 = vmatmul.mubr.bf16.gmra.mrb[0].mxu0 %v2456
    %v2549 = vpop.f32.mrb[0].mxu0
    %v2550 = vadd.f32 0.0, %v2549
    %v2551 = vpop.f32.mrb[0].mxu0
    %v2552 = vpop.f32.mrb[0].mxu0
    %v2553 = vadd.f32 0.0, %v2552
    %v2554 = vpop.f32.mrb[0].mxu0
    %2555 = vdwg.mxu0
    %vm2556 = vcmp.ge.f32.partialorder %v2542, 0.0
    %vm2557 = vcmp.ge.f32.partialorder %v2545, 0.0
    %vm2558 = vcmp.ge.f32.partialorder %v2550, 0.0
    %vm2559 = vcmp.ge.f32.partialorder %v2553, 0.0
    %v2560 = vmul.f32 %v2542, 0.2
    %v2561 = vmul.f32 %v2545, 0.2
    %v2562 = vmul.f32 %v2550, 0.2
    %v2563 = vmul.f32 %v2553, 0.2
    %v2564 = vsel %vm2556, %v2542, %v2560
    %v2565 = vsel %vm2557, %v2545, %v2561
    %v2566 = vsel %vm2558, %v2550, %v2562
    %v2567 = vsel %vm2559, %v2553, %v2563
    %v2568 = vpack.c.bf16 %v2565, %v2564
    %v2569 = vpack.c.bf16 %v2567, %v2566
    %v2572 = vunpack.c.l.b16 %v2568
    %v2573 = vunpack.c.h.b16 %v2568
    %v2574 = vunpack.c.l.b16 %v2569
    %v2575 = vunpack.c.h.b16 %v2569
    %v2576 = vpack.c.b16 %v2572, %v2572
    %v2577 = vpack.c.b16 %v2573, %v2573
    %v2578 = vpack.c.b16 %v2574, %v2574
    %v2579 = vpack.c.b16 %v2575, %v2575
    %2580 = vrot.lane.b32.xlu0 %v2576, 112
    %v2581 = vpop.permute.xlu0 %2580
    %2582 = vrot.lane.b32.xlu0 %v2577, 112
    %v2583 = vpop.permute.xlu0 %2582
    %2584 = vrot.lane.b32.xlu0 %v2578, 112
    %v2585 = vpop.permute.xlu0 %2584
    %2586 = vrot.lane.b32.xlu0 %v2579, 112
    %v2587 = vpop.permute.xlu0 %2586
    %vm2592 = vcmask 978816
    %2593 = vst.msk [vmem:[#allocation7] sm:$0xf] %vm2592, %v2581
    %2594 = vst.msk [vmem:[#allocation7 + $0x4] sm:$0xf] %vm2592, %v2583
    %2595 = vst.msk [vmem:[#allocation7 + $0x8] sm:$0xf] %vm2592, %v2585
    %2596 = vst.msk [vmem:[#allocation7 + $0xc] sm:$0xf] %vm2592, %v2587
    %s2597 = scalar_lea.vmem [#allocation2], 240
    %v2598 = vld [vmem:[%s2597] sm:$0xf]
    %v2599 = vld [vmem:[%s2597 + $0x4] sm:$0xf]
    %v2600 = vld [vmem:[%s2597 + $0x8] sm:$0xf]
    %v2601 = vld [vmem:[%s2597 + $0xc] sm:$0xf]
    %v2602 = vld [vmem:[#allocation5] sm:$0xf]
    %v2603 = vld [vmem:[#allocation5 + $0x4] sm:$0xf]
    %v2604 = vld [vmem:[#allocation5 + $0x8] sm:$0xf]
    %v2605 = vld [vmem:[#allocation5 + $0xc] sm:$0xf]
    %v2606 = vld [vmem:[#allocation5 + $0x10] sm:$0xf]
    %v2607 = vld [vmem:[#allocation5 + $0x14] sm:$0xf]
    %v2608 = vld [vmem:[#allocation5 + $0x18] sm:$0xf]
    %v2609 = vld [vmem:[#allocation5 + $0x1c] sm:$0xf]
    %v2610 = vld [vmem:[#allocation5 + $0x20] sm:$0xf]
    %v2611 = vld [vmem:[#allocation5 + $0x24] sm:$0xf]
    %v2612 = vld [vmem:[#allocation5 + $0x28] sm:$0xf]
    %v2613 = vld [vmem:[#allocation5 + $0x2c] sm:$0xf]
    %v2614 = vld [vmem:[#allocation5 + $0x30] sm:$0xf]
    %v2615 = vld [vmem:[#allocation5 + $0x34] sm:$0xf]
    %v2616 = vld [vmem:[#allocation5 + $0x38] sm:$0xf]
    %v2617 = vld [vmem:[#allocation5 + $0x3c] sm:$0xf]
    %v2622 = vunpack.c.l.b16 %v2598
    %v2623 = vunpack.c.l.b16 %v2599
    %v2624 = vunpack.c.l.b16 %v2600
    %v2625 = vunpack.c.l.b16 %v2601
    %v2626 = vpack.c.b16 %v2623, %v2622
    %v2627 = vpack.c.b16 %v2625, %v2624
    %v2646 = vunpack.c.l.b16 %v2602
    %v2647 = vunpack.c.l.b16 %v2603
    %v2648 = vunpack.c.l.b16 %v2604
    %v2649 = vunpack.c.l.b16 %v2605
    %v2650 = vunpack.c.l.b16 %v2606
    %v2651 = vunpack.c.l.b16 %v2607
    %v2652 = vunpack.c.l.b16 %v2608
    %v2653 = vunpack.c.l.b16 %v2609
    %v2654 = vunpack.c.l.b16 %v2610
    %v2655 = vunpack.c.l.b16 %v2611
    %v2656 = vunpack.c.l.b16 %v2612
    %v2657 = vunpack.c.l.b16 %v2613
    %v2658 = vunpack.c.l.b16 %v2614
    %v2659 = vunpack.c.l.b16 %v2615
    %v2660 = vunpack.c.l.b16 %v2616
    %v2661 = vunpack.c.l.b16 %v2617
    %v2662 = vpack.c.b16 %v2647, %v2646
    %v2663 = vpack.c.b16 %v2649, %v2648
    %v2664 = vpack.c.b16 %v2651, %v2650
    %v2665 = vpack.c.b16 %v2653, %v2652
    %v2666 = vpack.c.b16 %v2655, %v2654
    %v2667 = vpack.c.b16 %v2657, %v2656
    %v2668 = vpack.c.b16 %v2659, %v2658
    %v2669 = vpack.c.b16 %v2661, %v2660
    %2678 = vmatprep.subr.bf16.mxu0 0
    %2679 = vmatpush1.bf16.msra.mxu0 %v2662
    %2680 = vmatprep.subr.bf16.mxu0 0
    %2681 = vmatpush1.bf16.msra.mxu0 %v2663
    %2682 = vmatprep.subr.bf16.mxu0 0
    %2683 = vmatpush1.bf16.msra.mxu0 %v2664
    %2684 = vmatprep.subr.bf16.mxu0 0
    %2685 = vmatpush1.bf16.msra.mxu0 %v2665
    %2686 = vmatprep.subr.bf16.mxu0 0
    %2687 = vmatpush1.bf16.msra.mxu0 %v2666
    %2688 = vmatprep.subr.bf16.mxu0 0
    %2689 = vmatpush1.bf16.msra.mxu0 %v2667
    %2690 = vmatprep.subr.bf16.mxu0 0
    %2691 = vmatpush1.bf16.msra.mxu0 %v2668
    %2692 = vmatprep.subr.bf16.mxu0 0
    %2693 = vmatpush1.bf16.msra.mxu0 %v2669
    %2694 = vmatprep.subr.bf16.mxu0 0
    %2695 = vmatpush1.bf16.msra.mxu0 0
    %2696 = vmatprep.subr.bf16.mxu0 0
    %2697 = vmatpush1.bf16.msra.mxu0 0
    %2698 = vmatprep.subr.bf16.mxu0 0
    %2699 = vmatpush1.bf16.msra.mxu0 0
    %2700 = vmatprep.subr.bf16.mxu0 0
    %2701 = vmatpush1.bf16.msra.mxu0 0
    %2702 = vmatprep.subr.bf16.mxu0 0
    %2703 = vmatpush1.bf16.msra.mxu0 0
    %2704 = vmatprep.subr.bf16.mxu0 0
    %2705 = vmatpush1.bf16.msra.mxu0 0
    %2706 = vmatprep.subr.bf16.mxu0 0
    %2707 = vmatpush1.bf16.msra.mxu0 0
    %2708 = vmatprep.subr.bf16.mxu0 0
    %2709 = vmatpush1.bf16.msra.mxu0 0
    %2710 = vmatprep.mubr.bf16.mxu0 0
    %2711 = vmatmul.mubr.bf16.gmra.mrb[0].mxu0 %v2626
    %v2712 = vpop.f32.mrb[0].mxu0
    %v2713 = vadd.f32 0.0, %v2712
    %v2714 = vpop.f32.mrb[0].mxu0
    %v2715 = vpop.f32.mrb[0].mxu0
    %v2716 = vadd.f32 0.0, %v2715
    %v2717 = vpop.f32.mrb[0].mxu0
    %2718 = vmatprep.mubr.bf16.mxu0 0
    %2719 = vmatmul.mubr.bf16.gmra.mrb[0].mxu0 %v2627
    %v2720 = vpop.f32.mrb[0].mxu0
    %v2721 = vadd.f32 0.0, %v2720
    %v2722 = vpop.f32.mrb[0].mxu0
    %v2723 = vpop.f32.mrb[0].mxu0
    %v2724 = vadd.f32 0.0, %v2723
    %v2725 = vpop.f32.mrb[0].mxu0
    %2726 = vdwg.mxu0
    %vm2727 = vcmp.ge.f32.partialorder %v2713, 0.0
    %vm2728 = vcmp.ge.f32.partialorder %v2716, 0.0
    %vm2729 = vcmp.ge.f32.partialorder %v2721, 0.0
    %vm2730 = vcmp.ge.f32.partialorder %v2724, 0.0
    %v2731 = vmul.f32 %v2713, 0.2
    %v2732 = vmul.f32 %v2716, 0.2
    %v2733 = vmul.f32 %v2721, 0.2
    %v2734 = vmul.f32 %v2724, 0.2
    %v2735 = vsel %vm2727, %v2713, %v2731
    %v2736 = vsel %vm2728, %v2716, %v2732
    %v2737 = vsel %vm2729, %v2721, %v2733
    %v2738 = vsel %vm2730, %v2724, %v2734
    %v2739 = vpack.c.bf16 %v2736, %v2735
    %v2740 = vpack.c.bf16 %v2738, %v2737
    %v2743 = vunpack.c.l.b16 %v2739
    %v2744 = vunpack.c.h.b16 %v2739
    %v2745 = vunpack.c.l.b16 %v2740
    %v2746 = vunpack.c.h.b16 %v2740
    %v2747 = vpack.c.b16 %v2743, %v2743
    %v2748 = vpack.c.b16 %v2744, %v2744
    %v2749 = vpack.c.b16 %v2745, %v2745
    %v2750 = vpack.c.b16 %v2746, %v2746
    %2751 = vrot.lane.b32.xlu0 %v2747, 120
    %v2752 = vpop.permute.xlu0 %2751
    %2753 = vrot.lane.b32.xlu0 %v2748, 120
    %v2754 = vpop.permute.xlu0 %2753
    %2755 = vrot.lane.b32.xlu0 %v2749, 120
    %v2756 = vpop.permute.xlu0 %2755
    %2757 = vrot.lane.b32.xlu0 %v2750, 120
    %v2758 = vpop.permute.xlu0 %2757
    %vm2763 = vcmask 1044416
    %2764 = vst.msk [vmem:[#allocation7] sm:$0xf] %vm2763, %v2752
    %2765 = vst.msk [vmem:[#allocation7 + $0x4] sm:$0xf] %vm2763, %v2754
    %2766 = vst.msk [vmem:[#allocation7 + $0x8] sm:$0xf] %vm2763, %v2756
    %2767 = vst.msk [vmem:[#allocation7 + $0xc] sm:$0xf] %vm2763, %v2758
    // Predicated region
    $region18: #{discriminator_forward.4} parent=1 // pred_check
      _
    $region19: #{discriminator_forward.4} parent=1 // pred_check_branch
      %2769 = sbr.rel (0) target = $region21
    $region20: #{discriminator_forward.4} parent=1 // pred_region
      %s2771 = ssub.s32 256, 256
      %2772 = vsyncadd [#allocation4], %s2771
      %s2773 = sshll.u32 [#allocation7], 4
      %s2774 = int_to_ptr.vmem [resolvable:$true] %s2773
      %2779 = dma.vmem_to_hbm [thread:$0]  %s2774, 256, %s2, [#allocation4], 64, 64, 4
    $region21: #{discriminator_forward.4} parent=1 // pred_fallthru
      _
    // Predicated region
    $region22: #{discriminator_forward.4} parent=1 // pred_check
      _
    $region23: #{discriminator_forward.4} parent=1 // pred_check_branch
      %2781 = sbr.rel (0) target = $region25
    $region24: #{discriminator_forward.4} parent=1 // pred_region
      %2782 = dma.done [#allocation4], 256
    $region25: #{discriminator_forward.4} parent=1 // pred_fallthru
      _
    %2783 = vsyncpa [#allocation3], 1
    %2784 = vsyncpa [#allocation6], 1
    %2785 = vsyncpa [#allocation4], 1

// kernel: tile.23
$region0: #{tile.23}
  %s0 = inlined_call_operand.vmem [shape: f32[16,8,16], index: 0, kind: input, shape index: {}]
  %s1 = inlined_call_operand.hbm [shape: f32[16,128], index: 1, kind: output, shape index: {}]
  $region1: #{tile.23} parent=0
    #allocation0 [shape = 'u8[8192]{0}', space=vmem, size = 0x2000, scoped, tag = 'operand span for operand 1']
    #allocation1 [shape = 's32[1]{0}', space=sflag, size = 0x4, scoped, tag = 'scoped memory for tile.23']
    %2 = vsyncpa [#allocation1], 0
    %v3 = vld [vmem:[%s0] ss:$8 sm:$0xf]
    %v4 = vld [vmem:[%s0] ss:$8 sm:$0xf0]
    %vm5 = vcmask 1047556
    %v6 = vsel %vm5, %v4, %v3
    %vm7 = vcmask 130048
    %8 = vst.msk [vmem:[#allocation0] sm:$0xff] %vm7, %v6
    %s9 = scalar_lea.vmem %s0, 64
    %v10 = vld [vmem:[%s9] ss:$8 sm:$0xf]
    %s11 = scalar_lea.vmem %s0, 64
    %v12 = vld [vmem:[%s11] ss:$8 sm:$0xf0]
    %vm13 = vcmask 1047556
    %v14 = vsel %vm13, %v12, %v10
    %vm15 = vcmask 130048
    %s16 = scalar_lea.vmem [#allocation0], 8
    %17 = vst.msk [vmem:[%s16] sm:$0xff] %vm15, %v14
    %s18 = scalar_lea.vmem %s0, 7
    %v19 = vld [vmem:[%s18] ss:$8 sm:$0xf]
    %s20 = scalar_lea.vmem %s0, 7
    %v21 = vld [vmem:[%s20] ss:$8 sm:$0xf0]
    %vm22 = vcmask 1047556
    %v23 = vsel %vm22, %v21, %v19
    %24 = vrot.lane.b32.xlu0 %v23, 112
    %v25 = vpop.permute.xlu0 %24
    %vm26 = vcmask 1048448
    %27 = vst.msk [vmem:[#allocation0] sm:$0xff] %vm26, %v25
    %s28 = scalar_lea.vmem %s0, 71
    %v29 = vld [vmem:[%s28] ss:$8 sm:$0xf]
    %s30 = scalar_lea.vmem %s0, 71
    %v31 = vld [vmem:[%s30] ss:$8 sm:$0xf0]
    %vm32 = vcmask 1047556
    %v33 = vsel %vm32, %v31, %v29
    %34 = vrot.lane.b32.xlu0 %v33, 112
    %v35 = vpop.permute.xlu0 %34
    %vm36 = vcmask 1048448
    %s37 = scalar_lea.vmem [#allocation0], 8
    %38 = vst.msk [vmem:[%s37] sm:$0xff] %vm36, %v35
    %s39 = scalar_lea.vmem %s0, 6
    %v40 = vld [vmem:[%s39] ss:$8 sm:$0xf]
    %s41 = scalar_lea.vmem %s0, 6
    %v42 = vld [vmem:[%s41] ss:$8 sm:$0xf0]
    %vm43 = vcmask 1047556
    %v44 = vsel %vm43, %v42, %v40
    %45 = vrot.lane.b32.xlu0 %v44, 96
    %v46 = vpop.permute.xlu0 %45
    %vm47 = vcmask 917248
    %48 = vst.msk [vmem:[#allocation0] sm:$0xff] %vm47, %v46
    %s49 = scalar_lea.vmem %s0, 70
    %v50 = vld [vmem:[%s49] ss:$8 sm:$0xf]
    %s51 = scalar_lea.vmem %s0, 70
    %v52 = vld [vmem:[%s51] ss:$8 sm:$0xf0]
    %vm53 = vcmask 1047556
    %v54 = vsel %vm53, %v52, %v50
    %55 = vrot.lane.b32.xlu0 %v54, 96
    %v56 = vpop.permute.xlu0 %55
    %vm57 = vcmask 917248
    %s58 = scalar_lea.vmem [#allocation0], 8
    %59 = vst.msk [vmem:[%s58] sm:$0xff] %vm57, %v56
    %s60 = scalar_lea.vmem %s0, 5
    %v61 = vld [vmem:[%s60] ss:$8 sm:$0xf]
    %s62 = scalar_lea.vmem %s0, 5
    %v63 = vld [vmem:[%s62] ss:$8 sm:$0xf0]
    %vm64 = vcmask 1047556
    %v65 = vsel %vm64, %v63, %v61
    %66 = vrot.lane.b32.xlu0 %v65, 80
    %v67 = vpop.permute.xlu0 %66
    %vm68 = vcmask 786048
    %69 = vst.msk [vmem:[#allocation0] sm:$0xff] %vm68, %v67
    %s70 = scalar_lea.vmem %s0, 69
    %v71 = vld [vmem:[%s70] ss:$8 sm:$0xf]
    %s72 = scalar_lea.vmem %s0, 69
    %v73 = vld [vmem:[%s72] ss:$8 sm:$0xf0]
    %vm74 = vcmask 1047556
    %v75 = vsel %vm74, %v73, %v71
    %76 = vrot.lane.b32.xlu0 %v75, 80
    %v77 = vpop.permute.xlu0 %76
    %vm78 = vcmask 786048
    %s79 = scalar_lea.vmem [#allocation0], 8
    %80 = vst.msk [vmem:[%s79] sm:$0xff] %vm78, %v77
    %s81 = scalar_lea.vmem %s0, 4
    %v82 = vld [vmem:[%s81] ss:$8 sm:$0xf]
    %s83 = scalar_lea.vmem %s0, 4
    %v84 = vld [vmem:[%s83] ss:$8 sm:$0xf0]
    %vm85 = vcmask 1047556
    %v86 = vsel %vm85, %v84, %v82
    %87 = vrot.lane.b32.xlu0 %v86, 64
    %v88 = vpop.permute.xlu0 %87
    %vm89 = vcmask 654848
    %90 = vst.msk [vmem:[#allocation0] sm:$0xff] %vm89, %v88
    %s91 = scalar_lea.vmem %s0, 68
    %v92 = vld [vmem:[%s91] ss:$8 sm:$0xf]
    %s93 = scalar_lea.vmem %s0, 68
    %v94 = vld [vmem:[%s93] ss:$8 sm:$0xf0]
    %vm95 = vcmask 1047556
    %v96 = vsel %vm95, %v94, %v92
    %97 = vrot.lane.b32.xlu0 %v96, 64
    %v98 = vpop.permute.xlu0 %97
    %vm99 = vcmask 654848
    %s100 = scalar_lea.vmem [#allocation0], 8
    %101 = vst.msk [vmem:[%s100] sm:$0xff] %vm99, %v98
    %s102 = scalar_lea.vmem %s0, 3
    %v103 = vld [vmem:[%s102] ss:$8 sm:$0xf]
    %s104 = scalar_lea.vmem %s0, 3
    %v105 = vld [vmem:[%s104] ss:$8 sm:$0xf0]
    %vm106 = vcmask 1047556
    %v107 = vsel %vm106, %v105, %v103
    %108 = vrot.lane.b32.xlu0 %v107, 48
    %v109 = vpop.permute.xlu0 %108
    %vm110 = vcmask 523648
    %111 = vst.msk [vmem:[#allocation0] sm:$0xff] %vm110, %v109
    %s112 = scalar_lea.vmem %s0, 67
    %v113 = vld [vmem:[%s112] ss:$8 sm:$0xf]
    %s114 = scalar_lea.vmem %s0, 67
    %v115 = vld [vmem:[%s114] ss:$8 sm:$0xf0]
    %vm116 = vcmask 1047556
    %v117 = vsel %vm116, %v115, %v113
    %118 = vrot.lane.b32.xlu0 %v117, 48
    %v119 = vpop.permute.xlu0 %118
    %vm120 = vcmask 523648
    %s121 = scalar_lea.vmem [#allocation0], 8
    %122 = vst.msk [vmem:[%s121] sm:$0xff] %vm120, %v119
    %s123 = scalar_lea.vmem %s0, 2
    %v124 = vld [vmem:[%s123] ss:$8 sm:$0xf]
    %s125 = scalar_lea.vmem %s0, 2
    %v126 = vld [vmem:[%s125] ss:$8 sm:$0xf0]
    %vm127 = vcmask 1047556
    %v128 = vsel %vm127, %v126, %v124
    %129 = vrot.lane.b32.xlu0 %v128, 32
    %v130 = vpop.permute.xlu0 %129
    %vm131 = vcmask 392448
    %132 = vst.msk [vmem:[#allocation0] sm:$0xff] %vm131, %v130
    %s133 = scalar_lea.vmem %s0, 66
    %v134 = vld [vmem:[%s133] ss:$8 sm:$0xf]
    %s135 = scalar_lea.vmem %s0, 66
    %v136 = vld [vmem:[%s135] ss:$8 sm:$0xf0]
    %vm137 = vcmask 1047556
    %v138 = vsel %vm137, %v136, %v134
    %139 = vrot.lane.b32.xlu0 %v138, 32
    %v140 = vpop.permute.xlu0 %139
    %vm141 = vcmask 392448
    %s142 = scalar_lea.vmem [#allocation0], 8
    %143 = vst.msk [vmem:[%s142] sm:$0xff] %vm141, %v140
    %s144 = scalar_lea.vmem %s0, 1
    %v145 = vld [vmem:[%s144] ss:$8 sm:$0xf]
    %s146 = scalar_lea.vmem %s0, 1
    %v147 = vld [vmem:[%s146] ss:$8 sm:$0xf0]
    %vm148 = vcmask 1047556
    %v149 = vsel %vm148, %v147, %v145
    %150 = vrot.lane.b32.xlu0 %v149, 16
    %v151 = vpop.permute.xlu0 %150
    %vm152 = vcmask 261248
    %153 = vst.msk [vmem:[#allocation0] sm:$0xff] %vm152, %v151
    %s154 = scalar_lea.vmem %s0, 65
    %v155 = vld [vmem:[%s154] ss:$8 sm:$0xf]
    %s156 = scalar_lea.vmem %s0, 65
    %v157 = vld [vmem:[%s156] ss:$8 sm:$0xf0]
    %vm158 = vcmask 1047556
    %v159 = vsel %vm158, %v157, %v155
    %160 = vrot.lane.b32.xlu0 %v159, 16
    %v161 = vpop.permute.xlu0 %160
    %vm162 = vcmask 261248
    %s163 = scalar_lea.vmem [#allocation0], 8
    %164 = vst.msk [vmem:[%s163] sm:$0xff] %vm162, %v161
    %s166 = ssub.s32 256, 256
    %167 = vsyncadd [#allocation1], %s166
    %s169 = sshll.u32 [#allocation0], 4
    %s170 = int_to_ptr.vmem [resolvable:$true] %s169
    %172 = dma.vmem_to_hbm [thread:$0]  %s170, 256, %s1, [#allocation1]
    %173 = dma.done [#allocation1], 256
    %174 = vsyncpa [#allocation1], 1

// kernel: discriminator_forward.5
$region0: #{discriminator_forward.5}
  #allocation0 [shape = 'u32[]', space=smem, size = 0x4, offset = 0x4, fixed_abs, tag = 'smem constant byte address 0x4 - core index']
  #allocation1 [shape = 'u32[144,128]{1,0:T(1,128)}', space=vmem, size = 0x12000, scoped, tag = 'internal scratch']
  #allocation2 [shape = 'f32[1,16]{1,0:T(1,128)}', space=vmem, size = 0x200, scoped, tag = 'scratch operand']
  #allocation3 [shape = 'f32[1,16]{1,0:T(1,128)}', space=vmem, size = 0x200, scoped, tag = 'scratch operand']
  %s0 = inlined_call_operand.hbm [shape: bf16[8,16,256], index: 0, kind: input, shape index: {}]
  %s1 = inlined_call_operand.hbm [shape: bf16[256,16], index: 1, kind: input, shape index: {}]
  %s2 = inlined_call_operand.hbm [shape: f32[1,16], index: 2, kind: input, shape index: {}]
  %s3 = inlined_call_operand.hbm [shape: f32[1,16], index: 3, kind: input, shape index: {}]
  %s4 = inlined_call_operand.hbm [shape: f32[16,128], index: 4, kind: input, shape index: {}]
  %s5 = inlined_call_operand.hbm [shape: bf16[16,128], index: 5, kind: output, shape index: {}]
  %s6 = sld [smem:[#allocation0]]
  $region58: #{discriminator_forward.5} parent=0
    _
  %s8 = ssub.s32 1, %s6
  %s9 = scalar_select 0, %s8, %s6
  $region1: #{discriminator_forward.5} parent=0
    #allocation4 [shape = 'u8[65536]{0}', space=vmem, size = 0x10000, scoped, tag = 'input window, operand 0, single buffered']
    #allocation5 [shape = 's32[1]{0}', space=sflag, size = 0x4, scoped, tag = 'scoped memory for discriminator_forward.5']
    #allocation6 [shape = 's32[1]{0}', space=sflag, size = 0x4, scoped, tag = 'scoped memory for discriminator_forward.5']
    #allocation7 [shape = 'u8[65536]{0}', space=vmem, size = 0x10000, scoped, tag = 'input window, operand 1, single buffered']
    #allocation8 [shape = 's32[1]{0}', space=sflag, size = 0x4, scoped, tag = 'scoped memory for discriminator_forward.5']
    #allocation9 [shape = 'u8[512]{0}', space=vmem, size = 0x400, scoped, tag = 'input window, operand 2, single buffered']
    #allocation10 [shape = 'u8[512]{0}', space=vmem, size = 0x400, scoped, tag = 'input window, operand 3, single buffered']
    #allocation11 [shape = 's32[1]{0}', space=sflag, size = 0x4, scoped, tag = 'scoped memory for discriminator_forward.5']
    #allocation12 [shape = 'u8[8192]{0}', space=vmem, size = 0x2000, scoped, tag = 'input window, operand 4, single buffered']
    #allocation13 [shape = 'u8[4096]{0}', space=vmem, size = 0x1000, scoped, tag = 'output window, operand 0, single buffered']
    %10 = vsyncpa [#allocation5], 0
    %11 = vsyncpa [#allocation8], 0
    %12 = vsyncpa [#allocation11], 0
    %13 = vsyncpa [#allocation6], 0
    // Predicated region
    $region2: #{discriminator_forward.5} parent=1 // pred_check
      _
    $region3: #{discriminator_forward.5} parent=1 // pred_check_branch
      %15 = sbr.rel (0) target = $region5
    $region4: #{discriminator_forward.5} parent=1 // pred_region
      %s17 = ssub.s32 2048, 2048
      %18 = vsyncadd [#allocation5], %s17
      %s19 = sshll.u32 [#allocation4], 4
      %s20 = int_to_ptr.vmem [resolvable:$true] %s19
      %25 = dma.hbm_to_vmem [thread:$0]  %s0, 2048, %s20, [#allocation5], 128, 128, 8
    $region5: #{discriminator_forward.5} parent=1 // pred_fallthru
      _
    // Predicated region
    $region6: #{discriminator_forward.5} parent=1 // pred_check
      _
    $region7: #{discriminator_forward.5} parent=1 // pred_check_branch
      %27 = sbr.rel (0) target = $region9
    $region8: #{discriminator_forward.5} parent=1 // pred_region
      %s29 = ssub.s32 2048, 2048
      %30 = vsyncadd [#allocation8], %s29
      %s31 = sshll.u32 [#allocation7], 4
      %s32 = int_to_ptr.vmem [resolvable:$true] %s31
      %37 = dma.hbm_to_vmem [thread:$0]  %s1, 2048, %s32, [#allocation8], 64, 64, 4
    $region9: #{discriminator_forward.5} parent=1 // pred_fallthru
      _
    // Predicated region
    $region10: #{discriminator_forward.5} parent=1 // pred_check
      _
    $region11: #{discriminator_forward.5} parent=1 // pred_check_branch
      %39 = sbr.rel (0) target = $region13
    $region12: #{discriminator_forward.5} parent=1 // pred_region
      %s41 = ssub.s32 16, 16
      %42 = vsyncadd [#allocation8], %s41
      %s44 = sshll.u32 [#allocation9], 4
      %s45 = int_to_ptr.vmem [resolvable:$true] %s44
      %47 = dma.hbm_to_vmem [thread:$0]  %s2, 16, %s45, [#allocation8]
    $region13: #{discriminator_forward.5} parent=1 // pred_fallthru
      _
    // Predicated region
    $region14: #{discriminator_forward.5} parent=1 // pred_check
      _
    $region15: #{discriminator_forward.5} parent=1 // pred_check_branch
      %49 = sbr.rel (0) target = $region17
    $region16: #{discriminator_forward.5} parent=1 // pred_region
      %s51 = ssub.s32 16, 16
      %52 = vsyncadd [#allocation11], %s51
      %s54 = sshll.u32 [#allocation10], 4
      %s55 = int_to_ptr.vmem [resolvable:$true] %s54
      %57 = dma.hbm_to_vmem [thread:$0]  %s3, 16, %s55, [#allocation11]
    $region17: #{discriminator_forward.5} parent=1 // pred_fallthru
      _
    // Predicated region
    $region18: #{discriminator_forward.5} parent=1 // pred_check
      _
    $region19: #{discriminator_forward.5} parent=1 // pred_check_branch
      %59 = sbr.rel (0) target = $region21
    $region20: #{discriminator_forward.5} parent=1 // pred_region
      %s61 = ssub.s32 256, 256
      %62 = vsyncadd [#allocation11], %s61
      %s63 = sshll.u32 [#allocation12], 4
      %s64 = int_to_ptr.vmem [resolvable:$true] %s63
      %69 = dma.hbm_to_vmem [thread:$0]  %s4, 256, %s64, [#allocation11], 128, 128, 8
    $region21: #{discriminator_forward.5} parent=1 // pred_fallthru
      _
    // Predicated region
    $region22: #{discriminator_forward.5} parent=1 // pred_check
      _
    $region23: #{discriminator_forward.5} parent=1 // pred_check_branch
      %71 = sbr.rel (0) target = $region25
    $region24: #{discriminator_forward.5} parent=1 // pred_region
      %72 = dma.done [#allocation5], 2048
    $region25: #{discriminator_forward.5} parent=1 // pred_fallthru
      _
    // Predicated region
    $region26: #{discriminator_forward.5} parent=1 // pred_check
      _
    $region27: #{discriminator_forward.5} parent=1 // pred_check_branch
      %74 = sbr.rel (0) target = $region29
    $region28: #{discriminator_forward.5} parent=1 // pred_region
      %75 = dma.done [#allocation8], 2048
    $region29: #{discriminator_forward.5} parent=1 // pred_fallthru
      _
    // Predicated region
    $region30: #{discriminator_forward.5} parent=1 // pred_check
      _
    $region31: #{discriminator_forward.5} parent=1 // pred_check_branch
      %77 = sbr.rel (0) target = $region33
    $region32: #{discriminator_forward.5} parent=1 // pred_region
      %78 = dma.done [#allocation8], 16
    $region33: #{discriminator_forward.5} parent=1 // pred_fallthru
      _
    // Predicated region
    $region34: #{discriminator_forward.5} parent=1 // pred_check
      _
    $region35: #{discriminator_forward.5} parent=1 // pred_check_branch
      %80 = sbr.rel (0) target = $region37
    $region36: #{discriminator_forward.5} parent=1 // pred_region
      %81 = dma.done [#allocation11], 16
    $region37: #{discriminator_forward.5} parent=1 // pred_fallthru
      _
    // Predicated region
    $region38: #{discriminator_forward.5} parent=1 // pred_check
      _
    $region39: #{discriminator_forward.5} parent=1 // pred_check_branch
      %83 = sbr.rel (0) target = $region41
    $region40: #{discriminator_forward.5} parent=1 // pred_region
      %84 = dma.done [#allocation11], 256
    $region41: #{discriminator_forward.5} parent=1 // pred_fallthru
      _
    %p86 = scmp.eq.s32.totalorder 0, 0
    // Predicated region
    $region42: #{discriminator_forward.5} parent=1 // pred_check
      %p87 = pneg %p86
    $region43: #{discriminator_forward.5} parent=1 // pred_check_branch
      %89 = sbr.rel (%p87) target = $region45
    $region44: #{discriminator_forward.5} parent=1 // pred_region
      %vm90 = vcmask 122880
      %91 = vst.msk [vmem:[#allocation2] sm:$0x1] %vm90, 0.0
      %92 = vst.msk [vmem:[#allocation3] sm:$0x1] %vm90, 0.0
    $region45: #{discriminator_forward.5} parent=1 // pred_fallthru
      _
    %s93 = smul.u32 0, 16
    %v94 = vld [vmem:[#allocation4] sm:$0xff]
    %v95 = vld [vmem:[#allocation4 + $0x8] sm:$0xff]
    %v96 = vld [vmem:[#allocation7] sm:$0xf]
    %v97 = vld [vmem:[#allocation7 + $0x4] sm:$0xf]
    %v98 = vld [vmem:[#allocation7 + $0x8] sm:$0xf]
    %v99 = vld [vmem:[#allocation7 + $0xc] sm:$0xf]
    %v100 = vld [vmem:[#allocation7 + $0x10] sm:$0xf]
    %v101 = vld [vmem:[#allocation7 + $0x14] sm:$0xf]
    %v102 = vld [vmem:[#allocation7 + $0x18] sm:$0xf]
    %v103 = vld [vmem:[#allocation7 + $0x1c] sm:$0xf]
    %v104 = vld [vmem:[#allocation7 + $0x20] sm:$0xf]
    %v105 = vld [vmem:[#allocation7 + $0x24] sm:$0xf]
    %v106 = vld [vmem:[#allocation7 + $0x28] sm:$0xf]
    %v107 = vld [vmem:[#allocation7 + $0x2c] sm:$0xf]
    %v108 = vld [vmem:[#allocation7 + $0x30] sm:$0xf]
    %v109 = vld [vmem:[#allocation7 + $0x34] sm:$0xf]
    %v110 = vld [vmem:[#allocation7 + $0x38] sm:$0xf]
    %v111 = vld [vmem:[#allocation7 + $0x3c] sm:$0xf]
    %v112 = vld [vmem:[#allocation7 + $0x40] sm:$0xf]
    %v113 = vld [vmem:[#allocation7 + $0x44] sm:$0xf]
    %v114 = vld [vmem:[#allocation7 + $0x48] sm:$0xf]
    %v115 = vld [vmem:[#allocation7 + $0x4c] sm:$0xf]
    %v116 = vld [vmem:[#allocation7 + $0x50] sm:$0xf]
    %v117 = vld [vmem:[#allocation7 + $0x54] sm:$0xf]
    %v118 = vld [vmem:[#allocation7 + $0x58] sm:$0xf]
    %v119 = vld [vmem:[#allocation7 + $0x5c] sm:$0xf]
    %v120 = vld [vmem:[#allocation7 + $0x60] sm:$0xf]
    %v121 = vld [vmem:[#allocation7 + $0x64] sm:$0xf]
    %v122 = vld [vmem:[#allocation7 + $0x68] sm:$0xf]
    %v123 = vld [vmem:[#allocation7 + $0x6c] sm:$0xf]
    %v124 = vld [vmem:[#allocation7 + $0x70] sm:$0xf]
    %v125 = vld [vmem:[#allocation7 + $0x74] sm:$0xf]
    %v126 = vld [vmem:[#allocation7 + $0x78] sm:$0xf]
    %v127 = vld [vmem:[#allocation7 + $0x7c] sm:$0xf]
    %v130 = vunpack.c.l.b16 %v94
    %v131 = vunpack.c.h.b16 %v94
    %v132 = vunpack.c.l.b16 %v95
    %v133 = vunpack.c.h.b16 %v95
    %v134 = vpack.c.b16 %v132, %v130
    %v135 = vpack.c.b16 %v133, %v131
    %v170 = vunpack.c.l.b16 %v96
    %v171 = vunpack.c.l.b16 %v97
    %v172 = vunpack.c.l.b16 %v98
    %v173 = vunpack.c.l.b16 %v99
    %v174 = vunpack.c.l.b16 %v100
    %v175 = vunpack.c.l.b16 %v101
    %v176 = vunpack.c.l.b16 %v102
    %v177 = vunpack.c.l.b16 %v103
    %v178 = vunpack.c.l.b16 %v104
    %v179 = vunpack.c.l.b16 %v105
    %v180 = vunpack.c.l.b16 %v106
    %v181 = vunpack.c.l.b16 %v107
    %v182 = vunpack.c.l.b16 %v108
    %v183 = vunpack.c.l.b16 %v109
    %v184 = vunpack.c.l.b16 %v110
    %v185 = vunpack.c.l.b16 %v111
    %v186 = vunpack.c.l.b16 %v112
    %v187 = vunpack.c.l.b16 %v113
    %v188 = vunpack.c.l.b16 %v114
    %v189 = vunpack.c.l.b16 %v115
    %v190 = vunpack.c.l.b16 %v116
    %v191 = vunpack.c.l.b16 %v117
    %v192 = vunpack.c.l.b16 %v118
    %v193 = vunpack.c.l.b16 %v119
    %v194 = vunpack.c.l.b16 %v120
    %v195 = vunpack.c.l.b16 %v121
    %v196 = vunpack.c.l.b16 %v122
    %v197 = vunpack.c.l.b16 %v123
    %v198 = vunpack.c.l.b16 %v124
    %v199 = vunpack.c.l.b16 %v125
    %v200 = vunpack.c.l.b16 %v126
    %v201 = vunpack.c.l.b16 %v127
    %v202 = vpack.c.b16 %v171, %v170
    %v203 = vpack.c.b16 %v173, %v172
    %v204 = vpack.c.b16 %v175, %v174
    %v205 = vpack.c.b16 %v177, %v176
    %v206 = vpack.c.b16 %v179, %v178
    %v207 = vpack.c.b16 %v181, %v180
    %v208 = vpack.c.b16 %v183, %v182
    %v209 = vpack.c.b16 %v185, %v184
    %v210 = vpack.c.b16 %v187, %v186
    %v211 = vpack.c.b16 %v189, %v188
    %v212 = vpack.c.b16 %v191, %v190
    %v213 = vpack.c.b16 %v193, %v192
    %v214 = vpack.c.b16 %v195, %v194
    %v215 = vpack.c.b16 %v197, %v196
    %v216 = vpack.c.b16 %v199, %v198
    %v217 = vpack.c.b16 %v201, %v200
    %234 = vmatprep.subr.bf16.mxu0 0
    %235 = vmatpush1.bf16.msra.mxu0 %v202
    %236 = vmatprep.subr.bf16.mxu0 0
    %237 = vmatpush1.bf16.msra.mxu0 %v203
    %238 = vmatprep.subr.bf16.mxu0 0
    %239 = vmatpush1.bf16.msra.mxu0 %v204
    %240 = vmatprep.subr.bf16.mxu0 0
    %241 = vmatpush1.bf16.msra.mxu0 %v205
    %242 = vmatprep.subr.bf16.mxu0 0
    %243 = vmatpush1.bf16.msra.mxu0 %v206
    %244 = vmatprep.subr.bf16.mxu0 0
    %245 = vmatpush1.bf16.msra.mxu0 %v207
    %246 = vmatprep.subr.bf16.mxu0 0
    %247 = vmatpush1.bf16.msra.mxu0 %v208
    %248 = vmatprep.subr.bf16.mxu0 0
    %249 = vmatpush1.bf16.msra.mxu0 %v209
    %250 = vmatprep.subr.bf16.mxu0 0
    %251 = vmatpush1.bf16.msra.mxu0 %v210
    %252 = vmatprep.subr.bf16.mxu0 0
    %253 = vmatpush1.bf16.msra.mxu0 %v211
    %254 = vmatprep.subr.bf16.mxu0 0
    %255 = vmatpush1.bf16.msra.mxu0 %v212
    %256 = vmatprep.subr.bf16.mxu0 0
    %257 = vmatpush1.bf16.msra.mxu0 %v213
    %258 = vmatprep.subr.bf16.mxu0 0
    %259 = vmatpush1.bf16.msra.mxu0 %v214
    %260 = vmatprep.subr.bf16.mxu0 0
    %261 = vmatpush1.bf16.msra.mxu0 %v215
    %262 = vmatprep.subr.bf16.mxu0 0
    %263 = vmatpush1.bf16.msra.mxu0 %v216
    %264 = vmatprep.subr.bf16.mxu0 0
    %265 = vmatpush1.bf16.msra.mxu0 %v217
    %266 = vmatprep.mubr.bf16.mxu0 %v135
    %267 = vmatmul.mubr.bf16.gmra.mrb[0].mxu0 %v134
    %v268 = vpop.f32.mrb[0].mxu0
    %v269 = vadd.f32 0.0, %v268
    %v270 = vpop.f32.mrb[0].mxu0
    %v271 = vpop.f32.mrb[0].mxu0
    %v272 = vadd.f32 0.0, %v271
    %v273 = vpop.f32.mrb[0].mxu0
    %274 = vdwg.mxu0
    %v275 = vld [vmem:[#allocation2] sm:$0x1]
    %vm276 = vcmask 130048
    %v277 = vsel %vm276, %v269, 0.0
    %v278 = vsel %vm276, %v272, 0.0
    %v279 = vadd.f32 %v277, %v278
    %v280 = vrot.slane %v279, 4
    %v281 = vadd.f32 %v279, %v280
    %v282 = vrot.slane %v281, 2
    %v283 = vadd.f32 %v281, %v282
    %v284 = vrot.slane %v283, 1
    %v285 = vadd.f32 %v283, %v284
    %v286 = vadd.f32 %v275, %v285
    %vm287 = vcmask 122880
    %288 = vst.msk [vmem:[#allocation2] sm:$0x1] %vm287, %v286
    %v289 = vld [vmem:[#allocation3] sm:$0x1]
    %v290 = vmul.f32 %v269, %v269
    %v291 = vmul.f32 %v272, %v272
    %v292 = vsel %vm276, %v290, 0.0
    %v293 = vsel %vm276, %v291, 0.0
    %v294 = vadd.f32 %v292, %v293
    %v295 = vrot.slane %v294, 4
    %v296 = vadd.f32 %v294, %v295
    %v297 = vrot.slane %v296, 2
    %v298 = vadd.f32 %v296, %v297
    %v299 = vrot.slane %v298, 1
    %v300 = vadd.f32 %v298, %v299
    %v301 = vadd.f32 %v289, %v300
    %302 = vst.msk [vmem:[#allocation3] sm:$0x1] %vm287, %v301
    %v303 = vpack.c.bf16 %v272, %v269
    %v305 = vunpack.c.l.b16 %v303
    %v306 = vunpack.c.h.b16 %v303
    %v307 = vpack.c.b16 %v305, %v305
    %v308 = vpack.c.b16 %v306, %v306
    %s311 = sshra.s32 %s93, 3
    %s312 = sand.u32 %s93, 7
    %s313 = smul.addr %s311, 4
    %s314 = scalar_lea.vmem [#allocation13], %s313
    %vm315 = vcmask 125952
    %316 = vst.msk [vmem:[%s314] sm:$0xf] %vm315, %v307
    %317 = vst.msk [vmem:[%s314 + $0x4] sm:$0xf] %vm315, %v308
    %s318 = scalar_lea.vmem [#allocation4], 16
    %v319 = vld [vmem:[%s318] sm:$0xff]
    %v320 = vld [vmem:[%s318 + $0x8] sm:$0xff]
    %v321 = vld [vmem:[#allocation7] sm:$0xf]
    %v322 = vld [vmem:[#allocation7 + $0x4] sm:$0xf]
    %v323 = vld [vmem:[#allocation7 + $0x8] sm:$0xf]
    %v324 = vld [vmem:[#allocation7 + $0xc] sm:$0xf]
    %v325 = vld [vmem:[#allocation7 + $0x10] sm:$0xf]
    %v326 = vld [vmem:[#allocation7 + $0x14] sm:$0xf]
    %v327 = vld [vmem:[#allocation7 + $0x18] sm:$0xf]
    %v328 = vld [vmem:[#allocation7 + $0x1c] sm:$0xf]
    %v329 = vld [vmem:[#allocation7 + $0x20] sm:$0xf]
    %v330 = vld [vmem:[#allocation7 + $0x24] sm:$0xf]
    %v331 = vld [vmem:[#allocation7 + $0x28] sm:$0xf]
    %v332 = vld [vmem:[#allocation7 + $0x2c] sm:$0xf]
    %v333 = vld [vmem:[#allocation7 + $0x30] sm:$0xf]
    %v334 = vld [vmem:[#allocation7 + $0x34] sm:$0xf]
    %v335 = vld [vmem:[#allocation7 + $0x38] sm:$0xf]
    %v336 = vld [vmem:[#allocation7 + $0x3c] sm:$0xf]
    %v337 = vld [vmem:[#allocation7 + $0x40] sm:$0xf]
    %v338 = vld [vmem:[#allocation7 + $0x44] sm:$0xf]
    %v339 = vld [vmem:[#allocation7 + $0x48] sm:$0xf]
    %v340 = vld [vmem:[#allocation7 + $0x4c] sm:$0xf]
    %v341 = vld [vmem:[#allocation7 + $0x50] sm:$0xf]
    %v342 = vld [vmem:[#allocation7 + $0x54] sm:$0xf]
    %v343 = vld [vmem:[#allocation7 + $0x58] sm:$0xf]
    %v344 = vld [vmem:[#allocation7 + $0x5c] sm:$0xf]
    %v345 = vld [vmem:[#allocation7 + $0x60] sm:$0xf]
    %v346 = vld [vmem:[#allocation7 + $0x64] sm:$0xf]
    %v347 = vld [vmem:[#allocation7 + $0x68] sm:$0xf]
    %v348 = vld [vmem:[#allocation7 + $0x6c] sm:$0xf]
    %v349 = vld [vmem:[#allocation7 + $0x70] sm:$0xf]
    %v350 = vld [vmem:[#allocation7 + $0x74] sm:$0xf]
    %v351 = vld [vmem:[#allocation7 + $0x78] sm:$0xf]
    %v352 = vld [vmem:[#allocation7 + $0x7c] sm:$0xf]
    %v355 = vunpack.c.l.b16 %v319
    %v356 = vunpack.c.h.b16 %v319
    %v357 = vunpack.c.l.b16 %v320
    %v358 = vunpack.c.h.b16 %v320
    %v359 = vpack.c.b16 %v357, %v355
    %v360 = vpack.c.b16 %v358, %v356
    %v395 = vunpack.c.l.b16 %v321
    %v396 = vunpack.c.l.b16 %v322
    %v397 = vunpack.c.l.b16 %v323
    %v398 = vunpack.c.l.b16 %v324
    %v399 = vunpack.c.l.b16 %v325
    %v400 = vunpack.c.l.b16 %v326
    %v401 = vunpack.c.l.b16 %v327
    %v402 = vunpack.c.l.b16 %v328
    %v403 = vunpack.c.l.b16 %v329
    %v404 = vunpack.c.l.b16 %v330
    %v405 = vunpack.c.l.b16 %v331
    %v406 = vunpack.c.l.b16 %v332
    %v407 = vunpack.c.l.b16 %v333
    %v408 = vunpack.c.l.b16 %v334
    %v409 = vunpack.c.l.b16 %v335
    %v410 = vunpack.c.l.b16 %v336
    %v411 = vunpack.c.l.b16 %v337
    %v412 = vunpack.c.l.b16 %v338
    %v413 = vunpack.c.l.b16 %v339
    %v414 = vunpack.c.l.b16 %v340
    %v415 = vunpack.c.l.b16 %v341
    %v416 = vunpack.c.l.b16 %v342
    %v417 = vunpack.c.l.b16 %v343
    %v418 = vunpack.c.l.b16 %v344
    %v419 = vunpack.c.l.b16 %v345
    %v420 = vunpack.c.l.b16 %v346
    %v421 = vunpack.c.l.b16 %v347
    %v422 = vunpack.c.l.b16 %v348
    %v423 = vunpack.c.l.b16 %v349
    %v424 = vunpack.c.l.b16 %v350
    %v425 = vunpack.c.l.b16 %v351
    %v426 = vunpack.c.l.b16 %v352
    %v427 = vpack.c.b16 %v396, %v395
    %v428 = vpack.c.b16 %v398, %v397
    %v429 = vpack.c.b16 %v400, %v399
    %v430 = vpack.c.b16 %v402, %v401
    %v431 = vpack.c.b16 %v404, %v403
    %v432 = vpack.c.b16 %v406, %v405
    %v433 = vpack.c.b16 %v408, %v407
    %v434 = vpack.c.b16 %v410, %v409
    %v435 = vpack.c.b16 %v412, %v411
    %v436 = vpack.c.b16 %v414, %v413
    %v437 = vpack.c.b16 %v416, %v415
    %v438 = vpack.c.b16 %v418, %v417
    %v439 = vpack.c.b16 %v420, %v419
    %v440 = vpack.c.b16 %v422, %v421
    %v441 = vpack.c.b16 %v424, %v423
    %v442 = vpack.c.b16 %v426, %v425
    %459 = vmatprep.subr.bf16.mxu0 0
    %460 = vmatpush1.bf16.msra.mxu0 %v427
    %461 = vmatprep.subr.bf16.mxu0 0
    %462 = vmatpush1.bf16.msra.mxu0 %v428
    %463 = vmatprep.subr.bf16.mxu0 0
    %464 = vmatpush1.bf16.msra.mxu0 %v429
    %465 = vmatprep.subr.bf16.mxu0 0
    %466 = vmatpush1.bf16.msra.mxu0 %v430
    %467 = vmatprep.subr.bf16.mxu0 0
    %468 = vmatpush1.bf16.msra.mxu0 %v431
    %469 = vmatprep.subr.bf16.mxu0 0
    %470 = vmatpush1.bf16.msra.mxu0 %v432
    %471 = vmatprep.subr.bf16.mxu0 0
    %472 = vmatpush1.bf16.msra.mxu0 %v433
    %473 = vmatprep.subr.bf16.mxu0 0
    %474 = vmatpush1.bf16.msra.mxu0 %v434
    %475 = vmatprep.subr.bf16.mxu0 0
    %476 = vmatpush1.bf16.msra.mxu0 %v435
    %477 = vmatprep.subr.bf16.mxu0 0
    %478 = vmatpush1.bf16.msra.mxu0 %v436
    %479 = vmatprep.subr.bf16.mxu0 0
    %480 = vmatpush1.bf16.msra.mxu0 %v437
    %481 = vmatprep.subr.bf16.mxu0 0
    %482 = vmatpush1.bf16.msra.mxu0 %v438
    %483 = vmatprep.subr.bf16.mxu0 0
    %484 = vmatpush1.bf16.msra.mxu0 %v439
    %485 = vmatprep.subr.bf16.mxu0 0
    %486 = vmatpush1.bf16.msra.mxu0 %v440
    %487 = vmatprep.subr.bf16.mxu0 0
    %488 = vmatpush1.bf16.msra.mxu0 %v441
    %489 = vmatprep.subr.bf16.mxu0 0
    %490 = vmatpush1.bf16.msra.mxu0 %v442
    %491 = vmatprep.mubr.bf16.mxu0 %v360
    %492 = vmatmul.mubr.bf16.gmra.mrb[0].mxu0 %v359
    %v493 = vpop.f32.mrb[0].mxu0
    %v494 = vadd.f32 0.0, %v493
    %v495 = vpop.f32.mrb[0].mxu0
    %v496 = vpop.f32.mrb[0].mxu0
    %v497 = vadd.f32 0.0, %v496
    %v498 = vpop.f32.mrb[0].mxu0
    %499 = vdwg.mxu0
    %v500 = vld [vmem:[#allocation2] sm:$0x1]
    %v501 = vsel %vm276, %v494, 0.0
    %v502 = vsel %vm276, %v497, 0.0
    %v503 = vadd.f32 %v501, %v502
    %v504 = vrot.slane %v503, 4
    %v505 = vadd.f32 %v503, %v504
    %v506 = vrot.slane %v505, 2
    %v507 = vadd.f32 %v505, %v506
    %v508 = vrot.slane %v507, 1
    %v509 = vadd.f32 %v507, %v508
    %v510 = vadd.f32 %v500, %v509
    %511 = vst.msk [vmem:[#allocation2] sm:$0x1] %vm287, %v510
    %v512 = vld [vmem:[#allocation3] sm:$0x1]
    %v513 = vmul.f32 %v494, %v494
    %v514 = vmul.f32 %v497, %v497
    %v515 = vsel %vm276, %v513, 0.0
    %v516 = vsel %vm276, %v514, 0.0
    %v517 = vadd.f32 %v515, %v516
    %v518 = vrot.slane %v517, 4
    %v519 = vadd.f32 %v517, %v518
    %v520 = vrot.slane %v519, 2
    %v521 = vadd.f32 %v519, %v520
    %v522 = vrot.slane %v521, 1
    %v523 = vadd.f32 %v521, %v522
    %v524 = vadd.f32 %v512, %v523
    %525 = vst.msk [vmem:[#allocation3] sm:$0x1] %vm287, %v524
    %v526 = vpack.c.bf16 %v497, %v494
    %v528 = vunpack.c.l.b16 %v526
    %v529 = vunpack.c.h.b16 %v526
    %v530 = vpack.c.b16 %v528, %v528
    %v531 = vpack.c.b16 %v529, %v529
    %532 = vrot.lane.b32.xlu0 %v530, 16
    %v533 = vpop.permute.xlu0 %532
    %534 = vrot.lane.b32.xlu0 %v531, 16
    %v535 = vpop.permute.xlu0 %534
    %vm538 = vcmask 257152
    %539 = vst.msk [vmem:[%s314] sm:$0xf] %vm538, %v533
    %540 = vst.msk [vmem:[%s314 + $0x4] sm:$0xf] %vm538, %v535
    %s541 = scalar_lea.vmem [#allocation4], 32
    %v542 = vld [vmem:[%s541] sm:$0xff]
    %v543 = vld [vmem:[%s541 + $0x8] sm:$0xff]
    %v544 = vld [vmem:[#allocation7] sm:$0xf]
    %v545 = vld [vmem:[#allocation7 + $0x4] sm:$0xf]
    %v546 = vld [vmem:[#allocation7 + $0x8] sm:$0xf]
    %v547 = vld [vmem:[#allocation7 + $0xc] sm:$0xf]
    %v548 = vld [vmem:[#allocation7 + $0x10] sm:$0xf]
    %v549 = vld [vmem:[#allocation7 + $0x14] sm:$0xf]
    %v550 = vld [vmem:[#allocation7 + $0x18] sm:$0xf]
    %v551 = vld [vmem:[#allocation7 + $0x1c] sm:$0xf]
    %v552 = vld [vmem:[#allocation7 + $0x20] sm:$0xf]
    %v553 = vld [vmem:[#allocation7 + $0x24] sm:$0xf]
    %v554 = vld [vmem:[#allocation7 + $0x28] sm:$0xf]
    %v555 = vld [vmem:[#allocation7 + $0x2c] sm:$0xf]
    %v556 = vld [vmem:[#allocation7 + $0x30] sm:$0xf]
    %v557 = vld [vmem:[#allocation7 + $0x34] sm:$0xf]
    %v558 = vld [vmem:[#allocation7 + $0x38] sm:$0xf]
    %v559 = vld [vmem:[#allocation7 + $0x3c] sm:$0xf]
    %v560 = vld [vmem:[#allocation7 + $0x40] sm:$0xf]
    %v561 = vld [vmem:[#allocation7 + $0x44] sm:$0xf]
    %v562 = vld [vmem:[#allocation7 + $0x48] sm:$0xf]
    %v563 = vld [vmem:[#allocation7 + $0x4c] sm:$0xf]
    %v564 = vld [vmem:[#allocation7 + $0x50] sm:$0xf]
    %v565 = vld [vmem:[#allocation7 + $0x54] sm:$0xf]
    %v566 = vld [vmem:[#allocation7 + $0x58] sm:$0xf]
    %v567 = vld [vmem:[#allocation7 + $0x5c] sm:$0xf]
    %v568 = vld [vmem:[#allocation7 + $0x60] sm:$0xf]
    %v569 = vld [vmem:[#allocation7 + $0x64] sm:$0xf]
    %v570 = vld [vmem:[#allocation7 + $0x68] sm:$0xf]
    %v571 = vld [vmem:[#allocation7 + $0x6c] sm:$0xf]
    %v572 = vld [vmem:[#allocation7 + $0x70] sm:$0xf]
    %v573 = vld [vmem:[#allocation7 + $0x74] sm:$0xf]
    %v574 = vld [vmem:[#allocation7 + $0x78] sm:$0xf]
    %v575 = vld [vmem:[#allocation7 + $0x7c] sm:$0xf]
    %v578 = vunpack.c.l.b16 %v542
    %v579 = vunpack.c.h.b16 %v542
    %v580 = vunpack.c.l.b16 %v543
    %v581 = vunpack.c.h.b16 %v543
    %v582 = vpack.c.b16 %v580, %v578
    %v583 = vpack.c.b16 %v581, %v579
    %v618 = vunpack.c.l.b16 %v544
    %v619 = vunpack.c.l.b16 %v545
    %v620 = vunpack.c.l.b16 %v546
    %v621 = vunpack.c.l.b16 %v547
    %v622 = vunpack.c.l.b16 %v548
    %v623 = vunpack.c.l.b16 %v549
    %v624 = vunpack.c.l.b16 %v550
    %v625 = vunpack.c.l.b16 %v551
    %v626 = vunpack.c.l.b16 %v552
    %v627 = vunpack.c.l.b16 %v553
    %v628 = vunpack.c.l.b16 %v554
    %v629 = vunpack.c.l.b16 %v555
    %v630 = vunpack.c.l.b16 %v556
    %v631 = vunpack.c.l.b16 %v557
    %v632 = vunpack.c.l.b16 %v558
    %v633 = vunpack.c.l.b16 %v559
    %v634 = vunpack.c.l.b16 %v560
    %v635 = vunpack.c.l.b16 %v561
    %v636 = vunpack.c.l.b16 %v562
    %v637 = vunpack.c.l.b16 %v563
    %v638 = vunpack.c.l.b16 %v564
    %v639 = vunpack.c.l.b16 %v565
    %v640 = vunpack.c.l.b16 %v566
    %v641 = vunpack.c.l.b16 %v567
    %v642 = vunpack.c.l.b16 %v568
    %v643 = vunpack.c.l.b16 %v569
    %v644 = vunpack.c.l.b16 %v570
    %v645 = vunpack.c.l.b16 %v571
    %v646 = vunpack.c.l.b16 %v572
    %v647 = vunpack.c.l.b16 %v573
    %v648 = vunpack.c.l.b16 %v574
    %v649 = vunpack.c.l.b16 %v575
    %v650 = vpack.c.b16 %v619, %v618
    %v651 = vpack.c.b16 %v621, %v620
    %v652 = vpack.c.b16 %v623, %v622
    %v653 = vpack.c.b16 %v625, %v624
    %v654 = vpack.c.b16 %v627, %v626
    %v655 = vpack.c.b16 %v629, %v628
    %v656 = vpack.c.b16 %v631, %v630
    %v657 = vpack.c.b16 %v633, %v632
    %v658 = vpack.c.b16 %v635, %v634
    %v659 = vpack.c.b16 %v637, %v636
    %v660 = vpack.c.b16 %v639, %v638
    %v661 = vpack.c.b16 %v641, %v640
    %v662 = vpack.c.b16 %v643, %v642
    %v663 = vpack.c.b16 %v645, %v644
    %v664 = vpack.c.b16 %v647, %v646
    %v665 = vpack.c.b16 %v649, %v648
    %682 = vmatprep.subr.bf16.mxu0 0
    %683 = vmatpush1.bf16.msra.mxu0 %v650
    %684 = vmatprep.subr.bf16.mxu0 0
    %685 = vmatpush1.bf16.msra.mxu0 %v651
    %686 = vmatprep.subr.bf16.mxu0 0
    %687 = vmatpush1.bf16.msra.mxu0 %v652
    %688 = vmatprep.subr.bf16.mxu0 0
    %689 = vmatpush1.bf16.msra.mxu0 %v653
    %690 = vmatprep.subr.bf16.mxu0 0
    %691 = vmatpush1.bf16.msra.mxu0 %v654
    %692 = vmatprep.subr.bf16.mxu0 0
    %693 = vmatpush1.bf16.msra.mxu0 %v655
    %694 = vmatprep.subr.bf16.mxu0 0
    %695 = vmatpush1.bf16.msra.mxu0 %v656
    %696 = vmatprep.subr.bf16.mxu0 0
    %697 = vmatpush1.bf16.msra.mxu0 %v657
    %698 = vmatprep.subr.bf16.mxu0 0
    %699 = vmatpush1.bf16.msra.mxu0 %v658
    %700 = vmatprep.subr.bf16.mxu0 0
    %701 = vmatpush1.bf16.msra.mxu0 %v659
    %702 = vmatprep.subr.bf16.mxu0 0
    %703 = vmatpush1.bf16.msra.mxu0 %v660
    %704 = vmatprep.subr.bf16.mxu0 0
    %705 = vmatpush1.bf16.msra.mxu0 %v661
    %706 = vmatprep.subr.bf16.mxu0 0
    %707 = vmatpush1.bf16.msra.mxu0 %v662
    %708 = vmatprep.subr.bf16.mxu0 0
    %709 = vmatpush1.bf16.msra.mxu0 %v663
    %710 = vmatprep.subr.bf16.mxu0 0
    %711 = vmatpush1.bf16.msra.mxu0 %v664
    %712 = vmatprep.subr.bf16.mxu0 0
    %713 = vmatpush1.bf16.msra.mxu0 %v665
    %714 = vmatprep.mubr.bf16.mxu0 %v583
    %715 = vmatmul.mubr.bf16.gmra.mrb[0].mxu0 %v582
    %v716 = vpop.f32.mrb[0].mxu0
    %v717 = vadd.f32 0.0, %v716
    %v718 = vpop.f32.mrb[0].mxu0
    %v719 = vpop.f32.mrb[0].mxu0
    %v720 = vadd.f32 0.0, %v719
    %v721 = vpop.f32.mrb[0].mxu0
    %722 = vdwg.mxu0
    %v723 = vld [vmem:[#allocation2] sm:$0x1]
    %v724 = vsel %vm276, %v717, 0.0
    %v725 = vsel %vm276, %v720, 0.0
    %v726 = vadd.f32 %v724, %v725
    %v727 = vrot.slane %v726, 4
    %v728 = vadd.f32 %v726, %v727
    %v729 = vrot.slane %v728, 2
    %v730 = vadd.f32 %v728, %v729
    %v731 = vrot.slane %v730, 1
    %v732 = vadd.f32 %v730, %v731
    %v733 = vadd.f32 %v723, %v732
    %734 = vst.msk [vmem:[#allocation2] sm:$0x1] %vm287, %v733
    %v735 = vld [vmem:[#allocation3] sm:$0x1]
    %v736 = vmul.f32 %v717, %v717
    %v737 = vmul.f32 %v720, %v720
    %v738 = vsel %vm276, %v736, 0.0
    %v739 = vsel %vm276, %v737, 0.0
    %v740 = vadd.f32 %v738, %v739
    %v741 = vrot.slane %v740, 4
    %v742 = vadd.f32 %v740, %v741
    %v743 = vrot.slane %v742, 2
    %v744 = vadd.f32 %v742, %v743
    %v745 = vrot.slane %v744, 1
    %v746 = vadd.f32 %v744, %v745
    %v747 = vadd.f32 %v735, %v746
    %748 = vst.msk [vmem:[#allocation3] sm:$0x1] %vm287, %v747
    %v749 = vpack.c.bf16 %v720, %v717
    %v751 = vunpack.c.l.b16 %v749
    %v752 = vunpack.c.h.b16 %v749
    %v753 = vpack.c.b16 %v751, %v751
    %v754 = vpack.c.b16 %v752, %v752
    %755 = vrot.lane.b32.xlu0 %v753, 32
    %v756 = vpop.permute.xlu0 %755
    %757 = vrot.lane.b32.xlu0 %v754, 32
    %v758 = vpop.permute.xlu0 %757
    %vm761 = vcmask 388352
    %762 = vst.msk [vmem:[%s314] sm:$0xf] %vm761, %v756
    %763 = vst.msk [vmem:[%s314 + $0x4] sm:$0xf] %vm761, %v758
    %s764 = scalar_lea.vmem [#allocation4], 48
    %v765 = vld [vmem:[%s764] sm:$0xff]
    %v766 = vld [vmem:[%s764 + $0x8] sm:$0xff]
    %v767 = vld [vmem:[#allocation7] sm:$0xf]
    %v768 = vld [vmem:[#allocation7 + $0x4] sm:$0xf]
    %v769 = vld [vmem:[#allocation7 + $0x8] sm:$0xf]
    %v770 = vld [vmem:[#allocation7 + $0xc] sm:$0xf]
    %v771 = vld [vmem:[#allocation7 + $0x10] sm:$0xf]
    %v772 = vld [vmem:[#allocation7 + $0x14] sm:$0xf]
    %v773 = vld [vmem:[#allocation7 + $0x18] sm:$0xf]
    %v774 = vld [vmem:[#allocation7 + $0x1c] sm:$0xf]
    %v775 = vld [vmem:[#allocation7 + $0x20] sm:$0xf]
    %v776 = vld [vmem:[#allocation7 + $0x24] sm:$0xf]
    %v777 = vld [vmem:[#allocation7 + $0x28] sm:$0xf]
    %v778 = vld [vmem:[#allocation7 + $0x2c] sm:$0xf]
    %v779 = vld [vmem:[#allocation7 + $0x30] sm:$0xf]
    %v780 = vld [vmem:[#allocation7 + $0x34] sm:$0xf]
    %v781 = vld [vmem:[#allocation7 + $0x38] sm:$0xf]
    %v782 = vld [vmem:[#allocation7 + $0x3c] sm:$0xf]
    %v783 = vld [vmem:[#allocation7 + $0x40] sm:$0xf]
    %v784 = vld [vmem:[#allocation7 + $0x44] sm:$0xf]
    %v785 = vld [vmem:[#allocation7 + $0x48] sm:$0xf]
    %v786 = vld [vmem:[#allocation7 + $0x4c] sm:$0xf]
    %v787 = vld [vmem:[#allocation7 + $0x50] sm:$0xf]
    %v788 = vld [vmem:[#allocation7 + $0x54] sm:$0xf]
    %v789 = vld [vmem:[#allocation7 + $0x58] sm:$0xf]
    %v790 = vld [vmem:[#allocation7 + $0x5c] sm:$0xf]
    %v791 = vld [vmem:[#allocation7 + $0x60] sm:$0xf]
    %v792 = vld [vmem:[#allocation7 + $0x64] sm:$0xf]
    %v793 = vld [vmem:[#allocation7 + $0x68] sm:$0xf]
    %v794 = vld [vmem:[#allocation7 + $0x6c] sm:$0xf]
    %v795 = vld [vmem:[#allocation7 + $0x70] sm:$0xf]
    %v796 = vld [vmem:[#allocation7 + $0x74] sm:$0xf]
    %v797 = vld [vmem:[#allocation7 + $0x78] sm:$0xf]
    %v798 = vld [vmem:[#allocation7 + $0x7c] sm:$0xf]
    %v801 = vunpack.c.l.b16 %v765
    %v802 = vunpack.c.h.b16 %v765
    %v803 = vunpack.c.l.b16 %v766
    %v804 = vunpack.c.h.b16 %v766
    %v805 = vpack.c.b16 %v803, %v801
    %v806 = vpack.c.b16 %v804, %v802
    %v841 = vunpack.c.l.b16 %v767
    %v842 = vunpack.c.l.b16 %v768
    %v843 = vunpack.c.l.b16 %v769
    %v844 = vunpack.c.l.b16 %v770
    %v845 = vunpack.c.l.b16 %v771
    %v846 = vunpack.c.l.b16 %v772
    %v847 = vunpack.c.l.b16 %v773
    %v848 = vunpack.c.l.b16 %v774
    %v849 = vunpack.c.l.b16 %v775
    %v850 = vunpack.c.l.b16 %v776
    %v851 = vunpack.c.l.b16 %v777
    %v852 = vunpack.c.l.b16 %v778
    %v853 = vunpack.c.l.b16 %v779
    %v854 = vunpack.c.l.b16 %v780
    %v855 = vunpack.c.l.b16 %v781
    %v856 = vunpack.c.l.b16 %v782
    %v857 = vunpack.c.l.b16 %v783
    %v858 = vunpack.c.l.b16 %v784
    %v859 = vunpack.c.l.b16 %v785
    %v860 = vunpack.c.l.b16 %v786
    %v861 = vunpack.c.l.b16 %v787
    %v862 = vunpack.c.l.b16 %v788
    %v863 = vunpack.c.l.b16 %v789
    %v864 = vunpack.c.l.b16 %v790
    %v865 = vunpack.c.l.b16 %v791
    %v866 = vunpack.c.l.b16 %v792
    %v867 = vunpack.c.l.b16 %v793
    %v868 = vunpack.c.l.b16 %v794
    %v869 = vunpack.c.l.b16 %v795
    %v870 = vunpack.c.l.b16 %v796
    %v871 = vunpack.c.l.b16 %v797
    %v872 = vunpack.c.l.b16 %v798
    %v873 = vpack.c.b16 %v842, %v841
    %v874 = vpack.c.b16 %v844, %v843
    %v875 = vpack.c.b16 %v846, %v845
    %v876 = vpack.c.b16 %v848, %v847
    %v877 = vpack.c.b16 %v850, %v849
    %v878 = vpack.c.b16 %v852, %v851
    %v879 = vpack.c.b16 %v854, %v853
    %v880 = vpack.c.b16 %v856, %v855
    %v881 = vpack.c.b16 %v858, %v857
    %v882 = vpack.c.b16 %v860, %v859
    %v883 = vpack.c.b16 %v862, %v861
    %v884 = vpack.c.b16 %v864, %v863
    %v885 = vpack.c.b16 %v866, %v865
    %v886 = vpack.c.b16 %v868, %v867
    %v887 = vpack.c.b16 %v870, %v869
    %v888 = vpack.c.b16 %v872, %v871
    %905 = vmatprep.subr.bf16.mxu0 0
    %906 = vmatpush1.bf16.msra.mxu0 %v873
    %907 = vmatprep.subr.bf16.mxu0 0
    %908 = vmatpush1.bf16.msra.mxu0 %v874
    %909 = vmatprep.subr.bf16.mxu0 0
    %910 = vmatpush1.bf16.msra.mxu0 %v875
    %911 = vmatprep.subr.bf16.mxu0 0
    %912 = vmatpush1.bf16.msra.mxu0 %v876
    %913 = vmatprep.subr.bf16.mxu0 0
    %914 = vmatpush1.bf16.msra.mxu0 %v877
    %915 = vmatprep.subr.bf16.mxu0 0
    %916 = vmatpush1.bf16.msra.mxu0 %v878
    %917 = vmatprep.subr.bf16.mxu0 0
    %918 = vmatpush1.bf16.msra.mxu0 %v879
    %919 = vmatprep.subr.bf16.mxu0 0
    %920 = vmatpush1.bf16.msra.mxu0 %v880
    %921 = vmatprep.subr.bf16.mxu0 0
    %922 = vmatpush1.bf16.msra.mxu0 %v881
    %923 = vmatprep.subr.bf16.mxu0 0
    %924 = vmatpush1.bf16.msra.mxu0 %v882
    %925 = vmatprep.subr.bf16.mxu0 0
    %926 = vmatpush1.bf16.msra.mxu0 %v883
    %927 = vmatprep.subr.bf16.mxu0 0
    %928 = vmatpush1.bf16.msra.mxu0 %v884
    %929 = vmatprep.subr.bf16.mxu0 0
    %930 = vmatpush1.bf16.msra.mxu0 %v885
    %931 = vmatprep.subr.bf16.mxu0 0
    %932 = vmatpush1.bf16.msra.mxu0 %v886
    %933 = vmatprep.subr.bf16.mxu0 0
    %934 = vmatpush1.bf16.msra.mxu0 %v887
    %935 = vmatprep.subr.bf16.mxu0 0
    %936 = vmatpush1.bf16.msra.mxu0 %v888
    %937 = vmatprep.mubr.bf16.mxu0 %v806
    %938 = vmatmul.mubr.bf16.gmra.mrb[0].mxu0 %v805
    %v939 = vpop.f32.mrb[0].mxu0
    %v940 = vadd.f32 0.0, %v939
    %v941 = vpop.f32.mrb[0].mxu0
    %v942 = vpop.f32.mrb[0].mxu0
    %v943 = vadd.f32 0.0, %v942
    %v944 = vpop.f32.mrb[0].mxu0
    %945 = vdwg.mxu0
    %v946 = vld [vmem:[#allocation2] sm:$0x1]
    %v947 = vsel %vm276, %v940, 0.0
    %v948 = vsel %vm276, %v943, 0.0
    %v949 = vadd.f32 %v947, %v948
    %v950 = vrot.slane %v949, 4
    %v951 = vadd.f32 %v949, %v950
    %v952 = vrot.slane %v951, 2
    %v953 = vadd.f32 %v951, %v952
    %v954 = vrot.slane %v953, 1
    %v955 = vadd.f32 %v953, %v954
    %v956 = vadd.f32 %v946, %v955
    %957 = vst.msk [vmem:[#allocation2] sm:$0x1] %vm287, %v956
    %v958 = vld [vmem:[#allocation3] sm:$0x1]
    %v959 = vmul.f32 %v940, %v940
    %v960 = vmul.f32 %v943, %v943
    %v961 = vsel %vm276, %v959, 0.0
    %v962 = vsel %vm276, %v960, 0.0
    %v963 = vadd.f32 %v961, %v962
    %v964 = vrot.slane %v963, 4
    %v965 = vadd.f32 %v963, %v964
    %v966 = vrot.slane %v965, 2
    %v967 = vadd.f32 %v965, %v966
    %v968 = vrot.slane %v967, 1
    %v969 = vadd.f32 %v967, %v968
    %v970 = vadd.f32 %v958, %v969
    %971 = vst.msk [vmem:[#allocation3] sm:$0x1] %vm287, %v970
    %v972 = vpack.c.bf16 %v943, %v940
    %v974 = vunpack.c.l.b16 %v972
    %v975 = vunpack.c.h.b16 %v972
    %v976 = vpack.c.b16 %v974, %v974
    %v977 = vpack.c.b16 %v975, %v975
    %978 = vrot.lane.b32.xlu0 %v976, 48
    %v979 = vpop.permute.xlu0 %978
    %980 = vrot.lane.b32.xlu0 %v977, 48
    %v981 = vpop.permute.xlu0 %980
    %vm984 = vcmask 519552
    %985 = vst.msk [vmem:[%s314] sm:$0xf] %vm984, %v979
    %986 = vst.msk [vmem:[%s314 + $0x4] sm:$0xf] %vm984, %v981
    %s987 = scalar_lea.vmem [#allocation4], 64
    %v988 = vld [vmem:[%s987] sm:$0xff]
    %v989 = vld [vmem:[%s987 + $0x8] sm:$0xff]
    %v990 = vld [vmem:[#allocation7] sm:$0xf]
    %v991 = vld [vmem:[#allocation7 + $0x4] sm:$0xf]
    %v992 = vld [vmem:[#allocation7 + $0x8] sm:$0xf]
    %v993 = vld [vmem:[#allocation7 + $0xc] sm:$0xf]
    %v994 = vld [vmem:[#allocation7 + $0x10] sm:$0xf]
    %v995 = vld [vmem:[#allocation7 + $0x14] sm:$0xf]
    %v996 = vld [vmem:[#allocation7 + $0x18] sm:$0xf]
    %v997 = vld [vmem:[#allocation7 + $0x1c] sm:$0xf]
    %v998 = vld [vmem:[#allocation7 + $0x20] sm:$0xf]
    %v999 = vld [vmem:[#allocation7 + $0x24] sm:$0xf]
    %v1000 = vld [vmem:[#allocation7 + $0x28] sm:$0xf]
    %v1001 = vld [vmem:[#allocation7 + $0x2c] sm:$0xf]
    %v1002 = vld [vmem:[#allocation7 + $0x30] sm:$0xf]
    %v1003 = vld [vmem:[#allocation7 + $0x34] sm:$0xf]
    %v1004 = vld [vmem:[#allocation7 + $0x38] sm:$0xf]
    %v1005 = vld [vmem:[#allocation7 + $0x3c] sm:$0xf]
    %v1006 = vld [vmem:[#allocation7 + $0x40] sm:$0xf]
    %v1007 = vld [vmem:[#allocation7 + $0x44] sm:$0xf]
    %v1008 = vld [vmem:[#allocation7 + $0x48] sm:$0xf]
    %v1009 = vld [vmem:[#allocation7 + $0x4c] sm:$0xf]
    %v1010 = vld [vmem:[#allocation7 + $0x50] sm:$0xf]
    %v1011 = vld [vmem:[#allocation7 + $0x54] sm:$0xf]
    %v1012 = vld [vmem:[#allocation7 + $0x58] sm:$0xf]
    %v1013 = vld [vmem:[#allocation7 + $0x5c] sm:$0xf]
    %v1014 = vld [vmem:[#allocation7 + $0x60] sm:$0xf]
    %v1015 = vld [vmem:[#allocation7 + $0x64] sm:$0xf]
    %v1016 = vld [vmem:[#allocation7 + $0x68] sm:$0xf]
    %v1017 = vld [vmem:[#allocation7 + $0x6c] sm:$0xf]
    %v1018 = vld [vmem:[#allocation7 + $0x70] sm:$0xf]
    %v1019 = vld [vmem:[#allocation7 + $0x74] sm:$0xf]
    %v1020 = vld [vmem:[#allocation7 + $0x78] sm:$0xf]
    %v1021 = vld [vmem:[#allocation7 + $0x7c] sm:$0xf]
    %v1024 = vunpack.c.l.b16 %v988
    %v1025 = vunpack.c.h.b16 %v988
    %v1026 = vunpack.c.l.b16 %v989
    %v1027 = vunpack.c.h.b16 %v989
    %v1028 = vpack.c.b16 %v1026, %v1024
    %v1029 = vpack.c.b16 %v1027, %v1025
    %v1064 = vunpack.c.l.b16 %v990
    %v1065 = vunpack.c.l.b16 %v991
    %v1066 = vunpack.c.l.b16 %v992
    %v1067 = vunpack.c.l.b16 %v993
    %v1068 = vunpack.c.l.b16 %v994
    %v1069 = vunpack.c.l.b16 %v995
    %v1070 = vunpack.c.l.b16 %v996
    %v1071 = vunpack.c.l.b16 %v997
    %v1072 = vunpack.c.l.b16 %v998
    %v1073 = vunpack.c.l.b16 %v999
    %v1074 = vunpack.c.l.b16 %v1000
    %v1075 = vunpack.c.l.b16 %v1001
    %v1076 = vunpack.c.l.b16 %v1002
    %v1077 = vunpack.c.l.b16 %v1003
    %v1078 = vunpack.c.l.b16 %v1004
    %v1079 = vunpack.c.l.b16 %v1005
    %v1080 = vunpack.c.l.b16 %v1006
    %v1081 = vunpack.c.l.b16 %v1007
    %v1082 = vunpack.c.l.b16 %v1008
    %v1083 = vunpack.c.l.b16 %v1009
    %v1084 = vunpack.c.l.b16 %v1010
    %v1085 = vunpack.c.l.b16 %v1011
    %v1086 = vunpack.c.l.b16 %v1012
    %v1087 = vunpack.c.l.b16 %v1013
    %v1088 = vunpack.c.l.b16 %v1014
    %v1089 = vunpack.c.l.b16 %v1015
    %v1090 = vunpack.c.l.b16 %v1016
    %v1091 = vunpack.c.l.b16 %v1017
    %v1092 = vunpack.c.l.b16 %v1018
    %v1093 = vunpack.c.l.b16 %v1019
    %v1094 = vunpack.c.l.b16 %v1020
    %v1095 = vunpack.c.l.b16 %v1021
    %v1096 = vpack.c.b16 %v1065, %v1064
    %v1097 = vpack.c.b16 %v1067, %v1066
    %v1098 = vpack.c.b16 %v1069, %v1068
    %v1099 = vpack.c.b16 %v1071, %v1070
    %v1100 = vpack.c.b16 %v1073, %v1072
    %v1101 = vpack.c.b16 %v1075, %v1074
    %v1102 = vpack.c.b16 %v1077, %v1076
    %v1103 = vpack.c.b16 %v1079, %v1078
    %v1104 = vpack.c.b16 %v1081, %v1080
    %v1105 = vpack.c.b16 %v1083, %v1082
    %v1106 = vpack.c.b16 %v1085, %v1084
    %v1107 = vpack.c.b16 %v1087, %v1086
    %v1108 = vpack.c.b16 %v1089, %v1088
    %v1109 = vpack.c.b16 %v1091, %v1090
    %v1110 = vpack.c.b16 %v1093, %v1092
    %v1111 = vpack.c.b16 %v1095, %v1094
    %1128 = vmatprep.subr.bf16.mxu0 0
    %1129 = vmatpush1.bf16.msra.mxu0 %v1096
    %1130 = vmatprep.subr.bf16.mxu0 0
    %1131 = vmatpush1.bf16.msra.mxu0 %v1097
    %1132 = vmatprep.subr.bf16.mxu0 0
    %1133 = vmatpush1.bf16.msra.mxu0 %v1098
    %1134 = vmatprep.subr.bf16.mxu0 0
    %1135 = vmatpush1.bf16.msra.mxu0 %v1099
    %1136 = vmatprep.subr.bf16.mxu0 0
    %1137 = vmatpush1.bf16.msra.mxu0 %v1100
    %1138 = vmatprep.subr.bf16.mxu0 0
    %1139 = vmatpush1.bf16.msra.mxu0 %v1101
    %1140 = vmatprep.subr.bf16.mxu0 0
    %1141 = vmatpush1.bf16.msra.mxu0 %v1102
    %1142 = vmatprep.subr.bf16.mxu0 0
    %1143 = vmatpush1.bf16.msra.mxu0 %v1103
    %1144 = vmatprep.subr.bf16.mxu0 0
    %1145 = vmatpush1.bf16.msra.mxu0 %v1104
    %1146 = vmatprep.subr.bf16.mxu0 0
    %1147 = vmatpush1.bf16.msra.mxu0 %v1105
    %1148 = vmatprep.subr.bf16.mxu0 0
    %1149 = vmatpush1.bf16.msra.mxu0 %v1106
    %1150 = vmatprep.subr.bf16.mxu0 0
    %1151 = vmatpush1.bf16.msra.mxu0 %v1107
    %1152 = vmatprep.subr.bf16.mxu0 0
    %1153 = vmatpush1.bf16.msra.mxu0 %v1108
    %1154 = vmatprep.subr.bf16.mxu0 0
    %1155 = vmatpush1.bf16.msra.mxu0 %v1109
    %1156 = vmatprep.subr.bf16.mxu0 0
    %1157 = vmatpush1.bf16.msra.mxu0 %v1110
    %1158 = vmatprep.subr.bf16.mxu0 0
    %1159 = vmatpush1.bf16.msra.mxu0 %v1111
    %1160 = vmatprep.mubr.bf16.mxu0 %v1029
    %1161 = vmatmul.mubr.bf16.gmra.mrb[0].mxu0 %v1028
    %v1162 = vpop.f32.mrb[0].mxu0
    %v1163 = vadd.f32 0.0, %v1162
    %v1164 = vpop.f32.mrb[0].mxu0
    %v1165 = vpop.f32.mrb[0].mxu0
    %v1166 = vadd.f32 0.0, %v1165
    %v1167 = vpop.f32.mrb[0].mxu0
    %1168 = vdwg.mxu0
    %v1169 = vld [vmem:[#allocation2] sm:$0x1]
    %v1170 = vsel %vm276, %v1163, 0.0
    %v1171 = vsel %vm276, %v1166, 0.0
    %v1172 = vadd.f32 %v1170, %v1171
    %v1173 = vrot.slane %v1172, 4
    %v1174 = vadd.f32 %v1172, %v1173
    %v1175 = vrot.slane %v1174, 2
    %v1176 = vadd.f32 %v1174, %v1175
    %v1177 = vrot.slane %v1176, 1
    %v1178 = vadd.f32 %v1176, %v1177
    %v1179 = vadd.f32 %v1169, %v1178
    %1180 = vst.msk [vmem:[#allocation2] sm:$0x1] %vm287, %v1179
    %v1181 = vld [vmem:[#allocation3] sm:$0x1]
    %v1182 = vmul.f32 %v1163, %v1163
    %v1183 = vmul.f32 %v1166, %v1166
    %v1184 = vsel %vm276, %v1182, 0.0
    %v1185 = vsel %vm276, %v1183, 0.0
    %v1186 = vadd.f32 %v1184, %v1185
    %v1187 = vrot.slane %v1186, 4
    %v1188 = vadd.f32 %v1186, %v1187
    %v1189 = vrot.slane %v1188, 2
    %v1190 = vadd.f32 %v1188, %v1189
    %v1191 = vrot.slane %v1190, 1
    %v1192 = vadd.f32 %v1190, %v1191
    %v1193 = vadd.f32 %v1181, %v1192
    %1194 = vst.msk [vmem:[#allocation3] sm:$0x1] %vm287, %v1193
    %v1195 = vpack.c.bf16 %v1166, %v1163
    %v1197 = vunpack.c.l.b16 %v1195
    %v1198 = vunpack.c.h.b16 %v1195
    %v1199 = vpack.c.b16 %v1197, %v1197
    %v1200 = vpack.c.b16 %v1198, %v1198
    %1201 = vrot.lane.b32.xlu0 %v1199, 64
    %v1202 = vpop.permute.xlu0 %1201
    %1203 = vrot.lane.b32.xlu0 %v1200, 64
    %v1204 = vpop.permute.xlu0 %1203
    %vm1207 = vcmask 650752
    %1208 = vst.msk [vmem:[%s314] sm:$0xf] %vm1207, %v1202
    %1209 = vst.msk [vmem:[%s314 + $0x4] sm:$0xf] %vm1207, %v1204
    %s1210 = scalar_lea.vmem [#allocation4], 80
    %v1211 = vld [vmem:[%s1210] sm:$0xff]
    %v1212 = vld [vmem:[%s1210 + $0x8] sm:$0xff]
    %v1213 = vld [vmem:[#allocation7] sm:$0xf]
    %v1214 = vld [vmem:[#allocation7 + $0x4] sm:$0xf]
    %v1215 = vld [vmem:[#allocation7 + $0x8] sm:$0xf]
    %v1216 = vld [vmem:[#allocation7 + $0xc] sm:$0xf]
    %v1217 = vld [vmem:[#allocation7 + $0x10] sm:$0xf]
    %v1218 = vld [vmem:[#allocation7 + $0x14] sm:$0xf]
    %v1219 = vld [vmem:[#allocation7 + $0x18] sm:$0xf]
    %v1220 = vld [vmem:[#allocation7 + $0x1c] sm:$0xf]
    %v1221 = vld [vmem:[#allocation7 + $0x20] sm:$0xf]
    %v1222 = vld [vmem:[#allocation7 + $0x24] sm:$0xf]
    %v1223 = vld [vmem:[#allocation7 + $0x28] sm:$0xf]
    %v1224 = vld [vmem:[#allocation7 + $0x2c] sm:$0xf]
    %v1225 = vld [vmem:[#allocation7 + $0x30] sm:$0xf]
    %v1226 = vld [vmem:[#allocation7 + $0x34] sm:$0xf]
    %v1227 = vld [vmem:[#allocation7 + $0x38] sm:$0xf]
    %v1228 = vld [vmem:[#allocation7 + $0x3c] sm:$0xf]
    %v1229 = vld [vmem:[#allocation7 + $0x40] sm:$0xf]
    %v1230 = vld [vmem:[#allocation7 + $0x44] sm:$0xf]
    %v1231 = vld [vmem:[#allocation7 + $0x48] sm:$0xf]
    %v1232 = vld [vmem:[#allocation7 + $0x4c] sm:$0xf]
    %v1233 = vld [vmem:[#allocation7 + $0x50] sm:$0xf]
    %v1234 = vld [vmem:[#allocation7 + $0x54] sm:$0xf]
    %v1235 = vld [vmem:[#allocation7 + $0x58] sm:$0xf]
    %v1236 = vld [vmem:[#allocation7 + $0x5c] sm:$0xf]
    %v1237 = vld [vmem:[#allocation7 + $0x60] sm:$0xf]
    %v1238 = vld [vmem:[#allocation7 + $0x64] sm:$0xf]
    %v1239 = vld [vmem:[#allocation7 + $0x68] sm:$0xf]
    %v1240 = vld [vmem:[#allocation7 + $0x6c] sm:$0xf]
    %v1241 = vld [vmem:[#allocation7 + $0x70] sm:$0xf]
    %v1242 = vld [vmem:[#allocation7 + $0x74] sm:$0xf]
    %v1243 = vld [vmem:[#allocation7 + $0x78] sm:$0xf]
    %v1244 = vld [vmem:[#allocation7 + $0x7c] sm:$0xf]
    %v1247 = vunpack.c.l.b16 %v1211
    %v1248 = vunpack.c.h.b16 %v1211
    %v1249 = vunpack.c.l.b16 %v1212
    %v1250 = vunpack.c.h.b16 %v1212
    %v1251 = vpack.c.b16 %v1249, %v1247
    %v1252 = vpack.c.b16 %v1250, %v1248
    %v1287 = vunpack.c.l.b16 %v1213
    %v1288 = vunpack.c.l.b16 %v1214
    %v1289 = vunpack.c.l.b16 %v1215
    %v1290 = vunpack.c.l.b16 %v1216
    %v1291 = vunpack.c.l.b16 %v1217
    %v1292 = vunpack.c.l.b16 %v1218
    %v1293 = vunpack.c.l.b16 %v1219
    %v1294 = vunpack.c.l.b16 %v1220
    %v1295 = vunpack.c.l.b16 %v1221
    %v1296 = vunpack.c.l.b16 %v1222
    %v1297 = vunpack.c.l.b16 %v1223
    %v1298 = vunpack.c.l.b16 %v1224
    %v1299 = vunpack.c.l.b16 %v1225
    %v1300 = vunpack.c.l.b16 %v1226
    %v1301 = vunpack.c.l.b16 %v1227
    %v1302 = vunpack.c.l.b16 %v1228
    %v1303 = vunpack.c.l.b16 %v1229
    %v1304 = vunpack.c.l.b16 %v1230
    %v1305 = vunpack.c.l.b16 %v1231
    %v1306 = vunpack.c.l.b16 %v1232
    %v1307 = vunpack.c.l.b16 %v1233
    %v1308 = vunpack.c.l.b16 %v1234
    %v1309 = vunpack.c.l.b16 %v1235
    %v1310 = vunpack.c.l.b16 %v1236
    %v1311 = vunpack.c.l.b16 %v1237
    %v1312 = vunpack.c.l.b16 %v1238
    %v1313 = vunpack.c.l.b16 %v1239
    %v1314 = vunpack.c.l.b16 %v1240
    %v1315 = vunpack.c.l.b16 %v1241
    %v1316 = vunpack.c.l.b16 %v1242
    %v1317 = vunpack.c.l.b16 %v1243
    %v1318 = vunpack.c.l.b16 %v1244
    %v1319 = vpack.c.b16 %v1288, %v1287
    %v1320 = vpack.c.b16 %v1290, %v1289
    %v1321 = vpack.c.b16 %v1292, %v1291
    %v1322 = vpack.c.b16 %v1294, %v1293
    %v1323 = vpack.c.b16 %v1296, %v1295
    %v1324 = vpack.c.b16 %v1298, %v1297
    %v1325 = vpack.c.b16 %v1300, %v1299
    %v1326 = vpack.c.b16 %v1302, %v1301
    %v1327 = vpack.c.b16 %v1304, %v1303
    %v1328 = vpack.c.b16 %v1306, %v1305
    %v1329 = vpack.c.b16 %v1308, %v1307
    %v1330 = vpack.c.b16 %v1310, %v1309
    %v1331 = vpack.c.b16 %v1312, %v1311
    %v1332 = vpack.c.b16 %v1314, %v1313
    %v1333 = vpack.c.b16 %v1316, %v1315
    %v1334 = vpack.c.b16 %v1318, %v1317
    %1351 = vmatprep.subr.bf16.mxu0 0
    %1352 = vmatpush1.bf16.msra.mxu0 %v1319
    %1353 = vmatprep.subr.bf16.mxu0 0
    %1354 = vmatpush1.bf16.msra.mxu0 %v1320
    %1355 = vmatprep.subr.bf16.mxu0 0
    %1356 = vmatpush1.bf16.msra.mxu0 %v1321
    %1357 = vmatprep.subr.bf16.mxu0 0
    %1358 = vmatpush1.bf16.msra.mxu0 %v1322
    %1359 = vmatprep.subr.bf16.mxu0 0
    %1360 = vmatpush1.bf16.msra.mxu0 %v1323
    %1361 = vmatprep.subr.bf16.mxu0 0
    %1362 = vmatpush1.bf16.msra.mxu0 %v1324
    %1363 = vmatprep.subr.bf16.mxu0 0
    %1364 = vmatpush1.bf16.msra.mxu0 %v1325
    %1365 = vmatprep.subr.bf16.mxu0 0
    %1366 = vmatpush1.bf16.msra.mxu0 %v1326
    %1367 = vmatprep.subr.bf16.mxu0 0
    %1368 = vmatpush1.bf16.msra.mxu0 %v1327
    %1369 = vmatprep.subr.bf16.mxu0 0
    %1370 = vmatpush1.bf16.msra.mxu0 %v1328
    %1371 = vmatprep.subr.bf16.mxu0 0
    %1372 = vmatpush1.bf16.msra.mxu0 %v1329
    %1373 = vmatprep.subr.bf16.mxu0 0
    %1374 = vmatpush1.bf16.msra.mxu0 %v1330
    %1375 = vmatprep.subr.bf16.mxu0 0
    %1376 = vmatpush1.bf16.msra.mxu0 %v1331
    %1377 = vmatprep.subr.bf16.mxu0 0
    %1378 = vmatpush1.bf16.msra.mxu0 %v1332
    %1379 = vmatprep.subr.bf16.mxu0 0
    %1380 = vmatpush1.bf16.msra.mxu0 %v1333
    %1381 = vmatprep.subr.bf16.mxu0 0
    %1382 = vmatpush1.bf16.msra.mxu0 %v1334
    %1383 = vmatprep.mubr.bf16.mxu0 %v1252
    %1384 = vmatmul.mubr.bf16.gmra.mrb[0].mxu0 %v1251
    %v1385 = vpop.f32.mrb[0].mxu0
    %v1386 = vadd.f32 0.0, %v1385
    %v1387 = vpop.f32.mrb[0].mxu0
    %v1388 = vpop.f32.mrb[0].mxu0
    %v1389 = vadd.f32 0.0, %v1388
    %v1390 = vpop.f32.mrb[0].mxu0
    %1391 = vdwg.mxu0
    %v1392 = vld [vmem:[#allocation2] sm:$0x1]
    %v1393 = vsel %vm276, %v1386, 0.0
    %v1394 = vsel %vm276, %v1389, 0.0
    %v1395 = vadd.f32 %v1393, %v1394
    %v1396 = vrot.slane %v1395, 4
    %v1397 = vadd.f32 %v1395, %v1396
    %v1398 = vrot.slane %v1397, 2
    %v1399 = vadd.f32 %v1397, %v1398
    %v1400 = vrot.slane %v1399, 1
    %v1401 = vadd.f32 %v1399, %v1400
    %v1402 = vadd.f32 %v1392, %v1401
    %1403 = vst.msk [vmem:[#allocation2] sm:$0x1] %vm287, %v1402
    %v1404 = vld [vmem:[#allocation3] sm:$0x1]
    %v1405 = vmul.f32 %v1386, %v1386
    %v1406 = vmul.f32 %v1389, %v1389
    %v1407 = vsel %vm276, %v1405, 0.0
    %v1408 = vsel %vm276, %v1406, 0.0
    %v1409 = vadd.f32 %v1407, %v1408
    %v1410 = vrot.slane %v1409, 4
    %v1411 = vadd.f32 %v1409, %v1410
    %v1412 = vrot.slane %v1411, 2
    %v1413 = vadd.f32 %v1411, %v1412
    %v1414 = vrot.slane %v1413, 1
    %v1415 = vadd.f32 %v1413, %v1414
    %v1416 = vadd.f32 %v1404, %v1415
    %1417 = vst.msk [vmem:[#allocation3] sm:$0x1] %vm287, %v1416
    %v1418 = vpack.c.bf16 %v1389, %v1386
    %v1420 = vunpack.c.l.b16 %v1418
    %v1421 = vunpack.c.h.b16 %v1418
    %v1422 = vpack.c.b16 %v1420, %v1420
    %v1423 = vpack.c.b16 %v1421, %v1421
    %1424 = vrot.lane.b32.xlu0 %v1422, 80
    %v1425 = vpop.permute.xlu0 %1424
    %1426 = vrot.lane.b32.xlu0 %v1423, 80
    %v1427 = vpop.permute.xlu0 %1426
    %vm1430 = vcmask 781952
    %1431 = vst.msk [vmem:[%s314] sm:$0xf] %vm1430, %v1425
    %1432 = vst.msk [vmem:[%s314 + $0x4] sm:$0xf] %vm1430, %v1427
    %s1433 = scalar_lea.vmem [#allocation4], 96
    %v1434 = vld [vmem:[%s1433] sm:$0xff]
    %v1435 = vld [vmem:[%s1433 + $0x8] sm:$0xff]
    %v1436 = vld [vmem:[#allocation7] sm:$0xf]
    %v1437 = vld [vmem:[#allocation7 + $0x4] sm:$0xf]
    %v1438 = vld [vmem:[#allocation7 + $0x8] sm:$0xf]
    %v1439 = vld [vmem:[#allocation7 + $0xc] sm:$0xf]
    %v1440 = vld [vmem:[#allocation7 + $0x10] sm:$0xf]
    %v1441 = vld [vmem:[#allocation7 + $0x14] sm:$0xf]
    %v1442 = vld [vmem:[#allocation7 + $0x18] sm:$0xf]
    %v1443 = vld [vmem:[#allocation7 + $0x1c] sm:$0xf]
    %v1444 = vld [vmem:[#allocation7 + $0x20] sm:$0xf]
    %v1445 = vld [vmem:[#allocation7 + $0x24] sm:$0xf]
    %v1446 = vld [vmem:[#allocation7 + $0x28] sm:$0xf]
    %v1447 = vld [vmem:[#allocation7 + $0x2c] sm:$0xf]
    %v1448 = vld [vmem:[#allocation7 + $0x30] sm:$0xf]
    %v1449 = vld [vmem:[#allocation7 + $0x34] sm:$0xf]
    %v1450 = vld [vmem:[#allocation7 + $0x38] sm:$0xf]
    %v1451 = vld [vmem:[#allocation7 + $0x3c] sm:$0xf]
    %v1452 = vld [vmem:[#allocation7 + $0x40] sm:$0xf]
    %v1453 = vld [vmem:[#allocation7 + $0x44] sm:$0xf]
    %v1454 = vld [vmem:[#allocation7 + $0x48] sm:$0xf]
    %v1455 = vld [vmem:[#allocation7 + $0x4c] sm:$0xf]
    %v1456 = vld [vmem:[#allocation7 + $0x50] sm:$0xf]
    %v1457 = vld [vmem:[#allocation7 + $0x54] sm:$0xf]
    %v1458 = vld [vmem:[#allocation7 + $0x58] sm:$0xf]
    %v1459 = vld [vmem:[#allocation7 + $0x5c] sm:$0xf]
    %v1460 = vld [vmem:[#allocation7 + $0x60] sm:$0xf]
    %v1461 = vld [vmem:[#allocation7 + $0x64] sm:$0xf]
    %v1462 = vld [vmem:[#allocation7 + $0x68] sm:$0xf]
    %v1463 = vld [vmem:[#allocation7 + $0x6c] sm:$0xf]
    %v1464 = vld [vmem:[#allocation7 + $0x70] sm:$0xf]
    %v1465 = vld [vmem:[#allocation7 + $0x74] sm:$0xf]
    %v1466 = vld [vmem:[#allocation7 + $0x78] sm:$0xf]
    %v1467 = vld [vmem:[#allocation7 + $0x7c] sm:$0xf]
    %v1470 = vunpack.c.l.b16 %v1434
    %v1471 = vunpack.c.h.b16 %v1434
    %v1472 = vunpack.c.l.b16 %v1435
    %v1473 = vunpack.c.h.b16 %v1435
    %v1474 = vpack.c.b16 %v1472, %v1470
    %v1475 = vpack.c.b16 %v1473, %v1471
    %v1510 = vunpack.c.l.b16 %v1436
    %v1511 = vunpack.c.l.b16 %v1437
    %v1512 = vunpack.c.l.b16 %v1438
    %v1513 = vunpack.c.l.b16 %v1439
    %v1514 = vunpack.c.l.b16 %v1440
    %v1515 = vunpack.c.l.b16 %v1441
    %v1516 = vunpack.c.l.b16 %v1442
    %v1517 = vunpack.c.l.b16 %v1443
    %v1518 = vunpack.c.l.b16 %v1444
    %v1519 = vunpack.c.l.b16 %v1445
    %v1520 = vunpack.c.l.b16 %v1446
    %v1521 = vunpack.c.l.b16 %v1447
    %v1522 = vunpack.c.l.b16 %v1448
    %v1523 = vunpack.c.l.b16 %v1449
    %v1524 = vunpack.c.l.b16 %v1450
    %v1525 = vunpack.c.l.b16 %v1451
    %v1526 = vunpack.c.l.b16 %v1452
    %v1527 = vunpack.c.l.b16 %v1453
    %v1528 = vunpack.c.l.b16 %v1454
    %v1529 = vunpack.c.l.b16 %v1455
    %v1530 = vunpack.c.l.b16 %v1456
    %v1531 = vunpack.c.l.b16 %v1457
    %v1532 = vunpack.c.l.b16 %v1458
    %v1533 = vunpack.c.l.b16 %v1459
    %v1534 = vunpack.c.l.b16 %v1460
    %v1535 = vunpack.c.l.b16 %v1461
    %v1536 = vunpack.c.l.b16 %v1462
    %v1537 = vunpack.c.l.b16 %v1463
    %v1538 = vunpack.c.l.b16 %v1464
    %v1539 = vunpack.c.l.b16 %v1465
    %v1540 = vunpack.c.l.b16 %v1466
    %v1541 = vunpack.c.l.b16 %v1467
    %v1542 = vpack.c.b16 %v1511, %v1510
    %v1543 = vpack.c.b16 %v1513, %v1512
    %v1544 = vpack.c.b16 %v1515, %v1514
    %v1545 = vpack.c.b16 %v1517, %v1516
    %v1546 = vpack.c.b16 %v1519, %v1518
    %v1547 = vpack.c.b16 %v1521, %v1520
    %v1548 = vpack.c.b16 %v1523, %v1522
    %v1549 = vpack.c.b16 %v1525, %v1524
    %v1550 = vpack.c.b16 %v1527, %v1526
    %v1551 = vpack.c.b16 %v1529, %v1528
    %v1552 = vpack.c.b16 %v1531, %v1530
    %v1553 = vpack.c.b16 %v1533, %v1532
    %v1554 = vpack.c.b16 %v1535, %v1534
    %v1555 = vpack.c.b16 %v1537, %v1536
    %v1556 = vpack.c.b16 %v1539, %v1538
    %v1557 = vpack.c.b16 %v1541, %v1540
    %1574 = vmatprep.subr.bf16.mxu0 0
    %1575 = vmatpush1.bf16.msra.mxu0 %v1542
    %1576 = vmatprep.subr.bf16.mxu0 0
    %1577 = vmatpush1.bf16.msra.mxu0 %v1543
    %1578 = vmatprep.subr.bf16.mxu0 0
    %1579 = vmatpush1.bf16.msra.mxu0 %v1544
    %1580 = vmatprep.subr.bf16.mxu0 0
    %1581 = vmatpush1.bf16.msra.mxu0 %v1545
    %1582 = vmatprep.subr.bf16.mxu0 0
    %1583 = vmatpush1.bf16.msra.mxu0 %v1546
    %1584 = vmatprep.subr.bf16.mxu0 0
    %1585 = vmatpush1.bf16.msra.mxu0 %v1547
    %1586 = vmatprep.subr.bf16.mxu0 0
    %1587 = vmatpush1.bf16.msra.mxu0 %v1548
    %1588 = vmatprep.subr.bf16.mxu0 0
    %1589 = vmatpush1.bf16.msra.mxu0 %v1549
    %1590 = vmatprep.subr.bf16.mxu0 0
    %1591 = vmatpush1.bf16.msra.mxu0 %v1550
    %1592 = vmatprep.subr.bf16.mxu0 0
    %1593 = vmatpush1.bf16.msra.mxu0 %v1551
    %1594 = vmatprep.subr.bf16.mxu0 0
    %1595 = vmatpush1.bf16.msra.mxu0 %v1552
    %1596 = vmatprep.subr.bf16.mxu0 0
    %1597 = vmatpush1.bf16.msra.mxu0 %v1553
    %1598 = vmatprep.subr.bf16.mxu0 0
    %1599 = vmatpush1.bf16.msra.mxu0 %v1554
    %1600 = vmatprep.subr.bf16.mxu0 0
    %1601 = vmatpush1.bf16.msra.mxu0 %v1555
    %1602 = vmatprep.subr.bf16.mxu0 0
    %1603 = vmatpush1.bf16.msra.mxu0 %v1556
    %1604 = vmatprep.subr.bf16.mxu0 0
    %1605 = vmatpush1.bf16.msra.mxu0 %v1557
    %1606 = vmatprep.mubr.bf16.mxu0 %v1475
    %1607 = vmatmul.mubr.bf16.gmra.mrb[0].mxu0 %v1474
    %v1608 = vpop.f32.mrb[0].mxu0
    %v1609 = vadd.f32 0.0, %v1608
    %v1610 = vpop.f32.mrb[0].mxu0
    %v1611 = vpop.f32.mrb[0].mxu0
    %v1612 = vadd.f32 0.0, %v1611
    %v1613 = vpop.f32.mrb[0].mxu0
    %1614 = vdwg.mxu0
    %v1615 = vld [vmem:[#allocation2] sm:$0x1]
    %v1616 = vsel %vm276, %v1609, 0.0
    %v1617 = vsel %vm276, %v1612, 0.0
    %v1618 = vadd.f32 %v1616, %v1617
    %v1619 = vrot.slane %v1618, 4
    %v1620 = vadd.f32 %v1618, %v1619
    %v1621 = vrot.slane %v1620, 2
    %v1622 = vadd.f32 %v1620, %v1621
    %v1623 = vrot.slane %v1622, 1
    %v1624 = vadd.f32 %v1622, %v1623
    %v1625 = vadd.f32 %v1615, %v1624
    %1626 = vst.msk [vmem:[#allocation2] sm:$0x1] %vm287, %v1625
    %v1627 = vld [vmem:[#allocation3] sm:$0x1]
    %v1628 = vmul.f32 %v1609, %v1609
    %v1629 = vmul.f32 %v1612, %v1612
    %v1630 = vsel %vm276, %v1628, 0.0
    %v1631 = vsel %vm276, %v1629, 0.0
    %v1632 = vadd.f32 %v1630, %v1631
    %v1633 = vrot.slane %v1632, 4
    %v1634 = vadd.f32 %v1632, %v1633
    %v1635 = vrot.slane %v1634, 2
    %v1636 = vadd.f32 %v1634, %v1635
    %v1637 = vrot.slane %v1636, 1
    %v1638 = vadd.f32 %v1636, %v1637
    %v1639 = vadd.f32 %v1627, %v1638
    %1640 = vst.msk [vmem:[#allocation3] sm:$0x1] %vm287, %v1639
    %v1641 = vpack.c.bf16 %v1612, %v1609
    %v1643 = vunpack.c.l.b16 %v1641
    %v1644 = vunpack.c.h.b16 %v1641
    %v1645 = vpack.c.b16 %v1643, %v1643
    %v1646 = vpack.c.b16 %v1644, %v1644
    %1647 = vrot.lane.b32.xlu0 %v1645, 96
    %v1648 = vpop.permute.xlu0 %1647
    %1649 = vrot.lane.b32.xlu0 %v1646, 96
    %v1650 = vpop.permute.xlu0 %1649
    %vm1653 = vcmask 913152
    %1654 = vst.msk [vmem:[%s314] sm:$0xf] %vm1653, %v1648
    %1655 = vst.msk [vmem:[%s314 + $0x4] sm:$0xf] %vm1653, %v1650
    %s1656 = scalar_lea.vmem [#allocation4], 112
    %v1657 = vld [vmem:[%s1656] sm:$0xff]
    %v1658 = vld [vmem:[%s1656 + $0x8] sm:$0xff]
    %v1659 = vld [vmem:[#allocation7] sm:$0xf]
    %v1660 = vld [vmem:[#allocation7 + $0x4] sm:$0xf]
    %v1661 = vld [vmem:[#allocation7 + $0x8] sm:$0xf]
    %v1662 = vld [vmem:[#allocation7 + $0xc] sm:$0xf]
    %v1663 = vld [vmem:[#allocation7 + $0x10] sm:$0xf]
    %v1664 = vld [vmem:[#allocation7 + $0x14] sm:$0xf]
    %v1665 = vld [vmem:[#allocation7 + $0x18] sm:$0xf]
    %v1666 = vld [vmem:[#allocation7 + $0x1c] sm:$0xf]
    %v1667 = vld [vmem:[#allocation7 + $0x20] sm:$0xf]
    %v1668 = vld [vmem:[#allocation7 + $0x24] sm:$0xf]
    %v1669 = vld [vmem:[#allocation7 + $0x28] sm:$0xf]
    %v1670 = vld [vmem:[#allocation7 + $0x2c] sm:$0xf]
    %v1671 = vld [vmem:[#allocation7 + $0x30] sm:$0xf]
    %v1672 = vld [vmem:[#allocation7 + $0x34] sm:$0xf]
    %v1673 = vld [vmem:[#allocation7 + $0x38] sm:$0xf]
    %v1674 = vld [vmem:[#allocation7 + $0x3c] sm:$0xf]
    %v1675 = vld [vmem:[#allocation7 + $0x40] sm:$0xf]
    %v1676 = vld [vmem:[#allocation7 + $0x44] sm:$0xf]
    %v1677 = vld [vmem:[#allocation7 + $0x48] sm:$0xf]
    %v1678 = vld [vmem:[#allocation7 + $0x4c] sm:$0xf]
    %v1679 = vld [vmem:[#allocation7 + $0x50] sm:$0xf]
    %v1680 = vld [vmem:[#allocation7 + $0x54] sm:$0xf]
    %v1681 = vld [vmem:[#allocation7 + $0x58] sm:$0xf]
    %v1682 = vld [vmem:[#allocation7 + $0x5c] sm:$0xf]
    %v1683 = vld [vmem:[#allocation7 + $0x60] sm:$0xf]
    %v1684 = vld [vmem:[#allocation7 + $0x64] sm:$0xf]
    %v1685 = vld [vmem:[#allocation7 + $0x68] sm:$0xf]
    %v1686 = vld [vmem:[#allocation7 + $0x6c] sm:$0xf]
    %v1687 = vld [vmem:[#allocation7 + $0x70] sm:$0xf]
    %v1688 = vld [vmem:[#allocation7 + $0x74] sm:$0xf]
    %v1689 = vld [vmem:[#allocation7 + $0x78] sm:$0xf]
    %v1690 = vld [vmem:[#allocation7 + $0x7c] sm:$0xf]
    %v1693 = vunpack.c.l.b16 %v1657
    %v1694 = vunpack.c.h.b16 %v1657
    %v1695 = vunpack.c.l.b16 %v1658
    %v1696 = vunpack.c.h.b16 %v1658
    %v1697 = vpack.c.b16 %v1695, %v1693
    %v1698 = vpack.c.b16 %v1696, %v1694
    %v1733 = vunpack.c.l.b16 %v1659
    %v1734 = vunpack.c.l.b16 %v1660
    %v1735 = vunpack.c.l.b16 %v1661
    %v1736 = vunpack.c.l.b16 %v1662
    %v1737 = vunpack.c.l.b16 %v1663
    %v1738 = vunpack.c.l.b16 %v1664
    %v1739 = vunpack.c.l.b16 %v1665
    %v1740 = vunpack.c.l.b16 %v1666
    %v1741 = vunpack.c.l.b16 %v1667
    %v1742 = vunpack.c.l.b16 %v1668
    %v1743 = vunpack.c.l.b16 %v1669
    %v1744 = vunpack.c.l.b16 %v1670
    %v1745 = vunpack.c.l.b16 %v1671
    %v1746 = vunpack.c.l.b16 %v1672
    %v1747 = vunpack.c.l.b16 %v1673
    %v1748 = vunpack.c.l.b16 %v1674
    %v1749 = vunpack.c.l.b16 %v1675
    %v1750 = vunpack.c.l.b16 %v1676
    %v1751 = vunpack.c.l.b16 %v1677
    %v1752 = vunpack.c.l.b16 %v1678
    %v1753 = vunpack.c.l.b16 %v1679
    %v1754 = vunpack.c.l.b16 %v1680
    %v1755 = vunpack.c.l.b16 %v1681
    %v1756 = vunpack.c.l.b16 %v1682
    %v1757 = vunpack.c.l.b16 %v1683
    %v1758 = vunpack.c.l.b16 %v1684
    %v1759 = vunpack.c.l.b16 %v1685
    %v1760 = vunpack.c.l.b16 %v1686
    %v1761 = vunpack.c.l.b16 %v1687
    %v1762 = vunpack.c.l.b16 %v1688
    %v1763 = vunpack.c.l.b16 %v1689
    %v1764 = vunpack.c.l.b16 %v1690
    %v1765 = vpack.c.b16 %v1734, %v1733
    %v1766 = vpack.c.b16 %v1736, %v1735
    %v1767 = vpack.c.b16 %v1738, %v1737
    %v1768 = vpack.c.b16 %v1740, %v1739
    %v1769 = vpack.c.b16 %v1742, %v1741
    %v1770 = vpack.c.b16 %v1744, %v1743
    %v1771 = vpack.c.b16 %v1746, %v1745
    %v1772 = vpack.c.b16 %v1748, %v1747
    %v1773 = vpack.c.b16 %v1750, %v1749
    %v1774 = vpack.c.b16 %v1752, %v1751
    %v1775 = vpack.c.b16 %v1754, %v1753
    %v1776 = vpack.c.b16 %v1756, %v1755
    %v1777 = vpack.c.b16 %v1758, %v1757
    %v1778 = vpack.c.b16 %v1760, %v1759
    %v1779 = vpack.c.b16 %v1762, %v1761
    %v1780 = vpack.c.b16 %v1764, %v1763
    %1797 = vmatprep.subr.bf16.mxu0 0
    %1798 = vmatpush1.bf16.msra.mxu0 %v1765
    %1799 = vmatprep.subr.bf16.mxu0 0
    %1800 = vmatpush1.bf16.msra.mxu0 %v1766
    %1801 = vmatprep.subr.bf16.mxu0 0
    %1802 = vmatpush1.bf16.msra.mxu0 %v1767
    %1803 = vmatprep.subr.bf16.mxu0 0
    %1804 = vmatpush1.bf16.msra.mxu0 %v1768
    %1805 = vmatprep.subr.bf16.mxu0 0
    %1806 = vmatpush1.bf16.msra.mxu0 %v1769
    %1807 = vmatprep.subr.bf16.mxu0 0
    %1808 = vmatpush1.bf16.msra.mxu0 %v1770
    %1809 = vmatprep.subr.bf16.mxu0 0
    %1810 = vmatpush1.bf16.msra.mxu0 %v1771
    %1811 = vmatprep.subr.bf16.mxu0 0
    %1812 = vmatpush1.bf16.msra.mxu0 %v1772
    %1813 = vmatprep.subr.bf16.mxu0 0
    %1814 = vmatpush1.bf16.msra.mxu0 %v1773
    %1815 = vmatprep.subr.bf16.mxu0 0
    %1816 = vmatpush1.bf16.msra.mxu0 %v1774
    %1817 = vmatprep.subr.bf16.mxu0 0
    %1818 = vmatpush1.bf16.msra.mxu0 %v1775
    %1819 = vmatprep.subr.bf16.mxu0 0
    %1820 = vmatpush1.bf16.msra.mxu0 %v1776
    %1821 = vmatprep.subr.bf16.mxu0 0
    %1822 = vmatpush1.bf16.msra.mxu0 %v1777
    %1823 = vmatprep.subr.bf16.mxu0 0
    %1824 = vmatpush1.bf16.msra.mxu0 %v1778
    %1825 = vmatprep.subr.bf16.mxu0 0
    %1826 = vmatpush1.bf16.msra.mxu0 %v1779
    %1827 = vmatprep.subr.bf16.mxu0 0
    %1828 = vmatpush1.bf16.msra.mxu0 %v1780
    %1829 = vmatprep.mubr.bf16.mxu0 %v1698
    %1830 = vmatmul.mubr.bf16.gmra.mrb[0].mxu0 %v1697
    %v1831 = vpop.f32.mrb[0].mxu0
    %v1832 = vadd.f32 0.0, %v1831
    %v1833 = vpop.f32.mrb[0].mxu0
    %v1834 = vpop.f32.mrb[0].mxu0
    %v1835 = vadd.f32 0.0, %v1834
    %v1836 = vpop.f32.mrb[0].mxu0
    %1837 = vdwg.mxu0
    %v1838 = vld [vmem:[#allocation2] sm:$0x1]
    %v1839 = vsel %vm276, %v1832, 0.0
    %v1840 = vsel %vm276, %v1835, 0.0
    %v1841 = vadd.f32 %v1839, %v1840
    %v1842 = vrot.slane %v1841, 4
    %v1843 = vadd.f32 %v1841, %v1842
    %v1844 = vrot.slane %v1843, 2
    %v1845 = vadd.f32 %v1843, %v1844
    %v1846 = vrot.slane %v1845, 1
    %v1847 = vadd.f32 %v1845, %v1846
    %v1848 = vadd.f32 %v1838, %v1847
    %1849 = vst.msk [vmem:[#allocation2] sm:$0x1] %vm287, %v1848
    %v1850 = vld [vmem:[#allocation3] sm:$0x1]
    %v1851 = vmul.f32 %v1832, %v1832
    %v1852 = vmul.f32 %v1835, %v1835
    %v1853 = vsel %vm276, %v1851, 0.0
    %v1854 = vsel %vm276, %v1852, 0.0
    %v1855 = vadd.f32 %v1853, %v1854
    %v1856 = vrot.slane %v1855, 4
    %v1857 = vadd.f32 %v1855, %v1856
    %v1858 = vrot.slane %v1857, 2
    %v1859 = vadd.f32 %v1857, %v1858
    %v1860 = vrot.slane %v1859, 1
    %v1861 = vadd.f32 %v1859, %v1860
    %v1862 = vadd.f32 %v1850, %v1861
    %1863 = vst.msk [vmem:[#allocation3] sm:$0x1] %vm287, %v1862
    %v1864 = vpack.c.bf16 %v1835, %v1832
    %v1866 = vunpack.c.l.b16 %v1864
    %v1867 = vunpack.c.h.b16 %v1864
    %v1868 = vpack.c.b16 %v1866, %v1866
    %v1869 = vpack.c.b16 %v1867, %v1867
    %1870 = vrot.lane.b32.xlu0 %v1868, 112
    %v1871 = vpop.permute.xlu0 %1870
    %1872 = vrot.lane.b32.xlu0 %v1869, 112
    %v1873 = vpop.permute.xlu0 %1872
    %vm1876 = vcmask 1044352
    %1877 = vst.msk [vmem:[%s314] sm:$0xf] %vm1876, %v1871
    %1878 = vst.msk [vmem:[%s314 + $0x4] sm:$0xf] %vm1876, %v1873
    // Predicated region
    $region46: #{discriminator_forward.5} parent=1 // pred_check
      %p1879 = pneg %p86
    $region47: #{discriminator_forward.5} parent=1 // pred_check_branch
      %1881 = sbr.rel (%p1879) target = $region49
    $region48: #{discriminator_forward.5} parent=1 // pred_region
      %v1882 = vld [vmem:[#allocation2] sm:$0x1]
      %v1883 = vmul.f32 %v1882, 0.0078125
      %v1884 = vld [vmem:[#allocation3] sm:$0x1]
      %v1885 = vmul.f32 %v1884, 0.0078125
      %v1886 = vmul.f32 %v1883, %v1883
      %v1887 = vsub.f32 %v1885, %v1886
      %v1888 = vmax.f32 %v1887, 0.0
      %v1889 = vadd.f32 %v1888, 1e-05
      %v1890 = vrsqrt.pop %v1889
      %v1891 = vld [vmem:[#allocation9] sm:$0x1]
      %v1892 = vmul.f32 %v1891, %v1890
      %v1893 = vld [vmem:[#allocation10] sm:$0x1]
      %v1894 = vmul.f32 %v1883, %v1892
      %v1895 = vsub.f32 %v1893, %v1894
      %v1896 = vld [vmem:[#allocation12] sm:$0xff]
      %v1897 = vld [vmem:[#allocation12 + $0x8] sm:$0xff]
      %v1899 = vsel %vm276, %v1892, 0
      %1901 = vmatprep.subr.mxu0 0.0
      %1902 = vmatpush1.msra.mxu0 %v1896
      %1903 = vmatprep.subr.mxu0 0.0
      %1904 = vmatpush1.msra.mxu0 %v1897
      %1905 = vmatprep.subr.mxu0 0.0
      %1906 = vmatpush1.msra.mxu0 0.0
      %1907 = vmatprep.subr.mxu0 0.0
      %1908 = vmatpush1.msra.mxu0 0.0
      %1909 = vmatprep.subr.mxu0 0.0
      %1910 = vmatpush1.msra.mxu0 0.0
      %1911 = vmatprep.subr.mxu0 0.0
      %1912 = vmatpush1.msra.mxu0 0.0
      %1913 = vmatprep.subr.mxu0 0.0
      %1914 = vmatpush1.msra.mxu0 0.0
      %1915 = vmatprep.subr.mxu0 0.0
      %1916 = vmatpush1.msra.mxu0 0.0
      %1917 = vmatprep.subr.mxu0 0.0
      %1918 = vmatpush1.msra.mxu0 0.0
      %1919 = vmatprep.subr.mxu0 0.0
      %1920 = vmatpush1.msra.mxu0 0.0
      %1921 = vmatprep.subr.mxu0 0.0
      %1922 = vmatpush1.msra.mxu0 0.0
      %1923 = vmatprep.subr.mxu0 0.0
      %1924 = vmatpush1.msra.mxu0 0.0
      %1925 = vmatprep.subr.mxu0 0.0
      %1926 = vmatpush1.msra.mxu0 0.0
      %1927 = vmatprep.subr.mxu0 0.0
      %1928 = vmatpush1.msra.mxu0 0.0
      %1929 = vmatprep.subr.mxu0 0.0
      %1930 = vmatpush1.msra.mxu0 0.0
      %1931 = vmatprep.subr.mxu0 0.0
      %1932 = vmatpush1.msra.mxu0 0.0
      %1933 = vmatprep.subr.mxu0 0.0
      %1934 = vmatpush1.msra.mxu0 0.0
      %1935 = vmatprep.subr.mxu0 0.0
      %1936 = vmatpush1.msra.mxu0 0.0
      %1937 = vmatprep.subr.mxu0 0.0
      %1938 = vmatpush1.msra.mxu0 0.0
      %1939 = vmatprep.subr.mxu0 0.0
      %1940 = vmatpush1.msra.mxu0 0.0
      %1941 = vmatprep.subr.mxu0 0.0
      %1942 = vmatpush1.msra.mxu0 0.0
      %1943 = vmatprep.subr.mxu0 0.0
      %1944 = vmatpush1.msra.mxu0 0.0
      %1945 = vmatprep.subr.mxu0 0.0
      %1946 = vmatpush1.msra.mxu0 0.0
      %1947 = vmatprep.subr.mxu0 0.0
      %1948 = vmatpush1.msra.mxu0 0.0
      %1949 = vmatprep.subr.mxu0 0.0
      %1950 = vmatpush1.msra.mxu0 0.0
      %1951 = vmatprep.subr.mxu0 0.0
      %1952 = vmatpush1.msra.mxu0 0.0
      %1953 = vmatprep.subr.mxu0 0.0
      %1954 = vmatpush1.msra.mxu0 0.0
      %1955 = vmatprep.subr.mxu0 0.0
      %1956 = vmatpush1.msra.mxu0 0.0
      %1957 = vmatprep.subr.mxu0 0.0
      %1958 = vmatpush1.msra.mxu0 0.0
      %1959 = vmatprep.subr.mxu0 0.0
      %1960 = vmatpush1.msra.mxu0 0.0
      %1961 = vmatprep.subr.mxu0 0.0
      %1962 = vmatpush1.msra.mxu0 0.0
      %1963 = vmatprep.subr.mxu0 0.0
      %1964 = vmatpush1.msra.mxu0 0.0
      %1965 = vmatprep.mubr.f32.mxu0 0.0
      %1966 = vmatmul.mubr.f32.gmra.mrb[0].mxu0 %v1899
      %v1967 = vpop.f32.mrb[0].mxu0
      %v1968 = vadd.f32 0.0, %v1967
      %v1969 = vpop.f32.mrb[0].mxu0
      %1970 = vdwg.mxu0
      %v1972 = vsel %vm276, %v1895, 0
      %1974 = vmatprep.subr.mxu0 0.0
      %1975 = vmatpush1.msra.mxu0 %v1896
      %1976 = vmatprep.subr.mxu0 0.0
      %1977 = vmatpush1.msra.mxu0 %v1897
      %1978 = vmatprep.subr.mxu0 0.0
      %1979 = vmatpush1.msra.mxu0 0.0
      %1980 = vmatprep.subr.mxu0 0.0
      %1981 = vmatpush1.msra.mxu0 0.0
      %1982 = vmatprep.subr.mxu0 0.0
      %1983 = vmatpush1.msra.mxu0 0.0
      %1984 = vmatprep.subr.mxu0 0.0
      %1985 = vmatpush1.msra.mxu0 0.0
      %1986 = vmatprep.subr.mxu0 0.0
      %1987 = vmatpush1.msra.mxu0 0.0
      %1988 = vmatprep.subr.mxu0 0.0
      %1989 = vmatpush1.msra.mxu0 0.0
      %1990 = vmatprep.subr.mxu0 0.0
      %1991 = vmatpush1.msra.mxu0 0.0
      %1992 = vmatprep.subr.mxu0 0.0
      %1993 = vmatpush1.msra.mxu0 0.0
      %1994 = vmatprep.subr.mxu0 0.0
      %1995 = vmatpush1.msra.mxu0 0.0
      %1996 = vmatprep.subr.mxu0 0.0
      %1997 = vmatpush1.msra.mxu0 0.0
      %1998 = vmatprep.subr.mxu0 0.0
      %1999 = vmatpush1.msra.mxu0 0.0
      %2000 = vmatprep.subr.mxu0 0.0
      %2001 = vmatpush1.msra.mxu0 0.0
      %2002 = vmatprep.subr.mxu0 0.0
      %2003 = vmatpush1.msra.mxu0 0.0
      %2004 = vmatprep.subr.mxu0 0.0
      %2005 = vmatpush1.msra.mxu0 0.0
      %2006 = vmatprep.subr.mxu0 0.0
      %2007 = vmatpush1.msra.mxu0 0.0
      %2008 = vmatprep.subr.mxu0 0.0
      %2009 = vmatpush1.msra.mxu0 0.0
      %2010 = vmatprep.subr.mxu0 0.0
      %2011 = vmatpush1.msra.mxu0 0.0
      %2012 = vmatprep.subr.mxu0 0.0
      %2013 = vmatpush1.msra.mxu0 0.0
      %2014 = vmatprep.subr.mxu0 0.0
      %2015 = vmatpush1.msra.mxu0 0.0
      %2016 = vmatprep.subr.mxu0 0.0
      %2017 = vmatpush1.msra.mxu0 0.0
      %2018 = vmatprep.subr.mxu0 0.0
      %2019 = vmatpush1.msra.mxu0 0.0
      %2020 = vmatprep.subr.mxu0 0.0
      %2021 = vmatpush1.msra.mxu0 0.0
      %2022 = vmatprep.subr.mxu0 0.0
      %2023 = vmatpush1.msra.mxu0 0.0
      %2024 = vmatprep.subr.mxu0 0.0
      %2025 = vmatpush1.msra.mxu0 0.0
      %2026 = vmatprep.subr.mxu0 0.0
      %2027 = vmatpush1.msra.mxu0 0.0
      %2028 = vmatprep.subr.mxu0 0.0
      %2029 = vmatpush1.msra.mxu0 0.0
      %2030 = vmatprep.subr.mxu0 0.0
      %2031 = vmatpush1.msra.mxu0 0.0
      %2032 = vmatprep.subr.mxu0 0.0
      %2033 = vmatpush1.msra.mxu0 0.0
      %2034 = vmatprep.subr.mxu0 0.0
      %2035 = vmatpush1.msra.mxu0 0.0
      %2036 = vmatprep.subr.mxu0 0.0
      %2037 = vmatpush1.msra.mxu0 0.0
      %2038 = vmatprep.mubr.f32.mxu0 0.0
      %2039 = vmatmul.mubr.f32.gmra.mrb[0].mxu0 %v1972
      %v2040 = vpop.f32.mrb[0].mxu0
      %v2041 = vadd.f32 0.0, %v2040
      %v2042 = vpop.f32.mrb[0].mxu0
      %2043 = vdwg.mxu0
      %v2044 = vld [vmem:[#allocation13] sm:$0xf]
      %v2045 = vld [vmem:[#allocation13 + $0x4] sm:$0xf]
      %v2046 = vunpack.c.l.bf16 %v2044
      %v2047 = vunpack.c.l.bf16 %v2045
      %v2048 = vlaneseq
      %v2049 = vshrl.u32 %v2048, 7
      %v2050 = vsub.s32 0, %v2049
      %v2051 = vrot.slane %v1968, %v2050
      %v2052 = vmul.f32 %v2046, %v2051
      %v2053 = vmul.f32 %v2047, %v2051
      %v2054 = vlaneseq
      %v2055 = vshrl.u32 %v2054, 7
      %v2056 = vsub.s32 0, %v2055
      %v2057 = vrot.slane %v2041, %v2056
      %v2058 = vadd.f32 %v2052, %v2057
      %v2059 = vadd.f32 %v2053, %v2057
      %vm2060 = vcmp.ge.f32.partialorder %v2058, 0.0
      %vm2061 = vcmp.ge.f32.partialorder %v2059, 0.0
      %v2062 = vmul.f32 %v2058, 0.2
      %v2063 = vmul.f32 %v2059, 0.2
      %v2064 = vsel %vm2060, %v2058, %v2062
      %v2065 = vsel %vm2061, %v2059, %v2063
      %v2066 = vpack.c.bf16 %v2065, %v2064
      %v2068 = vunpack.c.l.b16 %v2066
      %v2069 = vunpack.c.h.b16 %v2066
      %v2070 = vpack.c.b16 %v2068, %v2068
      %v2071 = vpack.c.b16 %v2069, %v2069
      %2074 = vst [vmem:[#allocation13] sm:$0xf] %v2070
      %2075 = vst [vmem:[#allocation13 + $0x4] sm:$0xf] %v2071
    $region49: #{discriminator_forward.5} parent=1 // pred_fallthru
      _
    // Predicated region
    $region50: #{discriminator_forward.5} parent=1 // pred_check
      _
    $region51: #{discriminator_forward.5} parent=1 // pred_check_branch
      %2077 = sbr.rel (0) target = $region53
    $region52: #{discriminator_forward.5} parent=1 // pred_region
      %s2079 = ssub.s32 128, 128
      %2080 = vsyncadd [#allocation6], %s2079
      %s2081 = sshll.u32 [#allocation13], 4
      %s2082 = int_to_ptr.vmem [resolvable:$true] %s2081
      %2087 = dma.vmem_to_hbm [thread:$0]  %s2082, 128, %s5, [#allocation6], 64, 64, 4
    $region53: #{discriminator_forward.5} parent=1 // pred_fallthru
      _
    // Predicated region
    $region54: #{discriminator_forward.5} parent=1 // pred_check
      _
    $region55: #{discriminator_forward.5} parent=1 // pred_check_branch
      %2089 = sbr.rel (0) target = $region57
    $region56: #{discriminator_forward.5} parent=1 // pred_region
      %2090 = dma.done [#allocation6], 128
    $region57: #{discriminator_forward.5} parent=1 // pred_fallthru
      _
    %2091 = vsyncpa [#allocation5], 1
    %2092 = vsyncpa [#allocation8], 1
    %2093 = vsyncpa [#allocation11], 1
    %2094 = vsyncpa [#allocation6], 1

// kernel: tile.28
$region0: #{tile.28}
  %s0 = inlined_call_operand.vmem [shape: f32[32,4,32], index: 0, kind: input, shape index: {}]
  %s1 = inlined_call_operand.hbm [shape: f32[32,128], index: 1, kind: output, shape index: {}]
  $region1: #{tile.28} parent=0
    #allocation0 [shape = 'u8[16384]{0}', space=vmem, size = 0x4000, scoped, tag = 'operand span for operand 1']
    #allocation1 [shape = 's32[1]{0}', space=sflag, size = 0x4, scoped, tag = 'scoped memory for tile.28']
    #allocation2 [shape = 'u8[131072]{0}', space=vmem, size = 0x20000, scoped, tag = 'scoped mem for input reshape']
    %2 = vsyncpa [#allocation1], 0
    %s4 = sshllo.u32 0, 4
    %s5 = smul.addr 4, 31
    %s6 = scalar_lea.vmem %s0, %s5
    %v7 = vld [vmem:[%s6] sm:%s4]
    %s8 = scalar_lea.vmem [#allocation2], 248
    %9 = vst [vmem:[%s8] sm:%s4] %v7
    %s10 = smul.addr 4, 30
    %s11 = scalar_lea.vmem %s0, %s10
    %v12 = vld [vmem:[%s11] sm:%s4]
    %s13 = scalar_lea.vmem [#allocation2], 240
    %14 = vst [vmem:[%s13] sm:%s4] %v12
    %s15 = smul.addr 4, 29
    %s16 = scalar_lea.vmem %s0, %s15
    %v17 = vld [vmem:[%s16] sm:%s4]
    %s18 = scalar_lea.vmem [#allocation2], 232
    %19 = vst [vmem:[%s18] sm:%s4] %v17
    %s20 = smul.addr 4, 28
    %s21 = scalar_lea.vmem %s0, %s20
    %v22 = vld [vmem:[%s21] sm:%s4]
    %s23 = scalar_lea.vmem [#allocation2], 224
    %24 = vst [vmem:[%s23] sm:%s4] %v22
    %s25 = smul.addr 4, 27
    %s26 = scalar_lea.vmem %s0, %s25
    %v27 = vld [vmem:[%s26] sm:%s4]
    %s28 = scalar_lea.vmem [#allocation2], 216
    %29 = vst [vmem:[%s28] sm:%s4] %v27
    %s30 = smul.addr 4, 26
    %s31 = scalar_lea.vmem %s0, %s30
    %v32 = vld [vmem:[%s31] sm:%s4]
    %s33 = scalar_lea.vmem [#allocation2], 208
    %34 = vst [vmem:[%s33] sm:%s4] %v32
    %s35 = smul.addr 4, 25
    %s36 = scalar_lea.vmem %s0, %s35
    %v37 = vld [vmem:[%s36] sm:%s4]
    %s38 = scalar_lea.vmem [#allocation2], 200
    %39 = vst [vmem:[%s38] sm:%s4] %v37
    %s40 = smul.addr 4, 24
    %s41 = scalar_lea.vmem %s0, %s40
    %v42 = vld [vmem:[%s41] sm:%s4]
    %s43 = scalar_lea.vmem [#allocation2], 192
    %44 = vst [vmem:[%s43] sm:%s4] %v42
    %s45 = smul.addr 4, 23
    %s46 = scalar_lea.vmem %s0, %s45
    %v47 = vld [vmem:[%s46] sm:%s4]
    %s48 = scalar_lea.vmem [#allocation2], 184
    %49 = vst [vmem:[%s48] sm:%s4] %v47
    %s50 = smul.addr 4, 22
    %s51 = scalar_lea.vmem %s0, %s50
    %v52 = vld [vmem:[%s51] sm:%s4]
    %s53 = scalar_lea.vmem [#allocation2], 176
    %54 = vst [vmem:[%s53] sm:%s4] %v52
    %s55 = smul.addr 4, 21
    %s56 = scalar_lea.vmem %s0, %s55
    %v57 = vld [vmem:[%s56] sm:%s4]
    %s58 = scalar_lea.vmem [#allocation2], 168
    %59 = vst [vmem:[%s58] sm:%s4] %v57
    %s60 = smul.addr 4, 20
    %s61 = scalar_lea.vmem %s0, %s60
    %v62 = vld [vmem:[%s61] sm:%s4]
    %s63 = scalar_lea.vmem [#allocation2], 160
    %64 = vst [vmem:[%s63] sm:%s4] %v62
    %s65 = smul.addr 4, 19
    %s66 = scalar_lea.vmem %s0, %s65
    %v67 = vld [vmem:[%s66] sm:%s4]
    %s68 = scalar_lea.vmem [#allocation2], 152
    %69 = vst [vmem:[%s68] sm:%s4] %v67
    %s70 = smul.addr 4, 18
    %s71 = scalar_lea.vmem %s0, %s70
    %v72 = vld [vmem:[%s71] sm:%s4]
    %s73 = scalar_lea.vmem [#allocation2], 144
    %74 = vst [vmem:[%s73] sm:%s4] %v72
    %s75 = smul.addr 4, 17
    %s76 = scalar_lea.vmem %s0, %s75
    %v77 = vld [vmem:[%s76] sm:%s4]
    %s78 = scalar_lea.vmem [#allocation2], 136
    %79 = vst [vmem:[%s78] sm:%s4] %v77
    %s80 = smul.addr 4, 16
    %s81 = scalar_lea.vmem %s0, %s80
    %v82 = vld [vmem:[%s81] sm:%s4]
    %s83 = scalar_lea.vmem [#allocation2], 128
    %84 = vst [vmem:[%s83] sm:%s4] %v82
    %s85 = smul.addr 4, 15
    %s86 = scalar_lea.vmem %s0, %s85
    %v87 = vld [vmem:[%s86] sm:%s4]
    %s88 = scalar_lea.vmem [#allocation2], 120
    %89 = vst [vmem:[%s88] sm:%s4] %v87
    %s90 = smul.addr 4, 14
    %s91 = scalar_lea.vmem %s0, %s90
    %v92 = vld [vmem:[%s91] sm:%s4]
    %s93 = scalar_lea.vmem [#allocation2], 112
    %94 = vst [vmem:[%s93] sm:%s4] %v92
    %s95 = smul.addr 4, 13
    %s96 = scalar_lea.vmem %s0, %s95
    %v97 = vld [vmem:[%s96] sm:%s4]
    %s98 = scalar_lea.vmem [#allocation2], 104
    %99 = vst [vmem:[%s98] sm:%s4] %v97
    %s100 = smul.addr 4, 12
    %s101 = scalar_lea.vmem %s0, %s100
    %v102 = vld [vmem:[%s101] sm:%s4]
    %s103 = scalar_lea.vmem [#allocation2], 96
    %104 = vst [vmem:[%s103] sm:%s4] %v102
    %s105 = smul.addr 4, 11
    %s106 = scalar_lea.vmem %s0, %s105
    %v107 = vld [vmem:[%s106] sm:%s4]
    %s108 = scalar_lea.vmem [#allocation2], 88
    %109 = vst [vmem:[%s108] sm:%s4] %v107
    %s110 = smul.addr 4, 10
    %s111 = scalar_lea.vmem %s0, %s110
    %v112 = vld [vmem:[%s111] sm:%s4]
    %s113 = scalar_lea.vmem [#allocation2], 80
    %114 = vst [vmem:[%s113] sm:%s4] %v112
    %s115 = smul.addr 4, 9
    %s116 = scalar_lea.vmem %s0, %s115
    %v117 = vld [vmem:[%s116] sm:%s4]
    %s118 = scalar_lea.vmem [#allocation2], 72
    %119 = vst [vmem:[%s118] sm:%s4] %v117
    %s120 = smul.addr 4, 8
    %s121 = scalar_lea.vmem %s0, %s120
    %v122 = vld [vmem:[%s121] sm:%s4]
    %s123 = scalar_lea.vmem [#allocation2], 64
    %124 = vst [vmem:[%s123] sm:%s4] %v122
    %s125 = smul.addr 4, 7
    %s126 = scalar_lea.vmem %s0, %s125
    %v127 = vld [vmem:[%s126] sm:%s4]
    %s128 = scalar_lea.vmem [#allocation2], 56
    %129 = vst [vmem:[%s128] sm:%s4] %v127
    %s130 = smul.addr 4, 6
    %s131 = scalar_lea.vmem %s0, %s130
    %v132 = vld [vmem:[%s131] sm:%s4]
    %s133 = scalar_lea.vmem [#allocation2], 48
    %134 = vst [vmem:[%s133] sm:%s4] %v132
    %s135 = smul.addr 4, 5
    %s136 = scalar_lea.vmem %s0, %s135
    %v137 = vld [vmem:[%s136] sm:%s4]
    %s138 = scalar_lea.vmem [#allocation2], 40
    %139 = vst [vmem:[%s138] sm:%s4] %v137
    %s140 = smul.addr 4, 4
    %s141 = scalar_lea.vmem %s0, %s140
    %v142 = vld [vmem:[%s141] sm:%s4]
    %s143 = scalar_lea.vmem [#allocation2], 32
    %144 = vst [vmem:[%s143] sm:%s4] %v142
    %s145 = smul.addr 4, 3
    %s146 = scalar_lea.vmem %s0, %s145
    %v147 = vld [vmem:[%s146] sm:%s4]
    %s148 = scalar_lea.vmem [#allocation2], 24
    %149 = vst [vmem:[%s148] sm:%s4] %v147
    %s150 = smul.addr 4, 2
    %s151 = scalar_lea.vmem %s0, %s150
    %v152 = vld [vmem:[%s151] sm:%s4]
    %s153 = scalar_lea.vmem [#allocation2], 16
    %154 = vst [vmem:[%s153] sm:%s4] %v152
    %s155 = scalar_lea.vmem %s0, 4
    %v156 = vld [vmem:[%s155] sm:%s4]
    %s157 = scalar_lea.vmem [#allocation2], 8
    %158 = vst [vmem:[%s157] sm:%s4] %v156
    %v159 = vld [vmem:[%s0] sm:%s4]
    %160 = vst [vmem:[#allocation2] sm:%s4] %v159
    %v161 = vld [vmem:[#allocation2] ss:$8 sm:$0xf]
    %v162 = vld [vmem:[#allocation2] ss:$8 sm:$0xf0]
    %vm163 = vcmask 1047556
    %v164 = vsel %vm163, %v162, %v161
    %vm165 = vcmask 261120
    %166 = vst.msk [vmem:[#allocation0] sm:$0xff] %vm165, %v164
    %s167 = scalar_lea.vmem [#allocation2], 64
    %v168 = vld [vmem:[%s167] ss:$8 sm:$0xf]
    %s169 = scalar_lea.vmem [#allocation2], 64
    %v170 = vld [vmem:[%s169] ss:$8 sm:$0xf0]
    %vm171 = vcmask 1047556
    %v172 = vsel %vm171, %v170, %v168
    %vm173 = vcmask 261120
    %s174 = scalar_lea.vmem [#allocation0], 8
    %175 = vst.msk [vmem:[%s174] sm:$0xff] %vm173, %v172
    %s176 = scalar_lea.vmem [#allocation2], 128
    %v177 = vld [vmem:[%s176] ss:$8 sm:$0xf]
    %s178 = scalar_lea.vmem [#allocation2], 128
    %v179 = vld [vmem:[%s178] ss:$8 sm:$0xf0]
    %vm180 = vcmask 1047556
    %v181 = vsel %vm180, %v179, %v177
    %vm182 = vcmask 261120
    %s183 = scalar_lea.vmem [#allocation0], 16
    %184 = vst.msk [vmem:[%s183] sm:$0xff] %vm182, %v181
    %s185 = scalar_lea.vmem [#allocation2], 192
    %v186 = vld [vmem:[%s185] ss:$8 sm:$0xf]
    %s187 = scalar_lea.vmem [#allocation2], 192
    %v188 = vld [vmem:[%s187] ss:$8 sm:$0xf0]
    %vm189 = vcmask 1047556
    %v190 = vsel %vm189, %v188, %v186
    %vm191 = vcmask 261120
    %s192 = scalar_lea.vmem [#allocation0], 24
    %193 = vst.msk [vmem:[%s192] sm:$0xff] %vm191, %v190
    %s194 = scalar_lea.vmem [#allocation2], 3
    %v195 = vld [vmem:[%s194] ss:$8 sm:$0xf]
    %s196 = scalar_lea.vmem [#allocation2], 3
    %v197 = vld [vmem:[%s196] ss:$8 sm:$0xf0]
    %vm198 = vcmask 1047556
    %v199 = vsel %vm198, %v197, %v195
    %200 = vrot.lane.b32.xlu0 %v199, 96
    %v201 = vpop.permute.xlu0 %200
    %vm202 = vcmask 1048320
    %203 = vst.msk [vmem:[#allocation0] sm:$0xff] %vm202, %v201
    %s204 = scalar_lea.vmem [#allocation2], 67
    %v205 = vld [vmem:[%s204] ss:$8 sm:$0xf]
    %s206 = scalar_lea.vmem [#allocation2], 67
    %v207 = vld [vmem:[%s206] ss:$8 sm:$0xf0]
    %vm208 = vcmask 1047556
    %v209 = vsel %vm208, %v207, %v205
    %210 = vrot.lane.b32.xlu0 %v209, 96
    %v211 = vpop.permute.xlu0 %210
    %vm212 = vcmask 1048320
    %s213 = scalar_lea.vmem [#allocation0], 8
    %214 = vst.msk [vmem:[%s213] sm:$0xff] %vm212, %v211
    %s215 = scalar_lea.vmem [#allocation2], 131
    %v216 = vld [vmem:[%s215] ss:$8 sm:$0xf]
    %s217 = scalar_lea.vmem [#allocation2], 131
    %v218 = vld [vmem:[%s217] ss:$8 sm:$0xf0]
    %vm219 = vcmask 1047556
    %v220 = vsel %vm219, %v218, %v216
    %221 = vrot.lane.b32.xlu0 %v220, 96
    %v222 = vpop.permute.xlu0 %221
    %vm223 = vcmask 1048320
    %s224 = scalar_lea.vmem [#allocation0], 16
    %225 = vst.msk [vmem:[%s224] sm:$0xff] %vm223, %v222
    %s226 = scalar_lea.vmem [#allocation2], 195
    %v227 = vld [vmem:[%s226] ss:$8 sm:$0xf]
    %s228 = scalar_lea.vmem [#allocation2], 195
    %v229 = vld [vmem:[%s228] ss:$8 sm:$0xf0]
    %vm230 = vcmask 1047556
    %v231 = vsel %vm230, %v229, %v227
    %232 = vrot.lane.b32.xlu0 %v231, 96
    %v233 = vpop.permute.xlu0 %232
    %vm234 = vcmask 1048320
    %s235 = scalar_lea.vmem [#allocation0], 24
    %236 = vst.msk [vmem:[%s235] sm:$0xff] %vm234, %v233
    %s237 = scalar_lea.vmem [#allocation2], 2
    %v238 = vld [vmem:[%s237] ss:$8 sm:$0xf]
    %s239 = scalar_lea.vmem [#allocation2], 2
    %v240 = vld [vmem:[%s239] ss:$8 sm:$0xf0]
    %vm241 = vcmask 1047556
    %v242 = vsel %vm241, %v240, %v238
    %243 = vrot.lane.b32.xlu0 %v242, 64
    %v244 = vpop.permute.xlu0 %243
    %vm245 = vcmask 785920
    %246 = vst.msk [vmem:[#allocation0] sm:$0xff] %vm245, %v244
    %s247 = scalar_lea.vmem [#allocation2], 66
    %v248 = vld [vmem:[%s247] ss:$8 sm:$0xf]
    %s249 = scalar_lea.vmem [#allocation2], 66
    %v250 = vld [vmem:[%s249] ss:$8 sm:$0xf0]
    %vm251 = vcmask 1047556
    %v252 = vsel %vm251, %v250, %v248
    %253 = vrot.lane.b32.xlu0 %v252, 64
    %v254 = vpop.permute.xlu0 %253
    %vm255 = vcmask 785920
    %s256 = scalar_lea.vmem [#allocation0], 8
    %257 = vst.msk [vmem:[%s256] sm:$0xff] %vm255, %v254
    %s258 = scalar_lea.vmem [#allocation2], 130
    %v259 = vld [vmem:[%s258] ss:$8 sm:$0xf]
    %s260 = scalar_lea.vmem [#allocation2], 130
    %v261 = vld [vmem:[%s260] ss:$8 sm:$0xf0]
    %vm262 = vcmask 1047556
    %v263 = vsel %vm262, %v261, %v259
    %264 = vrot.lane.b32.xlu0 %v263, 64
    %v265 = vpop.permute.xlu0 %264
    %vm266 = vcmask 785920
    %s267 = scalar_lea.vmem [#allocation0], 16
    %268 = vst.msk [vmem:[%s267] sm:$0xff] %vm266, %v265
    %s269 = scalar_lea.vmem [#allocation2], 194
    %v270 = vld [vmem:[%s269] ss:$8 sm:$0xf]
    %s271 = scalar_lea.vmem [#allocation2], 194
    %v272 = vld [vmem:[%s271] ss:$8 sm:$0xf0]
    %vm273 = vcmask 1047556
    %v274 = vsel %vm273, %v272, %v270
    %275 = vrot.lane.b32.xlu0 %v274, 64
    %v276 = vpop.permute.xlu0 %275
    %vm277 = vcmask 785920
    %s278 = scalar_lea.vmem [#allocation0], 24
    %279 = vst.msk [vmem:[%s278] sm:$0xff] %vm277, %v276
    %s280 = scalar_lea.vmem [#allocation2], 1
    %v281 = vld [vmem:[%s280] ss:$8 sm:$0xf]
    %s282 = scalar_lea.vmem [#allocation2], 1
    %v283 = vld [vmem:[%s282] ss:$8 sm:$0xf0]
    %vm284 = vcmask 1047556
    %v285 = vsel %vm284, %v283, %v281
    %286 = vrot.lane.b32.xlu0 %v285, 32
    %v287 = vpop.permute.xlu0 %286
    %vm288 = vcmask 523520
    %289 = vst.msk [vmem:[#allocation0] sm:$0xff] %vm288, %v287
    %s290 = scalar_lea.vmem [#allocation2], 65
    %v291 = vld [vmem:[%s290] ss:$8 sm:$0xf]
    %s292 = scalar_lea.vmem [#allocation2], 65
    %v293 = vld [vmem:[%s292] ss:$8 sm:$0xf0]
    %vm294 = vcmask 1047556
    %v295 = vsel %vm294, %v293, %v291
    %296 = vrot.lane.b32.xlu0 %v295, 32
    %v297 = vpop.permute.xlu0 %296
    %vm298 = vcmask 523520
    %s299 = scalar_lea.vmem [#allocation0], 8
    %300 = vst.msk [vmem:[%s299] sm:$0xff] %vm298, %v297
    %s301 = scalar_lea.vmem [#allocation2], 129
    %v302 = vld [vmem:[%s301] ss:$8 sm:$0xf]
    %s303 = scalar_lea.vmem [#allocation2], 129
    %v304 = vld [vmem:[%s303] ss:$8 sm:$0xf0]
    %vm305 = vcmask 1047556
    %v306 = vsel %vm305, %v304, %v302
    %307 = vrot.lane.b32.xlu0 %v306, 32
    %v308 = vpop.permute.xlu0 %307
    %vm309 = vcmask 523520
    %s310 = scalar_lea.vmem [#allocation0], 16
    %311 = vst.msk [vmem:[%s310] sm:$0xff] %vm309, %v308
    %s312 = scalar_lea.vmem [#allocation2], 193
    %v313 = vld [vmem:[%s312] ss:$8 sm:$0xf]
    %s314 = scalar_lea.vmem [#allocation2], 193
    %v315 = vld [vmem:[%s314] ss:$8 sm:$0xf0]
    %vm316 = vcmask 1047556
    %v317 = vsel %vm316, %v315, %v313
    %318 = vrot.lane.b32.xlu0 %v317, 32
    %v319 = vpop.permute.xlu0 %318
    %vm320 = vcmask 523520
    %s321 = scalar_lea.vmem [#allocation0], 24
    %322 = vst.msk [vmem:[%s321] sm:$0xff] %vm320, %v319
    %s324 = ssub.s32 512, 512
    %325 = vsyncadd [#allocation1], %s324
    %s327 = sshll.u32 [#allocation0], 4
    %s328 = int_to_ptr.vmem [resolvable:$true] %s327
    %330 = dma.vmem_to_hbm [thread:$0]  %s328, 512, %s1, [#allocation1]
    %331 = dma.done [#allocation1], 512
    %332 = vsyncpa [#allocation1], 1

// kernel: discriminator_forward.6
$region0: #{discriminator_forward.6}
  #allocation0 [shape = 'u32[]', space=smem, size = 0x4, offset = 0x4, fixed_abs, tag = 'smem constant byte address 0x4 - core index']
  #allocation1 [shape = 'u32[144,128]{1,0:T(1,128)}', space=vmem, size = 0x12000, scoped, tag = 'internal scratch']
  #allocation2 [shape = 'f32[1,32]{1,0:T(1,128)}', space=vmem, size = 0x200, scoped, tag = 'scratch operand']
  #allocation3 [shape = 'f32[1,32]{1,0:T(1,128)}', space=vmem, size = 0x200, scoped, tag = 'scratch operand']
  %s0 = inlined_call_operand.hbm [shape: bf16[4,16,512], index: 0, kind: input, shape index: {}]
  %s1 = inlined_call_operand.hbm [shape: bf16[512,32], index: 1, kind: input, shape index: {}]
  %s2 = inlined_call_operand.hbm [shape: f32[1,32], index: 2, kind: input, shape index: {}]
  %s3 = inlined_call_operand.hbm [shape: f32[1,32], index: 3, kind: input, shape index: {}]
  %s4 = inlined_call_operand.hbm [shape: f32[32,128], index: 4, kind: input, shape index: {}]
  %s5 = inlined_call_operand.hbm [shape: bf16[16,128], index: 5, kind: output, shape index: {}]
  %s6 = sld [smem:[#allocation0]]
  $region58: #{discriminator_forward.6} parent=0
    _
  %s8 = ssub.s32 1, %s6
  %s9 = scalar_select 0, %s8, %s6
  $region1: #{discriminator_forward.6} parent=0
    #allocation4 [shape = 'u8[65536]{0}', space=vmem, size = 0x10000, scoped, tag = 'input window, operand 0, single buffered']
    #allocation5 [shape = 's32[1]{0}', space=sflag, size = 0x4, scoped, tag = 'scoped memory for discriminator_forward.6']
    #allocation6 [shape = 's32[1]{0}', space=sflag, size = 0x4, scoped, tag = 'scoped memory for discriminator_forward.6']
    #allocation7 [shape = 'u8[131072]{0}', space=vmem, size = 0x20000, scoped, tag = 'input window, operand 1, single buffered']
    #allocation8 [shape = 's32[1]{0}', space=sflag, size = 0x4, scoped, tag = 'scoped memory for discriminator_forward.6']
    #allocation9 [shape = 'u8[512]{0}', space=vmem, size = 0x400, scoped, tag = 'input window, operand 2, single buffered']
    #allocation10 [shape = 'u8[512]{0}', space=vmem, size = 0x400, scoped, tag = 'input window, operand 3, single buffered']
    #allocation11 [shape = 's32[1]{0}', space=sflag, size = 0x4, scoped, tag = 'scoped memory for discriminator_forward.6']
    #allocation12 [shape = 'u8[16384]{0}', space=vmem, size = 0x4000, scoped, tag = 'input window, operand 4, single buffered']
    #allocation13 [shape = 'u8[4096]{0}', space=vmem, size = 0x1000, scoped, tag = 'output window, operand 0, single buffered']
    %10 = vsyncpa [#allocation5], 0
    %11 = vsyncpa [#allocation8], 0
    %12 = vsyncpa [#allocation11], 0
    %13 = vsyncpa [#allocation6], 0
    // Predicated region
    $region2: #{discriminator_forward.6} parent=1 // pred_check
      _
    $region3: #{discriminator_forward.6} parent=1 // pred_check_branch
      %15 = sbr.rel (0) target = $region5
    $region4: #{discriminator_forward.6} parent=1 // pred_region
      %s17 = ssub.s32 2048, 2048
      %18 = vsyncadd [#allocation5], %s17
      %s19 = sshll.u32 [#allocation4], 4
      %s20 = int_to_ptr.vmem [resolvable:$true] %s19
      %25 = dma.hbm_to_vmem [thread:$0]  %s0, 2048, %s20, [#allocation5], 256, 256, 16
    $region5: #{discriminator_forward.6} parent=1 // pred_fallthru
      _
    // Predicated region
    $region6: #{discriminator_forward.6} parent=1 // pred_check
      _
    $region7: #{discriminator_forward.6} parent=1 // pred_check_branch
      %27 = sbr.rel (0) target = $region9
    $region8: #{discriminator_forward.6} parent=1 // pred_region
      %s29 = ssub.s32 4096, 4096
      %30 = vsyncadd [#allocation8], %s29
      %s31 = sshll.u32 [#allocation7], 4
      %s32 = int_to_ptr.vmem [resolvable:$true] %s31
      %37 = dma.hbm_to_vmem [thread:$0]  %s1, 4096, %s32, [#allocation8], 64, 64, 4
    $region9: #{discriminator_forward.6} parent=1 // pred_fallthru
      _
    // Predicated region
    $region10: #{discriminator_forward.6} parent=1 // pred_check
      _
    $region11: #{discriminator_forward.6} parent=1 // pred_check_branch
      %39 = sbr.rel (0) target = $region13
    $region12: #{discriminator_forward.6} parent=1 // pred_region
      %s41 = ssub.s32 16, 16
      %42 = vsyncadd [#allocation8], %s41
      %s44 = sshll.u32 [#allocation9], 4
      %s45 = int_to_ptr.vmem [resolvable:$true] %s44
      %47 = dma.hbm_to_vmem [thread:$0]  %s2, 16, %s45, [#allocation8]
    $region13: #{discriminator_forward.6} parent=1 // pred_fallthru
      _
    // Predicated region
    $region14: #{discriminator_forward.6} parent=1 // pred_check
      _
    $region15: #{discriminator_forward.6} parent=1 // pred_check_branch
      %49 = sbr.rel (0) target = $region17
    $region16: #{discriminator_forward.6} parent=1 // pred_region
      %s51 = ssub.s32 16, 16
      %52 = vsyncadd [#allocation11], %s51
      %s54 = sshll.u32 [#allocation10], 4
      %s55 = int_to_ptr.vmem [resolvable:$true] %s54
      %57 = dma.hbm_to_vmem [thread:$0]  %s3, 16, %s55, [#allocation11]
    $region17: #{discriminator_forward.6} parent=1 // pred_fallthru
      _
    // Predicated region
    $region18: #{discriminator_forward.6} parent=1 // pred_check
      _
    $region19: #{discriminator_forward.6} parent=1 // pred_check_branch
      %59 = sbr.rel (0) target = $region21
    $region20: #{discriminator_forward.6} parent=1 // pred_region
      %s61 = ssub.s32 512, 512
      %62 = vsyncadd [#allocation11], %s61
      %s63 = sshll.u32 [#allocation12], 4
      %s64 = int_to_ptr.vmem [resolvable:$true] %s63
      %69 = dma.hbm_to_vmem [thread:$0]  %s4, 512, %s64, [#allocation11], 128, 128, 8
    $region21: #{discriminator_forward.6} parent=1 // pred_fallthru
      _
    // Predicated region
    $region22: #{discriminator_forward.6} parent=1 // pred_check
      _
    $region23: #{discriminator_forward.6} parent=1 // pred_check_branch
      %71 = sbr.rel (0) target = $region25
    $region24: #{discriminator_forward.6} parent=1 // pred_region
      %72 = dma.done [#allocation5], 2048
    $region25: #{discriminator_forward.6} parent=1 // pred_fallthru
      _
    // Predicated region
    $region26: #{discriminator_forward.6} parent=1 // pred_check
      _
    $region27: #{discriminator_forward.6} parent=1 // pred_check_branch
      %74 = sbr.rel (0) target = $region29
    $region28: #{discriminator_forward.6} parent=1 // pred_region
      %75 = dma.done [#allocation8], 4096
    $region29: #{discriminator_forward.6} parent=1 // pred_fallthru
      _
    // Predicated region
    $region30: #{discriminator_forward.6} parent=1 // pred_check
      _
    $region31: #{discriminator_forward.6} parent=1 // pred_check_branch
      %77 = sbr.rel (0) target = $region33
    $region32: #{discriminator_forward.6} parent=1 // pred_region
      %78 = dma.done [#allocation8], 16
    $region33: #{discriminator_forward.6} parent=1 // pred_fallthru
      _
    // Predicated region
    $region34: #{discriminator_forward.6} parent=1 // pred_check
      _
    $region35: #{discriminator_forward.6} parent=1 // pred_check_branch
      %80 = sbr.rel (0) target = $region37
    $region36: #{discriminator_forward.6} parent=1 // pred_region
      %81 = dma.done [#allocation11], 16
    $region37: #{discriminator_forward.6} parent=1 // pred_fallthru
      _
    // Predicated region
    $region38: #{discriminator_forward.6} parent=1 // pred_check
      _
    $region39: #{discriminator_forward.6} parent=1 // pred_check_branch
      %83 = sbr.rel (0) target = $region41
    $region40: #{discriminator_forward.6} parent=1 // pred_region
      %84 = dma.done [#allocation11], 512
    $region41: #{discriminator_forward.6} parent=1 // pred_fallthru
      _
    %p86 = scmp.eq.s32.totalorder 0, 0
    // Predicated region
    $region42: #{discriminator_forward.6} parent=1 // pred_check
      %p87 = pneg %p86
    $region43: #{discriminator_forward.6} parent=1 // pred_check_branch
      %89 = sbr.rel (%p87) target = $region45
    $region44: #{discriminator_forward.6} parent=1 // pred_region
      %vm90 = vcmask 253952
      %91 = vst.msk [vmem:[#allocation2] sm:$0x1] %vm90, 0.0
      %92 = vst.msk [vmem:[#allocation3] sm:$0x1] %vm90, 0.0
    $region45: #{discriminator_forward.6} parent=1 // pred_fallthru
      _
    %s93 = smul.u32 0, 16
    %v94 = vld [vmem:[#allocation4] sm:$0xff]
    %v95 = vld [vmem:[#allocation4 + $0x8] sm:$0xff]
    %v96 = vld [vmem:[#allocation4 + $0x10] sm:$0xff]
    %v97 = vld [vmem:[#allocation4 + $0x18] sm:$0xff]
    %v98 = vld [vmem:[#allocation7] sm:$0xf]
    %v99 = vld [vmem:[#allocation7 + $0x4] sm:$0xf]
    %v100 = vld [vmem:[#allocation7 + $0x8] sm:$0xf]
    %v101 = vld [vmem:[#allocation7 + $0xc] sm:$0xf]
    %v102 = vld [vmem:[#allocation7 + $0x10] sm:$0xf]
    %v103 = vld [vmem:[#allocation7 + $0x14] sm:$0xf]
    %v104 = vld [vmem:[#allocation7 + $0x18] sm:$0xf]
    %v105 = vld [vmem:[#allocation7 + $0x1c] sm:$0xf]
    %v106 = vld [vmem:[#allocation7 + $0x20] sm:$0xf]
    %v107 = vld [vmem:[#allocation7 + $0x24] sm:$0xf]
    %v108 = vld [vmem:[#allocation7 + $0x28] sm:$0xf]
    %v109 = vld [vmem:[#allocation7 + $0x2c] sm:$0xf]
    %v110 = vld [vmem:[#allocation7 + $0x30] sm:$0xf]
    %v111 = vld [vmem:[#allocation7 + $0x34] sm:$0xf]
    %v112 = vld [vmem:[#allocation7 + $0x38] sm:$0xf]
    %v113 = vld [vmem:[#allocation7 + $0x3c] sm:$0xf]
    %v114 = vld [vmem:[#allocation7 + $0x40] sm:$0xf]
    %v115 = vld [vmem:[#allocation7 + $0x44] sm:$0xf]
    %v116 = vld [vmem:[#allocation7 + $0x48] sm:$0xf]
    %v117 = vld [vmem:[#allocation7 + $0x4c] sm:$0xf]
    %v118 = vld [vmem:[#allocation7 + $0x50] sm:$0xf]
    %v119 = vld [vmem:[#allocation7 + $0x54] sm:$0xf]
    %v120 = vld [vmem:[#allocation7 + $0x58] sm:$0xf]
    %v121 = vld [vmem:[#allocation7 + $0x5c] sm:$0xf]
    %v122 = vld [vmem:[#allocation7 + $0x60] sm:$0xf]
    %v123 = vld [vmem:[#allocation7 + $0x64] sm:$0xf]
    %v124 = vld [vmem:[#allocation7 + $0x68] sm:$0xf]
    %v125 = vld [vmem:[#allocation7 + $0x6c] sm:$0xf]
    %v126 = vld [vmem:[#allocation7 + $0x70] sm:$0xf]
    %v127 = vld [vmem:[#allocation7 + $0x74] sm:$0xf]
    %v128 = vld [vmem:[#allocation7 + $0x78] sm:$0xf]
    %v129 = vld [vmem:[#allocation7 + $0x7c] sm:$0xf]
    %v130 = vld [vmem:[#allocation7 + $0x80] sm:$0xf]
    %v131 = vld [vmem:[#allocation7 + $0x84] sm:$0xf]
    %v132 = vld [vmem:[#allocation7 + $0x88] sm:$0xf]
    %v133 = vld [vmem:[#allocation7 + $0x8c] sm:$0xf]
    %v134 = vld [vmem:[#allocation7 + $0x90] sm:$0xf]
    %v135 = vld [vmem:[#allocation7 + $0x94] sm:$0xf]
    %v136 = vld [vmem:[#allocation7 + $0x98] sm:$0xf]
    %v137 = vld [vmem:[#allocation7 + $0x9c] sm:$0xf]
    %v138 = vld [vmem:[#allocation7 + $0xa0] sm:$0xf]
    %v139 = vld [vmem:[#allocation7 + $0xa4] sm:$0xf]
    %v140 = vld [vmem:[#allocation7 + $0xa8] sm:$0xf]
    %v141 = vld [vmem:[#allocation7 + $0xac] sm:$0xf]
    %v142 = vld [vmem:[#allocation7 + $0xb0] sm:$0xf]
    %v143 = vld [vmem:[#allocation7 + $0xb4] sm:$0xf]
    %v144 = vld [vmem:[#allocation7 + $0xb8] sm:$0xf]
    %v145 = vld [vmem:[#allocation7 + $0xbc] sm:$0xf]
    %v146 = vld [vmem:[#allocation7 + $0xc0] sm:$0xf]
    %v147 = vld [vmem:[#allocation7 + $0xc4] sm:$0xf]
    %v148 = vld [vmem:[#allocation7 + $0xc8] sm:$0xf]
    %v149 = vld [vmem:[#allocation7 + $0xcc] sm:$0xf]
    %v150 = vld [vmem:[#allocation7 + $0xd0] sm:$0xf]
    %v151 = vld [vmem:[#allocation7 + $0xd4] sm:$0xf]
    %v152 = vld [vmem:[#allocation7 + $0xd8] sm:$0xf]
    %v153 = vld [vmem:[#allocation7 + $0xdc] sm:$0xf]
    %v154 = vld [vmem:[#allocation7 + $0xe0] sm:$0xf]
    %v155 = vld [vmem:[#allocation7 + $0xe4] sm:$0xf]
    %v156 = vld [vmem:[#allocation7 + $0xe8] sm:$0xf]
    %v157 = vld [vmem:[#allocation7 + $0xec] sm:$0xf]
    %v158 = vld [vmem:[#allocation7 + $0xf0] sm:$0xf]
    %v159 = vld [vmem:[#allocation7 + $0xf4] sm:$0xf]
    %v160 = vld [vmem:[#allocation7 + $0xf8] sm:$0xf]
    %v161 = vld [vmem:[#allocation7 + $0xfc] sm:$0xf]
    %v166 = vunpack.c.l.b16 %v94
    %v167 = vunpack.c.h.b16 %v94
    %v168 = vunpack.c.l.b16 %v95
    %v169 = vunpack.c.h.b16 %v95
    %v170 = vunpack.c.l.b16 %v96
    %v171 = vunpack.c.h.b16 %v96
    %v172 = vunpack.c.l.b16 %v97
    %v173 = vunpack.c.h.b16 %v97
    %v174 = vpack.c.b16 %v170, %v166
    %v175 = vpack.c.b16 %v171, %v167
    %v176 = vpack.c.b16 %v172, %v168
    %v177 = vpack.c.b16 %v173, %v169
    %v246 = vunpack.c.l.b16 %v98
    %v247 = vunpack.c.l.b16 %v99
    %v248 = vunpack.c.l.b16 %v100
    %v249 = vunpack.c.l.b16 %v101
    %v250 = vunpack.c.l.b16 %v102
    %v251 = vunpack.c.l.b16 %v103
    %v252 = vunpack.c.l.b16 %v104
    %v253 = vunpack.c.l.b16 %v105
    %v254 = vunpack.c.l.b16 %v106
    %v255 = vunpack.c.l.b16 %v107
    %v256 = vunpack.c.l.b16 %v108
    %v257 = vunpack.c.l.b16 %v109
    %v258 = vunpack.c.l.b16 %v110
    %v259 = vunpack.c.l.b16 %v111
    %v260 = vunpack.c.l.b16 %v112
    %v261 = vunpack.c.l.b16 %v113
    %v262 = vunpack.c.l.b16 %v114
    %v263 = vunpack.c.l.b16 %v115
    %v264 = vunpack.c.l.b16 %v116
    %v265 = vunpack.c.l.b16 %v117
    %v266 = vunpack.c.l.b16 %v118
    %v267 = vunpack.c.l.b16 %v119
    %v268 = vunpack.c.l.b16 %v120
    %v269 = vunpack.c.l.b16 %v121
    %v270 = vunpack.c.l.b16 %v122
    %v271 = vunpack.c.l.b16 %v123
    %v272 = vunpack.c.l.b16 %v124
    %v273 = vunpack.c.l.b16 %v125
    %v274 = vunpack.c.l.b16 %v126
    %v275 = vunpack.c.l.b16 %v127
    %v276 = vunpack.c.l.b16 %v128
    %v277 = vunpack.c.l.b16 %v129
    %v278 = vunpack.c.l.b16 %v130
    %v279 = vunpack.c.l.b16 %v131
    %v280 = vunpack.c.l.b16 %v132
    %v281 = vunpack.c.l.b16 %v133
    %v282 = vunpack.c.l.b16 %v134
    %v283 = vunpack.c.l.b16 %v135
    %v284 = vunpack.c.l.b16 %v136
    %v285 = vunpack.c.l.b16 %v137
    %v286 = vunpack.c.l.b16 %v138
    %v287 = vunpack.c.l.b16 %v139
    %v288 = vunpack.c.l.b16 %v140
    %v289 = vunpack.c.l.b16 %v141
    %v290 = vunpack.c.l.b16 %v142
    %v291 = vunpack.c.l.b16 %v143
    %v292 = vunpack.c.l.b16 %v144
    %v293 = vunpack.c.l.b16 %v145
    %v294 = vunpack.c.l.b16 %v146
    %v295 = vunpack.c.l.b16 %v147
    %v296 = vunpack.c.l.b16 %v148
    %v297 = vunpack.c.l.b16 %v149
    %v298 = vunpack.c.l.b16 %v150
    %v299 = vunpack.c.l.b16 %v151
    %v300 = vunpack.c.l.b16 %v152
    %v301 = vunpack.c.l.b16 %v153
    %v302 = vunpack.c.l.b16 %v154
    %v303 = vunpack.c.l.b16 %v155
    %v304 = vunpack.c.l.b16 %v156
    %v305 = vunpack.c.l.b16 %v157
    %v306 = vunpack.c.l.b16 %v158
    %v307 = vunpack.c.l.b16 %v159
    %v308 = vunpack.c.l.b16 %v160
    %v309 = vunpack.c.l.b16 %v161
    %v310 = vpack.c.b16 %v247, %v246
    %v311 = vpack.c.b16 %v249, %v248
    %v312 = vpack.c.b16 %v251, %v250
    %v313 = vpack.c.b16 %v253, %v252
    %v314 = vpack.c.b16 %v255, %v254
    %v315 = vpack.c.b16 %v257, %v256
    %v316 = vpack.c.b16 %v259, %v258
    %v317 = vpack.c.b16 %v261, %v260
    %v318 = vpack.c.b16 %v263, %v262
    %v319 = vpack.c.b16 %v265, %v264
    %v320 = vpack.c.b16 %v267, %v266
    %v321 = vpack.c.b16 %v269, %v268
    %v322 = vpack.c.b16 %v271, %v270
    %v323 = vpack.c.b16 %v273, %v272
    %v324 = vpack.c.b16 %v275, %v274
    %v325 = vpack.c.b16 %v277, %v276
    %v326 = vpack.c.b16 %v279, %v278
    %v327 = vpack.c.b16 %v281, %v280
    %v328 = vpack.c.b16 %v283, %v282
    %v329 = vpack.c.b16 %v285, %v284
    %v330 = vpack.c.b16 %v287, %v286
    %v331 = vpack.c.b16 %v289, %v288
    %v332 = vpack.c.b16 %v291, %v290
    %v333 = vpack.c.b16 %v293, %v292
    %v334 = vpack.c.b16 %v295, %v294
    %v335 = vpack.c.b16 %v297, %v296
    %v336 = vpack.c.b16 %v299, %v298
    %v337 = vpack.c.b16 %v301, %v300
    %v338 = vpack.c.b16 %v303, %v302
    %v339 = vpack.c.b16 %v305, %v304
    %v340 = vpack.c.b16 %v307, %v306
    %v341 = vpack.c.b16 %v309, %v308
    %374 = vmatprep.subr.bf16.mxu0 0
    %375 = vmatpush1.bf16.msra.mxu0 %v310
    %376 = vmatprep.subr.bf16.mxu0 0
    %377 = vmatpush1.bf16.msra.mxu0 %v311
    %378 = vmatprep.subr.bf16.mxu0 0
    %379 = vmatpush1.bf16.msra.mxu0 %v312
    %380 = vmatprep.subr.bf16.mxu0 0
    %381 = vmatpush1.bf16.msra.mxu0 %v313
    %382 = vmatprep.subr.bf16.mxu0 0
    %383 = vmatpush1.bf16.msra.mxu0 %v314
    %384 = vmatprep.subr.bf16.mxu0 0
    %385 = vmatpush1.bf16.msra.mxu0 %v315
    %386 = vmatprep.subr.bf16.mxu0 0
    %387 = vmatpush1.bf16.msra.mxu0 %v316
    %388 = vmatprep.subr.bf16.mxu0 0
    %389 = vmatpush1.bf16.msra.mxu0 %v317
    %390 = vmatprep.subr.bf16.mxu0 0
    %391 = vmatpush1.bf16.msra.mxu0 %v318
    %392 = vmatprep.subr.bf16.mxu0 0
    %393 = vmatpush1.bf16.msra.mxu0 %v319
    %394 = vmatprep.subr.bf16.mxu0 0
    %395 = vmatpush1.bf16.msra.mxu0 %v320
    %396 = vmatprep.subr.bf16.mxu0 0
    %397 = vmatpush1.bf16.msra.mxu0 %v321
    %398 = vmatprep.subr.bf16.mxu0 0
    %399 = vmatpush1.bf16.msra.mxu0 %v322
    %400 = vmatprep.subr.bf16.mxu0 0
    %401 = vmatpush1.bf16.msra.mxu0 %v323
    %402 = vmatprep.subr.bf16.mxu0 0
    %403 = vmatpush1.bf16.msra.mxu0 %v324
    %404 = vmatprep.subr.bf16.mxu0 0
    %405 = vmatpush1.bf16.msra.mxu0 %v325
    %406 = vmatprep.mubr.bf16.mxu0 %v175
    %407 = vmatmul.mubr.bf16.gmra.mrb[0].mxu0 %v174
    %v408 = vpop.f32.mrb[0].mxu0
    %v409 = vadd.f32 0.0, %v408
    %v410 = vpop.f32.mrb[0].mxu0
    %v411 = vpop.f32.mrb[0].mxu0
    %v412 = vadd.f32 0.0, %v411
    %v413 = vpop.f32.mrb[0].mxu0
    %414 = vdwg.mxu0
    %415 = vmatprep.subr.bf16.mxu0 0
    %416 = vmatpush1.bf16.msra.mxu0 %v326
    %417 = vmatprep.subr.bf16.mxu0 0
    %418 = vmatpush1.bf16.msra.mxu0 %v327
    %419 = vmatprep.subr.bf16.mxu0 0
    %420 = vmatpush1.bf16.msra.mxu0 %v328
    %421 = vmatprep.subr.bf16.mxu0 0
    %422 = vmatpush1.bf16.msra.mxu0 %v329
    %423 = vmatprep.subr.bf16.mxu0 0
    %424 = vmatpush1.bf16.msra.mxu0 %v330
    %425 = vmatprep.subr.bf16.mxu0 0
    %426 = vmatpush1.bf16.msra.mxu0 %v331
    %427 = vmatprep.subr.bf16.mxu0 0
    %428 = vmatpush1.bf16.msra.mxu0 %v332
    %429 = vmatprep.subr.bf16.mxu0 0
    %430 = vmatpush1.bf16.msra.mxu0 %v333
    %431 = vmatprep.subr.bf16.mxu0 0
    %432 = vmatpush1.bf16.msra.mxu0 %v334
    %433 = vmatprep.subr.bf16.mxu0 0
    %434 = vmatpush1.bf16.msra.mxu0 %v335
    %435 = vmatprep.subr.bf16.mxu0 0
    %436 = vmatpush1.bf16.msra.mxu0 %v336
    %437 = vmatprep.subr.bf16.mxu0 0
    %438 = vmatpush1.bf16.msra.mxu0 %v337
    %439 = vmatprep.subr.bf16.mxu0 0
    %440 = vmatpush1.bf16.msra.mxu0 %v338
    %441 = vmatprep.subr.bf16.mxu0 0
    %442 = vmatpush1.bf16.msra.mxu0 %v339
    %443 = vmatprep.subr.bf16.mxu0 0
    %444 = vmatpush1.bf16.msra.mxu0 %v340
    %445 = vmatprep.subr.bf16.mxu0 0
    %446 = vmatpush1.bf16.msra.mxu0 %v341
    %447 = vmatprep.mubr.bf16.mxu0 %v177
    %448 = vmatmul.mubr.bf16.gmra.mrb[0].mxu0 %v176
    %v449 = vpop.f32.mrb[0].mxu0
    %v450 = vadd.f32 %v409, %v449
    %v451 = vpop.f32.mrb[0].mxu0
    %v452 = vpop.f32.mrb[0].mxu0
    %v453 = vadd.f32 %v412, %v452
    %v454 = vpop.f32.mrb[0].mxu0
    %455 = vdwg.mxu0
    %v456 = vld [vmem:[#allocation2] sm:$0x1]
    %vm457 = vcmask 261120
    %v458 = vsel %vm457, %v450, 0.0
    %v459 = vsel %vm457, %v453, 0.0
    %v460 = vadd.f32 %v458, %v459
    %v461 = vrot.slane %v460, 4
    %v462 = vadd.f32 %v460, %v461
    %v463 = vrot.slane %v462, 2
    %v464 = vadd.f32 %v462, %v463
    %v465 = vrot.slane %v464, 1
    %v466 = vadd.f32 %v464, %v465
    %v467 = vadd.f32 %v456, %v466
    %vm468 = vcmask 253952
    %469 = vst.msk [vmem:[#allocation2] sm:$0x1] %vm468, %v467
    %v470 = vld [vmem:[#allocation3] sm:$0x1]
    %v471 = vmul.f32 %v450, %v450
    %v472 = vmul.f32 %v453, %v453
    %v473 = vsel %vm457, %v471, 0.0
    %v474 = vsel %vm457, %v472, 0.0
    %v475 = vadd.f32 %v473, %v474
    %v476 = vrot.slane %v475, 4
    %v477 = vadd.f32 %v475, %v476
    %v478 = vrot.slane %v477, 2
    %v479 = vadd.f32 %v477, %v478
    %v480 = vrot.slane %v479, 1
    %v481 = vadd.f32 %v479, %v480
    %v482 = vadd.f32 %v470, %v481
    %483 = vst.msk [vmem:[#allocation3] sm:$0x1] %vm468, %v482
    %v484 = vpack.c.bf16 %v453, %v450
    %v486 = vunpack.c.l.b16 %v484
    %v487 = vunpack.c.h.b16 %v484
    %v488 = vpack.c.b16 %v486, %v486
    %v489 = vpack.c.b16 %v487, %v487
    %s492 = sshra.s32 %s93, 3
    %s493 = sand.u32 %s93, 7
    %s494 = smul.addr %s492, 4
    %s495 = scalar_lea.vmem [#allocation13], %s494
    %vm496 = vcmask 257024
    %497 = vst.msk [vmem:[%s495] sm:$0xf] %vm496, %v488
    %498 = vst.msk [vmem:[%s495 + $0x4] sm:$0xf] %vm496, %v489
    %s499 = scalar_lea.vmem [#allocation4], 32
    %v500 = vld [vmem:[%s499] sm:$0xff]
    %v501 = vld [vmem:[%s499 + $0x8] sm:$0xff]
    %v502 = vld [vmem:[%s499 + $0x10] sm:$0xff]
    %v503 = vld [vmem:[%s499 + $0x18] sm:$0xff]
    %v504 = vld [vmem:[#allocation7] sm:$0xf]
    %v505 = vld [vmem:[#allocation7 + $0x4] sm:$0xf]
    %v506 = vld [vmem:[#allocation7 + $0x8] sm:$0xf]
    %v507 = vld [vmem:[#allocation7 + $0xc] sm:$0xf]
    %v508 = vld [vmem:[#allocation7 + $0x10] sm:$0xf]
    %v509 = vld [vmem:[#allocation7 + $0x14] sm:$0xf]
    %v510 = vld [vmem:[#allocation7 + $0x18] sm:$0xf]
    %v511 = vld [vmem:[#allocation7 + $0x1c] sm:$0xf]
    %v512 = vld [vmem:[#allocation7 + $0x20] sm:$0xf]
    %v513 = vld [vmem:[#allocation7 + $0x24] sm:$0xf]
    %v514 = vld [vmem:[#allocation7 + $0x28] sm:$0xf]
    %v515 = vld [vmem:[#allocation7 + $0x2c] sm:$0xf]
    %v516 = vld [vmem:[#allocation7 + $0x30] sm:$0xf]
    %v517 = vld [vmem:[#allocation7 + $0x34] sm:$0xf]
    %v518 = vld [vmem:[#allocation7 + $0x38] sm:$0xf]
    %v519 = vld [vmem:[#allocation7 + $0x3c] sm:$0xf]
    %v520 = vld [vmem:[#allocation7 + $0x40] sm:$0xf]
    %v521 = vld [vmem:[#allocation7 + $0x44] sm:$0xf]
    %v522 = vld [vmem:[#allocation7 + $0x48] sm:$0xf]
    %v523 = vld [vmem:[#allocation7 + $0x4c] sm:$0xf]
    %v524 = vld [vmem:[#allocation7 + $0x50] sm:$0xf]
    %v525 = vld [vmem:[#allocation7 + $0x54] sm:$0xf]
    %v526 = vld [vmem:[#allocation7 + $0x58] sm:$0xf]
    %v527 = vld [vmem:[#allocation7 + $0x5c] sm:$0xf]
    %v528 = vld [vmem:[#allocation7 + $0x60] sm:$0xf]
    %v529 = vld [vmem:[#allocation7 + $0x64] sm:$0xf]
    %v530 = vld [vmem:[#allocation7 + $0x68] sm:$0xf]
    %v531 = vld [vmem:[#allocation7 + $0x6c] sm:$0xf]
    %v532 = vld [vmem:[#allocation7 + $0x70] sm:$0xf]
    %v533 = vld [vmem:[#allocation7 + $0x74] sm:$0xf]
    %v534 = vld [vmem:[#allocation7 + $0x78] sm:$0xf]
    %v535 = vld [vmem:[#allocation7 + $0x7c] sm:$0xf]
    %v536 = vld [vmem:[#allocation7 + $0x80] sm:$0xf]
    %v537 = vld [vmem:[#allocation7 + $0x84] sm:$0xf]
    %v538 = vld [vmem:[#allocation7 + $0x88] sm:$0xf]
    %v539 = vld [vmem:[#allocation7 + $0x8c] sm:$0xf]
    %v540 = vld [vmem:[#allocation7 + $0x90] sm:$0xf]
    %v541 = vld [vmem:[#allocation7 + $0x94] sm:$0xf]
    %v542 = vld [vmem:[#allocation7 + $0x98] sm:$0xf]
    %v543 = vld [vmem:[#allocation7 + $0x9c] sm:$0xf]
    %v544 = vld [vmem:[#allocation7 + $0xa0] sm:$0xf]
    %v545 = vld [vmem:[#allocation7 + $0xa4] sm:$0xf]
    %v546 = vld [vmem:[#allocation7 + $0xa8] sm:$0xf]
    %v547 = vld [vmem:[#allocation7 + $0xac] sm:$0xf]
    %v548 = vld [vmem:[#allocation7 + $0xb0] sm:$0xf]
    %v549 = vld [vmem:[#allocation7 + $0xb4] sm:$0xf]
    %v550 = vld [vmem:[#allocation7 + $0xb8] sm:$0xf]
    %v551 = vld [vmem:[#allocation7 + $0xbc] sm:$0xf]
    %v552 = vld [vmem:[#allocation7 + $0xc0] sm:$0xf]
    %v553 = vld [vmem:[#allocation7 + $0xc4] sm:$0xf]
    %v554 = vld [vmem:[#allocation7 + $0xc8] sm:$0xf]
    %v555 = vld [vmem:[#allocation7 + $0xcc] sm:$0xf]
    %v556 = vld [vmem:[#allocation7 + $0xd0] sm:$0xf]
    %v557 = vld [vmem:[#allocation7 + $0xd4] sm:$0xf]
    %v558 = vld [vmem:[#allocation7 + $0xd8] sm:$0xf]
    %v559 = vld [vmem:[#allocation7 + $0xdc] sm:$0xf]
    %v560 = vld [vmem:[#allocation7 + $0xe0] sm:$0xf]
    %v561 = vld [vmem:[#allocation7 + $0xe4] sm:$0xf]
    %v562 = vld [vmem:[#allocation7 + $0xe8] sm:$0xf]
    %v563 = vld [vmem:[#allocation7 + $0xec] sm:$0xf]
    %v564 = vld [vmem:[#allocation7 + $0xf0] sm:$0xf]
    %v565 = vld [vmem:[#allocation7 + $0xf4] sm:$0xf]
    %v566 = vld [vmem:[#allocation7 + $0xf8] sm:$0xf]
    %v567 = vld [vmem:[#allocation7 + $0xfc] sm:$0xf]
    %v572 = vunpack.c.l.b16 %v500
    %v573 = vunpack.c.h.b16 %v500
    %v574 = vunpack.c.l.b16 %v501
    %v575 = vunpack.c.h.b16 %v501
    %v576 = vunpack.c.l.b16 %v502
    %v577 = vunpack.c.h.b16 %v502
    %v578 = vunpack.c.l.b16 %v503
    %v579 = vunpack.c.h.b16 %v503
    %v580 = vpack.c.b16 %v576, %v572
    %v581 = vpack.c.b16 %v577, %v573
    %v582 = vpack.c.b16 %v578, %v574
    %v583 = vpack.c.b16 %v579, %v575
    %v652 = vunpack.c.l.b16 %v504
    %v653 = vunpack.c.l.b16 %v505
    %v654 = vunpack.c.l.b16 %v506
    %v655 = vunpack.c.l.b16 %v507
    %v656 = vunpack.c.l.b16 %v508
    %v657 = vunpack.c.l.b16 %v509
    %v658 = vunpack.c.l.b16 %v510
    %v659 = vunpack.c.l.b16 %v511
    %v660 = vunpack.c.l.b16 %v512
    %v661 = vunpack.c.l.b16 %v513
    %v662 = vunpack.c.l.b16 %v514
    %v663 = vunpack.c.l.b16 %v515
    %v664 = vunpack.c.l.b16 %v516
    %v665 = vunpack.c.l.b16 %v517
    %v666 = vunpack.c.l.b16 %v518
    %v667 = vunpack.c.l.b16 %v519
    %v668 = vunpack.c.l.b16 %v520
    %v669 = vunpack.c.l.b16 %v521
    %v670 = vunpack.c.l.b16 %v522
    %v671 = vunpack.c.l.b16 %v523
    %v672 = vunpack.c.l.b16 %v524
    %v673 = vunpack.c.l.b16 %v525
    %v674 = vunpack.c.l.b16 %v526
    %v675 = vunpack.c.l.b16 %v527
    %v676 = vunpack.c.l.b16 %v528
    %v677 = vunpack.c.l.b16 %v529
    %v678 = vunpack.c.l.b16 %v530
    %v679 = vunpack.c.l.b16 %v531
    %v680 = vunpack.c.l.b16 %v532
    %v681 = vunpack.c.l.b16 %v533
    %v682 = vunpack.c.l.b16 %v534
    %v683 = vunpack.c.l.b16 %v535
    %v684 = vunpack.c.l.b16 %v536
    %v685 = vunpack.c.l.b16 %v537
    %v686 = vunpack.c.l.b16 %v538
    %v687 = vunpack.c.l.b16 %v539
    %v688 = vunpack.c.l.b16 %v540
    %v689 = vunpack.c.l.b16 %v541
    %v690 = vunpack.c.l.b16 %v542
    %v691 = vunpack.c.l.b16 %v543
    %v692 = vunpack.c.l.b16 %v544
    %v693 = vunpack.c.l.b16 %v545
    %v694 = vunpack.c.l.b16 %v546
    %v695 = vunpack.c.l.b16 %v547
    %v696 = vunpack.c.l.b16 %v548
    %v697 = vunpack.c.l.b16 %v549
    %v698 = vunpack.c.l.b16 %v550
    %v699 = vunpack.c.l.b16 %v551
    %v700 = vunpack.c.l.b16 %v552
    %v701 = vunpack.c.l.b16 %v553
    %v702 = vunpack.c.l.b16 %v554
    %v703 = vunpack.c.l.b16 %v555
    %v704 = vunpack.c.l.b16 %v556
    %v705 = vunpack.c.l.b16 %v557
    %v706 = vunpack.c.l.b16 %v558
    %v707 = vunpack.c.l.b16 %v559
    %v708 = vunpack.c.l.b16 %v560
    %v709 = vunpack.c.l.b16 %v561
    %v710 = vunpack.c.l.b16 %v562
    %v711 = vunpack.c.l.b16 %v563
    %v712 = vunpack.c.l.b16 %v564
    %v713 = vunpack.c.l.b16 %v565
    %v714 = vunpack.c.l.b16 %v566
    %v715 = vunpack.c.l.b16 %v567
    %v716 = vpack.c.b16 %v653, %v652
    %v717 = vpack.c.b16 %v655, %v654
    %v718 = vpack.c.b16 %v657, %v656
    %v719 = vpack.c.b16 %v659, %v658
    %v720 = vpack.c.b16 %v661, %v660
    %v721 = vpack.c.b16 %v663, %v662
    %v722 = vpack.c.b16 %v665, %v664
    %v723 = vpack.c.b16 %v667, %v666
    %v724 = vpack.c.b16 %v669, %v668
    %v725 = vpack.c.b16 %v671, %v670
    %v726 = vpack.c.b16 %v673, %v672
    %v727 = vpack.c.b16 %v675, %v674
    %v728 = vpack.c.b16 %v677, %v676
    %v729 = vpack.c.b16 %v679, %v678
    %v730 = vpack.c.b16 %v681, %v680
    %v731 = vpack.c.b16 %v683, %v682
    %v732 = vpack.c.b16 %v685, %v684
    %v733 = vpack.c.b16 %v687, %v686
    %v734 = vpack.c.b16 %v689, %v688
    %v735 = vpack.c.b16 %v691, %v690
    %v736 = vpack.c.b16 %v693, %v692
    %v737 = vpack.c.b16 %v695, %v694
    %v738 = vpack.c.b16 %v697, %v696
    %v739 = vpack.c.b16 %v699, %v698
    %v740 = vpack.c.b16 %v701, %v700
    %v741 = vpack.c.b16 %v703, %v702
    %v742 = vpack.c.b16 %v705, %v704
    %v743 = vpack.c.b16 %v707, %v706
    %v744 = vpack.c.b16 %v709, %v708
    %v745 = vpack.c.b16 %v711, %v710
    %v746 = vpack.c.b16 %v713, %v712
    %v747 = vpack.c.b16 %v715, %v714
    %780 = vmatprep.subr.bf16.mxu0 0
    %781 = vmatpush1.bf16.msra.mxu0 %v716
    %782 = vmatprep.subr.bf16.mxu0 0
    %783 = vmatpush1.bf16.msra.mxu0 %v717
    %784 = vmatprep.subr.bf16.mxu0 0
    %785 = vmatpush1.bf16.msra.mxu0 %v718
    %786 = vmatprep.subr.bf16.mxu0 0
    %787 = vmatpush1.bf16.msra.mxu0 %v719
    %788 = vmatprep.subr.bf16.mxu0 0
    %789 = vmatpush1.bf16.msra.mxu0 %v720
    %790 = vmatprep.subr.bf16.mxu0 0
    %791 = vmatpush1.bf16.msra.mxu0 %v721
    %792 = vmatprep.subr.bf16.mxu0 0
    %793 = vmatpush1.bf16.msra.mxu0 %v722
    %794 = vmatprep.subr.bf16.mxu0 0
    %795 = vmatpush1.bf16.msra.mxu0 %v723
    %796 = vmatprep.subr.bf16.mxu0 0
    %797 = vmatpush1.bf16.msra.mxu0 %v724
    %798 = vmatprep.subr.bf16.mxu0 0
    %799 = vmatpush1.bf16.msra.mxu0 %v725
    %800 = vmatprep.subr.bf16.mxu0 0
    %801 = vmatpush1.bf16.msra.mxu0 %v726
    %802 = vmatprep.subr.bf16.mxu0 0
    %803 = vmatpush1.bf16.msra.mxu0 %v727
    %804 = vmatprep.subr.bf16.mxu0 0
    %805 = vmatpush1.bf16.msra.mxu0 %v728
    %806 = vmatprep.subr.bf16.mxu0 0
    %807 = vmatpush1.bf16.msra.mxu0 %v729
    %808 = vmatprep.subr.bf16.mxu0 0
    %809 = vmatpush1.bf16.msra.mxu0 %v730
    %810 = vmatprep.subr.bf16.mxu0 0
    %811 = vmatpush1.bf16.msra.mxu0 %v731
    %812 = vmatprep.mubr.bf16.mxu0 %v581
    %813 = vmatmul.mubr.bf16.gmra.mrb[0].mxu0 %v580
    %v814 = vpop.f32.mrb[0].mxu0
    %v815 = vadd.f32 0.0, %v814
    %v816 = vpop.f32.mrb[0].mxu0
    %v817 = vpop.f32.mrb[0].mxu0
    %v818 = vadd.f32 0.0, %v817
    %v819 = vpop.f32.mrb[0].mxu0
    %820 = vdwg.mxu0
    %821 = vmatprep.subr.bf16.mxu0 0
    %822 = vmatpush1.bf16.msra.mxu0 %v732
    %823 = vmatprep.subr.bf16.mxu0 0
    %824 = vmatpush1.bf16.msra.mxu0 %v733
    %825 = vmatprep.subr.bf16.mxu0 0
    %826 = vmatpush1.bf16.msra.mxu0 %v734
    %827 = vmatprep.subr.bf16.mxu0 0
    %828 = vmatpush1.bf16.msra.mxu0 %v735
    %829 = vmatprep.subr.bf16.mxu0 0
    %830 = vmatpush1.bf16.msra.mxu0 %v736
    %831 = vmatprep.subr.bf16.mxu0 0
    %832 = vmatpush1.bf16.msra.mxu0 %v737
    %833 = vmatprep.subr.bf16.mxu0 0
    %834 = vmatpush1.bf16.msra.mxu0 %v738
    %835 = vmatprep.subr.bf16.mxu0 0
    %836 = vmatpush1.bf16.msra.mxu0 %v739
    %837 = vmatprep.subr.bf16.mxu0 0
    %838 = vmatpush1.bf16.msra.mxu0 %v740
    %839 = vmatprep.subr.bf16.mxu0 0
    %840 = vmatpush1.bf16.msra.mxu0 %v741
    %841 = vmatprep.subr.bf16.mxu0 0
    %842 = vmatpush1.bf16.msra.mxu0 %v742
    %843 = vmatprep.subr.bf16.mxu0 0
    %844 = vmatpush1.bf16.msra.mxu0 %v743
    %845 = vmatprep.subr.bf16.mxu0 0
    %846 = vmatpush1.bf16.msra.mxu0 %v744
    %847 = vmatprep.subr.bf16.mxu0 0
    %848 = vmatpush1.bf16.msra.mxu0 %v745
    %849 = vmatprep.subr.bf16.mxu0 0
    %850 = vmatpush1.bf16.msra.mxu0 %v746
    %851 = vmatprep.subr.bf16.mxu0 0
    %852 = vmatpush1.bf16.msra.mxu0 %v747
    %853 = vmatprep.mubr.bf16.mxu0 %v583
    %854 = vmatmul.mubr.bf16.gmra.mrb[0].mxu0 %v582
    %v855 = vpop.f32.mrb[0].mxu0
    %v856 = vadd.f32 %v815, %v855
    %v857 = vpop.f32.mrb[0].mxu0
    %v858 = vpop.f32.mrb[0].mxu0
    %v859 = vadd.f32 %v818, %v858
    %v860 = vpop.f32.mrb[0].mxu0
    %861 = vdwg.mxu0
    %v862 = vld [vmem:[#allocation2] sm:$0x1]
    %v863 = vsel %vm457, %v856, 0.0
    %v864 = vsel %vm457, %v859, 0.0
    %v865 = vadd.f32 %v863, %v864
    %v866 = vrot.slane %v865, 4
    %v867 = vadd.f32 %v865, %v866
    %v868 = vrot.slane %v867, 2
    %v869 = vadd.f32 %v867, %v868
    %v870 = vrot.slane %v869, 1
    %v871 = vadd.f32 %v869, %v870
    %v872 = vadd.f32 %v862, %v871
    %873 = vst.msk [vmem:[#allocation2] sm:$0x1] %vm468, %v872
    %v874 = vld [vmem:[#allocation3] sm:$0x1]
    %v875 = vmul.f32 %v856, %v856
    %v876 = vmul.f32 %v859, %v859
    %v877 = vsel %vm457, %v875, 0.0
    %v878 = vsel %vm457, %v876, 0.0
    %v879 = vadd.f32 %v877, %v878
    %v880 = vrot.slane %v879, 4
    %v881 = vadd.f32 %v879, %v880
    %v882 = vrot.slane %v881, 2
    %v883 = vadd.f32 %v881, %v882
    %v884 = vrot.slane %v883, 1
    %v885 = vadd.f32 %v883, %v884
    %v886 = vadd.f32 %v874, %v885
    %887 = vst.msk [vmem:[#allocation3] sm:$0x1] %vm468, %v886
    %v888 = vpack.c.bf16 %v859, %v856
    %v890 = vunpack.c.l.b16 %v888
    %v891 = vunpack.c.h.b16 %v888
    %v892 = vpack.c.b16 %v890, %v890
    %v893 = vpack.c.b16 %v891, %v891
    %894 = vrot.lane.b32.xlu0 %v892, 32
    %v895 = vpop.permute.xlu0 %894
    %896 = vrot.lane.b32.xlu0 %v893, 32
    %v897 = vpop.permute.xlu0 %896
    %vm900 = vcmask 519424
    %901 = vst.msk [vmem:[%s495] sm:$0xf] %vm900, %v895
    %902 = vst.msk [vmem:[%s495 + $0x4] sm:$0xf] %vm900, %v897
    %s903 = scalar_lea.vmem [#allocation4], 64
    %v904 = vld [vmem:[%s903] sm:$0xff]
    %v905 = vld [vmem:[%s903 + $0x8] sm:$0xff]
    %v906 = vld [vmem:[%s903 + $0x10] sm:$0xff]
    %v907 = vld [vmem:[%s903 + $0x18] sm:$0xff]
    %v908 = vld [vmem:[#allocation7] sm:$0xf]
    %v909 = vld [vmem:[#allocation7 + $0x4] sm:$0xf]
    %v910 = vld [vmem:[#allocation7 + $0x8] sm:$0xf]
    %v911 = vld [vmem:[#allocation7 + $0xc] sm:$0xf]
    %v912 = vld [vmem:[#allocation7 + $0x10] sm:$0xf]
    %v913 = vld [vmem:[#allocation7 + $0x14] sm:$0xf]
    %v914 = vld [vmem:[#allocation7 + $0x18] sm:$0xf]
    %v915 = vld [vmem:[#allocation7 + $0x1c] sm:$0xf]
    %v916 = vld [vmem:[#allocation7 + $0x20] sm:$0xf]
    %v917 = vld [vmem:[#allocation7 + $0x24] sm:$0xf]
    %v918 = vld [vmem:[#allocation7 + $0x28] sm:$0xf]
    %v919 = vld [vmem:[#allocation7 + $0x2c] sm:$0xf]
    %v920 = vld [vmem:[#allocation7 + $0x30] sm:$0xf]
    %v921 = vld [vmem:[#allocation7 + $0x34] sm:$0xf]
    %v922 = vld [vmem:[#allocation7 + $0x38] sm:$0xf]
    %v923 = vld [vmem:[#allocation7 + $0x3c] sm:$0xf]
    %v924 = vld [vmem:[#allocation7 + $0x40] sm:$0xf]
    %v925 = vld [vmem:[#allocation7 + $0x44] sm:$0xf]
    %v926 = vld [vmem:[#allocation7 + $0x48] sm:$0xf]
    %v927 = vld [vmem:[#allocation7 + $0x4c] sm:$0xf]
    %v928 = vld [vmem:[#allocation7 + $0x50] sm:$0xf]
    %v929 = vld [vmem:[#allocation7 + $0x54] sm:$0xf]
    %v930 = vld [vmem:[#allocation7 + $0x58] sm:$0xf]
    %v931 = vld [vmem:[#allocation7 + $0x5c] sm:$0xf]
    %v932 = vld [vmem:[#allocation7 + $0x60] sm:$0xf]
    %v933 = vld [vmem:[#allocation7 + $0x64] sm:$0xf]
    %v934 = vld [vmem:[#allocation7 + $0x68] sm:$0xf]
    %v935 = vld [vmem:[#allocation7 + $0x6c] sm:$0xf]
    %v936 = vld [vmem:[#allocation7 + $0x70] sm:$0xf]
    %v937 = vld [vmem:[#allocation7 + $0x74] sm:$0xf]
    %v938 = vld [vmem:[#allocation7 + $0x78] sm:$0xf]
    %v939 = vld [vmem:[#allocation7 + $0x7c] sm:$0xf]
    %v940 = vld [vmem:[#allocation7 + $0x80] sm:$0xf]
    %v941 = vld [vmem:[#allocation7 + $0x84] sm:$0xf]
    %v942 = vld [vmem:[#allocation7 + $0x88] sm:$0xf]
    %v943 = vld [vmem:[#allocation7 + $0x8c] sm:$0xf]
    %v944 = vld [vmem:[#allocation7 + $0x90] sm:$0xf]
    %v945 = vld [vmem:[#allocation7 + $0x94] sm:$0xf]
    %v946 = vld [vmem:[#allocation7 + $0x98] sm:$0xf]
    %v947 = vld [vmem:[#allocation7 + $0x9c] sm:$0xf]
    %v948 = vld [vmem:[#allocation7 + $0xa0] sm:$0xf]
    %v949 = vld [vmem:[#allocation7 + $0xa4] sm:$0xf]
    %v950 = vld [vmem:[#allocation7 + $0xa8] sm:$0xf]
    %v951 = vld [vmem:[#allocation7 + $0xac] sm:$0xf]
    %v952 = vld [vmem:[#allocation7 + $0xb0] sm:$0xf]
    %v953 = vld [vmem:[#allocation7 + $0xb4] sm:$0xf]
    %v954 = vld [vmem:[#allocation7 + $0xb8] sm:$0xf]
    %v955 = vld [vmem:[#allocation7 + $0xbc] sm:$0xf]
    %v956 = vld [vmem:[#allocation7 + $0xc0] sm:$0xf]
    %v957 = vld [vmem:[#allocation7 + $0xc4] sm:$0xf]
    %v958 = vld [vmem:[#allocation7 + $0xc8] sm:$0xf]
    %v959 = vld [vmem:[#allocation7 + $0xcc] sm:$0xf]
    %v960 = vld [vmem:[#allocation7 + $0xd0] sm:$0xf]
    %v961 = vld [vmem:[#allocation7 + $0xd4] sm:$0xf]
    %v962 = vld [vmem:[#allocation7 + $0xd8] sm:$0xf]
    %v963 = vld [vmem:[#allocation7 + $0xdc] sm:$0xf]
    %v964 = vld [vmem:[#allocation7 + $0xe0] sm:$0xf]
    %v965 = vld [vmem:[#allocation7 + $0xe4] sm:$0xf]
    %v966 = vld [vmem:[#allocation7 + $0xe8] sm:$0xf]
    %v967 = vld [vmem:[#allocation7 + $0xec] sm:$0xf]
    %v968 = vld [vmem:[#allocation7 + $0xf0] sm:$0xf]
    %v969 = vld [vmem:[#allocation7 + $0xf4] sm:$0xf]
    %v970 = vld [vmem:[#allocation7 + $0xf8] sm:$0xf]
    %v971 = vld [vmem:[#allocation7 + $0xfc] sm:$0xf]
    %v976 = vunpack.c.l.b16 %v904
    %v977 = vunpack.c.h.b16 %v904
    %v978 = vunpack.c.l.b16 %v905
    %v979 = vunpack.c.h.b16 %v905
    %v980 = vunpack.c.l.b16 %v906
    %v981 = vunpack.c.h.b16 %v906
    %v982 = vunpack.c.l.b16 %v907
    %v983 = vunpack.c.h.b16 %v907
    %v984 = vpack.c.b16 %v980, %v976
    %v985 = vpack.c.b16 %v981, %v977
    %v986 = vpack.c.b16 %v982, %v978
    %v987 = vpack.c.b16 %v983, %v979
    %v1056 = vunpack.c.l.b16 %v908
    %v1057 = vunpack.c.l.b16 %v909
    %v1058 = vunpack.c.l.b16 %v910
    %v1059 = vunpack.c.l.b16 %v911
    %v1060 = vunpack.c.l.b16 %v912
    %v1061 = vunpack.c.l.b16 %v913
    %v1062 = vunpack.c.l.b16 %v914
    %v1063 = vunpack.c.l.b16 %v915
    %v1064 = vunpack.c.l.b16 %v916
    %v1065 = vunpack.c.l.b16 %v917
    %v1066 = vunpack.c.l.b16 %v918
    %v1067 = vunpack.c.l.b16 %v919
    %v1068 = vunpack.c.l.b16 %v920
    %v1069 = vunpack.c.l.b16 %v921
    %v1070 = vunpack.c.l.b16 %v922
    %v1071 = vunpack.c.l.b16 %v923
    %v1072 = vunpack.c.l.b16 %v924
    %v1073 = vunpack.c.l.b16 %v925
    %v1074 = vunpack.c.l.b16 %v926
    %v1075 = vunpack.c.l.b16 %v927
    %v1076 = vunpack.c.l.b16 %v928
    %v1077 = vunpack.c.l.b16 %v929
    %v1078 = vunpack.c.l.b16 %v930
    %v1079 = vunpack.c.l.b16 %v931
    %v1080 = vunpack.c.l.b16 %v932
    %v1081 = vunpack.c.l.b16 %v933
    %v1082 = vunpack.c.l.b16 %v934
    %v1083 = vunpack.c.l.b16 %v935
    %v1084 = vunpack.c.l.b16 %v936
    %v1085 = vunpack.c.l.b16 %v937
    %v1086 = vunpack.c.l.b16 %v938
    %v1087 = vunpack.c.l.b16 %v939
    %v1088 = vunpack.c.l.b16 %v940
    %v1089 = vunpack.c.l.b16 %v941
    %v1090 = vunpack.c.l.b16 %v942
    %v1091 = vunpack.c.l.b16 %v943
    %v1092 = vunpack.c.l.b16 %v944
    %v1093 = vunpack.c.l.b16 %v945
    %v1094 = vunpack.c.l.b16 %v946
    %v1095 = vunpack.c.l.b16 %v947
    %v1096 = vunpack.c.l.b16 %v948
    %v1097 = vunpack.c.l.b16 %v949
    %v1098 = vunpack.c.l.b16 %v950
    %v1099 = vunpack.c.l.b16 %v951
    %v1100 = vunpack.c.l.b16 %v952
    %v1101 = vunpack.c.l.b16 %v953
    %v1102 = vunpack.c.l.b16 %v954
    %v1103 = vunpack.c.l.b16 %v955
    %v1104 = vunpack.c.l.b16 %v956
    %v1105 = vunpack.c.l.b16 %v957
    %v1106 = vunpack.c.l.b16 %v958
    %v1107 = vunpack.c.l.b16 %v959
    %v1108 = vunpack.c.l.b16 %v960
    %v1109 = vunpack.c.l.b16 %v961
    %v1110 = vunpack.c.l.b16 %v962
    %v1111 = vunpack.c.l.b16 %v963
    %v1112 = vunpack.c.l.b16 %v964
    %v1113 = vunpack.c.l.b16 %v965
    %v1114 = vunpack.c.l.b16 %v966
    %v1115 = vunpack.c.l.b16 %v967
    %v1116 = vunpack.c.l.b16 %v968
    %v1117 = vunpack.c.l.b16 %v969
    %v1118 = vunpack.c.l.b16 %v970
    %v1119 = vunpack.c.l.b16 %v971
    %v1120 = vpack.c.b16 %v1057, %v1056
    %v1121 = vpack.c.b16 %v1059, %v1058
    %v1122 = vpack.c.b16 %v1061, %v1060
    %v1123 = vpack.c.b16 %v1063, %v1062
    %v1124 = vpack.c.b16 %v1065, %v1064
    %v1125 = vpack.c.b16 %v1067, %v1066
    %v1126 = vpack.c.b16 %v1069, %v1068
    %v1127 = vpack.c.b16 %v1071, %v1070
    %v1128 = vpack.c.b16 %v1073, %v1072
    %v1129 = vpack.c.b16 %v1075, %v1074
    %v1130 = vpack.c.b16 %v1077, %v1076
    %v1131 = vpack.c.b16 %v1079, %v1078
    %v1132 = vpack.c.b16 %v1081, %v1080
    %v1133 = vpack.c.b16 %v1083, %v1082
    %v1134 = vpack.c.b16 %v1085, %v1084
    %v1135 = vpack.c.b16 %v1087, %v1086
    %v1136 = vpack.c.b16 %v1089, %v1088
    %v1137 = vpack.c.b16 %v1091, %v1090
    %v1138 = vpack.c.b16 %v1093, %v1092
    %v1139 = vpack.c.b16 %v1095, %v1094
    %v1140 = vpack.c.b16 %v1097, %v1096
    %v1141 = vpack.c.b16 %v1099, %v1098
    %v1142 = vpack.c.b16 %v1101, %v1100
    %v1143 = vpack.c.b16 %v1103, %v1102
    %v1144 = vpack.c.b16 %v1105, %v1104
    %v1145 = vpack.c.b16 %v1107, %v1106
    %v1146 = vpack.c.b16 %v1109, %v1108
    %v1147 = vpack.c.b16 %v1111, %v1110
    %v1148 = vpack.c.b16 %v1113, %v1112
    %v1149 = vpack.c.b16 %v1115, %v1114
    %v1150 = vpack.c.b16 %v1117, %v1116
    %v1151 = vpack.c.b16 %v1119, %v1118
    %1184 = vmatprep.subr.bf16.mxu0 0
    %1185 = vmatpush1.bf16.msra.mxu0 %v1120
    %1186 = vmatprep.subr.bf16.mxu0 0
    %1187 = vmatpush1.bf16.msra.mxu0 %v1121
    %1188 = vmatprep.subr.bf16.mxu0 0
    %1189 = vmatpush1.bf16.msra.mxu0 %v1122
    %1190 = vmatprep.subr.bf16.mxu0 0
    %1191 = vmatpush1.bf16.msra.mxu0 %v1123
    %1192 = vmatprep.subr.bf16.mxu0 0
    %1193 = vmatpush1.bf16.msra.mxu0 %v1124
    %1194 = vmatprep.subr.bf16.mxu0 0
    %1195 = vmatpush1.bf16.msra.mxu0 %v1125
    %1196 = vmatprep.subr.bf16.mxu0 0
    %1197 = vmatpush1.bf16.msra.mxu0 %v1126
    %1198 = vmatprep.subr.bf16.mxu0 0
    %1199 = vmatpush1.bf16.msra.mxu0 %v1127
    %1200 = vmatprep.subr.bf16.mxu0 0
    %1201 = vmatpush1.bf16.msra.mxu0 %v1128
    %1202 = vmatprep.subr.bf16.mxu0 0
    %1203 = vmatpush1.bf16.msra.mxu0 %v1129
    %1204 = vmatprep.subr.bf16.mxu0 0
    %1205 = vmatpush1.bf16.msra.mxu0 %v1130
    %1206 = vmatprep.subr.bf16.mxu0 0
    %1207 = vmatpush1.bf16.msra.mxu0 %v1131
    %1208 = vmatprep.subr.bf16.mxu0 0
    %1209 = vmatpush1.bf16.msra.mxu0 %v1132
    %1210 = vmatprep.subr.bf16.mxu0 0
    %1211 = vmatpush1.bf16.msra.mxu0 %v1133
    %1212 = vmatprep.subr.bf16.mxu0 0
    %1213 = vmatpush1.bf16.msra.mxu0 %v1134
    %1214 = vmatprep.subr.bf16.mxu0 0
    %1215 = vmatpush1.bf16.msra.mxu0 %v1135
    %1216 = vmatprep.mubr.bf16.mxu0 %v985
    %1217 = vmatmul.mubr.bf16.gmra.mrb[0].mxu0 %v984
    %v1218 = vpop.f32.mrb[0].mxu0
    %v1219 = vadd.f32 0.0, %v1218
    %v1220 = vpop.f32.mrb[0].mxu0
    %v1221 = vpop.f32.mrb[0].mxu0
    %v1222 = vadd.f32 0.0, %v1221
    %v1223 = vpop.f32.mrb[0].mxu0
    %1224 = vdwg.mxu0
    %1225 = vmatprep.subr.bf16.mxu0 0
    %1226 = vmatpush1.bf16.msra.mxu0 %v1136
    %1227 = vmatprep.subr.bf16.mxu0 0
    %1228 = vmatpush1.bf16.msra.mxu0 %v1137
    %1229 = vmatprep.subr.bf16.mxu0 0
    %1230 = vmatpush1.bf16.msra.mxu0 %v1138
    %1231 = vmatprep.subr.bf16.mxu0 0
    %1232 = vmatpush1.bf16.msra.mxu0 %v1139
    %1233 = vmatprep.subr.bf16.mxu0 0
    %1234 = vmatpush1.bf16.msra.mxu0 %v1140
    %1235 = vmatprep.subr.bf16.mxu0 0
    %1236 = vmatpush1.bf16.msra.mxu0 %v1141
    %1237 = vmatprep.subr.bf16.mxu0 0
    %1238 = vmatpush1.bf16.msra.mxu0 %v1142
    %1239 = vmatprep.subr.bf16.mxu0 0
    %1240 = vmatpush1.bf16.msra.mxu0 %v1143
    %1241 = vmatprep.subr.bf16.mxu0 0
    %1242 = vmatpush1.bf16.msra.mxu0 %v1144
    %1243 = vmatprep.subr.bf16.mxu0 0
    %1244 = vmatpush1.bf16.msra.mxu0 %v1145
    %1245 = vmatprep.subr.bf16.mxu0 0
    %1246 = vmatpush1.bf16.msra.mxu0 %v1146
    %1247 = vmatprep.subr.bf16.mxu0 0
    %1248 = vmatpush1.bf16.msra.mxu0 %v1147
    %1249 = vmatprep.subr.bf16.mxu0 0
    %1250 = vmatpush1.bf16.msra.mxu0 %v1148
    %1251 = vmatprep.subr.bf16.mxu0 0
    %1252 = vmatpush1.bf16.msra.mxu0 %v1149
    %1253 = vmatprep.subr.bf16.mxu0 0
    %1254 = vmatpush1.bf16.msra.mxu0 %v1150
    %1255 = vmatprep.subr.bf16.mxu0 0
    %1256 = vmatpush1.bf16.msra.mxu0 %v1151
    %1257 = vmatprep.mubr.bf16.mxu0 %v987
    %1258 = vmatmul.mubr.bf16.gmra.mrb[0].mxu0 %v986
    %v1259 = vpop.f32.mrb[0].mxu0
    %v1260 = vadd.f32 %v1219, %v1259
    %v1261 = vpop.f32.mrb[0].mxu0
    %v1262 = vpop.f32.mrb[0].mxu0
    %v1263 = vadd.f32 %v1222, %v1262
    %v1264 = vpop.f32.mrb[0].mxu0
    %1265 = vdwg.mxu0
    %v1266 = vld [vmem:[#allocation2] sm:$0x1]
    %v1267 = vsel %vm457, %v1260, 0.0
    %v1268 = vsel %vm457, %v1263, 0.0
    %v1269 = vadd.f32 %v1267, %v1268
    %v1270 = vrot.slane %v1269, 4
    %v1271 = vadd.f32 %v1269, %v1270
    %v1272 = vrot.slane %v1271, 2
    %v1273 = vadd.f32 %v1271, %v1272
    %v1274 = vrot.slane %v1273, 1
    %v1275 = vadd.f32 %v1273, %v1274
    %v1276 = vadd.f32 %v1266, %v1275
    %1277 = vst.msk [vmem:[#allocation2] sm:$0x1] %vm468, %v1276
    %v1278 = vld [vmem:[#allocation3] sm:$0x1]
    %v1279 = vmul.f32 %v1260, %v1260
    %v1280 = vmul.f32 %v1263, %v1263
    %v1281 = vsel %vm457, %v1279, 0.0
    %v1282 = vsel %vm457, %v1280, 0.0
    %v1283 = vadd.f32 %v1281, %v1282
    %v1284 = vrot.slane %v1283, 4
    %v1285 = vadd.f32 %v1283, %v1284
    %v1286 = vrot.slane %v1285, 2
    %v1287 = vadd.f32 %v1285, %v1286
    %v1288 = vrot.slane %v1287, 1
    %v1289 = vadd.f32 %v1287, %v1288
    %v1290 = vadd.f32 %v1278, %v1289
    %1291 = vst.msk [vmem:[#allocation3] sm:$0x1] %vm468, %v1290
    %v1292 = vpack.c.bf16 %v1263, %v1260
    %v1294 = vunpack.c.l.b16 %v1292
    %v1295 = vunpack.c.h.b16 %v1292
    %v1296 = vpack.c.b16 %v1294, %v1294
    %v1297 = vpack.c.b16 %v1295, %v1295
    %1298 = vrot.lane.b32.xlu0 %v1296, 64
    %v1299 = vpop.permute.xlu0 %1298
    %1300 = vrot.lane.b32.xlu0 %v1297, 64
    %v1301 = vpop.permute.xlu0 %1300
    %vm1304 = vcmask 781824
    %1305 = vst.msk [vmem:[%s495] sm:$0xf] %vm1304, %v1299
    %1306 = vst.msk [vmem:[%s495 + $0x4] sm:$0xf] %vm1304, %v1301
    %s1307 = scalar_lea.vmem [#allocation4], 96
    %v1308 = vld [vmem:[%s1307] sm:$0xff]
    %v1309 = vld [vmem:[%s1307 + $0x8] sm:$0xff]
    %v1310 = vld [vmem:[%s1307 + $0x10] sm:$0xff]
    %v1311 = vld [vmem:[%s1307 + $0x18] sm:$0xff]
    %v1312 = vld [vmem:[#allocation7] sm:$0xf]
    %v1313 = vld [vmem:[#allocation7 + $0x4] sm:$0xf]
    %v1314 = vld [vmem:[#allocation7 + $0x8] sm:$0xf]
    %v1315 = vld [vmem:[#allocation7 + $0xc] sm:$0xf]
    %v1316 = vld [vmem:[#allocation7 + $0x10] sm:$0xf]
    %v1317 = vld [vmem:[#allocation7 + $0x14] sm:$0xf]
    %v1318 = vld [vmem:[#allocation7 + $0x18] sm:$0xf]
    %v1319 = vld [vmem:[#allocation7 + $0x1c] sm:$0xf]
    %v1320 = vld [vmem:[#allocation7 + $0x20] sm:$0xf]
    %v1321 = vld [vmem:[#allocation7 + $0x24] sm:$0xf]
    %v1322 = vld [vmem:[#allocation7 + $0x28] sm:$0xf]
    %v1323 = vld [vmem:[#allocation7 + $0x2c] sm:$0xf]
    %v1324 = vld [vmem:[#allocation7 + $0x30] sm:$0xf]
    %v1325 = vld [vmem:[#allocation7 + $0x34] sm:$0xf]
    %v1326 = vld [vmem:[#allocation7 + $0x38] sm:$0xf]
    %v1327 = vld [vmem:[#allocation7 + $0x3c] sm:$0xf]
    %v1328 = vld [vmem:[#allocation7 + $0x40] sm:$0xf]
    %v1329 = vld [vmem:[#allocation7 + $0x44] sm:$0xf]
    %v1330 = vld [vmem:[#allocation7 + $0x48] sm:$0xf]
    %v1331 = vld [vmem:[#allocation7 + $0x4c] sm:$0xf]
    %v1332 = vld [vmem:[#allocation7 + $0x50] sm:$0xf]
    %v1333 = vld [vmem:[#allocation7 + $0x54] sm:$0xf]
    %v1334 = vld [vmem:[#allocation7 + $0x58] sm:$0xf]
    %v1335 = vld [vmem:[#allocation7 + $0x5c] sm:$0xf]
    %v1336 = vld [vmem:[#allocation7 + $0x60] sm:$0xf]
    %v1337 = vld [vmem:[#allocation7 + $0x64] sm:$0xf]
    %v1338 = vld [vmem:[#allocation7 + $0x68] sm:$0xf]
    %v1339 = vld [vmem:[#allocation7 + $0x6c] sm:$0xf]
    %v1340 = vld [vmem:[#allocation7 + $0x70] sm:$0xf]
    %v1341 = vld [vmem:[#allocation7 + $0x74] sm:$0xf]
    %v1342 = vld [vmem:[#allocation7 + $0x78] sm:$0xf]
    %v1343 = vld [vmem:[#allocation7 + $0x7c] sm:$0xf]
    %v1344 = vld [vmem:[#allocation7 + $0x80] sm:$0xf]
    %v1345 = vld [vmem:[#allocation7 + $0x84] sm:$0xf]
    %v1346 = vld [vmem:[#allocation7 + $0x88] sm:$0xf]
    %v1347 = vld [vmem:[#allocation7 + $0x8c] sm:$0xf]
    %v1348 = vld [vmem:[#allocation7 + $0x90] sm:$0xf]
    %v1349 = vld [vmem:[#allocation7 + $0x94] sm:$0xf]
    %v1350 = vld [vmem:[#allocation7 + $0x98] sm:$0xf]
    %v1351 = vld [vmem:[#allocation7 + $0x9c] sm:$0xf]
    %v1352 = vld [vmem:[#allocation7 + $0xa0] sm:$0xf]
    %v1353 = vld [vmem:[#allocation7 + $0xa4] sm:$0xf]
    %v1354 = vld [vmem:[#allocation7 + $0xa8] sm:$0xf]
    %v1355 = vld [vmem:[#allocation7 + $0xac] sm:$0xf]
    %v1356 = vld [vmem:[#allocation7 + $0xb0] sm:$0xf]
    %v1357 = vld [vmem:[#allocation7 + $0xb4] sm:$0xf]
    %v1358 = vld [vmem:[#allocation7 + $0xb8] sm:$0xf]
    %v1359 = vld [vmem:[#allocation7 + $0xbc] sm:$0xf]
    %v1360 = vld [vmem:[#allocation7 + $0xc0] sm:$0xf]
    %v1361 = vld [vmem:[#allocation7 + $0xc4] sm:$0xf]
    %v1362 = vld [vmem:[#allocation7 + $0xc8] sm:$0xf]
    %v1363 = vld [vmem:[#allocation7 + $0xcc] sm:$0xf]
    %v1364 = vld [vmem:[#allocation7 + $0xd0] sm:$0xf]
    %v1365 = vld [vmem:[#allocation7 + $0xd4] sm:$0xf]
    %v1366 = vld [vmem:[#allocation7 + $0xd8] sm:$0xf]
    %v1367 = vld [vmem:[#allocation7 + $0xdc] sm:$0xf]
    %v1368 = vld [vmem:[#allocation7 + $0xe0] sm:$0xf]
    %v1369 = vld [vmem:[#allocation7 + $0xe4] sm:$0xf]
    %v1370 = vld [vmem:[#allocation7 + $0xe8] sm:$0xf]
    %v1371 = vld [vmem:[#allocation7 + $0xec] sm:$0xf]
    %v1372 = vld [vmem:[#allocation7 + $0xf0] sm:$0xf]
    %v1373 = vld [vmem:[#allocation7 + $0xf4] sm:$0xf]
    %v1374 = vld [vmem:[#allocation7 + $0xf8] sm:$0xf]
    %v1375 = vld [vmem:[#allocation7 + $0xfc] sm:$0xf]
    %v1380 = vunpack.c.l.b16 %v1308
    %v1381 = vunpack.c.h.b16 %v1308
    %v1382 = vunpack.c.l.b16 %v1309
    %v1383 = vunpack.c.h.b16 %v1309
    %v1384 = vunpack.c.l.b16 %v1310
    %v1385 = vunpack.c.h.b16 %v1310
    %v1386 = vunpack.c.l.b16 %v1311
    %v1387 = vunpack.c.h.b16 %v1311
    %v1388 = vpack.c.b16 %v1384, %v1380
    %v1389 = vpack.c.b16 %v1385, %v1381
    %v1390 = vpack.c.b16 %v1386, %v1382
    %v1391 = vpack.c.b16 %v1387, %v1383
    %v1460 = vunpack.c.l.b16 %v1312
    %v1461 = vunpack.c.l.b16 %v1313
    %v1462 = vunpack.c.l.b16 %v1314
    %v1463 = vunpack.c.l.b16 %v1315
    %v1464 = vunpack.c.l.b16 %v1316
    %v1465 = vunpack.c.l.b16 %v1317
    %v1466 = vunpack.c.l.b16 %v1318
    %v1467 = vunpack.c.l.b16 %v1319
    %v1468 = vunpack.c.l.b16 %v1320
    %v1469 = vunpack.c.l.b16 %v1321
    %v1470 = vunpack.c.l.b16 %v1322
    %v1471 = vunpack.c.l.b16 %v1323
    %v1472 = vunpack.c.l.b16 %v1324
    %v1473 = vunpack.c.l.b16 %v1325
    %v1474 = vunpack.c.l.b16 %v1326
    %v1475 = vunpack.c.l.b16 %v1327
    %v1476 = vunpack.c.l.b16 %v1328
    %v1477 = vunpack.c.l.b16 %v1329
    %v1478 = vunpack.c.l.b16 %v1330
    %v1479 = vunpack.c.l.b16 %v1331
    %v1480 = vunpack.c.l.b16 %v1332
    %v1481 = vunpack.c.l.b16 %v1333
    %v1482 = vunpack.c.l.b16 %v1334
    %v1483 = vunpack.c.l.b16 %v1335
    %v1484 = vunpack.c.l.b16 %v1336
    %v1485 = vunpack.c.l.b16 %v1337
    %v1486 = vunpack.c.l.b16 %v1338
    %v1487 = vunpack.c.l.b16 %v1339
    %v1488 = vunpack.c.l.b16 %v1340
    %v1489 = vunpack.c.l.b16 %v1341
    %v1490 = vunpack.c.l.b16 %v1342
    %v1491 = vunpack.c.l.b16 %v1343
    %v1492 = vunpack.c.l.b16 %v1344
    %v1493 = vunpack.c.l.b16 %v1345
    %v1494 = vunpack.c.l.b16 %v1346
    %v1495 = vunpack.c.l.b16 %v1347
    %v1496 = vunpack.c.l.b16 %v1348
    %v1497 = vunpack.c.l.b16 %v1349
    %v1498 = vunpack.c.l.b16 %v1350
    %v1499 = vunpack.c.l.b16 %v1351
    %v1500 = vunpack.c.l.b16 %v1352
    %v1501 = vunpack.c.l.b16 %v1353
    %v1502 = vunpack.c.l.b16 %v1354
    %v1503 = vunpack.c.l.b16 %v1355
    %v1504 = vunpack.c.l.b16 %v1356
    %v1505 = vunpack.c.l.b16 %v1357
    %v1506 = vunpack.c.l.b16 %v1358
    %v1507 = vunpack.c.l.b16 %v1359
    %v1508 = vunpack.c.l.b16 %v1360
    %v1509 = vunpack.c.l.b16 %v1361
    %v1510 = vunpack.c.l.b16 %v1362
    %v1511 = vunpack.c.l.b16 %v1363
    %v1512 = vunpack.c.l.b16 %v1364
    %v1513 = vunpack.c.l.b16 %v1365
    %v1514 = vunpack.c.l.b16 %v1366
    %v1515 = vunpack.c.l.b16 %v1367
    %v1516 = vunpack.c.l.b16 %v1368
    %v1517 = vunpack.c.l.b16 %v1369
    %v1518 = vunpack.c.l.b16 %v1370
    %v1519 = vunpack.c.l.b16 %v1371
    %v1520 = vunpack.c.l.b16 %v1372
    %v1521 = vunpack.c.l.b16 %v1373
    %v1522 = vunpack.c.l.b16 %v1374
    %v1523 = vunpack.c.l.b16 %v1375
    %v1524 = vpack.c.b16 %v1461, %v1460
    %v1525 = vpack.c.b16 %v1463, %v1462
    %v1526 = vpack.c.b16 %v1465, %v1464
    %v1527 = vpack.c.b16 %v1467, %v1466
    %v1528 = vpack.c.b16 %v1469, %v1468
    %v1529 = vpack.c.b16 %v1471, %v1470
    %v1530 = vpack.c.b16 %v1473, %v1472
    %v1531 = vpack.c.b16 %v1475, %v1474
    %v1532 = vpack.c.b16 %v1477, %v1476
    %v1533 = vpack.c.b16 %v1479, %v1478
    %v1534 = vpack.c.b16 %v1481, %v1480
    %v1535 = vpack.c.b16 %v1483, %v1482
    %v1536 = vpack.c.b16 %v1485, %v1484
    %v1537 = vpack.c.b16 %v1487, %v1486
    %v1538 = vpack.c.b16 %v1489, %v1488
    %v1539 = vpack.c.b16 %v1491, %v1490
    %v1540 = vpack.c.b16 %v1493, %v1492
    %v1541 = vpack.c.b16 %v1495, %v1494
    %v1542 = vpack.c.b16 %v1497, %v1496
    %v1543 = vpack.c.b16 %v1499, %v1498
    %v1544 = vpack.c.b16 %v1501, %v1500
    %v1545 = vpack.c.b16 %v1503, %v1502
    %v1546 = vpack.c.b16 %v1505, %v1504
    %v1547 = vpack.c.b16 %v1507, %v1506
    %v1548 = vpack.c.b16 %v1509, %v1508
    %v1549 = vpack.c.b16 %v1511, %v1510
    %v1550 = vpack.c.b16 %v1513, %v1512
    %v1551 = vpack.c.b16 %v1515, %v1514
    %v1552 = vpack.c.b16 %v1517, %v1516
    %v1553 = vpack.c.b16 %v1519, %v1518
    %v1554 = vpack.c.b16 %v1521, %v1520
    %v1555 = vpack.c.b16 %v1523, %v1522
    %1588 = vmatprep.subr.bf16.mxu0 0
    %1589 = vmatpush1.bf16.msra.mxu0 %v1524
    %1590 = vmatprep.subr.bf16.mxu0 0
    %1591 = vmatpush1.bf16.msra.mxu0 %v1525
    %1592 = vmatprep.subr.bf16.mxu0 0
    %1593 = vmatpush1.bf16.msra.mxu0 %v1526
    %1594 = vmatprep.subr.bf16.mxu0 0
    %1595 = vmatpush1.bf16.msra.mxu0 %v1527
    %1596 = vmatprep.subr.bf16.mxu0 0
    %1597 = vmatpush1.bf16.msra.mxu0 %v1528
    %1598 = vmatprep.subr.bf16.mxu0 0
    %1599 = vmatpush1.bf16.msra.mxu0 %v1529
    %1600 = vmatprep.subr.bf16.mxu0 0
    %1601 = vmatpush1.bf16.msra.mxu0 %v1530
    %1602 = vmatprep.subr.bf16.mxu0 0
    %1603 = vmatpush1.bf16.msra.mxu0 %v1531
    %1604 = vmatprep.subr.bf16.mxu0 0
    %1605 = vmatpush1.bf16.msra.mxu0 %v1532
    %1606 = vmatprep.subr.bf16.mxu0 0
    %1607 = vmatpush1.bf16.msra.mxu0 %v1533
    %1608 = vmatprep.subr.bf16.mxu0 0
    %1609 = vmatpush1.bf16.msra.mxu0 %v1534
    %1610 = vmatprep.subr.bf16.mxu0 0
    %1611 = vmatpush1.bf16.msra.mxu0 %v1535
    %1612 = vmatprep.subr.bf16.mxu0 0
    %1613 = vmatpush1.bf16.msra.mxu0 %v1536
    %1614 = vmatprep.subr.bf16.mxu0 0
    %1615 = vmatpush1.bf16.msra.mxu0 %v1537
    %1616 = vmatprep.subr.bf16.mxu0 0
    %1617 = vmatpush1.bf16.msra.mxu0 %v1538
    %1618 = vmatprep.subr.bf16.mxu0 0
    %1619 = vmatpush1.bf16.msra.mxu0 %v1539
    %1620 = vmatprep.mubr.bf16.mxu0 %v1389
    %1621 = vmatmul.mubr.bf16.gmra.mrb[0].mxu0 %v1388
    %v1622 = vpop.f32.mrb[0].mxu0
    %v1623 = vadd.f32 0.0, %v1622
    %v1624 = vpop.f32.mrb[0].mxu0
    %v1625 = vpop.f32.mrb[0].mxu0
    %v1626 = vadd.f32 0.0, %v1625
    %v1627 = vpop.f32.mrb[0].mxu0
    %1628 = vdwg.mxu0
    %1629 = vmatprep.subr.bf16.mxu0 0
    %1630 = vmatpush1.bf16.msra.mxu0 %v1540
    %1631 = vmatprep.subr.bf16.mxu0 0
    %1632 = vmatpush1.bf16.msra.mxu0 %v1541
    %1633 = vmatprep.subr.bf16.mxu0 0
    %1634 = vmatpush1.bf16.msra.mxu0 %v1542
    %1635 = vmatprep.subr.bf16.mxu0 0
    %1636 = vmatpush1.bf16.msra.mxu0 %v1543
    %1637 = vmatprep.subr.bf16.mxu0 0
    %1638 = vmatpush1.bf16.msra.mxu0 %v1544
    %1639 = vmatprep.subr.bf16.mxu0 0
    %1640 = vmatpush1.bf16.msra.mxu0 %v1545
    %1641 = vmatprep.subr.bf16.mxu0 0
    %1642 = vmatpush1.bf16.msra.mxu0 %v1546
    %1643 = vmatprep.subr.bf16.mxu0 0
    %1644 = vmatpush1.bf16.msra.mxu0 %v1547
    %1645 = vmatprep.subr.bf16.mxu0 0
    %1646 = vmatpush1.bf16.msra.mxu0 %v1548
    %1647 = vmatprep.subr.bf16.mxu0 0
    %1648 = vmatpush1.bf16.msra.mxu0 %v1549
    %1649 = vmatprep.subr.bf16.mxu0 0
    %1650 = vmatpush1.bf16.msra.mxu0 %v1550
    %1651 = vmatprep.subr.bf16.mxu0 0
    %1652 = vmatpush1.bf16.msra.mxu0 %v1551
    %1653 = vmatprep.subr.bf16.mxu0 0
    %1654 = vmatpush1.bf16.msra.mxu0 %v1552
    %1655 = vmatprep.subr.bf16.mxu0 0
    %1656 = vmatpush1.bf16.msra.mxu0 %v1553
    %1657 = vmatprep.subr.bf16.mxu0 0
    %1658 = vmatpush1.bf16.msra.mxu0 %v1554
    %1659 = vmatprep.subr.bf16.mxu0 0
    %1660 = vmatpush1.bf16.msra.mxu0 %v1555
    %1661 = vmatprep.mubr.bf16.mxu0 %v1391
    %1662 = vmatmul.mubr.bf16.gmra.mrb[0].mxu0 %v1390
    %v1663 = vpop.f32.mrb[0].mxu0
    %v1664 = vadd.f32 %v1623, %v1663
    %v1665 = vpop.f32.mrb[0].mxu0
    %v1666 = vpop.f32.mrb[0].mxu0
    %v1667 = vadd.f32 %v1626, %v1666
    %v1668 = vpop.f32.mrb[0].mxu0
    %1669 = vdwg.mxu0
    %v1670 = vld [vmem:[#allocation2] sm:$0x1]
    %v1671 = vsel %vm457, %v1664, 0.0
    %v1672 = vsel %vm457, %v1667, 0.0
    %v1673 = vadd.f32 %v1671, %v1672
    %v1674 = vrot.slane %v1673, 4
    %v1675 = vadd.f32 %v1673, %v1674
    %v1676 = vrot.slane %v1675, 2
    %v1677 = vadd.f32 %v1675, %v1676
    %v1678 = vrot.slane %v1677, 1
    %v1679 = vadd.f32 %v1677, %v1678
    %v1680 = vadd.f32 %v1670, %v1679
    %1681 = vst.msk [vmem:[#allocation2] sm:$0x1] %vm468, %v1680
    %v1682 = vld [vmem:[#allocation3] sm:$0x1]
    %v1683 = vmul.f32 %v1664, %v1664
    %v1684 = vmul.f32 %v1667, %v1667
    %v1685 = vsel %vm457, %v1683, 0.0
    %v1686 = vsel %vm457, %v1684, 0.0
    %v1687 = vadd.f32 %v1685, %v1686
    %v1688 = vrot.slane %v1687, 4
    %v1689 = vadd.f32 %v1687, %v1688
    %v1690 = vrot.slane %v1689, 2
    %v1691 = vadd.f32 %v1689, %v1690
    %v1692 = vrot.slane %v1691, 1
    %v1693 = vadd.f32 %v1691, %v1692
    %v1694 = vadd.f32 %v1682, %v1693
    %1695 = vst.msk [vmem:[#allocation3] sm:$0x1] %vm468, %v1694
    %v1696 = vpack.c.bf16 %v1667, %v1664
    %v1698 = vunpack.c.l.b16 %v1696
    %v1699 = vunpack.c.h.b16 %v1696
    %v1700 = vpack.c.b16 %v1698, %v1698
    %v1701 = vpack.c.b16 %v1699, %v1699
    %1702 = vrot.lane.b32.xlu0 %v1700, 96
    %v1703 = vpop.permute.xlu0 %1702
    %1704 = vrot.lane.b32.xlu0 %v1701, 96
    %v1705 = vpop.permute.xlu0 %1704
    %vm1708 = vcmask 1044224
    %1709 = vst.msk [vmem:[%s495] sm:$0xf] %vm1708, %v1703
    %1710 = vst.msk [vmem:[%s495 + $0x4] sm:$0xf] %vm1708, %v1705
    // Predicated region
    $region46: #{discriminator_forward.6} parent=1 // pred_check
      %p1711 = pneg %p86
    $region47: #{discriminator_forward.6} parent=1 // pred_check_branch
      %1713 = sbr.rel (%p1711) target = $region49
    $region48: #{discriminator_forward.6} parent=1 // pred_region
      %v1714 = vld [vmem:[#allocation2] sm:$0x1]
      %v1715 = vmul.f32 %v1714, 0.03125
      %v1716 = vld [vmem:[#allocation3] sm:$0x1]
      %v1717 = vmul.f32 %v1716, 0.03125
      %v1718 = vmul.f32 %v1715, %v1715
      %v1719 = vsub.f32 %v1717, %v1718
      %v1720 = vmax.f32 %v1719, 0.0
      %v1721 = vadd.f32 %v1720, 1e-05
      %v1722 = vrsqrt.pop %v1721
      %v1723 = vld [vmem:[#allocation9] sm:$0x1]
      %v1724 = vmul.f32 %v1723, %v1722
      %v1725 = vld [vmem:[#allocation10] sm:$0x1]
      %v1726 = vmul.f32 %v1715, %v1724
      %v1727 = vsub.f32 %v1725, %v1726
      %v1728 = vld [vmem:[#allocation12] sm:$0xff]
      %v1729 = vld [vmem:[#allocation12 + $0x8] sm:$0xff]
      %v1730 = vld [vmem:[#allocation12 + $0x10] sm:$0xff]
      %v1731 = vld [vmem:[#allocation12 + $0x18] sm:$0xff]
      %v1733 = vsel %vm457, %v1724, 0
      %1735 = vmatprep.subr.mxu0 0.0
      %1736 = vmatpush1.msra.mxu0 %v1728
      %1737 = vmatprep.subr.mxu0 0.0
      %1738 = vmatpush1.msra.mxu0 %v1729
      %1739 = vmatprep.subr.mxu0 0.0
      %1740 = vmatpush1.msra.mxu0 %v1730
      %1741 = vmatprep.subr.mxu0 0.0
      %1742 = vmatpush1.msra.mxu0 %v1731
      %1743 = vmatprep.subr.mxu0 0.0
      %1744 = vmatpush1.msra.mxu0 0.0
      %1745 = vmatprep.subr.mxu0 0.0
      %1746 = vmatpush1.msra.mxu0 0.0
      %1747 = vmatprep.subr.mxu0 0.0
      %1748 = vmatpush1.msra.mxu0 0.0
      %1749 = vmatprep.subr.mxu0 0.0
      %1750 = vmatpush1.msra.mxu0 0.0
      %1751 = vmatprep.subr.mxu0 0.0
      %1752 = vmatpush1.msra.mxu0 0.0
      %1753 = vmatprep.subr.mxu0 0.0
      %1754 = vmatpush1.msra.mxu0 0.0
      %1755 = vmatprep.subr.mxu0 0.0
      %1756 = vmatpush1.msra.mxu0 0.0
      %1757 = vmatprep.subr.mxu0 0.0
      %1758 = vmatpush1.msra.mxu0 0.0
      %1759 = vmatprep.subr.mxu0 0.0
      %1760 = vmatpush1.msra.mxu0 0.0
      %1761 = vmatprep.subr.mxu0 0.0
      %1762 = vmatpush1.msra.mxu0 0.0
      %1763 = vmatprep.subr.mxu0 0.0
      %1764 = vmatpush1.msra.mxu0 0.0
      %1765 = vmatprep.subr.mxu0 0.0
      %1766 = vmatpush1.msra.mxu0 0.0
      %1767 = vmatprep.subr.mxu0 0.0
      %1768 = vmatpush1.msra.mxu0 0.0
      %1769 = vmatprep.subr.mxu0 0.0
      %1770 = vmatpush1.msra.mxu0 0.0
      %1771 = vmatprep.subr.mxu0 0.0
      %1772 = vmatpush1.msra.mxu0 0.0
      %1773 = vmatprep.subr.mxu0 0.0
      %1774 = vmatpush1.msra.mxu0 0.0
      %1775 = vmatprep.subr.mxu0 0.0
      %1776 = vmatpush1.msra.mxu0 0.0
      %1777 = vmatprep.subr.mxu0 0.0
      %1778 = vmatpush1.msra.mxu0 0.0
      %1779 = vmatprep.subr.mxu0 0.0
      %1780 = vmatpush1.msra.mxu0 0.0
      %1781 = vmatprep.subr.mxu0 0.0
      %1782 = vmatpush1.msra.mxu0 0.0
      %1783 = vmatprep.subr.mxu0 0.0
      %1784 = vmatpush1.msra.mxu0 0.0
      %1785 = vmatprep.subr.mxu0 0.0
      %1786 = vmatpush1.msra.mxu0 0.0
      %1787 = vmatprep.subr.mxu0 0.0
      %1788 = vmatpush1.msra.mxu0 0.0
      %1789 = vmatprep.subr.mxu0 0.0
      %1790 = vmatpush1.msra.mxu0 0.0
      %1791 = vmatprep.subr.mxu0 0.0
      %1792 = vmatpush1.msra.mxu0 0.0
      %1793 = vmatprep.subr.mxu0 0.0
      %1794 = vmatpush1.msra.mxu0 0.0
      %1795 = vmatprep.subr.mxu0 0.0
      %1796 = vmatpush1.msra.mxu0 0.0
      %1797 = vmatprep.subr.mxu0 0.0
      %1798 = vmatpush1.msra.mxu0 0.0
      %1799 = vmatprep.mubr.f32.mxu0 0.0
      %1800 = vmatmul.mubr.f32.gmra.mrb[0].mxu0 %v1733
      %v1801 = vpop.f32.mrb[0].mxu0
      %v1802 = vadd.f32 0.0, %v1801
      %v1803 = vpop.f32.mrb[0].mxu0
      %1804 = vdwg.mxu0
      %v1806 = vsel %vm457, %v1727, 0
      %1808 = vmatprep.subr.mxu0 0.0
      %1809 = vmatpush1.msra.mxu0 %v1728
      %1810 = vmatprep.subr.mxu0 0.0
      %1811 = vmatpush1.msra.mxu0 %v1729
      %1812 = vmatprep.subr.mxu0 0.0
      %1813 = vmatpush1.msra.mxu0 %v1730
      %1814 = vmatprep.subr.mxu0 0.0
      %1815 = vmatpush1.msra.mxu0 %v1731
      %1816 = vmatprep.subr.mxu0 0.0
      %1817 = vmatpush1.msra.mxu0 0.0
      %1818 = vmatprep.subr.mxu0 0.0
      %1819 = vmatpush1.msra.mxu0 0.0
      %1820 = vmatprep.subr.mxu0 0.0
      %1821 = vmatpush1.msra.mxu0 0.0
      %1822 = vmatprep.subr.mxu0 0.0
      %1823 = vmatpush1.msra.mxu0 0.0
      %1824 = vmatprep.subr.mxu0 0.0
      %1825 = vmatpush1.msra.mxu0 0.0
      %1826 = vmatprep.subr.mxu0 0.0
      %1827 = vmatpush1.msra.mxu0 0.0
      %1828 = vmatprep.subr.mxu0 0.0
      %1829 = vmatpush1.msra.mxu0 0.0
      %1830 = vmatprep.subr.mxu0 0.0
      %1831 = vmatpush1.msra.mxu0 0.0
      %1832 = vmatprep.subr.mxu0 0.0
      %1833 = vmatpush1.msra.mxu0 0.0
      %1834 = vmatprep.subr.mxu0 0.0
      %1835 = vmatpush1.msra.mxu0 0.0
      %1836 = vmatprep.subr.mxu0 0.0
      %1837 = vmatpush1.msra.mxu0 0.0
      %1838 = vmatprep.subr.mxu0 0.0
      %1839 = vmatpush1.msra.mxu0 0.0
      %1840 = vmatprep.subr.mxu0 0.0
      %1841 = vmatpush1.msra.mxu0 0.0
      %1842 = vmatprep.subr.mxu0 0.0
      %1843 = vmatpush1.msra.mxu0 0.0
      %1844 = vmatprep.subr.mxu0 0.0
      %1845 = vmatpush1.msra.mxu0 0.0
      %1846 = vmatprep.subr.mxu0 0.0
      %1847 = vmatpush1.msra.mxu0 0.0
      %1848 = vmatprep.subr.mxu0 0.0
      %1849 = vmatpush1.msra.mxu0 0.0
      %1850 = vmatprep.subr.mxu0 0.0
      %1851 = vmatpush1.msra.mxu0 0.0
      %1852 = vmatprep.subr.mxu0 0.0
      %1853 = vmatpush1.msra.mxu0 0.0
      %1854 = vmatprep.subr.mxu0 0.0
      %1855 = vmatpush1.msra.mxu0 0.0
      %1856 = vmatprep.subr.mxu0 0.0
      %1857 = vmatpush1.msra.mxu0 0.0
      %1858 = vmatprep.subr.mxu0 0.0
      %1859 = vmatpush1.msra.mxu0 0.0
      %1860 = vmatprep.subr.mxu0 0.0
      %1861 = vmatpush1.msra.mxu0 0.0
      %1862 = vmatprep.subr.mxu0 0.0
      %1863 = vmatpush1.msra.mxu0 0.0
      %1864 = vmatprep.subr.mxu0 0.0
      %1865 = vmatpush1.msra.mxu0 0.0
      %1866 = vmatprep.subr.mxu0 0.0
      %1867 = vmatpush1.msra.mxu0 0.0
      %1868 = vmatprep.subr.mxu0 0.0
      %1869 = vmatpush1.msra.mxu0 0.0
      %1870 = vmatprep.subr.mxu0 0.0
      %1871 = vmatpush1.msra.mxu0 0.0
      %1872 = vmatprep.mubr.f32.mxu0 0.0
      %1873 = vmatmul.mubr.f32.gmra.mrb[0].mxu0 %v1806
      %v1874 = vpop.f32.mrb[0].mxu0
      %v1875 = vadd.f32 0.0, %v1874
      %v1876 = vpop.f32.mrb[0].mxu0
      %1877 = vdwg.mxu0
      %v1878 = vld [vmem:[#allocation13] sm:$0xf]
      %v1879 = vld [vmem:[#allocation13 + $0x4] sm:$0xf]
      %v1880 = vunpack.c.l.bf16 %v1878
      %v1881 = vunpack.c.l.bf16 %v1879
      %v1882 = vlaneseq
      %v1883 = vshrl.u32 %v1882, 7
      %v1884 = vsub.s32 0, %v1883
      %v1885 = vrot.slane %v1802, %v1884
      %v1886 = vmul.f32 %v1880, %v1885
      %v1887 = vmul.f32 %v1881, %v1885
      %v1888 = vlaneseq
      %v1889 = vshrl.u32 %v1888, 7
      %v1890 = vsub.s32 0, %v1889
      %v1891 = vrot.slane %v1875, %v1890
      %v1892 = vadd.f32 %v1886, %v1891
      %v1893 = vadd.f32 %v1887, %v1891
      %vm1894 = vcmp.ge.f32.partialorder %v1892, 0.0
      %vm1895 = vcmp.ge.f32.partialorder %v1893, 0.0
      %v1896 = vmul.f32 %v1892, 0.2
      %v1897 = vmul.f32 %v1893, 0.2
      %v1898 = vsel %vm1894, %v1892, %v1896
      %v1899 = vsel %vm1895, %v1893, %v1897
      %v1900 = vpack.c.bf16 %v1899, %v1898
      %v1902 = vunpack.c.l.b16 %v1900
      %v1903 = vunpack.c.h.b16 %v1900
      %v1904 = vpack.c.b16 %v1902, %v1902
      %v1905 = vpack.c.b16 %v1903, %v1903
      %1908 = vst [vmem:[#allocation13] sm:$0xf] %v1904
      %1909 = vst [vmem:[#allocation13 + $0x4] sm:$0xf] %v1905
    $region49: #{discriminator_forward.6} parent=1 // pred_fallthru
      _
    // Predicated region
    $region50: #{discriminator_forward.6} parent=1 // pred_check
      _
    $region51: #{discriminator_forward.6} parent=1 // pred_check_branch
      %1911 = sbr.rel (0) target = $region53
    $region52: #{discriminator_forward.6} parent=1 // pred_region
      %s1913 = ssub.s32 128, 128
      %1914 = vsyncadd [#allocation6], %s1913
      %s1915 = sshll.u32 [#allocation13], 4
      %s1916 = int_to_ptr.vmem [resolvable:$true] %s1915
      %1921 = dma.vmem_to_hbm [thread:$0]  %s1916, 128, %s5, [#allocation6], 64, 64, 4
    $region53: #{discriminator_forward.6} parent=1 // pred_fallthru
      _
    // Predicated region
    $region54: #{discriminator_forward.6} parent=1 // pred_check
      _
    $region55: #{discriminator_forward.6} parent=1 // pred_check_branch
      %1923 = sbr.rel (0) target = $region57
    $region56: #{discriminator_forward.6} parent=1 // pred_region
      %1924 = dma.done [#allocation6], 128
    $region57: #{discriminator_forward.6} parent=1 // pred_fallthru
      _
    %1925 = vsyncpa [#allocation5], 1
    %1926 = vsyncpa [#allocation8], 1
    %1927 = vsyncpa [#allocation11], 1
    %1928 = vsyncpa [#allocation6], 1

// kernel: tile.37
$region0: #{tile.37}
  %s0 = inlined_call_operand.vmem [shape: f32[64,2,64], index: 0, kind: input, shape index: {}]
  %s1 = inlined_call_operand.hbm [shape: f32[64,128], index: 1, kind: output, shape index: {}]
  $region1: #{tile.37} parent=0
    #allocation0 [shape = 'u8[32768]{0}', space=vmem, size = 0x8000, scoped, tag = 'operand span for operand 1']
    #allocation1 [shape = 's32[1]{0}', space=sflag, size = 0x4, scoped, tag = 'scoped memory for tile.37']
    #allocation2 [shape = 'u8[262144]{0}', space=vmem, size = 0x40000, scoped, tag = 'scoped mem for input reshape']
    %2 = vsyncpa [#allocation1], 0
    %s4 = sshllo.u32 0, 2
    %s5 = smul.addr 2, 63
    %s6 = scalar_lea.vmem %s0, %s5
    %v7 = vld [vmem:[%s6] sm:%s4]
    %s8 = scalar_lea.vmem [#allocation2], 504
    %9 = vst [vmem:[%s8] sm:%s4] %v7
    %s10 = smul.addr 2, 62
    %s11 = scalar_lea.vmem %s0, %s10
    %v12 = vld [vmem:[%s11] sm:%s4]
    %s13 = scalar_lea.vmem [#allocation2], 496
    %14 = vst [vmem:[%s13] sm:%s4] %v12
    %s15 = smul.addr 2, 61
    %s16 = scalar_lea.vmem %s0, %s15
    %v17 = vld [vmem:[%s16] sm:%s4]
    %s18 = scalar_lea.vmem [#allocation2], 488
    %19 = vst [vmem:[%s18] sm:%s4] %v17
    %s20 = smul.addr 2, 60
    %s21 = scalar_lea.vmem %s0, %s20
    %v22 = vld [vmem:[%s21] sm:%s4]
    %s23 = scalar_lea.vmem [#allocation2], 480
    %24 = vst [vmem:[%s23] sm:%s4] %v22
    %s25 = smul.addr 2, 59
    %s26 = scalar_lea.vmem %s0, %s25
    %v27 = vld [vmem:[%s26] sm:%s4]
    %s28 = scalar_lea.vmem [#allocation2], 472
    %29 = vst [vmem:[%s28] sm:%s4] %v27
    %s30 = smul.addr 2, 58
    %s31 = scalar_lea.vmem %s0, %s30
    %v32 = vld [vmem:[%s31] sm:%s4]
    %s33 = scalar_lea.vmem [#allocation2], 464
    %34 = vst [vmem:[%s33] sm:%s4] %v32
    %s35 = smul.addr 2, 57
    %s36 = scalar_lea.vmem %s0, %s35
    %v37 = vld [vmem:[%s36] sm:%s4]
    %s38 = scalar_lea.vmem [#allocation2], 456
    %39 = vst [vmem:[%s38] sm:%s4] %v37
    %s40 = smul.addr 2, 56
    %s41 = scalar_lea.vmem %s0, %s40
    %v42 = vld [vmem:[%s41] sm:%s4]
    %s43 = scalar_lea.vmem [#allocation2], 448
    %44 = vst [vmem:[%s43] sm:%s4] %v42
    %s45 = smul.addr 2, 55
    %s46 = scalar_lea.vmem %s0, %s45
    %v47 = vld [vmem:[%s46] sm:%s4]
    %s48 = scalar_lea.vmem [#allocation2], 440
    %49 = vst [vmem:[%s48] sm:%s4] %v47
    %s50 = smul.addr 2, 54
    %s51 = scalar_lea.vmem %s0, %s50
    %v52 = vld [vmem:[%s51] sm:%s4]
    %s53 = scalar_lea.vmem [#allocation2], 432
    %54 = vst [vmem:[%s53] sm:%s4] %v52
    %s55 = smul.addr 2, 53
    %s56 = scalar_lea.vmem %s0, %s55
    %v57 = vld [vmem:[%s56] sm:%s4]
    %s58 = scalar_lea.vmem [#allocation2], 424
    %59 = vst [vmem:[%s58] sm:%s4] %v57
    %s60 = smul.addr 2, 52
    %s61 = scalar_lea.vmem %s0, %s60
    %v62 = vld [vmem:[%s61] sm:%s4]
    %s63 = scalar_lea.vmem [#allocation2], 416
    %64 = vst [vmem:[%s63] sm:%s4] %v62
    %s65 = smul.addr 2, 51
    %s66 = scalar_lea.vmem %s0, %s65
    %v67 = vld [vmem:[%s66] sm:%s4]
    %s68 = scalar_lea.vmem [#allocation2], 408
    %69 = vst [vmem:[%s68] sm:%s4] %v67
    %s70 = smul.addr 2, 50
    %s71 = scalar_lea.vmem %s0, %s70
    %v72 = vld [vmem:[%s71] sm:%s4]
    %s73 = scalar_lea.vmem [#allocation2], 400
    %74 = vst [vmem:[%s73] sm:%s4] %v72
    %s75 = smul.addr 2, 49
    %s76 = scalar_lea.vmem %s0, %s75
    %v77 = vld [vmem:[%s76] sm:%s4]
    %s78 = scalar_lea.vmem [#allocation2], 392
    %79 = vst [vmem:[%s78] sm:%s4] %v77
    %s80 = smul.addr 2, 48
    %s81 = scalar_lea.vmem %s0, %s80
    %v82 = vld [vmem:[%s81] sm:%s4]
    %s83 = scalar_lea.vmem [#allocation2], 384
    %84 = vst [vmem:[%s83] sm:%s4] %v82
    %s85 = smul.addr 2, 47
    %s86 = scalar_lea.vmem %s0, %s85
    %v87 = vld [vmem:[%s86] sm:%s4]
    %s88 = scalar_lea.vmem [#allocation2], 376
    %89 = vst [vmem:[%s88] sm:%s4] %v87
    %s90 = smul.addr 2, 46
    %s91 = scalar_lea.vmem %s0, %s90
    %v92 = vld [vmem:[%s91] sm:%s4]
    %s93 = scalar_lea.vmem [#allocation2], 368
    %94 = vst [vmem:[%s93] sm:%s4] %v92
    %s95 = smul.addr 2, 45
    %s96 = scalar_lea.vmem %s0, %s95
    %v97 = vld [vmem:[%s96] sm:%s4]
    %s98 = scalar_lea.vmem [#allocation2], 360
    %99 = vst [vmem:[%s98] sm:%s4] %v97
    %s100 = smul.addr 2, 44
    %s101 = scalar_lea.vmem %s0, %s100
    %v102 = vld [vmem:[%s101] sm:%s4]
    %s103 = scalar_lea.vmem [#allocation2], 352
    %104 = vst [vmem:[%s103] sm:%s4] %v102
    %s105 = smul.addr 2, 43
    %s106 = scalar_lea.vmem %s0, %s105
    %v107 = vld [vmem:[%s106] sm:%s4]
    %s108 = scalar_lea.vmem [#allocation2], 344
    %109 = vst [vmem:[%s108] sm:%s4] %v107
    %s110 = smul.addr 2, 42
    %s111 = scalar_lea.vmem %s0, %s110
    %v112 = vld [vmem:[%s111] sm:%s4]
    %s113 = scalar_lea.vmem [#allocation2], 336
    %114 = vst [vmem:[%s113] sm:%s4] %v112
    %s115 = smul.addr 2, 41
    %s116 = scalar_lea.vmem %s0, %s115
    %v117 = vld [vmem:[%s116] sm:%s4]
    %s118 = scalar_lea.vmem [#allocation2], 328
    %119 = vst [vmem:[%s118] sm:%s4] %v117
    %s120 = smul.addr 2, 40
    %s121 = scalar_lea.vmem %s0, %s120
    %v122 = vld [vmem:[%s121] sm:%s4]
    %s123 = scalar_lea.vmem [#allocation2], 320
    %124 = vst [vmem:[%s123] sm:%s4] %v122
    %s125 = smul.addr 2, 39
    %s126 = scalar_lea.vmem %s0, %s125
    %v127 = vld [vmem:[%s126] sm:%s4]
    %s128 = scalar_lea.vmem [#allocation2], 312
    %129 = vst [vmem:[%s128] sm:%s4] %v127
    %s130 = smul.addr 2, 38
    %s131 = scalar_lea.vmem %s0, %s130
    %v132 = vld [vmem:[%s131] sm:%s4]
    %s133 = scalar_lea.vmem [#allocation2], 304
    %134 = vst [vmem:[%s133] sm:%s4] %v132
    %s135 = smul.addr 2, 37
    %s136 = scalar_lea.vmem %s0, %s135
    %v137 = vld [vmem:[%s136] sm:%s4]
    %s138 = scalar_lea.vmem [#allocation2], 296
    %139 = vst [vmem:[%s138] sm:%s4] %v137
    %s140 = smul.addr 2, 36
    %s141 = scalar_lea.vmem %s0, %s140
    %v142 = vld [vmem:[%s141] sm:%s4]
    %s143 = scalar_lea.vmem [#allocation2], 288
    %144 = vst [vmem:[%s143] sm:%s4] %v142
    %s145 = smul.addr 2, 35
    %s146 = scalar_lea.vmem %s0, %s145
    %v147 = vld [vmem:[%s146] sm:%s4]
    %s148 = scalar_lea.vmem [#allocation2], 280
    %149 = vst [vmem:[%s148] sm:%s4] %v147
    %s150 = smul.addr 2, 34
    %s151 = scalar_lea.vmem %s0, %s150
    %v152 = vld [vmem:[%s151] sm:%s4]
    %s153 = scalar_lea.vmem [#allocation2], 272
    %154 = vst [vmem:[%s153] sm:%s4] %v152
    %s155 = smul.addr 2, 33
    %s156 = scalar_lea.vmem %s0, %s155
    %v157 = vld [vmem:[%s156] sm:%s4]
    %s158 = scalar_lea.vmem [#allocation2], 264
    %159 = vst [vmem:[%s158] sm:%s4] %v157
    %s160 = smul.addr 2, 32
    %s161 = scalar_lea.vmem %s0, %s160
    %v162 = vld [vmem:[%s161] sm:%s4]
    %s163 = scalar_lea.vmem [#allocation2], 256
    %164 = vst [vmem:[%s163] sm:%s4] %v162
    %s165 = smul.addr 2, 31
    %s166 = scalar_lea.vmem %s0, %s165
    %v167 = vld [vmem:[%s166] sm:%s4]
    %s168 = scalar_lea.vmem [#allocation2], 248
    %169 = vst [vmem:[%s168] sm:%s4] %v167
    %s170 = smul.addr 2, 30
    %s171 = scalar_lea.vmem %s0, %s170
    %v172 = vld [vmem:[%s171] sm:%s4]
    %s173 = scalar_lea.vmem [#allocation2], 240
    %174 = vst [vmem:[%s173] sm:%s4] %v172
    %s175 = smul.addr 2, 29
    %s176 = scalar_lea.vmem %s0, %s175
    %v177 = vld [vmem:[%s176] sm:%s4]
    %s178 = scalar_lea.vmem [#allocation2], 232
    %179 = vst [vmem:[%s178] sm:%s4] %v177
    %s180 = smul.addr 2, 28
    %s181 = scalar_lea.vmem %s0, %s180
    %v182 = vld [vmem:[%s181] sm:%s4]
    %s183 = scalar_lea.vmem [#allocation2], 224
    %184 = vst [vmem:[%s183] sm:%s4] %v182
    %s185 = smul.addr 2, 27
    %s186 = scalar_lea.vmem %s0, %s185
    %v187 = vld [vmem:[%s186] sm:%s4]
    %s188 = scalar_lea.vmem [#allocation2], 216
    %189 = vst [vmem:[%s188] sm:%s4] %v187
    %s190 = smul.addr 2, 26
    %s191 = scalar_lea.vmem %s0, %s190
    %v192 = vld [vmem:[%s191] sm:%s4]
    %s193 = scalar_lea.vmem [#allocation2], 208
    %194 = vst [vmem:[%s193] sm:%s4] %v192
    %s195 = smul.addr 2, 25
    %s196 = scalar_lea.vmem %s0, %s195
    %v197 = vld [vmem:[%s196] sm:%s4]
    %s198 = scalar_lea.vmem [#allocation2], 200
    %199 = vst [vmem:[%s198] sm:%s4] %v197
    %s200 = smul.addr 2, 24
    %s201 = scalar_lea.vmem %s0, %s200
    %v202 = vld [vmem:[%s201] sm:%s4]
    %s203 = scalar_lea.vmem [#allocation2], 192
    %204 = vst [vmem:[%s203] sm:%s4] %v202
    %s205 = smul.addr 2, 23
    %s206 = scalar_lea.vmem %s0, %s205
    %v207 = vld [vmem:[%s206] sm:%s4]
    %s208 = scalar_lea.vmem [#allocation2], 184
    %209 = vst [vmem:[%s208] sm:%s4] %v207
    %s210 = smul.addr 2, 22
    %s211 = scalar_lea.vmem %s0, %s210
    %v212 = vld [vmem:[%s211] sm:%s4]
    %s213 = scalar_lea.vmem [#allocation2], 176
    %214 = vst [vmem:[%s213] sm:%s4] %v212
    %s215 = smul.addr 2, 21
    %s216 = scalar_lea.vmem %s0, %s215
    %v217 = vld [vmem:[%s216] sm:%s4]
    %s218 = scalar_lea.vmem [#allocation2], 168
    %219 = vst [vmem:[%s218] sm:%s4] %v217
    %s220 = smul.addr 2, 20
    %s221 = scalar_lea.vmem %s0, %s220
    %v222 = vld [vmem:[%s221] sm:%s4]
    %s223 = scalar_lea.vmem [#allocation2], 160
    %224 = vst [vmem:[%s223] sm:%s4] %v222
    %s225 = smul.addr 2, 19
    %s226 = scalar_lea.vmem %s0, %s225
    %v227 = vld [vmem:[%s226] sm:%s4]
    %s228 = scalar_lea.vmem [#allocation2], 152
    %229 = vst [vmem:[%s228] sm:%s4] %v227
    %s230 = smul.addr 2, 18
    %s231 = scalar_lea.vmem %s0, %s230
    %v232 = vld [vmem:[%s231] sm:%s4]
    %s233 = scalar_lea.vmem [#allocation2], 144
    %234 = vst [vmem:[%s233] sm:%s4] %v232
    %s235 = smul.addr 2, 17
    %s236 = scalar_lea.vmem %s0, %s235
    %v237 = vld [vmem:[%s236] sm:%s4]
    %s238 = scalar_lea.vmem [#allocation2], 136
    %239 = vst [vmem:[%s238] sm:%s4] %v237
    %s240 = smul.addr 2, 16
    %s241 = scalar_lea.vmem %s0, %s240
    %v242 = vld [vmem:[%s241] sm:%s4]
    %s243 = scalar_lea.vmem [#allocation2], 128
    %244 = vst [vmem:[%s243] sm:%s4] %v242
    %s245 = smul.addr 2, 15
    %s246 = scalar_lea.vmem %s0, %s245
    %v247 = vld [vmem:[%s246] sm:%s4]
    %s248 = scalar_lea.vmem [#allocation2], 120
    %249 = vst [vmem:[%s248] sm:%s4] %v247
    %s250 = smul.addr 2, 14
    %s251 = scalar_lea.vmem %s0, %s250
    %v252 = vld [vmem:[%s251] sm:%s4]
    %s253 = scalar_lea.vmem [#allocation2], 112
    %254 = vst [vmem:[%s253] sm:%s4] %v252
    %s255 = smul.addr 2, 13
    %s256 = scalar_lea.vmem %s0, %s255
    %v257 = vld [vmem:[%s256] sm:%s4]
    %s258 = scalar_lea.vmem [#allocation2], 104
    %259 = vst [vmem:[%s258] sm:%s4] %v257
    %s260 = smul.addr 2, 12
    %s261 = scalar_lea.vmem %s0, %s260
    %v262 = vld [vmem:[%s261] sm:%s4]
    %s263 = scalar_lea.vmem [#allocation2], 96
    %264 = vst [vmem:[%s263] sm:%s4] %v262
    %s265 = smul.addr 2, 11
    %s266 = scalar_lea.vmem %s0, %s265
    %v267 = vld [vmem:[%s266] sm:%s4]
    %s268 = scalar_lea.vmem [#allocation2], 88
    %269 = vst [vmem:[%s268] sm:%s4] %v267
    %s270 = smul.addr 2, 10
    %s271 = scalar_lea.vmem %s0, %s270
    %v272 = vld [vmem:[%s271] sm:%s4]
    %s273 = scalar_lea.vmem [#allocation2], 80
    %274 = vst [vmem:[%s273] sm:%s4] %v272
    %s275 = smul.addr 2, 9
    %s276 = scalar_lea.vmem %s0, %s275
    %v277 = vld [vmem:[%s276] sm:%s4]
    %s278 = scalar_lea.vmem [#allocation2], 72
    %279 = vst [vmem:[%s278] sm:%s4] %v277
    %s280 = smul.addr 2, 8
    %s281 = scalar_lea.vmem %s0, %s280
    %v282 = vld [vmem:[%s281] sm:%s4]
    %s283 = scalar_lea.vmem [#allocation2], 64
    %284 = vst [vmem:[%s283] sm:%s4] %v282
    %s285 = smul.addr 2, 7
    %s286 = scalar_lea.vmem %s0, %s285
    %v287 = vld [vmem:[%s286] sm:%s4]
    %s288 = scalar_lea.vmem [#allocation2], 56
    %289 = vst [vmem:[%s288] sm:%s4] %v287
    %s290 = smul.addr 2, 6
    %s291 = scalar_lea.vmem %s0, %s290
    %v292 = vld [vmem:[%s291] sm:%s4]
    %s293 = scalar_lea.vmem [#allocation2], 48
    %294 = vst [vmem:[%s293] sm:%s4] %v292
    %s295 = smul.addr 2, 5
    %s296 = scalar_lea.vmem %s0, %s295
    %v297 = vld [vmem:[%s296] sm:%s4]
    %s298 = scalar_lea.vmem [#allocation2], 40
    %299 = vst [vmem:[%s298] sm:%s4] %v297
    %s300 = smul.addr 2, 4
    %s301 = scalar_lea.vmem %s0, %s300
    %v302 = vld [vmem:[%s301] sm:%s4]
    %s303 = scalar_lea.vmem [#allocation2], 32
    %304 = vst [vmem:[%s303] sm:%s4] %v302
    %s305 = smul.addr 2, 3
    %s306 = scalar_lea.vmem %s0, %s305
    %v307 = vld [vmem:[%s306] sm:%s4]
    %s308 = scalar_lea.vmem [#allocation2], 24
    %309 = vst [vmem:[%s308] sm:%s4] %v307
    %s310 = smul.addr 2, 2
    %s311 = scalar_lea.vmem %s0, %s310
    %v312 = vld [vmem:[%s311] sm:%s4]
    %s313 = scalar_lea.vmem [#allocation2], 16
    %314 = vst [vmem:[%s313] sm:%s4] %v312
    %s315 = scalar_lea.vmem %s0, 2
    %v316 = vld [vmem:[%s315] sm:%s4]
    %s317 = scalar_lea.vmem [#allocation2], 8
    %318 = vst [vmem:[%s317] sm:%s4] %v316
    %v319 = vld [vmem:[%s0] sm:%s4]
    %320 = vst [vmem:[#allocation2] sm:%s4] %v319
    %v321 = vld [vmem:[#allocation2] ss:$8 sm:$0xf]
    %v322 = vld [vmem:[#allocation2] ss:$8 sm:$0xf0]
    %vm323 = vcmask 1047556
    %v324 = vsel %vm323, %v322, %v321
    %vm325 = vcmask 523264
    %326 = vst.msk [vmem:[#allocation0] sm:$0xff] %vm325, %v324
    %s327 = scalar_lea.vmem [#allocation2], 64
    %v328 = vld [vmem:[%s327] ss:$8 sm:$0xf]
    %s329 = scalar_lea.vmem [#allocation2], 64
    %v330 = vld [vmem:[%s329] ss:$8 sm:$0xf0]
    %vm331 = vcmask 1047556
    %v332 = vsel %vm331, %v330, %v328
    %vm333 = vcmask 523264
    %s334 = scalar_lea.vmem [#allocation0], 8
    %335 = vst.msk [vmem:[%s334] sm:$0xff] %vm333, %v332
    %s336 = scalar_lea.vmem [#allocation2], 128
    %v337 = vld [vmem:[%s336] ss:$8 sm:$0xf]
    %s338 = scalar_lea.vmem [#allocation2], 128
    %v339 = vld [vmem:[%s338] ss:$8 sm:$0xf0]
    %vm340 = vcmask 1047556
    %v341 = vsel %vm340, %v339, %v337
    %vm342 = vcmask 523264
    %s343 = scalar_lea.vmem [#allocation0], 16
    %344 = vst.msk [vmem:[%s343] sm:$0xff] %vm342, %v341
    %s345 = scalar_lea.vmem [#allocation2], 192
    %v346 = vld [vmem:[%s345] ss:$8 sm:$0xf]
    %s347 = scalar_lea.vmem [#allocation2], 192
    %v348 = vld [vmem:[%s347] ss:$8 sm:$0xf0]
    %vm349 = vcmask 1047556
    %v350 = vsel %vm349, %v348, %v346
    %vm351 = vcmask 523264
    %s352 = scalar_lea.vmem [#allocation0], 24
    %353 = vst.msk [vmem:[%s352] sm:$0xff] %vm351, %v350
    %s354 = scalar_lea.vmem [#allocation2], 256
    %v355 = vld [vmem:[%s354] ss:$8 sm:$0xf]
    %s356 = scalar_lea.vmem [#allocation2], 256
    %v357 = vld [vmem:[%s356] ss:$8 sm:$0xf0]
    %vm358 = vcmask 1047556
    %v359 = vsel %vm358, %v357, %v355
    %vm360 = vcmask 523264
    %s361 = scalar_lea.vmem [#allocation0], 32
    %362 = vst.msk [vmem:[%s361] sm:$0xff] %vm360, %v359
    %s363 = scalar_lea.vmem [#allocation2], 320
    %v364 = vld [vmem:[%s363] ss:$8 sm:$0xf]
    %s365 = scalar_lea.vmem [#allocation2], 320
    %v366 = vld [vmem:[%s365] ss:$8 sm:$0xf0]
    %vm367 = vcmask 1047556
    %v368 = vsel %vm367, %v366, %v364
    %vm369 = vcmask 523264
    %s370 = scalar_lea.vmem [#allocation0], 40
    %371 = vst.msk [vmem:[%s370] sm:$0xff] %vm369, %v368
    %s372 = scalar_lea.vmem [#allocation2], 384
    %v373 = vld [vmem:[%s372] ss:$8 sm:$0xf]
    %s374 = scalar_lea.vmem [#allocation2], 384
    %v375 = vld [vmem:[%s374] ss:$8 sm:$0xf0]
    %vm376 = vcmask 1047556
    %v377 = vsel %vm376, %v375, %v373
    %vm378 = vcmask 523264
    %s379 = scalar_lea.vmem [#allocation0], 48
    %380 = vst.msk [vmem:[%s379] sm:$0xff] %vm378, %v377
    %s381 = scalar_lea.vmem [#allocation2], 448
    %v382 = vld [vmem:[%s381] ss:$8 sm:$0xf]
    %s383 = scalar_lea.vmem [#allocation2], 448
    %v384 = vld [vmem:[%s383] ss:$8 sm:$0xf0]
    %vm385 = vcmask 1047556
    %v386 = vsel %vm385, %v384, %v382
    %vm387 = vcmask 523264
    %s388 = scalar_lea.vmem [#allocation0], 56
    %389 = vst.msk [vmem:[%s388] sm:$0xff] %vm387, %v386
    %s390 = scalar_lea.vmem [#allocation2], 1
    %v391 = vld [vmem:[%s390] ss:$8 sm:$0xf]
    %s392 = scalar_lea.vmem [#allocation2], 1
    %v393 = vld [vmem:[%s392] ss:$8 sm:$0xf0]
    %vm394 = vcmask 1047556
    %v395 = vsel %vm394, %v393, %v391
    %396 = vrot.lane.b32.xlu0 %v395, 64
    %v397 = vpop.permute.xlu0 %396
    %vm398 = vcmask 1048064
    %399 = vst.msk [vmem:[#allocation0] sm:$0xff] %vm398, %v397
    %s400 = scalar_lea.vmem [#allocation2], 257
    %v401 = vld [vmem:[%s400] ss:$8 sm:$0xf]
    %s402 = scalar_lea.vmem [#allocation2], 257
    %v403 = vld [vmem:[%s402] ss:$8 sm:$0xf0]
    %vm404 = vcmask 1047556
    %v405 = vsel %vm404, %v403, %v401
    %406 = vrot.lane.b32.xlu0 %v405, 64
    %v407 = vpop.permute.xlu0 %406
    %vm408 = vcmask 1048064
    %s409 = scalar_lea.vmem [#allocation0], 32
    %410 = vst.msk [vmem:[%s409] sm:$0xff] %vm408, %v407
    %s411 = scalar_lea.vmem [#allocation2], 65
    %v412 = vld [vmem:[%s411] ss:$8 sm:$0xf]
    %s413 = scalar_lea.vmem [#allocation2], 65
    %v414 = vld [vmem:[%s413] ss:$8 sm:$0xf0]
    %vm415 = vcmask 1047556
    %v416 = vsel %vm415, %v414, %v412
    %417 = vrot.lane.b32.xlu0 %v416, 64
    %v418 = vpop.permute.xlu0 %417
    %vm419 = vcmask 1048064
    %s420 = scalar_lea.vmem [#allocation0], 8
    %421 = vst.msk [vmem:[%s420] sm:$0xff] %vm419, %v418
    %s422 = scalar_lea.vmem [#allocation2], 321
    %v423 = vld [vmem:[%s422] ss:$8 sm:$0xf]
    %s424 = scalar_lea.vmem [#allocation2], 321
    %v425 = vld [vmem:[%s424] ss:$8 sm:$0xf0]
    %vm426 = vcmask 1047556
    %v427 = vsel %vm426, %v425, %v423
    %428 = vrot.lane.b32.xlu0 %v427, 64
    %v429 = vpop.permute.xlu0 %428
    %vm430 = vcmask 1048064
    %s431 = scalar_lea.vmem [#allocation0], 40
    %432 = vst.msk [vmem:[%s431] sm:$0xff] %vm430, %v429
    %s433 = scalar_lea.vmem [#allocation2], 129
    %v434 = vld [vmem:[%s433] ss:$8 sm:$0xf]
    %s435 = scalar_lea.vmem [#allocation2], 129
    %v436 = vld [vmem:[%s435] ss:$8 sm:$0xf0]
    %vm437 = vcmask 1047556
    %v438 = vsel %vm437, %v436, %v434
    %439 = vrot.lane.b32.xlu0 %v438, 64
    %v440 = vpop.permute.xlu0 %439
    %vm441 = vcmask 1048064
    %s442 = scalar_lea.vmem [#allocation0], 16
    %443 = vst.msk [vmem:[%s442] sm:$0xff] %vm441, %v440
    %s444 = scalar_lea.vmem [#allocation2], 385
    %v445 = vld [vmem:[%s444] ss:$8 sm:$0xf]
    %s446 = scalar_lea.vmem [#allocation2], 385
    %v447 = vld [vmem:[%s446] ss:$8 sm:$0xf0]
    %vm448 = vcmask 1047556
    %v449 = vsel %vm448, %v447, %v445
    %450 = vrot.lane.b32.xlu0 %v449, 64
    %v451 = vpop.permute.xlu0 %450
    %vm452 = vcmask 1048064
    %s453 = scalar_lea.vmem [#allocation0], 48
    %454 = vst.msk [vmem:[%s453] sm:$0xff] %vm452, %v451
    %s455 = scalar_lea.vmem [#allocation2], 193
    %v456 = vld [vmem:[%s455] ss:$8 sm:$0xf]
    %s457 = scalar_lea.vmem [#allocation2], 193
    %v458 = vld [vmem:[%s457] ss:$8 sm:$0xf0]
    %vm459 = vcmask 1047556
    %v460 = vsel %vm459, %v458, %v456
    %461 = vrot.lane.b32.xlu0 %v460, 64
    %v462 = vpop.permute.xlu0 %461
    %vm463 = vcmask 1048064
    %s464 = scalar_lea.vmem [#allocation0], 24
    %465 = vst.msk [vmem:[%s464] sm:$0xff] %vm463, %v462
    %s466 = scalar_lea.vmem [#allocation2], 449
    %v467 = vld [vmem:[%s466] ss:$8 sm:$0xf]
    %s468 = scalar_lea.vmem [#allocation2], 449
    %v469 = vld [vmem:[%s468] ss:$8 sm:$0xf0]
    %vm470 = vcmask 1047556
    %v471 = vsel %vm470, %v469, %v467
    %472 = vrot.lane.b32.xlu0 %v471, 64
    %v473 = vpop.permute.xlu0 %472
    %vm474 = vcmask 1048064
    %s475 = scalar_lea.vmem [#allocation0], 56
    %476 = vst.msk [vmem:[%s475] sm:$0xff] %vm474, %v473
    %s478 = ssub.s32 1024, 1024
    %479 = vsyncadd [#allocation1], %s478
    %s481 = sshll.u32 [#allocation0], 4
    %s482 = int_to_ptr.vmem [resolvable:$true] %s481
    %484 = dma.vmem_to_hbm [thread:$0]  %s482, 1024, %s1, [#allocation1]
    %485 = dma.done [#allocation1], 1024
    %486 = vsyncpa [#allocation1], 1

// kernel: discriminator_forward.7
$region0: #{discriminator_forward.7}
  #allocation0 [shape = 'u32[]', space=smem, size = 0x4, offset = 0x4, fixed_abs, tag = 'smem constant byte address 0x4 - core index']
  #allocation1 [shape = 'u32[144,128]{1,0:T(1,128)}', space=vmem, size = 0x12000, scoped, tag = 'internal scratch']
  #allocation2 [shape = 'f32[16,128]{1,0:T(8,128)}', space=vmem, size = 0x2000, scoped, tag = 'scratch operand']
  #allocation3 [shape = 'f32[1,64]{1,0:T(1,128)}', space=vmem, size = 0x200, scoped, tag = 'scratch operand']
  #allocation4 [shape = 'f32[1,64]{1,0:T(1,128)}', space=vmem, size = 0x200, scoped, tag = 'scratch operand']
  #allocation5 [shape = 'f32[1,1]{1,0:T(1,128)S(1)}', space=vmem, size = 0x200, scoped, tag = 'scoped memory for discriminator_forward.7']
  %s0 = inlined_call_operand.hbm [shape: bf16[2,16,896], index: 0, kind: input, shape index: {}]
  %s1 = inlined_call_operand.hbm [shape: bf16[896,64], index: 1, kind: input, shape index: {}]
  %s2 = inlined_call_operand.hbm [shape: f32[1,64], index: 2, kind: input, shape index: {}]
  %s3 = inlined_call_operand.hbm [shape: f32[1,64], index: 3, kind: input, shape index: {}]
  %s4 = inlined_call_operand.hbm [shape: f32[64,128], index: 4, kind: input, shape index: {}]
  %s5 = inlined_call_operand.hbm [shape: f32[16,128], index: 5, kind: input, shape index: {}]
  %s6 = inlined_call_operand.hbm [shape: f32[2,16], index: 6, kind: input, shape index: {}]
  %s7 = inlined_call_operand.<no memory space> [shape: f32[1,1], index: 7, kind: input, shape index: {}]
  %s8 = inlined_call_operand.hbm [shape: f32[2,1], index: 8, kind: output, shape index: {}]
  %s9 = sld [smem:[#allocation0]]
  $region78: #{discriminator_forward.7} parent=0
    _
  %s11 = ssub.s32 1, %s9
  %s12 = scalar_select 0, %s11, %s9
  %v13 = vstv %s7
  %14 = vst [vmem:[#allocation5] sm:$0x1] %v13
  $region1: #{discriminator_forward.7} parent=0
    #allocation6 [shape = 'u8[57344]{0}', space=vmem, size = 0xe000, scoped, tag = 'input window, operand 0, single buffered']
    #allocation7 [shape = 's32[1]{0}', space=sflag, size = 0x4, scoped, tag = 'scoped memory for discriminator_forward.7']
    #allocation8 [shape = 's32[1]{0}', space=sflag, size = 0x4, scoped, tag = 'scoped memory for discriminator_forward.7']
    #allocation9 [shape = 'u8[229376]{0}', space=vmem, size = 0x38000, scoped, tag = 'input window, operand 1, single buffered']
    #allocation10 [shape = 's32[1]{0}', space=sflag, size = 0x4, scoped, tag = 'scoped memory for discriminator_forward.7']
    #allocation11 [shape = 'u8[512]{0}', space=vmem, size = 0x400, scoped, tag = 'input window, operand 2, single buffered']
    #allocation12 [shape = 'u8[512]{0}', space=vmem, size = 0x400, scoped, tag = 'input window, operand 3, single buffered']
    #allocation13 [shape = 's32[1]{0}', space=sflag, size = 0x4, scoped, tag = 'scoped memory for discriminator_forward.7']
    #allocation14 [shape = 'u8[32768]{0}', space=vmem, size = 0x8000, scoped, tag = 'input window, operand 4, single buffered']
    #allocation15 [shape = 'u8[8192]{0}', space=vmem, size = 0x2000, scoped, tag = 'input window, operand 5, single buffered']
    #allocation16 [shape = 's32[1]{0}', space=sflag, size = 0x4, scoped, tag = 'scoped memory for discriminator_forward.7']
    #allocation17 [shape = 'u8[1024]{0}', space=vmem, size = 0x400, scoped, tag = 'input window, operand 6, single buffered']
    #allocation18 [shape = 'u8[1024]{0}', space=vmem, size = 0x400, scoped, tag = 'output window, operand 0, single buffered']
    %15 = vsyncpa [#allocation7], 0
    %16 = vsyncpa [#allocation10], 0
    %17 = vsyncpa [#allocation13], 0
    %18 = vsyncpa [#allocation16], 0
    %19 = vsyncpa [#allocation8], 0
    // Predicated region
    $region2: #{discriminator_forward.7} parent=1 // pred_check
      _
    $region3: #{discriminator_forward.7} parent=1 // pred_check_branch
      %21 = sbr.rel (0) target = $region5
    $region4: #{discriminator_forward.7} parent=1 // pred_region
      %s23 = ssub.s32 1792, 1792
      %24 = vsyncadd [#allocation7], %s23
      %s25 = sshll.u32 [#allocation6], 4
      %s26 = int_to_ptr.vmem [resolvable:$true] %s25
      %31 = dma.hbm_to_vmem [thread:$0]  %s0, 1792, %s26, [#allocation7], 448, 448, 28
    $region5: #{discriminator_forward.7} parent=1 // pred_fallthru
      _
    // Predicated region
    $region6: #{discriminator_forward.7} parent=1 // pred_check
      _
    $region7: #{discriminator_forward.7} parent=1 // pred_check_branch
      %33 = sbr.rel (0) target = $region9
    $region8: #{discriminator_forward.7} parent=1 // pred_region
      %s35 = ssub.s32 7168, 7168
      %36 = vsyncadd [#allocation10], %s35
      %s37 = sshll.u32 [#allocation9], 4
      %s38 = int_to_ptr.vmem [resolvable:$true] %s37
      %43 = dma.hbm_to_vmem [thread:$0]  %s1, 7168, %s38, [#allocation10], 64, 64, 4
    $region9: #{discriminator_forward.7} parent=1 // pred_fallthru
      _
    // Predicated region
    $region10: #{discriminator_forward.7} parent=1 // pred_check
      _
    $region11: #{discriminator_forward.7} parent=1 // pred_check_branch
      %45 = sbr.rel (0) target = $region13
    $region12: #{discriminator_forward.7} parent=1 // pred_region
      %s47 = ssub.s32 16, 16
      %48 = vsyncadd [#allocation10], %s47
      %s50 = sshll.u32 [#allocation11], 4
      %s51 = int_to_ptr.vmem [resolvable:$true] %s50
      %53 = dma.hbm_to_vmem [thread:$0]  %s2, 16, %s51, [#allocation10]
    $region13: #{discriminator_forward.7} parent=1 // pred_fallthru
      _
    // Predicated region
    $region14: #{discriminator_forward.7} parent=1 // pred_check
      _
    $region15: #{discriminator_forward.7} parent=1 // pred_check_branch
      %55 = sbr.rel (0) target = $region17
    $region16: #{discriminator_forward.7} parent=1 // pred_region
      %s57 = ssub.s32 16, 16
      %58 = vsyncadd [#allocation13], %s57
      %s60 = sshll.u32 [#allocation12], 4
      %s61 = int_to_ptr.vmem [resolvable:$true] %s60
      %63 = dma.hbm_to_vmem [thread:$0]  %s3, 16, %s61, [#allocation13]
    $region17: #{discriminator_forward.7} parent=1 // pred_fallthru
      _
    // Predicated region
    $region18: #{discriminator_forward.7} parent=1 // pred_check
      _
    $region19: #{discriminator_forward.7} parent=1 // pred_check_branch
      %65 = sbr.rel (0) target = $region21
    $region20: #{discriminator_forward.7} parent=1 // pred_region
      %s67 = ssub.s32 1024, 1024
      %68 = vsyncadd [#allocation13], %s67
      %s69 = sshll.u32 [#allocation14], 4
      %s70 = int_to_ptr.vmem [resolvable:$true] %s69
      %75 = dma.hbm_to_vmem [thread:$0]  %s4, 1024, %s70, [#allocation13], 128, 128, 8
    $region21: #{discriminator_forward.7} parent=1 // pred_fallthru
      _
    // Predicated region
    $region22: #{discriminator_forward.7} parent=1 // pred_check
      _
    $region23: #{discriminator_forward.7} parent=1 // pred_check_branch
      %77 = sbr.rel (0) target = $region25
    $region24: #{discriminator_forward.7} parent=1 // pred_region
      %s79 = ssub.s32 256, 256
      %80 = vsyncadd [#allocation16], %s79
      %s81 = sshll.u32 [#allocation15], 4
      %s82 = int_to_ptr.vmem [resolvable:$true] %s81
      %87 = dma.hbm_to_vmem [thread:$0]  %s5, 256, %s82, [#allocation16], 128, 128, 8
    $region25: #{discriminator_forward.7} parent=1 // pred_fallthru
      _
    // Predicated region
    $region26: #{discriminator_forward.7} parent=1 // pred_check
      _
    $region27: #{discriminator_forward.7} parent=1 // pred_check_branch
      %89 = sbr.rel (0) target = $region29
    $region28: #{discriminator_forward.7} parent=1 // pred_region
      %s91 = ssub.s32 32, 32
      %92 = vsyncadd [#allocation16], %s91
      %s94 = sshll.u32 [#allocation17], 4
      %s95 = int_to_ptr.vmem [resolvable:$true] %s94
      %97 = dma.hbm_to_vmem [thread:$0]  %s6, 32, %s95, [#allocation16]
    $region29: #{discriminator_forward.7} parent=1 // pred_fallthru
      _
    // Predicated region
    $region30: #{discriminator_forward.7} parent=1 // pred_check
      _
    $region31: #{discriminator_forward.7} parent=1 // pred_check_branch
      %99 = sbr.rel (0) target = $region33
    $region32: #{discriminator_forward.7} parent=1 // pred_region
      _
    $region33: #{discriminator_forward.7} parent=1 // pred_fallthru
      _
    // Predicated region
    $region34: #{discriminator_forward.7} parent=1 // pred_check
      _
    $region35: #{discriminator_forward.7} parent=1 // pred_check_branch
      %101 = sbr.rel (0) target = $region37
    $region36: #{discriminator_forward.7} parent=1 // pred_region
      %102 = dma.done [#allocation7], 1792
    $region37: #{discriminator_forward.7} parent=1 // pred_fallthru
      _
    // Predicated region
    $region38: #{discriminator_forward.7} parent=1 // pred_check
      _
    $region39: #{discriminator_forward.7} parent=1 // pred_check_branch
      %104 = sbr.rel (0) target = $region41
    $region40: #{discriminator_forward.7} parent=1 // pred_region
      %105 = dma.done [#allocation10], 7168
    $region41: #{discriminator_forward.7} parent=1 // pred_fallthru
      _
    // Predicated region
    $region42: #{discriminator_forward.7} parent=1 // pred_check
      _
    $region43: #{discriminator_forward.7} parent=1 // pred_check_branch
      %107 = sbr.rel (0) target = $region45
    $region44: #{discriminator_forward.7} parent=1 // pred_region
      %108 = dma.done [#allocation10], 16
    $region45: #{discriminator_forward.7} parent=1 // pred_fallthru
      _
    // Predicated region
    $region46: #{discriminator_forward.7} parent=1 // pred_check
      _
    $region47: #{discriminator_forward.7} parent=1 // pred_check_branch
      %110 = sbr.rel (0) target = $region49
    $region48: #{discriminator_forward.7} parent=1 // pred_region
      %111 = dma.done [#allocation13], 16
    $region49: #{discriminator_forward.7} parent=1 // pred_fallthru
      _
    // Predicated region
    $region50: #{discriminator_forward.7} parent=1 // pred_check
      _
    $region51: #{discriminator_forward.7} parent=1 // pred_check_branch
      %113 = sbr.rel (0) target = $region53
    $region52: #{discriminator_forward.7} parent=1 // pred_region
      %114 = dma.done [#allocation13], 1024
    $region53: #{discriminator_forward.7} parent=1 // pred_fallthru
      _
    // Predicated region
    $region54: #{discriminator_forward.7} parent=1 // pred_check
      _
    $region55: #{discriminator_forward.7} parent=1 // pred_check_branch
      %116 = sbr.rel (0) target = $region57
    $region56: #{discriminator_forward.7} parent=1 // pred_region
      %117 = dma.done [#allocation16], 256
    $region57: #{discriminator_forward.7} parent=1 // pred_fallthru
      _
    // Predicated region
    $region58: #{discriminator_forward.7} parent=1 // pred_check
      _
    $region59: #{discriminator_forward.7} parent=1 // pred_check_branch
      %119 = sbr.rel (0) target = $region61
    $region60: #{discriminator_forward.7} parent=1 // pred_region
      %120 = dma.done [#allocation16], 32
    $region61: #{discriminator_forward.7} parent=1 // pred_fallthru
      _
    %p122 = scmp.eq.s32.totalorder 0, 0
    // Predicated region
    $region62: #{discriminator_forward.7} parent=1 // pred_check
      %p123 = pneg %p122
    $region63: #{discriminator_forward.7} parent=1 // pred_check_branch
      %125 = sbr.rel (%p123) target = $region65
    $region64: #{discriminator_forward.7} parent=1 // pred_region
      %vm126 = vcmask 516096
      %127 = vst.msk [vmem:[#allocation3] sm:$0x1] %vm126, 0.0
      %128 = vst.msk [vmem:[#allocation4] sm:$0x1] %vm126, 0.0
    $region65: #{discriminator_forward.7} parent=1 // pred_fallthru
      _
    %s129 = smul.u32 0, 16
    %v130 = vld [vmem:[#allocation6] sm:$0xff]
    %v131 = vld [vmem:[#allocation6 + $0x8] sm:$0xff]
    %v132 = vld [vmem:[#allocation6 + $0x10] sm:$0xff]
    %v133 = vld [vmem:[#allocation6 + $0x18] sm:$0xf]
    %v134 = vld [vmem:[#allocation6 + $0x1c] sm:$0xff]
    %v135 = vld [vmem:[#allocation6 + $0x24] sm:$0xff]
    %v136 = vld [vmem:[#allocation6 + $0x2c] sm:$0xff]
    %v137 = vld [vmem:[#allocation6 + $0x34] sm:$0xf]
    %v138 = vld [vmem:[#allocation9] sm:$0xf]
    %v139 = vld [vmem:[#allocation9 + $0x4] sm:$0xf]
    %v140 = vld [vmem:[#allocation9 + $0x8] sm:$0xf]
    %v141 = vld [vmem:[#allocation9 + $0xc] sm:$0xf]
    %v142 = vld [vmem:[#allocation9 + $0x10] sm:$0xf]
    %v143 = vld [vmem:[#allocation9 + $0x14] sm:$0xf]
    %v144 = vld [vmem:[#allocation9 + $0x18] sm:$0xf]
    %v145 = vld [vmem:[#allocation9 + $0x1c] sm:$0xf]
    %v146 = vld [vmem:[#allocation9 + $0x20] sm:$0xf]
    %v147 = vld [vmem:[#allocation9 + $0x24] sm:$0xf]
    %v148 = vld [vmem:[#allocation9 + $0x28] sm:$0xf]
    %v149 = vld [vmem:[#allocation9 + $0x2c] sm:$0xf]
    %v150 = vld [vmem:[#allocation9 + $0x30] sm:$0xf]
    %v151 = vld [vmem:[#allocation9 + $0x34] sm:$0xf]
    %v152 = vld [vmem:[#allocation9 + $0x38] sm:$0xf]
    %v153 = vld [vmem:[#allocation9 + $0x3c] sm:$0xf]
    %v154 = vld [vmem:[#allocation9 + $0x40] sm:$0xf]
    %v155 = vld [vmem:[#allocation9 + $0x44] sm:$0xf]
    %v156 = vld [vmem:[#allocation9 + $0x48] sm:$0xf]
    %v157 = vld [vmem:[#allocation9 + $0x4c] sm:$0xf]
    %v158 = vld [vmem:[#allocation9 + $0x50] sm:$0xf]
    %v159 = vld [vmem:[#allocation9 + $0x54] sm:$0xf]
    %v160 = vld [vmem:[#allocation9 + $0x58] sm:$0xf]
    %v161 = vld [vmem:[#allocation9 + $0x5c] sm:$0xf]
    %v162 = vld [vmem:[#allocation9 + $0x60] sm:$0xf]
    %v163 = vld [vmem:[#allocation9 + $0x64] sm:$0xf]
    %v164 = vld [vmem:[#allocation9 + $0x68] sm:$0xf]
    %v165 = vld [vmem:[#allocation9 + $0x6c] sm:$0xf]
    %v166 = vld [vmem:[#allocation9 + $0x70] sm:$0xf]
    %v167 = vld [vmem:[#allocation9 + $0x74] sm:$0xf]
    %v168 = vld [vmem:[#allocation9 + $0x78] sm:$0xf]
    %v169 = vld [vmem:[#allocation9 + $0x7c] sm:$0xf]
    %v170 = vld [vmem:[#allocation9 + $0x80] sm:$0xf]
    %v171 = vld [vmem:[#allocation9 + $0x84] sm:$0xf]
    %v172 = vld [vmem:[#allocation9 + $0x88] sm:$0xf]
    %v173 = vld [vmem:[#allocation9 + $0x8c] sm:$0xf]
    %v174 = vld [vmem:[#allocation9 + $0x90] sm:$0xf]
    %v175 = vld [vmem:[#allocation9 + $0x94] sm:$0xf]
    %v176 = vld [vmem:[#allocation9 + $0x98] sm:$0xf]
    %v177 = vld [vmem:[#allocation9 + $0x9c] sm:$0xf]
    %v178 = vld [vmem:[#allocation9 + $0xa0] sm:$0xf]
    %v179 = vld [vmem:[#allocation9 + $0xa4] sm:$0xf]
    %v180 = vld [vmem:[#allocation9 + $0xa8] sm:$0xf]
    %v181 = vld [vmem:[#allocation9 + $0xac] sm:$0xf]
    %v182 = vld [vmem:[#allocation9 + $0xb0] sm:$0xf]
    %v183 = vld [vmem:[#allocation9 + $0xb4] sm:$0xf]
    %v184 = vld [vmem:[#allocation9 + $0xb8] sm:$0xf]
    %v185 = vld [vmem:[#allocation9 + $0xbc] sm:$0xf]
    %v186 = vld [vmem:[#allocation9 + $0xc0] sm:$0xf]
    %v187 = vld [vmem:[#allocation9 + $0xc4] sm:$0xf]
    %v188 = vld [vmem:[#allocation9 + $0xc8] sm:$0xf]
    %v189 = vld [vmem:[#allocation9 + $0xcc] sm:$0xf]
    %v190 = vld [vmem:[#allocation9 + $0xd0] sm:$0xf]
    %v191 = vld [vmem:[#allocation9 + $0xd4] sm:$0xf]
    %v192 = vld [vmem:[#allocation9 + $0xd8] sm:$0xf]
    %v193 = vld [vmem:[#allocation9 + $0xdc] sm:$0xf]
    %v194 = vld [vmem:[#allocation9 + $0xe0] sm:$0xf]
    %v195 = vld [vmem:[#allocation9 + $0xe4] sm:$0xf]
    %v196 = vld [vmem:[#allocation9 + $0xe8] sm:$0xf]
    %v197 = vld [vmem:[#allocation9 + $0xec] sm:$0xf]
    %v198 = vld [vmem:[#allocation9 + $0xf0] sm:$0xf]
    %v199 = vld [vmem:[#allocation9 + $0xf4] sm:$0xf]
    %v200 = vld [vmem:[#allocation9 + $0xf8] sm:$0xf]
    %v201 = vld [vmem:[#allocation9 + $0xfc] sm:$0xf]
    %v202 = vld [vmem:[#allocation9 + $0x100] sm:$0xf]
    %v203 = vld [vmem:[#allocation9 + $0x104] sm:$0xf]
    %v204 = vld [vmem:[#allocation9 + $0x108] sm:$0xf]
    %v205 = vld [vmem:[#allocation9 + $0x10c] sm:$0xf]
    %v206 = vld [vmem:[#allocation9 + $0x110] sm:$0xf]
    %v207 = vld [vmem:[#allocation9 + $0x114] sm:$0xf]
    %v208 = vld [vmem:[#allocation9 + $0x118] sm:$0xf]
    %v209 = vld [vmem:[#allocation9 + $0x11c] sm:$0xf]
    %v210 = vld [vmem:[#allocation9 + $0x120] sm:$0xf]
    %v211 = vld [vmem:[#allocation9 + $0x124] sm:$0xf]
    %v212 = vld [vmem:[#allocation9 + $0x128] sm:$0xf]
    %v213 = vld [vmem:[#allocation9 + $0x12c] sm:$0xf]
    %v214 = vld [vmem:[#allocation9 + $0x130] sm:$0xf]
    %v215 = vld [vmem:[#allocation9 + $0x134] sm:$0xf]
    %v216 = vld [vmem:[#allocation9 + $0x138] sm:$0xf]
    %v217 = vld [vmem:[#allocation9 + $0x13c] sm:$0xf]
    %v218 = vld [vmem:[#allocation9 + $0x140] sm:$0xf]
    %v219 = vld [vmem:[#allocation9 + $0x144] sm:$0xf]
    %v220 = vld [vmem:[#allocation9 + $0x148] sm:$0xf]
    %v221 = vld [vmem:[#allocation9 + $0x14c] sm:$0xf]
    %v222 = vld [vmem:[#allocation9 + $0x150] sm:$0xf]
    %v223 = vld [vmem:[#allocation9 + $0x154] sm:$0xf]
    %v224 = vld [vmem:[#allocation9 + $0x158] sm:$0xf]
    %v225 = vld [vmem:[#allocation9 + $0x15c] sm:$0xf]
    %v226 = vld [vmem:[#allocation9 + $0x160] sm:$0xf]
    %v227 = vld [vmem:[#allocation9 + $0x164] sm:$0xf]
    %v228 = vld [vmem:[#allocation9 + $0x168] sm:$0xf]
    %v229 = vld [vmem:[#allocation9 + $0x16c] sm:$0xf]
    %v230 = vld [vmem:[#allocation9 + $0x170] sm:$0xf]
    %v231 = vld [vmem:[#allocation9 + $0x174] sm:$0xf]
    %v232 = vld [vmem:[#allocation9 + $0x178] sm:$0xf]
    %v233 = vld [vmem:[#allocation9 + $0x17c] sm:$0xf]
    %v234 = vld [vmem:[#allocation9 + $0x180] sm:$0xf]
    %v235 = vld [vmem:[#allocation9 + $0x184] sm:$0xf]
    %v236 = vld [vmem:[#allocation9 + $0x188] sm:$0xf]
    %v237 = vld [vmem:[#allocation9 + $0x18c] sm:$0xf]
    %v238 = vld [vmem:[#allocation9 + $0x190] sm:$0xf]
    %v239 = vld [vmem:[#allocation9 + $0x194] sm:$0xf]
    %v240 = vld [vmem:[#allocation9 + $0x198] sm:$0xf]
    %v241 = vld [vmem:[#allocation9 + $0x19c] sm:$0xf]
    %v242 = vld [vmem:[#allocation9 + $0x1a0] sm:$0xf]
    %v243 = vld [vmem:[#allocation9 + $0x1a4] sm:$0xf]
    %v244 = vld [vmem:[#allocation9 + $0x1a8] sm:$0xf]
    %v245 = vld [vmem:[#allocation9 + $0x1ac] sm:$0xf]
    %v246 = vld [vmem:[#allocation9 + $0x1b0] sm:$0xf]
    %v247 = vld [vmem:[#allocation9 + $0x1b4] sm:$0xf]
    %v248 = vld [vmem:[#allocation9 + $0x1b8] sm:$0xf]
    %v249 = vld [vmem:[#allocation9 + $0x1bc] sm:$0xf]
    %v258 = vunpack.c.l.b16 %v130
    %v259 = vunpack.c.h.b16 %v130
    %v260 = vunpack.c.l.b16 %v131
    %v261 = vunpack.c.h.b16 %v131
    %v262 = vunpack.c.l.b16 %v132
    %v263 = vunpack.c.h.b16 %v132
    %v264 = vunpack.c.l.b16 %v133
    %v265 = vunpack.c.l.b16 %v134
    %v266 = vunpack.c.h.b16 %v134
    %v267 = vunpack.c.l.b16 %v135
    %v268 = vunpack.c.h.b16 %v135
    %v269 = vunpack.c.l.b16 %v136
    %v270 = vunpack.c.h.b16 %v136
    %v271 = vunpack.c.l.b16 %v137
    %v272 = vpack.c.b16 %v265, %v258
    %v273 = vpack.c.b16 %v266, %v259
    %v274 = vpack.c.b16 %v267, %v260
    %v275 = vpack.c.b16 %v268, %v261
    %v276 = vpack.c.b16 %v269, %v262
    %v277 = vpack.c.b16 %v270, %v263
    %v278 = vpack.c.b16 %v271, %v264
    %v398 = vunpack.c.l.b16 %v138
    %v399 = vunpack.c.l.b16 %v139
    %v400 = vunpack.c.l.b16 %v140
    %v401 = vunpack.c.l.b16 %v141
    %v402 = vunpack.c.l.b16 %v142
    %v403 = vunpack.c.l.b16 %v143
    %v404 = vunpack.c.l.b16 %v144
    %v405 = vunpack.c.l.b16 %v145
    %v406 = vunpack.c.l.b16 %v146
    %v407 = vunpack.c.l.b16 %v147
    %v408 = vunpack.c.l.b16 %v148
    %v409 = vunpack.c.l.b16 %v149
    %v410 = vunpack.c.l.b16 %v150
    %v411 = vunpack.c.l.b16 %v151
    %v412 = vunpack.c.l.b16 %v152
    %v413 = vunpack.c.l.b16 %v153
    %v414 = vunpack.c.l.b16 %v154
    %v415 = vunpack.c.l.b16 %v155
    %v416 = vunpack.c.l.b16 %v156
    %v417 = vunpack.c.l.b16 %v157
    %v418 = vunpack.c.l.b16 %v158
    %v419 = vunpack.c.l.b16 %v159
    %v420 = vunpack.c.l.b16 %v160
    %v421 = vunpack.c.l.b16 %v161
    %v422 = vunpack.c.l.b16 %v162
    %v423 = vunpack.c.l.b16 %v163
    %v424 = vunpack.c.l.b16 %v164
    %v425 = vunpack.c.l.b16 %v165
    %v426 = vunpack.c.l.b16 %v166
    %v427 = vunpack.c.l.b16 %v167
    %v428 = vunpack.c.l.b16 %v168
    %v429 = vunpack.c.l.b16 %v169
    %v430 = vunpack.c.l.b16 %v170
    %v431 = vunpack.c.l.b16 %v171
    %v432 = vunpack.c.l.b16 %v172
    %v433 = vunpack.c.l.b16 %v173
    %v434 = vunpack.c.l.b16 %v174
    %v435 = vunpack.c.l.b16 %v175
    %v436 = vunpack.c.l.b16 %v176
    %v437 = vunpack.c.l.b16 %v177
    %v438 = vunpack.c.l.b16 %v178
    %v439 = vunpack.c.l.b16 %v179
    %v440 = vunpack.c.l.b16 %v180
    %v441 = vunpack.c.l.b16 %v181
    %v442 = vunpack.c.l.b16 %v182
    %v443 = vunpack.c.l.b16 %v183
    %v444 = vunpack.c.l.b16 %v184
    %v445 = vunpack.c.l.b16 %v185
    %v446 = vunpack.c.l.b16 %v186
    %v447 = vunpack.c.l.b16 %v187
    %v448 = vunpack.c.l.b16 %v188
    %v449 = vunpack.c.l.b16 %v189
    %v450 = vunpack.c.l.b16 %v190
    %v451 = vunpack.c.l.b16 %v191
    %v452 = vunpack.c.l.b16 %v192
    %v453 = vunpack.c.l.b16 %v193
    %v454 = vunpack.c.l.b16 %v194
    %v455 = vunpack.c.l.b16 %v195
    %v456 = vunpack.c.l.b16 %v196
    %v457 = vunpack.c.l.b16 %v197
    %v458 = vunpack.c.l.b16 %v198
    %v459 = vunpack.c.l.b16 %v199
    %v460 = vunpack.c.l.b16 %v200
    %v461 = vunpack.c.l.b16 %v201
    %v462 = vunpack.c.l.b16 %v202
    %v463 = vunpack.c.l.b16 %v203
    %v464 = vunpack.c.l.b16 %v204
    %v465 = vunpack.c.l.b16 %v205
    %v466 = vunpack.c.l.b16 %v206
    %v467 = vunpack.c.l.b16 %v207
    %v468 = vunpack.c.l.b16 %v208
    %v469 = vunpack.c.l.b16 %v209
    %v470 = vunpack.c.l.b16 %v210
    %v471 = vunpack.c.l.b16 %v211
    %v472 = vunpack.c.l.b16 %v212
    %v473 = vunpack.c.l.b16 %v213
    %v474 = vunpack.c.l.b16 %v214
    %v475 = vunpack.c.l.b16 %v215
    %v476 = vunpack.c.l.b16 %v216
    %v477 = vunpack.c.l.b16 %v217
    %v478 = vunpack.c.l.b16 %v218
    %v479 = vunpack.c.l.b16 %v219
    %v480 = vunpack.c.l.b16 %v220
    %v481 = vunpack.c.l.b16 %v221
    %v482 = vunpack.c.l.b16 %v222
    %v483 = vunpack.c.l.b16 %v223
    %v484 = vunpack.c.l.b16 %v224
    %v485 = vunpack.c.l.b16 %v225
    %v486 = vunpack.c.l.b16 %v226
    %v487 = vunpack.c.l.b16 %v227
    %v488 = vunpack.c.l.b16 %v228
    %v489 = vunpack.c.l.b16 %v229
    %v490 = vunpack.c.l.b16 %v230
    %v491 = vunpack.c.l.b16 %v231
    %v492 = vunpack.c.l.b16 %v232
    %v493 = vunpack.c.l.b16 %v233
    %v494 = vunpack.c.l.b16 %v234
    %v495 = vunpack.c.l.b16 %v235
    %v496 = vunpack.c.l.b16 %v236
    %v497 = vunpack.c.l.b16 %v237
    %v498 = vunpack.c.l.b16 %v238
    %v499 = vunpack.c.l.b16 %v239
    %v500 = vunpack.c.l.b16 %v240
    %v501 = vunpack.c.l.b16 %v241
    %v502 = vunpack.c.l.b16 %v242
    %v503 = vunpack.c.l.b16 %v243
    %v504 = vunpack.c.l.b16 %v244
    %v505 = vunpack.c.l.b16 %v245
    %v506 = vunpack.c.l.b16 %v246
    %v507 = vunpack.c.l.b16 %v247
    %v508 = vunpack.c.l.b16 %v248
    %v509 = vunpack.c.l.b16 %v249
    %v510 = vpack.c.b16 %v399, %v398
    %v511 = vpack.c.b16 %v401, %v400
    %v512 = vpack.c.b16 %v403, %v402
    %v513 = vpack.c.b16 %v405, %v404
    %v514 = vpack.c.b16 %v407, %v406
    %v515 = vpack.c.b16 %v409, %v408
    %v516 = vpack.c.b16 %v411, %v410
    %v517 = vpack.c.b16 %v413, %v412
    %v518 = vpack.c.b16 %v415, %v414
    %v519 = vpack.c.b16 %v417, %v416
    %v520 = vpack.c.b16 %v419, %v418
    %v521 = vpack.c.b16 %v421, %v420
    %v522 = vpack.c.b16 %v423, %v422
    %v523 = vpack.c.b16 %v425, %v424
    %v524 = vpack.c.b16 %v427, %v426
    %v525 = vpack.c.b16 %v429, %v428
    %v526 = vpack.c.b16 %v431, %v430
    %v527 = vpack.c.b16 %v433, %v432
    %v528 = vpack.c.b16 %v435, %v434
    %v529 = vpack.c.b16 %v437, %v436
    %v530 = vpack.c.b16 %v439, %v438
    %v531 = vpack.c.b16 %v441, %v440
    %v532 = vpack.c.b16 %v443, %v442
    %v533 = vpack.c.b16 %v445, %v444
    %v534 = vpack.c.b16 %v447, %v446
    %v535 = vpack.c.b16 %v449, %v448
    %v536 = vpack.c.b16 %v451, %v450
    %v537 = vpack.c.b16 %v453, %v452
    %v538 = vpack.c.b16 %v455, %v454
    %v539 = vpack.c.b16 %v457, %v456
    %v540 = vpack.c.b16 %v459, %v458
    %v541 = vpack.c.b16 %v461, %v460
    %v542 = vpack.c.b16 %v463, %v462
    %v543 = vpack.c.b16 %v465, %v464
    %v544 = vpack.c.b16 %v467, %v466
    %v545 = vpack.c.b16 %v469, %v468
    %v546 = vpack.c.b16 %v471, %v470
    %v547 = vpack.c.b16 %v473, %v472
    %v548 = vpack.c.b16 %v475, %v474
    %v549 = vpack.c.b16 %v477, %v476
    %v550 = vpack.c.b16 %v479, %v478
    %v551 = vpack.c.b16 %v481, %v480
    %v552 = vpack.c.b16 %v483, %v482
    %v553 = vpack.c.b16 %v485, %v484
    %v554 = vpack.c.b16 %v487, %v486
    %v555 = vpack.c.b16 %v489, %v488
    %v556 = vpack.c.b16 %v491, %v490
    %v557 = vpack.c.b16 %v493, %v492
    %v558 = vpack.c.b16 %v495, %v494
    %v559 = vpack.c.b16 %v497, %v496
    %v560 = vpack.c.b16 %v499, %v498
    %v561 = vpack.c.b16 %v501, %v500
    %v562 = vpack.c.b16 %v503, %v502
    %v563 = vpack.c.b16 %v505, %v504
    %v564 = vpack.c.b16 %v507, %v506
    %v565 = vpack.c.b16 %v509, %v508
    %622 = vmatprep.subr.bf16.mxu0 0
    %623 = vmatpush1.bf16.msra.mxu0 %v510
    %624 = vmatprep.subr.bf16.mxu0 0
    %625 = vmatpush1.bf16.msra.mxu0 %v511
    %626 = vmatprep.subr.bf16.mxu0 0
    %627 = vmatpush1.bf16.msra.mxu0 %v512
    %628 = vmatprep.subr.bf16.mxu0 0
    %629 = vmatpush1.bf16.msra.mxu0 %v513
    %630 = vmatprep.subr.bf16.mxu0 0
    %631 = vmatpush1.bf16.msra.mxu0 %v514
    %632 = vmatprep.subr.bf16.mxu0 0
    %633 = vmatpush1.bf16.msra.mxu0 %v515
    %634 = vmatprep.subr.bf16.mxu0 0
    %635 = vmatpush1.bf16.msra.mxu0 %v516
    %636 = vmatprep.subr.bf16.mxu0 0
    %637 = vmatpush1.bf16.msra.mxu0 %v517
    %638 = vmatprep.subr.bf16.mxu0 0
    %639 = vmatpush1.bf16.msra.mxu0 %v518
    %640 = vmatprep.subr.bf16.mxu0 0
    %641 = vmatpush1.bf16.msra.mxu0 %v519
    %642 = vmatprep.subr.bf16.mxu0 0
    %643 = vmatpush1.bf16.msra.mxu0 %v520
    %644 = vmatprep.subr.bf16.mxu0 0
    %645 = vmatpush1.bf16.msra.mxu0 %v521
    %646 = vmatprep.subr.bf16.mxu0 0
    %647 = vmatpush1.bf16.msra.mxu0 %v522
    %648 = vmatprep.subr.bf16.mxu0 0
    %649 = vmatpush1.bf16.msra.mxu0 %v523
    %650 = vmatprep.subr.bf16.mxu0 0
    %651 = vmatpush1.bf16.msra.mxu0 %v524
    %652 = vmatprep.subr.bf16.mxu0 0
    %653 = vmatpush1.bf16.msra.mxu0 %v525
    %654 = vmatprep.mubr.bf16.mxu0 %v273
    %655 = vmatmul.mubr.bf16.gmra.mrb[0].mxu0 %v272
    %v656 = vpop.f32.mrb[0].mxu0
    %v657 = vadd.f32 0.0, %v656
    %v658 = vpop.f32.mrb[0].mxu0
    %v659 = vpop.f32.mrb[0].mxu0
    %v660 = vadd.f32 0.0, %v659
    %v661 = vpop.f32.mrb[0].mxu0
    %662 = vdwg.mxu0
    %663 = vmatprep.subr.bf16.mxu0 0
    %664 = vmatpush1.bf16.msra.mxu0 %v526
    %665 = vmatprep.subr.bf16.mxu0 0
    %666 = vmatpush1.bf16.msra.mxu0 %v527
    %667 = vmatprep.subr.bf16.mxu0 0
    %668 = vmatpush1.bf16.msra.mxu0 %v528
    %669 = vmatprep.subr.bf16.mxu0 0
    %670 = vmatpush1.bf16.msra.mxu0 %v529
    %671 = vmatprep.subr.bf16.mxu0 0
    %672 = vmatpush1.bf16.msra.mxu0 %v530
    %673 = vmatprep.subr.bf16.mxu0 0
    %674 = vmatpush1.bf16.msra.mxu0 %v531
    %675 = vmatprep.subr.bf16.mxu0 0
    %676 = vmatpush1.bf16.msra.mxu0 %v532
    %677 = vmatprep.subr.bf16.mxu0 0
    %678 = vmatpush1.bf16.msra.mxu0 %v533
    %679 = vmatprep.subr.bf16.mxu0 0
    %680 = vmatpush1.bf16.msra.mxu0 %v534
    %681 = vmatprep.subr.bf16.mxu0 0
    %682 = vmatpush1.bf16.msra.mxu0 %v535
    %683 = vmatprep.subr.bf16.mxu0 0
    %684 = vmatpush1.bf16.msra.mxu0 %v536
    %685 = vmatprep.subr.bf16.mxu0 0
    %686 = vmatpush1.bf16.msra.mxu0 %v537
    %687 = vmatprep.subr.bf16.mxu0 0
    %688 = vmatpush1.bf16.msra.mxu0 %v538
    %689 = vmatprep.subr.bf16.mxu0 0
    %690 = vmatpush1.bf16.msra.mxu0 %v539
    %691 = vmatprep.subr.bf16.mxu0 0
    %692 = vmatpush1.bf16.msra.mxu0 %v540
    %693 = vmatprep.subr.bf16.mxu0 0
    %694 = vmatpush1.bf16.msra.mxu0 %v541
    %695 = vmatprep.mubr.bf16.mxu0 %v275
    %696 = vmatmul.mubr.bf16.gmra.mrb[0].mxu0 %v274
    %v697 = vpop.f32.mrb[0].mxu0
    %v698 = vadd.f32 %v657, %v697
    %v699 = vpop.f32.mrb[0].mxu0
    %v700 = vpop.f32.mrb[0].mxu0
    %v701 = vadd.f32 %v660, %v700
    %v702 = vpop.f32.mrb[0].mxu0
    %703 = vdwg.mxu0
    %704 = vmatprep.subr.bf16.mxu0 0
    %705 = vmatpush1.bf16.msra.mxu0 %v542
    %706 = vmatprep.subr.bf16.mxu0 0
    %707 = vmatpush1.bf16.msra.mxu0 %v543
    %708 = vmatprep.subr.bf16.mxu0 0
    %709 = vmatpush1.bf16.msra.mxu0 %v544
    %710 = vmatprep.subr.bf16.mxu0 0
    %711 = vmatpush1.bf16.msra.mxu0 %v545
    %712 = vmatprep.subr.bf16.mxu0 0
    %713 = vmatpush1.bf16.msra.mxu0 %v546
    %714 = vmatprep.subr.bf16.mxu0 0
    %715 = vmatpush1.bf16.msra.mxu0 %v547
    %716 = vmatprep.subr.bf16.mxu0 0
    %717 = vmatpush1.bf16.msra.mxu0 %v548
    %718 = vmatprep.subr.bf16.mxu0 0
    %719 = vmatpush1.bf16.msra.mxu0 %v549
    %720 = vmatprep.subr.bf16.mxu0 0
    %721 = vmatpush1.bf16.msra.mxu0 %v550
    %722 = vmatprep.subr.bf16.mxu0 0
    %723 = vmatpush1.bf16.msra.mxu0 %v551
    %724 = vmatprep.subr.bf16.mxu0 0
    %725 = vmatpush1.bf16.msra.mxu0 %v552
    %726 = vmatprep.subr.bf16.mxu0 0
    %727 = vmatpush1.bf16.msra.mxu0 %v553
    %728 = vmatprep.subr.bf16.mxu0 0
    %729 = vmatpush1.bf16.msra.mxu0 %v554
    %730 = vmatprep.subr.bf16.mxu0 0
    %731 = vmatpush1.bf16.msra.mxu0 %v555
    %732 = vmatprep.subr.bf16.mxu0 0
    %733 = vmatpush1.bf16.msra.mxu0 %v556
    %734 = vmatprep.subr.bf16.mxu0 0
    %735 = vmatpush1.bf16.msra.mxu0 %v557
    %736 = vmatprep.mubr.bf16.mxu0 %v277
    %737 = vmatmul.mubr.bf16.gmra.mrb[0].mxu0 %v276
    %v738 = vpop.f32.mrb[0].mxu0
    %v739 = vadd.f32 %v698, %v738
    %v740 = vpop.f32.mrb[0].mxu0
    %v741 = vpop.f32.mrb[0].mxu0
    %v742 = vadd.f32 %v701, %v741
    %v743 = vpop.f32.mrb[0].mxu0
    %744 = vdwg.mxu0
    %745 = vmatprep.subr.bf16.mxu0 0
    %746 = vmatpush1.bf16.msra.mxu0 %v558
    %747 = vmatprep.subr.bf16.mxu0 0
    %748 = vmatpush1.bf16.msra.mxu0 %v559
    %749 = vmatprep.subr.bf16.mxu0 0
    %750 = vmatpush1.bf16.msra.mxu0 %v560
    %751 = vmatprep.subr.bf16.mxu0 0
    %752 = vmatpush1.bf16.msra.mxu0 %v561
    %753 = vmatprep.subr.bf16.mxu0 0
    %754 = vmatpush1.bf16.msra.mxu0 %v562
    %755 = vmatprep.subr.bf16.mxu0 0
    %756 = vmatpush1.bf16.msra.mxu0 %v563
    %757 = vmatprep.subr.bf16.mxu0 0
    %758 = vmatpush1.bf16.msra.mxu0 %v564
    %759 = vmatprep.subr.bf16.mxu0 0
    %760 = vmatpush1.bf16.msra.mxu0 %v565
    %761 = vmatprep.subr.bf16.mxu0 0
    %762 = vmatpush1.bf16.msra.mxu0 0
    %763 = vmatprep.subr.bf16.mxu0 0
    %764 = vmatpush1.bf16.msra.mxu0 0
    %765 = vmatprep.subr.bf16.mxu0 0
    %766 = vmatpush1.bf16.msra.mxu0 0
    %767 = vmatprep.subr.bf16.mxu0 0
    %768 = vmatpush1.bf16.msra.mxu0 0
    %769 = vmatprep.subr.bf16.mxu0 0
    %770 = vmatpush1.bf16.msra.mxu0 0
    %771 = vmatprep.subr.bf16.mxu0 0
    %772 = vmatpush1.bf16.msra.mxu0 0
    %773 = vmatprep.subr.bf16.mxu0 0
    %774 = vmatpush1.bf16.msra.mxu0 0
    %775 = vmatprep.subr.bf16.mxu0 0
    %776 = vmatpush1.bf16.msra.mxu0 0
    %777 = vmatprep.mubr.bf16.mxu0 0
    %778 = vmatmul.mubr.bf16.gmra.mrb[0].mxu0 %v278
    %v779 = vpop.f32.mrb[0].mxu0
    %v780 = vadd.f32 %v739, %v779
    %v781 = vpop.f32.mrb[0].mxu0
    %v782 = vpop.f32.mrb[0].mxu0
    %v783 = vadd.f32 %v742, %v782
    %v784 = vpop.f32.mrb[0].mxu0
    %785 = vdwg.mxu0
    %v786 = vld [vmem:[#allocation3] sm:$0x1]
    %vm787 = vcmask 523264
    %v788 = vsel %vm787, %v780, 0.0
    %v789 = vsel %vm787, %v783, 0.0
    %v790 = vadd.f32 %v788, %v789
    %v791 = vrot.slane %v790, 4
    %v792 = vadd.f32 %v790, %v791
    %v793 = vrot.slane %v792, 2
    %v794 = vadd.f32 %v792, %v793
    %v795 = vrot.slane %v794, 1
    %v796 = vadd.f32 %v794, %v795
    %v797 = vadd.f32 %v786, %v796
    %vm798 = vcmask 516096
    %799 = vst.msk [vmem:[#allocation3] sm:$0x1] %vm798, %v797
    %v800 = vld [vmem:[#allocation4] sm:$0x1]
    %v801 = vmul.f32 %v780, %v780
    %v802 = vmul.f32 %v783, %v783
    %v803 = vsel %vm787, %v801, 0.0
    %v804 = vsel %vm787, %v802, 0.0
    %v805 = vadd.f32 %v803, %v804
    %v806 = vrot.slane %v805, 4
    %v807 = vadd.f32 %v805, %v806
    %v808 = vrot.slane %v807, 2
    %v809 = vadd.f32 %v807, %v808
    %v810 = vrot.slane %v809, 1
    %v811 = vadd.f32 %v809, %v810
    %v812 = vadd.f32 %v800, %v811
    %813 = vst.msk [vmem:[#allocation4] sm:$0x1] %vm798, %v812
    %s814 = scalar_lea.vmem [#allocation2], %s129
    %815 = vst.msk [vmem:[%s814] sm:$0xff] %vm787, %v780
    %816 = vst.msk [vmem:[%s814 + $0x8] sm:$0xff] %vm787, %v783
    %s817 = scalar_lea.vmem [#allocation6], 56
    %v818 = vld [vmem:[%s817] sm:$0xff]
    %v819 = vld [vmem:[%s817 + $0x8] sm:$0xff]
    %v820 = vld [vmem:[%s817 + $0x10] sm:$0xff]
    %v821 = vld [vmem:[%s817 + $0x18] sm:$0xf]
    %v822 = vld [vmem:[%s817 + $0x1c] sm:$0xff]
    %v823 = vld [vmem:[%s817 + $0x24] sm:$0xff]
    %v824 = vld [vmem:[%s817 + $0x2c] sm:$0xff]
    %v825 = vld [vmem:[%s817 + $0x34] sm:$0xf]
    %v826 = vld [vmem:[#allocation9] sm:$0xf]
    %v827 = vld [vmem:[#allocation9 + $0x4] sm:$0xf]
    %v828 = vld [vmem:[#allocation9 + $0x8] sm:$0xf]
    %v829 = vld [vmem:[#allocation9 + $0xc] sm:$0xf]
    %v830 = vld [vmem:[#allocation9 + $0x10] sm:$0xf]
    %v831 = vld [vmem:[#allocation9 + $0x14] sm:$0xf]
    %v832 = vld [vmem:[#allocation9 + $0x18] sm:$0xf]
    %v833 = vld [vmem:[#allocation9 + $0x1c] sm:$0xf]
    %v834 = vld [vmem:[#allocation9 + $0x20] sm:$0xf]
    %v835 = vld [vmem:[#allocation9 + $0x24] sm:$0xf]
    %v836 = vld [vmem:[#allocation9 + $0x28] sm:$0xf]
    %v837 = vld [vmem:[#allocation9 + $0x2c] sm:$0xf]
    %v838 = vld [vmem:[#allocation9 + $0x30] sm:$0xf]
    %v839 = vld [vmem:[#allocation9 + $0x34] sm:$0xf]
    %v840 = vld [vmem:[#allocation9 + $0x38] sm:$0xf]
    %v841 = vld [vmem:[#allocation9 + $0x3c] sm:$0xf]
    %v842 = vld [vmem:[#allocation9 + $0x40] sm:$0xf]
    %v843 = vld [vmem:[#allocation9 + $0x44] sm:$0xf]
    %v844 = vld [vmem:[#allocation9 + $0x48] sm:$0xf]
    %v845 = vld [vmem:[#allocation9 + $0x4c] sm:$0xf]
    %v846 = vld [vmem:[#allocation9 + $0x50] sm:$0xf]
    %v847 = vld [vmem:[#allocation9 + $0x54] sm:$0xf]
    %v848 = vld [vmem:[#allocation9 + $0x58] sm:$0xf]
    %v849 = vld [vmem:[#allocation9 + $0x5c] sm:$0xf]
    %v850 = vld [vmem:[#allocation9 + $0x60] sm:$0xf]
    %v851 = vld [vmem:[#allocation9 + $0x64] sm:$0xf]
    %v852 = vld [vmem:[#allocation9 + $0x68] sm:$0xf]
    %v853 = vld [vmem:[#allocation9 + $0x6c] sm:$0xf]
    %v854 = vld [vmem:[#allocation9 + $0x70] sm:$0xf]
    %v855 = vld [vmem:[#allocation9 + $0x74] sm:$0xf]
    %v856 = vld [vmem:[#allocation9 + $0x78] sm:$0xf]
    %v857 = vld [vmem:[#allocation9 + $0x7c] sm:$0xf]
    %v858 = vld [vmem:[#allocation9 + $0x80] sm:$0xf]
    %v859 = vld [vmem:[#allocation9 + $0x84] sm:$0xf]
    %v860 = vld [vmem:[#allocation9 + $0x88] sm:$0xf]
    %v861 = vld [vmem:[#allocation9 + $0x8c] sm:$0xf]
    %v862 = vld [vmem:[#allocation9 + $0x90] sm:$0xf]
    %v863 = vld [vmem:[#allocation9 + $0x94] sm:$0xf]
    %v864 = vld [vmem:[#allocation9 + $0x98] sm:$0xf]
    %v865 = vld [vmem:[#allocation9 + $0x9c] sm:$0xf]
    %v866 = vld [vmem:[#allocation9 + $0xa0] sm:$0xf]
    %v867 = vld [vmem:[#allocation9 + $0xa4] sm:$0xf]
    %v868 = vld [vmem:[#allocation9 + $0xa8] sm:$0xf]
    %v869 = vld [vmem:[#allocation9 + $0xac] sm:$0xf]
    %v870 = vld [vmem:[#allocation9 + $0xb0] sm:$0xf]
    %v871 = vld [vmem:[#allocation9 + $0xb4] sm:$0xf]
    %v872 = vld [vmem:[#allocation9 + $0xb8] sm:$0xf]
    %v873 = vld [vmem:[#allocation9 + $0xbc] sm:$0xf]
    %v874 = vld [vmem:[#allocation9 + $0xc0] sm:$0xf]
    %v875 = vld [vmem:[#allocation9 + $0xc4] sm:$0xf]
    %v876 = vld [vmem:[#allocation9 + $0xc8] sm:$0xf]
    %v877 = vld [vmem:[#allocation9 + $0xcc] sm:$0xf]
    %v878 = vld [vmem:[#allocation9 + $0xd0] sm:$0xf]
    %v879 = vld [vmem:[#allocation9 + $0xd4] sm:$0xf]
    %v880 = vld [vmem:[#allocation9 + $0xd8] sm:$0xf]
    %v881 = vld [vmem:[#allocation9 + $0xdc] sm:$0xf]
    %v882 = vld [vmem:[#allocation9 + $0xe0] sm:$0xf]
    %v883 = vld [vmem:[#allocation9 + $0xe4] sm:$0xf]
    %v884 = vld [vmem:[#allocation9 + $0xe8] sm:$0xf]
    %v885 = vld [vmem:[#allocation9 + $0xec] sm:$0xf]
    %v886 = vld [vmem:[#allocation9 + $0xf0] sm:$0xf]
    %v887 = vld [vmem:[#allocation9 + $0xf4] sm:$0xf]
    %v888 = vld [vmem:[#allocation9 + $0xf8] sm:$0xf]
    %v889 = vld [vmem:[#allocation9 + $0xfc] sm:$0xf]
    %v890 = vld [vmem:[#allocation9 + $0x100] sm:$0xf]
    %v891 = vld [vmem:[#allocation9 + $0x104] sm:$0xf]
    %v892 = vld [vmem:[#allocation9 + $0x108] sm:$0xf]
    %v893 = vld [vmem:[#allocation9 + $0x10c] sm:$0xf]
    %v894 = vld [vmem:[#allocation9 + $0x110] sm:$0xf]
    %v895 = vld [vmem:[#allocation9 + $0x114] sm:$0xf]
    %v896 = vld [vmem:[#allocation9 + $0x118] sm:$0xf]
    %v897 = vld [vmem:[#allocation9 + $0x11c] sm:$0xf]
    %v898 = vld [vmem:[#allocation9 + $0x120] sm:$0xf]
    %v899 = vld [vmem:[#allocation9 + $0x124] sm:$0xf]
    %v900 = vld [vmem:[#allocation9 + $0x128] sm:$0xf]
    %v901 = vld [vmem:[#allocation9 + $0x12c] sm:$0xf]
    %v902 = vld [vmem:[#allocation9 + $0x130] sm:$0xf]
    %v903 = vld [vmem:[#allocation9 + $0x134] sm:$0xf]
    %v904 = vld [vmem:[#allocation9 + $0x138] sm:$0xf]
    %v905 = vld [vmem:[#allocation9 + $0x13c] sm:$0xf]
    %v906 = vld [vmem:[#allocation9 + $0x140] sm:$0xf]
    %v907 = vld [vmem:[#allocation9 + $0x144] sm:$0xf]
    %v908 = vld [vmem:[#allocation9 + $0x148] sm:$0xf]
    %v909 = vld [vmem:[#allocation9 + $0x14c] sm:$0xf]
    %v910 = vld [vmem:[#allocation9 + $0x150] sm:$0xf]
    %v911 = vld [vmem:[#allocation9 + $0x154] sm:$0xf]
    %v912 = vld [vmem:[#allocation9 + $0x158] sm:$0xf]
    %v913 = vld [vmem:[#allocation9 + $0x15c] sm:$0xf]
    %v914 = vld [vmem:[#allocation9 + $0x160] sm:$0xf]
    %v915 = vld [vmem:[#allocation9 + $0x164] sm:$0xf]
    %v916 = vld [vmem:[#allocation9 + $0x168] sm:$0xf]
    %v917 = vld [vmem:[#allocation9 + $0x16c] sm:$0xf]
    %v918 = vld [vmem:[#allocation9 + $0x170] sm:$0xf]
    %v919 = vld [vmem:[#allocation9 + $0x174] sm:$0xf]
    %v920 = vld [vmem:[#allocation9 + $0x178] sm:$0xf]
    %v921 = vld [vmem:[#allocation9 + $0x17c] sm:$0xf]
    %v922 = vld [vmem:[#allocation9 + $0x180] sm:$0xf]
    %v923 = vld [vmem:[#allocation9 + $0x184] sm:$0xf]
    %v924 = vld [vmem:[#allocation9 + $0x188] sm:$0xf]
    %v925 = vld [vmem:[#allocation9 + $0x18c] sm:$0xf]
    %v926 = vld [vmem:[#allocation9 + $0x190] sm:$0xf]
    %v927 = vld [vmem:[#allocation9 + $0x194] sm:$0xf]
    %v928 = vld [vmem:[#allocation9 + $0x198] sm:$0xf]
    %v929 = vld [vmem:[#allocation9 + $0x19c] sm:$0xf]
    %v930 = vld [vmem:[#allocation9 + $0x1a0] sm:$0xf]
    %v931 = vld [vmem:[#allocation9 + $0x1a4] sm:$0xf]
    %v932 = vld [vmem:[#allocation9 + $0x1a8] sm:$0xf]
    %v933 = vld [vmem:[#allocation9 + $0x1ac] sm:$0xf]
    %v934 = vld [vmem:[#allocation9 + $0x1b0] sm:$0xf]
    %v935 = vld [vmem:[#allocation9 + $0x1b4] sm:$0xf]
    %v936 = vld [vmem:[#allocation9 + $0x1b8] sm:$0xf]
    %v937 = vld [vmem:[#allocation9 + $0x1bc] sm:$0xf]
    %v946 = vunpack.c.l.b16 %v818
    %v947 = vunpack.c.h.b16 %v818
    %v948 = vunpack.c.l.b16 %v819
    %v949 = vunpack.c.h.b16 %v819
    %v950 = vunpack.c.l.b16 %v820
    %v951 = vunpack.c.h.b16 %v820
    %v952 = vunpack.c.l.b16 %v821
    %v953 = vunpack.c.l.b16 %v822
    %v954 = vunpack.c.h.b16 %v822
    %v955 = vunpack.c.l.b16 %v823
    %v956 = vunpack.c.h.b16 %v823
    %v957 = vunpack.c.l.b16 %v824
    %v958 = vunpack.c.h.b16 %v824
    %v959 = vunpack.c.l.b16 %v825
    %v960 = vpack.c.b16 %v953, %v946
    %v961 = vpack.c.b16 %v954, %v947
    %v962 = vpack.c.b16 %v955, %v948
    %v963 = vpack.c.b16 %v956, %v949
    %v964 = vpack.c.b16 %v957, %v950
    %v965 = vpack.c.b16 %v958, %v951
    %v966 = vpack.c.b16 %v959, %v952
    %v1086 = vunpack.c.l.b16 %v826
    %v1087 = vunpack.c.l.b16 %v827
    %v1088 = vunpack.c.l.b16 %v828
    %v1089 = vunpack.c.l.b16 %v829
    %v1090 = vunpack.c.l.b16 %v830
    %v1091 = vunpack.c.l.b16 %v831
    %v1092 = vunpack.c.l.b16 %v832
    %v1093 = vunpack.c.l.b16 %v833
    %v1094 = vunpack.c.l.b16 %v834
    %v1095 = vunpack.c.l.b16 %v835
    %v1096 = vunpack.c.l.b16 %v836
    %v1097 = vunpack.c.l.b16 %v837
    %v1098 = vunpack.c.l.b16 %v838
    %v1099 = vunpack.c.l.b16 %v839
    %v1100 = vunpack.c.l.b16 %v840
    %v1101 = vunpack.c.l.b16 %v841
    %v1102 = vunpack.c.l.b16 %v842
    %v1103 = vunpack.c.l.b16 %v843
    %v1104 = vunpack.c.l.b16 %v844
    %v1105 = vunpack.c.l.b16 %v845
    %v1106 = vunpack.c.l.b16 %v846
    %v1107 = vunpack.c.l.b16 %v847
    %v1108 = vunpack.c.l.b16 %v848
    %v1109 = vunpack.c.l.b16 %v849
    %v1110 = vunpack.c.l.b16 %v850
    %v1111 = vunpack.c.l.b16 %v851
    %v1112 = vunpack.c.l.b16 %v852
    %v1113 = vunpack.c.l.b16 %v853
    %v1114 = vunpack.c.l.b16 %v854
    %v1115 = vunpack.c.l.b16 %v855
    %v1116 = vunpack.c.l.b16 %v856
    %v1117 = vunpack.c.l.b16 %v857
    %v1118 = vunpack.c.l.b16 %v858
    %v1119 = vunpack.c.l.b16 %v859
    %v1120 = vunpack.c.l.b16 %v860
    %v1121 = vunpack.c.l.b16 %v861
    %v1122 = vunpack.c.l.b16 %v862
    %v1123 = vunpack.c.l.b16 %v863
    %v1124 = vunpack.c.l.b16 %v864
    %v1125 = vunpack.c.l.b16 %v865
    %v1126 = vunpack.c.l.b16 %v866
    %v1127 = vunpack.c.l.b16 %v867
    %v1128 = vunpack.c.l.b16 %v868
    %v1129 = vunpack.c.l.b16 %v869
    %v1130 = vunpack.c.l.b16 %v870
    %v1131 = vunpack.c.l.b16 %v871
    %v1132 = vunpack.c.l.b16 %v872
    %v1133 = vunpack.c.l.b16 %v873
    %v1134 = vunpack.c.l.b16 %v874
    %v1135 = vunpack.c.l.b16 %v875
    %v1136 = vunpack.c.l.b16 %v876
    %v1137 = vunpack.c.l.b16 %v877
    %v1138 = vunpack.c.l.b16 %v878
    %v1139 = vunpack.c.l.b16 %v879
    %v1140 = vunpack.c.l.b16 %v880
    %v1141 = vunpack.c.l.b16 %v881
    %v1142 = vunpack.c.l.b16 %v882
    %v1143 = vunpack.c.l.b16 %v883
    %v1144 = vunpack.c.l.b16 %v884
    %v1145 = vunpack.c.l.b16 %v885
    %v1146 = vunpack.c.l.b16 %v886
    %v1147 = vunpack.c.l.b16 %v887
    %v1148 = vunpack.c.l.b16 %v888
    %v1149 = vunpack.c.l.b16 %v889
    %v1150 = vunpack.c.l.b16 %v890
    %v1151 = vunpack.c.l.b16 %v891
    %v1152 = vunpack.c.l.b16 %v892
    %v1153 = vunpack.c.l.b16 %v893
    %v1154 = vunpack.c.l.b16 %v894
    %v1155 = vunpack.c.l.b16 %v895
    %v1156 = vunpack.c.l.b16 %v896
    %v1157 = vunpack.c.l.b16 %v897
    %v1158 = vunpack.c.l.b16 %v898
    %v1159 = vunpack.c.l.b16 %v899
    %v1160 = vunpack.c.l.b16 %v900
    %v1161 = vunpack.c.l.b16 %v901
    %v1162 = vunpack.c.l.b16 %v902
    %v1163 = vunpack.c.l.b16 %v903
    %v1164 = vunpack.c.l.b16 %v904
    %v1165 = vunpack.c.l.b16 %v905
    %v1166 = vunpack.c.l.b16 %v906
    %v1167 = vunpack.c.l.b16 %v907
    %v1168 = vunpack.c.l.b16 %v908
    %v1169 = vunpack.c.l.b16 %v909
    %v1170 = vunpack.c.l.b16 %v910
    %v1171 = vunpack.c.l.b16 %v911
    %v1172 = vunpack.c.l.b16 %v912
    %v1173 = vunpack.c.l.b16 %v913
    %v1174 = vunpack.c.l.b16 %v914
    %v1175 = vunpack.c.l.b16 %v915
    %v1176 = vunpack.c.l.b16 %v916
    %v1177 = vunpack.c.l.b16 %v917
    %v1178 = vunpack.c.l.b16 %v918
    %v1179 = vunpack.c.l.b16 %v919
    %v1180 = vunpack.c.l.b16 %v920
    %v1181 = vunpack.c.l.b16 %v921
    %v1182 = vunpack.c.l.b16 %v922
    %v1183 = vunpack.c.l.b16 %v923
    %v1184 = vunpack.c.l.b16 %v924
    %v1185 = vunpack.c.l.b16 %v925
    %v1186 = vunpack.c.l.b16 %v926
    %v1187 = vunpack.c.l.b16 %v927
    %v1188 = vunpack.c.l.b16 %v928
    %v1189 = vunpack.c.l.b16 %v929
    %v1190 = vunpack.c.l.b16 %v930
    %v1191 = vunpack.c.l.b16 %v931
    %v1192 = vunpack.c.l.b16 %v932
    %v1193 = vunpack.c.l.b16 %v933
    %v1194 = vunpack.c.l.b16 %v934
    %v1195 = vunpack.c.l.b16 %v935
    %v1196 = vunpack.c.l.b16 %v936
    %v1197 = vunpack.c.l.b16 %v937
    %v1198 = vpack.c.b16 %v1087, %v1086
    %v1199 = vpack.c.b16 %v1089, %v1088
    %v1200 = vpack.c.b16 %v1091, %v1090
    %v1201 = vpack.c.b16 %v1093, %v1092
    %v1202 = vpack.c.b16 %v1095, %v1094
    %v1203 = vpack.c.b16 %v1097, %v1096
    %v1204 = vpack.c.b16 %v1099, %v1098
    %v1205 = vpack.c.b16 %v1101, %v1100
    %v1206 = vpack.c.b16 %v1103, %v1102
    %v1207 = vpack.c.b16 %v1105, %v1104
    %v1208 = vpack.c.b16 %v1107, %v1106
    %v1209 = vpack.c.b16 %v1109, %v1108
    %v1210 = vpack.c.b16 %v1111, %v1110
    %v1211 = vpack.c.b16 %v1113, %v1112
    %v1212 = vpack.c.b16 %v1115, %v1114
    %v1213 = vpack.c.b16 %v1117, %v1116
    %v1214 = vpack.c.b16 %v1119, %v1118
    %v1215 = vpack.c.b16 %v1121, %v1120
    %v1216 = vpack.c.b16 %v1123, %v1122
    %v1217 = vpack.c.b16 %v1125, %v1124
    %v1218 = vpack.c.b16 %v1127, %v1126
    %v1219 = vpack.c.b16 %v1129, %v1128
    %v1220 = vpack.c.b16 %v1131, %v1130
    %v1221 = vpack.c.b16 %v1133, %v1132
    %v1222 = vpack.c.b16 %v1135, %v1134
    %v1223 = vpack.c.b16 %v1137, %v1136
    %v1224 = vpack.c.b16 %v1139, %v1138
    %v1225 = vpack.c.b16 %v1141, %v1140
    %v1226 = vpack.c.b16 %v1143, %v1142
    %v1227 = vpack.c.b16 %v1145, %v1144
    %v1228 = vpack.c.b16 %v1147, %v1146
    %v1229 = vpack.c.b16 %v1149, %v1148
    %v1230 = vpack.c.b16 %v1151, %v1150
    %v1231 = vpack.c.b16 %v1153, %v1152
    %v1232 = vpack.c.b16 %v1155, %v1154
    %v1233 = vpack.c.b16 %v1157, %v1156
    %v1234 = vpack.c.b16 %v1159, %v1158
    %v1235 = vpack.c.b16 %v1161, %v1160
    %v1236 = vpack.c.b16 %v1163, %v1162
    %v1237 = vpack.c.b16 %v1165, %v1164
    %v1238 = vpack.c.b16 %v1167, %v1166
    %v1239 = vpack.c.b16 %v1169, %v1168
    %v1240 = vpack.c.b16 %v1171, %v1170
    %v1241 = vpack.c.b16 %v1173, %v1172
    %v1242 = vpack.c.b16 %v1175, %v1174
    %v1243 = vpack.c.b16 %v1177, %v1176
    %v1244 = vpack.c.b16 %v1179, %v1178
    %v1245 = vpack.c.b16 %v1181, %v1180
    %v1246 = vpack.c.b16 %v1183, %v1182
    %v1247 = vpack.c.b16 %v1185, %v1184
    %v1248 = vpack.c.b16 %v1187, %v1186
    %v1249 = vpack.c.b16 %v1189, %v1188
    %v1250 = vpack.c.b16 %v1191, %v1190
    %v1251 = vpack.c.b16 %v1193, %v1192
    %v1252 = vpack.c.b16 %v1195, %v1194
    %v1253 = vpack.c.b16 %v1197, %v1196
    %1310 = vmatprep.subr.bf16.mxu0 0
    %1311 = vmatpush1.bf16.msra.mxu0 %v1198
    %1312 = vmatprep.subr.bf16.mxu0 0
    %1313 = vmatpush1.bf16.msra.mxu0 %v1199
    %1314 = vmatprep.subr.bf16.mxu0 0
    %1315 = vmatpush1.bf16.msra.mxu0 %v1200
    %1316 = vmatprep.subr.bf16.mxu0 0
    %1317 = vmatpush1.bf16.msra.mxu0 %v1201
    %1318 = vmatprep.subr.bf16.mxu0 0
    %1319 = vmatpush1.bf16.msra.mxu0 %v1202
    %1320 = vmatprep.subr.bf16.mxu0 0
    %1321 = vmatpush1.bf16.msra.mxu0 %v1203
    %1322 = vmatprep.subr.bf16.mxu0 0
    %1323 = vmatpush1.bf16.msra.mxu0 %v1204
    %1324 = vmatprep.subr.bf16.mxu0 0
    %1325 = vmatpush1.bf16.msra.mxu0 %v1205
    %1326 = vmatprep.subr.bf16.mxu0 0
    %1327 = vmatpush1.bf16.msra.mxu0 %v1206
    %1328 = vmatprep.subr.bf16.mxu0 0
    %1329 = vmatpush1.bf16.msra.mxu0 %v1207
    %1330 = vmatprep.subr.bf16.mxu0 0
    %1331 = vmatpush1.bf16.msra.mxu0 %v1208
    %1332 = vmatprep.subr.bf16.mxu0 0
    %1333 = vmatpush1.bf16.msra.mxu0 %v1209
    %1334 = vmatprep.subr.bf16.mxu0 0
    %1335 = vmatpush1.bf16.msra.mxu0 %v1210
    %1336 = vmatprep.subr.bf16.mxu0 0
    %1337 = vmatpush1.bf16.msra.mxu0 %v1211
    %1338 = vmatprep.subr.bf16.mxu0 0
    %1339 = vmatpush1.bf16.msra.mxu0 %v1212
    %1340 = vmatprep.subr.bf16.mxu0 0
    %1341 = vmatpush1.bf16.msra.mxu0 %v1213
    %1342 = vmatprep.mubr.bf16.mxu0 %v961
    %1343 = vmatmul.mubr.bf16.gmra.mrb[0].mxu0 %v960
    %v1344 = vpop.f32.mrb[0].mxu0
    %v1345 = vadd.f32 0.0, %v1344
    %v1346 = vpop.f32.mrb[0].mxu0
    %v1347 = vpop.f32.mrb[0].mxu0
    %v1348 = vadd.f32 0.0, %v1347
    %v1349 = vpop.f32.mrb[0].mxu0
    %1350 = vdwg.mxu0
    %1351 = vmatprep.subr.bf16.mxu0 0
    %1352 = vmatpush1.bf16.msra.mxu0 %v1214
    %1353 = vmatprep.subr.bf16.mxu0 0
    %1354 = vmatpush1.bf16.msra.mxu0 %v1215
    %1355 = vmatprep.subr.bf16.mxu0 0
    %1356 = vmatpush1.bf16.msra.mxu0 %v1216
    %1357 = vmatprep.subr.bf16.mxu0 0
    %1358 = vmatpush1.bf16.msra.mxu0 %v1217
    %1359 = vmatprep.subr.bf16.mxu0 0
    %1360 = vmatpush1.bf16.msra.mxu0 %v1218
    %1361 = vmatprep.subr.bf16.mxu0 0
    %1362 = vmatpush1.bf16.msra.mxu0 %v1219
    %1363 = vmatprep.subr.bf16.mxu0 0
    %1364 = vmatpush1.bf16.msra.mxu0 %v1220
    %1365 = vmatprep.subr.bf16.mxu0 0
    %1366 = vmatpush1.bf16.msra.mxu0 %v1221
    %1367 = vmatprep.subr.bf16.mxu0 0
    %1368 = vmatpush1.bf16.msra.mxu0 %v1222
    %1369 = vmatprep.subr.bf16.mxu0 0
    %1370 = vmatpush1.bf16.msra.mxu0 %v1223
    %1371 = vmatprep.subr.bf16.mxu0 0
    %1372 = vmatpush1.bf16.msra.mxu0 %v1224
    %1373 = vmatprep.subr.bf16.mxu0 0
    %1374 = vmatpush1.bf16.msra.mxu0 %v1225
    %1375 = vmatprep.subr.bf16.mxu0 0
    %1376 = vmatpush1.bf16.msra.mxu0 %v1226
    %1377 = vmatprep.subr.bf16.mxu0 0
    %1378 = vmatpush1.bf16.msra.mxu0 %v1227
    %1379 = vmatprep.subr.bf16.mxu0 0
    %1380 = vmatpush1.bf16.msra.mxu0 %v1228
    %1381 = vmatprep.subr.bf16.mxu0 0
    %1382 = vmatpush1.bf16.msra.mxu0 %v1229
    %1383 = vmatprep.mubr.bf16.mxu0 %v963
    %1384 = vmatmul.mubr.bf16.gmra.mrb[0].mxu0 %v962
    %v1385 = vpop.f32.mrb[0].mxu0
    %v1386 = vadd.f32 %v1345, %v1385
    %v1387 = vpop.f32.mrb[0].mxu0
    %v1388 = vpop.f32.mrb[0].mxu0
    %v1389 = vadd.f32 %v1348, %v1388
    %v1390 = vpop.f32.mrb[0].mxu0
    %1391 = vdwg.mxu0
    %1392 = vmatprep.subr.bf16.mxu0 0
    %1393 = vmatpush1.bf16.msra.mxu0 %v1230
    %1394 = vmatprep.subr.bf16.mxu0 0
    %1395 = vmatpush1.bf16.msra.mxu0 %v1231
    %1396 = vmatprep.subr.bf16.mxu0 0
    %1397 = vmatpush1.bf16.msra.mxu0 %v1232
    %1398 = vmatprep.subr.bf16.mxu0 0
    %1399 = vmatpush1.bf16.msra.mxu0 %v1233
    %1400 = vmatprep.subr.bf16.mxu0 0
    %1401 = vmatpush1.bf16.msra.mxu0 %v1234
    %1402 = vmatprep.subr.bf16.mxu0 0
    %1403 = vmatpush1.bf16.msra.mxu0 %v1235
    %1404 = vmatprep.subr.bf16.mxu0 0
    %1405 = vmatpush1.bf16.msra.mxu0 %v1236
    %1406 = vmatprep.subr.bf16.mxu0 0
    %1407 = vmatpush1.bf16.msra.mxu0 %v1237
    %1408 = vmatprep.subr.bf16.mxu0 0
    %1409 = vmatpush1.bf16.msra.mxu0 %v1238
    %1410 = vmatprep.subr.bf16.mxu0 0
    %1411 = vmatpush1.bf16.msra.mxu0 %v1239
    %1412 = vmatprep.subr.bf16.mxu0 0
    %1413 = vmatpush1.bf16.msra.mxu0 %v1240
    %1414 = vmatprep.subr.bf16.mxu0 0
    %1415 = vmatpush1.bf16.msra.mxu0 %v1241
    %1416 = vmatprep.subr.bf16.mxu0 0
    %1417 = vmatpush1.bf16.msra.mxu0 %v1242
    %1418 = vmatprep.subr.bf16.mxu0 0
    %1419 = vmatpush1.bf16.msra.mxu0 %v1243
    %1420 = vmatprep.subr.bf16.mxu0 0
    %1421 = vmatpush1.bf16.msra.mxu0 %v1244
    %1422 = vmatprep.subr.bf16.mxu0 0
    %1423 = vmatpush1.bf16.msra.mxu0 %v1245
    %1424 = vmatprep.mubr.bf16.mxu0 %v965
    %1425 = vmatmul.mubr.bf16.gmra.mrb[0].mxu0 %v964
    %v1426 = vpop.f32.mrb[0].mxu0
    %v1427 = vadd.f32 %v1386, %v1426
    %v1428 = vpop.f32.mrb[0].mxu0
    %v1429 = vpop.f32.mrb[0].mxu0
    %v1430 = vadd.f32 %v1389, %v1429
    %v1431 = vpop.f32.mrb[0].mxu0
    %1432 = vdwg.mxu0
    %1433 = vmatprep.subr.bf16.mxu0 0
    %1434 = vmatpush1.bf16.msra.mxu0 %v1246
    %1435 = vmatprep.subr.bf16.mxu0 0
    %1436 = vmatpush1.bf16.msra.mxu0 %v1247
    %1437 = vmatprep.subr.bf16.mxu0 0
    %1438 = vmatpush1.bf16.msra.mxu0 %v1248
    %1439 = vmatprep.subr.bf16.mxu0 0
    %1440 = vmatpush1.bf16.msra.mxu0 %v1249
    %1441 = vmatprep.subr.bf16.mxu0 0
    %1442 = vmatpush1.bf16.msra.mxu0 %v1250
    %1443 = vmatprep.subr.bf16.mxu0 0
    %1444 = vmatpush1.bf16.msra.mxu0 %v1251
    %1445 = vmatprep.subr.bf16.mxu0 0
    %1446 = vmatpush1.bf16.msra.mxu0 %v1252
    %1447 = vmatprep.subr.bf16.mxu0 0
    %1448 = vmatpush1.bf16.msra.mxu0 %v1253
    %1449 = vmatprep.subr.bf16.mxu0 0
    %1450 = vmatpush1.bf16.msra.mxu0 0
    %1451 = vmatprep.subr.bf16.mxu0 0
    %1452 = vmatpush1.bf16.msra.mxu0 0
    %1453 = vmatprep.subr.bf16.mxu0 0
    %1454 = vmatpush1.bf16.msra.mxu0 0
    %1455 = vmatprep.subr.bf16.mxu0 0
    %1456 = vmatpush1.bf16.msra.mxu0 0
    %1457 = vmatprep.subr.bf16.mxu0 0
    %1458 = vmatpush1.bf16.msra.mxu0 0
    %1459 = vmatprep.subr.bf16.mxu0 0
    %1460 = vmatpush1.bf16.msra.mxu0 0
    %1461 = vmatprep.subr.bf16.mxu0 0
    %1462 = vmatpush1.bf16.msra.mxu0 0
    %1463 = vmatprep.subr.bf16.mxu0 0
    %1464 = vmatpush1.bf16.msra.mxu0 0
    %1465 = vmatprep.mubr.bf16.mxu0 0
    %1466 = vmatmul.mubr.bf16.gmra.mrb[0].mxu0 %v966
    %v1467 = vpop.f32.mrb[0].mxu0
    %v1468 = vadd.f32 %v1427, %v1467
    %v1469 = vpop.f32.mrb[0].mxu0
    %v1470 = vpop.f32.mrb[0].mxu0
    %v1471 = vadd.f32 %v1430, %v1470
    %v1472 = vpop.f32.mrb[0].mxu0
    %1473 = vdwg.mxu0
    %v1474 = vld [vmem:[#allocation3] sm:$0x1]
    %v1475 = vsel %vm787, %v1468, 0.0
    %v1476 = vsel %vm787, %v1471, 0.0
    %v1477 = vadd.f32 %v1475, %v1476
    %v1478 = vrot.slane %v1477, 4
    %v1479 = vadd.f32 %v1477, %v1478
    %v1480 = vrot.slane %v1479, 2
    %v1481 = vadd.f32 %v1479, %v1480
    %v1482 = vrot.slane %v1481, 1
    %v1483 = vadd.f32 %v1481, %v1482
    %v1484 = vadd.f32 %v1474, %v1483
    %1485 = vst.msk [vmem:[#allocation3] sm:$0x1] %vm798, %v1484
    %v1486 = vld [vmem:[#allocation4] sm:$0x1]
    %v1487 = vmul.f32 %v1468, %v1468
    %v1488 = vmul.f32 %v1471, %v1471
    %v1489 = vsel %vm787, %v1487, 0.0
    %v1490 = vsel %vm787, %v1488, 0.0
    %v1491 = vadd.f32 %v1489, %v1490
    %v1492 = vrot.slane %v1491, 4
    %v1493 = vadd.f32 %v1491, %v1492
    %v1494 = vrot.slane %v1493, 2
    %v1495 = vadd.f32 %v1493, %v1494
    %v1496 = vrot.slane %v1495, 1
    %v1497 = vadd.f32 %v1495, %v1496
    %v1498 = vadd.f32 %v1486, %v1497
    %1499 = vst.msk [vmem:[#allocation4] sm:$0x1] %vm798, %v1498
    %1502 = vrot.lane.b32.xlu0 %v1468, 64
    %v1503 = vpop.permute.xlu0 %1502
    %1504 = vrot.lane.b32.xlu0 %v1471, 64
    %v1505 = vpop.permute.xlu0 %1504
    %vm1508 = vcmask 1048064
    %1509 = vst.msk [vmem:[%s814] sm:$0xff] %vm1508, %v1503
    %1510 = vst.msk [vmem:[%s814 + $0x8] sm:$0xff] %vm1508, %v1505
    // Predicated region
    $region66: #{discriminator_forward.7} parent=1 // pred_check
      %p1511 = pneg %p122
    $region67: #{discriminator_forward.7} parent=1 // pred_check_branch
      %1513 = sbr.rel (%p1511) target = $region69
    $region68: #{discriminator_forward.7} parent=1 // pred_region
      %v1514 = vld [vmem:[#allocation3] sm:$0x1]
      %v1515 = vmul.f32 %v1514, 0.125
      %v1516 = vld [vmem:[#allocation4] sm:$0x1]
      %v1517 = vmul.f32 %v1516, 0.125
      %v1518 = vmul.f32 %v1515, %v1515
      %v1519 = vsub.f32 %v1517, %v1518
      %v1520 = vmax.f32 %v1519, 0.0
      %v1521 = vadd.f32 %v1520, 1e-05
      %v1522 = vrsqrt.pop %v1521
      %v1523 = vld [vmem:[#allocation11] sm:$0x1]
      %v1524 = vmul.f32 %v1523, %v1522
      %v1525 = vld [vmem:[#allocation12] sm:$0x1]
      %v1526 = vmul.f32 %v1515, %v1524
      %v1527 = vsub.f32 %v1525, %v1526
      %v1528 = vld [vmem:[#allocation14] sm:$0xff]
      %v1529 = vld [vmem:[#allocation14 + $0x8] sm:$0xff]
      %v1530 = vld [vmem:[#allocation14 + $0x10] sm:$0xff]
      %v1531 = vld [vmem:[#allocation14 + $0x18] sm:$0xff]
      %v1532 = vld [vmem:[#allocation14 + $0x20] sm:$0xff]
      %v1533 = vld [vmem:[#allocation14 + $0x28] sm:$0xff]
      %v1534 = vld [vmem:[#allocation14 + $0x30] sm:$0xff]
      %v1535 = vld [vmem:[#allocation14 + $0x38] sm:$0xff]
      %v1537 = vsel %vm787, %v1524, 0
      %1539 = vmatprep.subr.mxu0 0.0
      %1540 = vmatpush1.msra.mxu0 %v1528
      %1541 = vmatprep.subr.mxu0 0.0
      %1542 = vmatpush1.msra.mxu0 %v1529
      %1543 = vmatprep.subr.mxu0 0.0
      %1544 = vmatpush1.msra.mxu0 %v1530
      %1545 = vmatprep.subr.mxu0 0.0
      %1546 = vmatpush1.msra.mxu0 %v1531
      %1547 = vmatprep.subr.mxu0 0.0
      %1548 = vmatpush1.msra.mxu0 %v1532
      %1549 = vmatprep.subr.mxu0 0.0
      %1550 = vmatpush1.msra.mxu0 %v1533
      %1551 = vmatprep.subr.mxu0 0.0
      %1552 = vmatpush1.msra.mxu0 %v1534
      %1553 = vmatprep.subr.mxu0 0.0
      %1554 = vmatpush1.msra.mxu0 %v1535
      %1555 = vmatprep.subr.mxu0 0.0
      %1556 = vmatpush1.msra.mxu0 0.0
      %1557 = vmatprep.subr.mxu0 0.0
      %1558 = vmatpush1.msra.mxu0 0.0
      %1559 = vmatprep.subr.mxu0 0.0
      %1560 = vmatpush1.msra.mxu0 0.0
      %1561 = vmatprep.subr.mxu0 0.0
      %1562 = vmatpush1.msra.mxu0 0.0
      %1563 = vmatprep.subr.mxu0 0.0
      %1564 = vmatpush1.msra.mxu0 0.0
      %1565 = vmatprep.subr.mxu0 0.0
      %1566 = vmatpush1.msra.mxu0 0.0
      %1567 = vmatprep.subr.mxu0 0.0
      %1568 = vmatpush1.msra.mxu0 0.0
      %1569 = vmatprep.subr.mxu0 0.0
      %1570 = vmatpush1.msra.mxu0 0.0
      %1571 = vmatprep.subr.mxu0 0.0
      %1572 = vmatpush1.msra.mxu0 0.0
      %1573 = vmatprep.subr.mxu0 0.0
      %1574 = vmatpush1.msra.mxu0 0.0
      %1575 = vmatprep.subr.mxu0 0.0
      %1576 = vmatpush1.msra.mxu0 0.0
      %1577 = vmatprep.subr.mxu0 0.0
      %1578 = vmatpush1.msra.mxu0 0.0
      %1579 = vmatprep.subr.mxu0 0.0
      %1580 = vmatpush1.msra.mxu0 0.0
      %1581 = vmatprep.subr.mxu0 0.0
      %1582 = vmatpush1.msra.mxu0 0.0
      %1583 = vmatprep.subr.mxu0 0.0
      %1584 = vmatpush1.msra.mxu0 0.0
      %1585 = vmatprep.subr.mxu0 0.0
      %1586 = vmatpush1.msra.mxu0 0.0
      %1587 = vmatprep.subr.mxu0 0.0
      %1588 = vmatpush1.msra.mxu0 0.0
      %1589 = vmatprep.subr.mxu0 0.0
      %1590 = vmatpush1.msra.mxu0 0.0
      %1591 = vmatprep.subr.mxu0 0.0
      %1592 = vmatpush1.msra.mxu0 0.0
      %1593 = vmatprep.subr.mxu0 0.0
      %1594 = vmatpush1.msra.mxu0 0.0
      %1595 = vmatprep.subr.mxu0 0.0
      %1596 = vmatpush1.msra.mxu0 0.0
      %1597 = vmatprep.subr.mxu0 0.0
      %1598 = vmatpush1.msra.mxu0 0.0
      %1599 = vmatprep.subr.mxu0 0.0
      %1600 = vmatpush1.msra.mxu0 0.0
      %1601 = vmatprep.subr.mxu0 0.0
      %1602 = vmatpush1.msra.mxu0 0.0
      %1603 = vmatprep.mubr.f32.mxu0 0.0
      %1604 = vmatmul.mubr.f32.gmra.mrb[0].mxu0 %v1537
      %v1605 = vpop.f32.mrb[0].mxu0
      %v1606 = vadd.f32 0.0, %v1605
      %v1607 = vpop.f32.mrb[0].mxu0
      %1608 = vdwg.mxu0
      %v1610 = vsel %vm787, %v1527, 0
      %1612 = vmatprep.subr.mxu0 0.0
      %1613 = vmatpush1.msra.mxu0 %v1528
      %1614 = vmatprep.subr.mxu0 0.0
      %1615 = vmatpush1.msra.mxu0 %v1529
      %1616 = vmatprep.subr.mxu0 0.0
      %1617 = vmatpush1.msra.mxu0 %v1530
      %1618 = vmatprep.subr.mxu0 0.0
      %1619 = vmatpush1.msra.mxu0 %v1531
      %1620 = vmatprep.subr.mxu0 0.0
      %1621 = vmatpush1.msra.mxu0 %v1532
      %1622 = vmatprep.subr.mxu0 0.0
      %1623 = vmatpush1.msra.mxu0 %v1533
      %1624 = vmatprep.subr.mxu0 0.0
      %1625 = vmatpush1.msra.mxu0 %v1534
      %1626 = vmatprep.subr.mxu0 0.0
      %1627 = vmatpush1.msra.mxu0 %v1535
      %1628 = vmatprep.subr.mxu0 0.0
      %1629 = vmatpush1.msra.mxu0 0.0
      %1630 = vmatprep.subr.mxu0 0.0
      %1631 = vmatpush1.msra.mxu0 0.0
      %1632 = vmatprep.subr.mxu0 0.0
      %1633 = vmatpush1.msra.mxu0 0.0
      %1634 = vmatprep.subr.mxu0 0.0
      %1635 = vmatpush1.msra.mxu0 0.0
      %1636 = vmatprep.subr.mxu0 0.0
      %1637 = vmatpush1.msra.mxu0 0.0
      %1638 = vmatprep.subr.mxu0 0.0
      %1639 = vmatpush1.msra.mxu0 0.0
      %1640 = vmatprep.subr.mxu0 0.0
      %1641 = vmatpush1.msra.mxu0 0.0
      %1642 = vmatprep.subr.mxu0 0.0
      %1643 = vmatpush1.msra.mxu0 0.0
      %1644 = vmatprep.subr.mxu0 0.0
      %1645 = vmatpush1.msra.mxu0 0.0
      %1646 = vmatprep.subr.mxu0 0.0
      %1647 = vmatpush1.msra.mxu0 0.0
      %1648 = vmatprep.subr.mxu0 0.0
      %1649 = vmatpush1.msra.mxu0 0.0
      %1650 = vmatprep.subr.mxu0 0.0
      %1651 = vmatpush1.msra.mxu0 0.0
      %1652 = vmatprep.subr.mxu0 0.0
      %1653 = vmatpush1.msra.mxu0 0.0
      %1654 = vmatprep.subr.mxu0 0.0
      %1655 = vmatpush1.msra.mxu0 0.0
      %1656 = vmatprep.subr.mxu0 0.0
      %1657 = vmatpush1.msra.mxu0 0.0
      %1658 = vmatprep.subr.mxu0 0.0
      %1659 = vmatpush1.msra.mxu0 0.0
      %1660 = vmatprep.subr.mxu0 0.0
      %1661 = vmatpush1.msra.mxu0 0.0
      %1662 = vmatprep.subr.mxu0 0.0
      %1663 = vmatpush1.msra.mxu0 0.0
      %1664 = vmatprep.subr.mxu0 0.0
      %1665 = vmatpush1.msra.mxu0 0.0
      %1666 = vmatprep.subr.mxu0 0.0
      %1667 = vmatpush1.msra.mxu0 0.0
      %1668 = vmatprep.subr.mxu0 0.0
      %1669 = vmatpush1.msra.mxu0 0.0
      %1670 = vmatprep.subr.mxu0 0.0
      %1671 = vmatpush1.msra.mxu0 0.0
      %1672 = vmatprep.subr.mxu0 0.0
      %1673 = vmatpush1.msra.mxu0 0.0
      %1674 = vmatprep.subr.mxu0 0.0
      %1675 = vmatpush1.msra.mxu0 0.0
      %1676 = vmatprep.mubr.f32.mxu0 0.0
      %1677 = vmatmul.mubr.f32.gmra.mrb[0].mxu0 %v1610
      %v1678 = vpop.f32.mrb[0].mxu0
      %v1679 = vadd.f32 0.0, %v1678
      %v1680 = vpop.f32.mrb[0].mxu0
      %1681 = vdwg.mxu0
      %v1682 = vld [vmem:[#allocation2] sm:$0xff]
      %v1683 = vld [vmem:[#allocation2 + $0x8] sm:$0xff]
      %v1684 = vlaneseq
      %v1685 = vshrl.u32 %v1684, 7
      %v1686 = vsub.s32 0, %v1685
      %v1687 = vrot.slane %v1606, %v1686
      %v1688 = vmul.f32 %v1682, %v1687
      %v1689 = vmul.f32 %v1683, %v1687
      %v1690 = vlaneseq
      %v1691 = vshrl.u32 %v1690, 7
      %v1692 = vsub.s32 0, %v1691
      %v1693 = vrot.slane %v1679, %v1692
      %v1694 = vadd.f32 %v1688, %v1693
      %v1695 = vadd.f32 %v1689, %v1693
      %vm1696 = vcmp.ge.f32.partialorder %v1694, 0.0
      %vm1697 = vcmp.ge.f32.partialorder %v1695, 0.0
      %v1698 = vmul.f32 %v1694, 0.2
      %v1699 = vmul.f32 %v1695, 0.2
      %v1700 = vsel %vm1696, %v1694, %v1698
      %v1701 = vsel %vm1697, %v1695, %v1699
      %v1702 = vld [vmem:[#allocation15] sm:$0xff]
      %v1703 = vld [vmem:[#allocation15 + $0x8] sm:$0xff]
      %v1704 = vmul.f32 %v1700, %v1702
      %v1705 = vmul.f32 %v1701, %v1703
      %1706 = vadd.xlane.f32.xlu0 %v1704
      %v1707 = vpop.xlane.xlu0 %1706
      %1708 = vadd.xlane.f32.xlu0 %v1705
      %v1709 = vpop.xlane.xlu0 %1708
      %v1710 = vld [vmem:[#allocation17] sm:$0x3]
      %v1711 = vld [vmem:[#allocation5] sm:$0x1]
      %v1713 = vlaneseq
      %v1714 = vshrl.u32 %v1713, 7
      %v1715 = vsub.s32 0, %v1714
      %v1716 = vrot.slane %v1711, %v1715
      %vm1718 = vcmask 130048
      %v1720 = vsel %vm1718, %v1710, 0
      %1722 = vmatprep.subr.mxu0 0.0
      %1723 = vmatpush1.msra.mxu0 %v1707
      %1724 = vmatprep.subr.mxu0 0.0
      %1725 = vmatpush1.msra.mxu0 %v1709
      %1726 = vmatprep.subr.mxu0 0.0
      %1727 = vmatpush1.msra.mxu0 0.0
      %1728 = vmatprep.subr.mxu0 0.0
      %1729 = vmatpush1.msra.mxu0 0.0
      %1730 = vmatprep.subr.mxu0 0.0
      %1731 = vmatpush1.msra.mxu0 0.0
      %1732 = vmatprep.subr.mxu0 0.0
      %1733 = vmatpush1.msra.mxu0 0.0
      %1734 = vmatprep.subr.mxu0 0.0
      %1735 = vmatpush1.msra.mxu0 0.0
      %1736 = vmatprep.subr.mxu0 0.0
      %1737 = vmatpush1.msra.mxu0 0.0
      %1738 = vmatprep.subr.mxu0 0.0
      %1739 = vmatpush1.msra.mxu0 0.0
      %1740 = vmatprep.subr.mxu0 0.0
      %1741 = vmatpush1.msra.mxu0 0.0
      %1742 = vmatprep.subr.mxu0 0.0
      %1743 = vmatpush1.msra.mxu0 0.0
      %1744 = vmatprep.subr.mxu0 0.0
      %1745 = vmatpush1.msra.mxu0 0.0
      %1746 = vmatprep.subr.mxu0 0.0
      %1747 = vmatpush1.msra.mxu0 0.0
      %1748 = vmatprep.subr.mxu0 0.0
      %1749 = vmatpush1.msra.mxu0 0.0
      %1750 = vmatprep.subr.mxu0 0.0
      %1751 = vmatpush1.msra.mxu0 0.0
      %1752 = vmatprep.subr.mxu0 0.0
      %1753 = vmatpush1.msra.mxu0 0.0
      %1754 = vmatprep.subr.mxu0 0.0
      %1755 = vmatpush1.msra.mxu0 0.0
      %1756 = vmatprep.subr.mxu0 0.0
      %1757 = vmatpush1.msra.mxu0 0.0
      %1758 = vmatprep.subr.mxu0 0.0
      %1759 = vmatpush1.msra.mxu0 0.0
      %1760 = vmatprep.subr.mxu0 0.0
      %1761 = vmatpush1.msra.mxu0 0.0
      %1762 = vmatprep.subr.mxu0 0.0
      %1763 = vmatpush1.msra.mxu0 0.0
      %1764 = vmatprep.subr.mxu0 0.0
      %1765 = vmatpush1.msra.mxu0 0.0
      %1766 = vmatprep.subr.mxu0 0.0
      %1767 = vmatpush1.msra.mxu0 0.0
      %1768 = vmatprep.subr.mxu0 0.0
      %1769 = vmatpush1.msra.mxu0 0.0
      %1770 = vmatprep.subr.mxu0 0.0
      %1771 = vmatpush1.msra.mxu0 0.0
      %1772 = vmatprep.subr.mxu0 0.0
      %1773 = vmatpush1.msra.mxu0 0.0
      %1774 = vmatprep.subr.mxu0 0.0
      %1775 = vmatpush1.msra.mxu0 0.0
      %1776 = vmatprep.subr.mxu0 0.0
      %1777 = vmatpush1.msra.mxu0 0.0
      %1778 = vmatprep.subr.mxu0 0.0
      %1779 = vmatpush1.msra.mxu0 0.0
      %1780 = vmatprep.subr.mxu0 0.0
      %1781 = vmatpush1.msra.mxu0 0.0
      %1782 = vmatprep.subr.mxu0 0.0
      %1783 = vmatpush1.msra.mxu0 0.0
      %1784 = vmatprep.subr.mxu0 0.0
      %1785 = vmatpush1.msra.mxu0 0.0
      %1786 = vmatprep.mubr.f32.mxu0 0.0
      %1787 = vmatmul.mubr.f32.gmra.mrb[0].mxu0 %v1720
      %v1788 = vpop.f32.mrb[0].mxu0
      %v1789 = vadd.f32 %v1716, %v1788
      %v1790 = vpop.f32.mrb[0].mxu0
      %1791 = vdwg.mxu0
      %v1792 = vsub.f32 0.0, %v1789
      %v1793 = vmul.f32 %v1792, 1.442695
      %v1794 = vpow.pop %v1793
      %v1795 = vadd.f32 %v1794, 1.0
      %v1796 = vrcp.pop %v1795
      %v1797 = vmul.f32 1.0, %v1796
      %vm1798 = vcmask 1024
      %1799 = vst.msk [vmem:[#allocation18] sm:$0x3] %vm1798, %v1797
    $region69: #{discriminator_forward.7} parent=1 // pred_fallthru
      _
    // Predicated region
    $region70: #{discriminator_forward.7} parent=1 // pred_check
      _
    $region71: #{discriminator_forward.7} parent=1 // pred_check_branch
      %1801 = sbr.rel (0) target = $region73
    $region72: #{discriminator_forward.7} parent=1 // pred_region
      %s1803 = ssub.s32 32, 32
      %1804 = vsyncadd [#allocation8], %s1803
      %s1806 = sshll.u32 [#allocation18], 4
      %s1807 = int_to_ptr.vmem [resolvable:$true] %s1806
      %1809 = dma.vmem_to_hbm [thread:$0]  %s1807, 32, %s8, [#allocation8]
    $region73: #{discriminator_forward.7} parent=1 // pred_fallthru
      _
    // Predicated region
    $region74: #{discriminator_forward.7} parent=1 // pred_check
      _
    $region75: #{discriminator_forward.7} parent=1 // pred_check_branch
      %1811 = sbr.rel (0) target = $region77
    $region76: #{discriminator_forward.7} parent=1 // pred_region
      %1812 = dma.done [#allocation8], 32
    $region77: #{discriminator_forward.7} parent=1 // pred_fallthru
      _
    %1813 = vsyncpa [#allocation7], 1
    %1814 = vsyncpa [#allocation10], 1
    %1815 = vsyncpa [#allocation13], 1
    %1816 = vsyncpa [#allocation16], 1
    %1817 = vsyncpa [#allocation8], 1

</llo_original>
